<compile_context>
chip_gen: v6e
topology: v6e:2x2x1
jax: 0.10.0
libtpu: 0.0.40
codegen_flags: <defaults>
</compile_context>

<pallas_src>
import functools

import numpy as np

import jax
import jax.numpy as jnp
from jax.experimental import pallas as pl
from jax.experimental.pallas import tpu as pltpu


# ---------------------------------------------------------------------------
# In-kernel building blocks (all operate on batch-flattened (B*H, W*C) slabs)
# ---------------------------------------------------------------------------
def _roll(x, shift, axis):
    """pltpu.roll with the shift normalized to [0, size)."""
    size = x.shape[axis]
    return pltpu.roll(x, shift % size, axis)


def _conv3x3(x, t_ref, b_ref, h_img, pre_relu):
    """3x3 SAME conv on images flattened along rows.

    x:     (M, W*Cin) f32 with M = B_TILE*h_img (image b occupies rows b*h_img..).
    t_ref: (3, W*Cin, W*Cout) bf16 block-Toeplitz weights (one per vertical tap dy);
           zero padding in W is folded into the Toeplitz columns.
    b_ref: (1, W*Cout) f32 bias tiled across the W lane blocks.
    Vertical taps use sublane rolls; image-boundary rows are masked to 0
    (the zero padding in H).
    """
    f32 = jnp.float32
    if pre_relu:
        x = jnp.maximum(x, 0.0)          # relu(0)==0, so relu commutes with zero-pad
    m, k = x.shape
    local = jax.lax.broadcasted_iota(jnp.int32, (m, k), 0) % h_img
    x_m1 = jnp.where(local == 0, 0.0, _roll(x, 1, 0))            # row i-1 (top pad)
    x_p1 = jnp.where(local == h_img - 1, 0.0, _roll(x, -1, 0))   # row i+1 (bottom pad)
    acc = jnp.dot(x_m1.astype(jnp.bfloat16), t_ref[0], preferred_element_type=f32)
    acc = acc + jnp.dot(x.astype(jnp.bfloat16), t_ref[1], preferred_element_type=f32)
    acc = acc + jnp.dot(x_p1.astype(jnp.bfloat16), t_ref[2], preferred_element_type=f32)
    return acc + b_ref[...]


def _maxpool3x3_s2(y, h_img, cout, drow_ref, dcol_ref):
    """PyTorch MaxPool2d(3, stride=2, padding=1) on row-flattened images.

    y: (B*h_img, W*cout) f32  ->  (B*(h_img//2), (W//2)*cout) f32.
    Row/column ±1 taps via rolls + (-inf) boundary masks; the stride-2
    decimation uses two small one-hot matmuls (drow block-diag over the batch
    tile; dcol selects even Cout lane-blocks).
    """
    f32 = jnp.float32
    ninf = f32(-jnp.inf)
    m, n = y.shape
    local = jax.lax.broadcasted_iota(jnp.int32, (m, n), 0) % h_img
    r_m1 = jnp.where(local == 0, ninf, _roll(y, 1, 0))           # row -1 is padding
    r_p1 = jnp.where(local == h_img - 1, ninf, _roll(y, -1, 0))  # row h is padding
    rmax = jnp.maximum(jnp.maximum(r_m1, y), r_p1)               # finite everywhere
    # stride-2 row decimation: (B*h2, B*h) @ (B*h, n)
    rdec = jnp.dot(drow_ref[...], rmax.astype(jnp.bfloat16), preferred_element_type=f32)
    lane = jax.lax.broadcasted_iota(jnp.int32, rdec.shape, 1)
    c_m1 = jnp.where(lane < cout, ninf, _roll(rdec, cout, 1))    # column -1 is padding
    c_p1 = _roll(rdec, -cout, 1)      # wrapped block only lands in discarded odd blocks
    cmax = jnp.maximum(jnp.maximum(c_m1, rdec), c_p1)
    # stride-2 column decimation: (B*h2, W*cout) @ (W*cout, (W//2)*cout)
    return jnp.dot(cmax.astype(jnp.bfloat16), dcol_ref[...], preferred_element_type=f32)


_W_PER_STAGE = 12  # tc, bc, t1a, b1a, t1b, b1b, t2a, b2a, t2b, b2b, drow, dcol


def _stage(x, refs, dims, final_relu):
    """One ConvSequence: conv -> maxpool -> ResBlock -> ResBlock [-> ReLU]."""
    (tc, bc, t1a, b1a, t1b, b1b, t2a, b2a, t2b, b2b, drow, dcol) = refs
    h, _w, _cin, cout = dims
    h2 = h // 2
    y = _conv3x3(x, tc, bc, h, pre_relu=False)
    y = _maxpool3x3_s2(y, h, cout, drow, dcol)

    r = _conv3x3(y, t1a, b1a, h2, pre_relu=True)
    r = _conv3x3(r, t1b, b1b, h2, pre_relu=True)
    y = y + r

    r = _conv3x3(y, t2a, b2a, h2, pre_relu=True)
    r = _conv3x3(r, t2b, b2b, h2, pre_relu=True)
    y = y + r

    if final_relu:       # final nn.ReLU() of the Sequential, fused into the last stage
        y = jnp.maximum(y, 0.0)
    return y


def _impala_kernel(x_ref, *refs, stage_dims):
    """Fully fused ImpalaCnn forward for one batch tile of images."""
    o_ref = refs[-1]
    wrefs = refs[:-1]
    x = x_ref[...].astype(jnp.float32)
    n_stages = len(stage_dims)
    for s, dims in enumerate(stage_dims):
        srefs = wrefs[s * _W_PER_STAGE:(s + 1) * _W_PER_STAGE]
        x = _stage(x, srefs, dims, final_relu=(s == n_stages - 1))
    o_ref[...] = x.astype(o_ref.dtype)


# ---------------------------------------------------------------------------
# Host-side packing: block-Toeplitz conv weights, bias rows, decimation one-hots
# ---------------------------------------------------------------------------
def _toeplitz_taps(w_hwio, width):
    """(3,3,Cin,Cout) HWIO weights -> (3, width*Cin, width*Cout) bf16 per-dy Toeplitz."""
    w = np.asarray(jax.device_get(w_hwio), np.float32)
    cin, cout = w.shape[2], w.shape[3]
    t = np.zeros((3, width * cin, width * cout), np.float32)
    for dy in range(3):
        for dx in range(3):
            for j in range(width):
                jp = j + dx - 1                      # input column of this tap
                if 0 <= jp < width:                  # out-of-range tap == zero pad in W
                    t[dy, jp * cin:(jp + 1) * cin, j * cout:(j + 1) * cout] = w[dy, dx]
    return jnp.asarray(t, jnp.bfloat16)


def _bias_row(b, width):
    b = np.asarray(jax.device_get(b), np.float32)
    return jnp.asarray(np.tile(b, width)[None, :])           # (1, width*Cout), f32


def _row_decimation(b_tile, h):
    """(b_tile*h/2, b_tile*h) one-hot picking local row 2*i of every image."""
    h2 = h // 2
    d = np.zeros((b_tile * h2, b_tile * h), np.float32)
    for b in range(b_tile):
        for i in range(h2):
            d[b * h2 + i, b * h + 2 * i] = 1.0
    return jnp.asarray(d, jnp.bfloat16)


def _col_decimation(w, c):
    """(w*c, (w/2)*c) one-hot picking even column blocks (stride-2 in W)."""
    w2 = w // 2
    d = np.zeros((w * c, w2 * c), np.float32)
    for q in range(w2):
        d[2 * q * c:(2 * q + 1) * c, q * c:(q + 1) * c] = np.eye(c, dtype=np.float32)
    return jnp.asarray(d, jnp.bfloat16)


def pack_params(params, in_channels, height, width, b_tile):
    """Pre-pack raw HWIO conv params into the operands the fused kernel uses."""
    packed, cin, h, w = [], in_channels, height, width
    for p in params:
        cout = int(p["conv"]["w"].shape[-1])
        h2, w2 = h // 2, w // 2
        packed.append(dict(
            dims=(h, w, cin, cout),
            tc=_toeplitz_taps(p["conv"]["w"], w), bc=_bias_row(p["conv"]["b"], w),
            t1a=_toeplitz_taps(p["res1"]["w1"], w2), b1a=_bias_row(p["res1"]["b1"], w2),
            t1b=_toeplitz_taps(p["res1"]["w2"], w2), b1b=_bias_row(p["res1"]["b2"], w2),
            t2a=_toeplitz_taps(p["res2"]["w1"], w2), b2a=_bias_row(p["res2"]["b1"], w2),
            t2b=_toeplitz_taps(p["res2"]["w2"], w2), b2b=_bias_row(p["res2"]["b2"], w2),
            drow=_row_decimation(b_tile, h), dcol=_col_decimation(w, cout),
        ))
        cin, h, w = cout, h2, w2
    return dict(stages=packed, b_tile=b_tile,
                in_shape=(height, width, in_channels), out_shape=(h, w, cin))


_ORDER = ("tc", "bc", "t1a", "b1a", "t1b", "b1b", "t2a", "b2a", "t2b", "b2b",
          "drow", "dcol")


# ---------------------------------------------------------------------------
# Single fused pallas_call, gridded over batch tiles.
# ---------------------------------------------------------------------------
def impala_cnn_forward(obs_nchw, packed):
    """obs_nchw: (N, C, H, W) float32, as in the PyTorch module."""
    stages, bt = packed["stages"], packed["b_tile"]
    h0, w0, c0 = packed["in_shape"]
    h3, w3, c3 = packed["out_shape"]
    n = obs_nchw.shape[0]
    n_pad = -(-n // bt) * bt                                     # ceil to batch-tile

    x = jnp.transpose(obs_nchw, (0, 2, 3, 1)).astype(jnp.float32)   # NCHW -> NHWC
    if n_pad != n:
        x = jnp.concatenate([x, jnp.zeros((n_pad - n, h0, w0, c0), x.dtype)], axis=0)
    x2 = x.reshape(n_pad * h0, w0 * c0)                          # lane-dense rows

    weight_ops = []
    in_specs = [pl.BlockSpec((bt * h0, w0 * c0), lambda i: (i, 0))]
    for sp in stages:
        for name in _ORDER:
            a = sp[name]
            weight_ops.append(a)
            in_specs.append(pl.BlockSpec(a.shape, lambda i, _nd=a.ndim: (0,) * _nd))
    out_specs = pl.BlockSpec((bt * h3, w3 * c3), lambda i: (i, 0))

    # Cost estimate (advisory): all matmuls, per grid step, times number of steps.
    def _mm(m, k, nn):
        return 2 * m * k * nn
    flops_step = 0
    for sp in stages:
        h, w, cin, cout = sp["dims"]
        h2, w2 = h // 2, w // 2
        flops_step += 3 * _mm(bt * h, w * cin, w * cout)          # stage conv
        flops_step += _mm(bt * h2, bt * h, w * cout)              # pool row decimation
        flops_step += _mm(bt * h2, w * cout, w2 * cout)           # pool col decimation
        flops_step += 4 * 3 * _mm(bt * h2, w2 * cout, w2 * cout)  # residual convs
    n_steps = n_pad // bt
    bytes_accessed = int(x2.size * 4
                         + sum(a.size * a.dtype.itemsize for a in weight_ops)
                         + n_pad * h3 * w3 * c3 * 4)

    kernel = functools.partial(_impala_kernel,
                               stage_dims=tuple(sp["dims"] for sp in stages))
    out2 = pl.pallas_call(
        kernel,
        grid=(n_steps,),
        in_specs=in_specs,
        out_specs=out_specs,
        out_shape=jax.ShapeDtypeStruct((n_pad * h3, w3 * c3), jnp.float32),
        compiler_params=pltpu.CompilerParams(
            dimension_semantics=("parallel",),    # batch-tile grid splits across TCs
            vmem_limit_bytes=32 * 1024 * 1024,    # weights+buffers ~4 MiB, ample headroom
        ),
        cost_estimate=pl.CostEstimate(flops=int(flops_step * n_steps),
                                      transcendentals=0,
                                      bytes_accessed=bytes_accessed),
    )(x2, *weight_ops)

    feat = out2.reshape(n_pad, h3, w3, c3)[:n]                   # bytes are NHWC
    # nn.Flatten on an NCHW tensor flattens in (C, H, W) order.
    return jnp.transpose(feat, (0, 3, 1, 2)).reshape(n, h3 * w3 * c3)


# ---------------------------------------------------------------------------
# Plain-JAX reference (XLA conv / reduce_window) used only for validation.
# ---------------------------------------------------------------------------
def impala_cnn_reference(obs_nchw, params):
    x = jnp.transpose(obs_nchw, (0, 2, 3, 1))

    def conv(x, w, b):
        y = jax.lax.conv_general_dilated(
            x, w, window_strides=(1, 1), padding="SAME",
            dimension_numbers=("NHWC", "HWIO", "NHWC"),
            precision=jax.lax.Precision.HIGHEST)
        return y + b

    for p in params:
        x = conv(x, p["conv"]["w"], p["conv"]["b"])
        x = jax.lax.reduce_window(
            x, -jnp.inf, jax.lax.max, (1, 3, 3, 1), (1, 2, 2, 1),
            ((0, 0), (1, 1), (1, 1), (0, 0)))
        for r in ("res1", "res2"):
            hh = conv(jax.nn.relu(x), p[r]["w1"], p[r]["b1"])
            hh = conv(jax.nn.relu(hh), p[r]["w2"], p[r]["b2"])
            x = x + hh
    x = jax.nn.relu(x)
    x = jnp.transpose(x, (0, 3, 1, 2))
    return x.reshape(x.shape[0], -1)


# ---------------------------------------------------------------------------
# Deterministic parameter initialization (synthetic; shapes match the module)
# ---------------------------------------------------------------------------
def init_params(key, in_channels, impala_channels=(16, 32, 32)):
    def conv_p(kw, kb, ci, co):
        w = 0.1 * jax.random.normal(kw, (3, 3, ci, co), jnp.float32)   # HWIO
        b = 0.01 * jax.random.normal(kb, (co,), jnp.float32)
        return {"w": w, "b": b}

    params = []
    cin = in_channels
    for cout in impala_channels:
        keys = jax.random.split(key, 11)
        key = keys[0]
        c0 = conv_p(keys[1], keys[2], cin, cout)
        r1a = conv_p(keys[3], keys[4], cout, cout)
        r1b = conv_p(keys[5], keys[6], cout, cout)
        r2a = conv_p(keys[7], keys[8], cout, cout)
        r2b = conv_p(keys[9], keys[10], cout, cout)
        params.append({
            "conv": c0,
            "res1": {"w1": r1a["w"], "b1": r1a["b"], "w2": r1b["w"], "b2": r1b["b"]},
            "res2": {"w1": r2a["w"], "b1": r2a["b"], "w2": r2b["w"], "b2": r2b["b"]},
        })
        cin = cout
    return params


if __name__ == "__main__":
    key = jax.random.PRNGKey(0)
    pkey, xkey = jax.random.split(key)

    in_channels = 4
    params = init_params(pkey, in_channels)

    # Small NCHW input consistent with the module: batch=2, channels=4, 16x16 spatial.
    x = jax.random.normal(xkey, (2, in_channels, 16, 16), jnp.float32)

    packed = pack_params(params, in_channels, 16, 16, b_tile=8)
    fwd = jax.jit(lambda obs: impala_cnn_forward(obs, packed))

    out = jax.block_until_ready(fwd(x))

    # 16x16 -> 8 -> 4 -> 2 spatial, 32 channels => 32*2*2 = 128 features.
    assert out.shape == (2, 128), out.shape
    assert bool(jnp.all(out >= 0.0))                       # final fused ReLU

    # Correctness check against the high-precision XLA reference
    # (kernel matmuls are bf16 with f32 accumulation -> ~1e-3..1e-2 expected).
    ref = jax.block_until_ready(jax.jit(impala_cnn_reference)(x, params))
    rel_err = float(jnp.linalg.norm(out - ref) / jnp.linalg.norm(ref))
    assert rel_err < 3e-2, f"relative error vs reference too large: {rel_err}"

    print("KERNEL_OK")
</pallas_src>

<mosaic_0001>
module attributes {stable_mosaic.version = 11 : i64} {
  func.func @_impala_kernel(%arg0: i32, %arg1: memref<128x64xf32, #tpu.memory_space<vmem>>, %arg2: memref<3x64x256xbf16, #tpu.memory_space<vmem>>, %arg3: memref<1x256xf32, #tpu.memory_space<vmem>>, %arg4: memref<3x128x128xbf16, #tpu.memory_space<vmem>>, %arg5: memref<1x128xf32, #tpu.memory_space<vmem>>, %arg6: memref<3x128x128xbf16, #tpu.memory_space<vmem>>, %arg7: memref<1x128xf32, #tpu.memory_space<vmem>>, %arg8: memref<3x128x128xbf16, #tpu.memory_space<vmem>>, %arg9: memref<1x128xf32, #tpu.memory_space<vmem>>, %arg10: memref<3x128x128xbf16, #tpu.memory_space<vmem>>, %arg11: memref<1x128xf32, #tpu.memory_space<vmem>>, %arg12: memref<64x128xbf16, #tpu.memory_space<vmem>>, %arg13: memref<256x128xbf16, #tpu.memory_space<vmem>>, %arg14: memref<3x128x256xbf16, #tpu.memory_space<vmem>>, %arg15: memref<1x256xf32, #tpu.memory_space<vmem>>, %arg16: memref<3x128x128xbf16, #tpu.memory_space<vmem>>, %arg17: memref<1x128xf32, #tpu.memory_space<vmem>>, %arg18: memref<3x128x128xbf16, #tpu.memory_space<vmem>>, %arg19: memref<1x128xf32, #tpu.memory_space<vmem>>, %arg20: memref<3x128x128xbf16, #tpu.memory_space<vmem>>, %arg21: memref<1x128xf32, #tpu.memory_space<vmem>>, %arg22: memref<3x128x128xbf16, #tpu.memory_space<vmem>>, %arg23: memref<1x128xf32, #tpu.memory_space<vmem>>, %arg24: memref<32x64xbf16, #tpu.memory_space<vmem>>, %arg25: memref<256x128xbf16, #tpu.memory_space<vmem>>, %arg26: memref<3x128x128xbf16, #tpu.memory_space<vmem>>, %arg27: memref<1x128xf32, #tpu.memory_space<vmem>>, %arg28: memref<3x64x64xbf16, #tpu.memory_space<vmem>>, %arg29: memref<1x64xf32, #tpu.memory_space<vmem>>, %arg30: memref<3x64x64xbf16, #tpu.memory_space<vmem>>, %arg31: memref<1x64xf32, #tpu.memory_space<vmem>>, %arg32: memref<3x64x64xbf16, #tpu.memory_space<vmem>>, %arg33: memref<1x64xf32, #tpu.memory_space<vmem>>, %arg34: memref<3x64x64xbf16, #tpu.memory_space<vmem>>, %arg35: memref<1x64xf32, #tpu.memory_space<vmem>>, %arg36: memref<16x32xbf16, #tpu.memory_space<vmem>>, %arg37: memref<128x64xbf16, #tpu.memory_space<vmem>>, %arg38: memref<16x64xf32, #tpu.memory_space<vmem>>) attributes {dimension_semantics = [#tpu.dimension_semantics<parallel>], iteration_bounds = array<i64: 1>, scalar_prefetch = 0 : i64, scratch_operands = 0 : i64, tpu.core_type = #tpu.core_type<tc>, window_params = [{transform_indices = @transform_0, window_bounds = array<i64: 128, 64>}, {pipeline_mode = #tpu.pipeline_mode<synchronous>, transform_indices = @transform_1, window_bounds = array<i64: 3, 64, 256>}, {pipeline_mode = #tpu.pipeline_mode<synchronous>, transform_indices = @transform_2, window_bounds = array<i64: 1, 256>}, {pipeline_mode = #tpu.pipeline_mode<synchronous>, transform_indices = @transform_3, window_bounds = array<i64: 3, 128, 128>}, {pipeline_mode = #tpu.pipeline_mode<synchronous>, transform_indices = @transform_4, window_bounds = array<i64: 1, 128>}, {pipeline_mode = #tpu.pipeline_mode<synchronous>, transform_indices = @transform_5, window_bounds = array<i64: 3, 128, 128>}, {pipeline_mode = #tpu.pipeline_mode<synchronous>, transform_indices = @transform_6, window_bounds = array<i64: 1, 128>}, {pipeline_mode = #tpu.pipeline_mode<synchronous>, transform_indices = @transform_7, window_bounds = array<i64: 3, 128, 128>}, {pipeline_mode = #tpu.pipeline_mode<synchronous>, transform_indices = @transform_8, window_bounds = array<i64: 1, 128>}, {pipeline_mode = #tpu.pipeline_mode<synchronous>, transform_indices = @transform_9, window_bounds = array<i64: 3, 128, 128>}, {pipeline_mode = #tpu.pipeline_mode<synchronous>, transform_indices = @transform_10, window_bounds = array<i64: 1, 128>}, {pipeline_mode = #tpu.pipeline_mode<synchronous>, transform_indices = @transform_11, window_bounds = array<i64: 64, 128>}, {pipeline_mode = #tpu.pipeline_mode<synchronous>, transform_indices = @transform_12, window_bounds = array<i64: 256, 128>}, {pipeline_mode = #tpu.pipeline_mode<synchronous>, transform_indices = @transform_13, window_bounds = array<i64: 3, 128, 256>}, {pipeline_mode = #tpu.pipeline_mode<synchronous>, transform_indices = @transform_14, window_bounds = array<i64: 1, 256>}, {pipeline_mode = #tpu.pipeline_mode<synchronous>, transform_indices = @transform_15, window_bounds = array<i64: 3, 128, 128>}, {pipeline_mode = #tpu.pipeline_mode<synchronous>, transform_indices = @transform_16, window_bounds = array<i64: 1, 128>}, {pipeline_mode = #tpu.pipeline_mode<synchronous>, transform_indices = @transform_17, window_bounds = array<i64: 3, 128, 128>}, {pipeline_mode = #tpu.pipeline_mode<synchronous>, transform_indices = @transform_18, window_bounds = array<i64: 1, 128>}, {pipeline_mode = #tpu.pipeline_mode<synchronous>, transform_indices = @transform_19, window_bounds = array<i64: 3, 128, 128>}, {pipeline_mode = #tpu.pipeline_mode<synchronous>, transform_indices = @transform_20, window_bounds = array<i64: 1, 128>}, {pipeline_mode = #tpu.pipeline_mode<synchronous>, transform_indices = @transform_21, window_bounds = array<i64: 3, 128, 128>}, {pipeline_mode = #tpu.pipeline_mode<synchronous>, transform_indices = @transform_22, window_bounds = array<i64: 1, 128>}, {pipeline_mode = #tpu.pipeline_mode<synchronous>, transform_indices = @transform_23, window_bounds = array<i64: 32, 64>}, {pipeline_mode = #tpu.pipeline_mode<synchronous>, transform_indices = @transform_24, window_bounds = array<i64: 256, 128>}, {pipeline_mode = #tpu.pipeline_mode<synchronous>, transform_indices = @transform_25, window_bounds = array<i64: 3, 128, 128>}, {pipeline_mode = #tpu.pipeline_mode<synchronous>, transform_indices = @transform_26, window_bounds = array<i64: 1, 128>}, {pipeline_mode = #tpu.pipeline_mode<synchronous>, transform_indices = @transform_27, window_bounds = array<i64: 3, 64, 64>}, {pipeline_mode = #tpu.pipeline_mode<synchronous>, transform_indices = @transform_28, window_bounds = array<i64: 1, 64>}, {pipeline_mode = #tpu.pipeline_mode<synchronous>, transform_indices = @transform_29, window_bounds = array<i64: 3, 64, 64>}, {pipeline_mode = #tpu.pipeline_mode<synchronous>, transform_indices = @transform_30, window_bounds = array<i64: 1, 64>}, {pipeline_mode = #tpu.pipeline_mode<synchronous>, transform_indices = @transform_31, window_bounds = array<i64: 3, 64, 64>}, {pipeline_mode = #tpu.pipeline_mode<synchronous>, transform_indices = @transform_32, window_bounds = array<i64: 1, 64>}, {pipeline_mode = #tpu.pipeline_mode<synchronous>, transform_indices = @transform_33, window_bounds = array<i64: 3, 64, 64>}, {pipeline_mode = #tpu.pipeline_mode<synchronous>, transform_indices = @transform_34, window_bounds = array<i64: 1, 64>}, {pipeline_mode = #tpu.pipeline_mode<synchronous>, transform_indices = @transform_35, window_bounds = array<i64: 16, 32>}, {pipeline_mode = #tpu.pipeline_mode<synchronous>, transform_indices = @transform_36, window_bounds = array<i64: 128, 64>}, {transform_indices = @transform_37, window_bounds = array<i64: 16, 64>}]} {
    %c0 = arith.constant 0 : index
    %c0_0 = arith.constant 0 : index
    %0 = vector.load %arg1[%c0, %c0_0] : memref<128x64xf32, #tpu.memory_space<vmem>>, vector<128x64xf32>
    %1 = tpu.iota {dimensions = array<i32: 0>} : vector<128x64xi32>
    %c16_i32 = arith.constant 16 : i32
    %c0_i32 = arith.constant 0 : i32
    %2 = arith.cmpi eq, %c16_i32, %c0_i32 : i32
    %c1_i32 = arith.constant 1 : i32
    %3 = arith.select %2, %c1_i32, %c16_i32 : i32
    %4 = vector.broadcast %3 : i32 to vector<128x64xi32>
    %5 = arith.remsi %1, %4 : vector<128x64xi32>
    %c0_i32_1 = arith.constant 0 : i32
    %6 = vector.broadcast %c0_i32_1 : i32 to vector<128x64xi32>
    %7 = arith.cmpi ne, %5, %6 : vector<128x64xi32>
    %c0_i32_2 = arith.constant 0 : i32
    %8 = vector.broadcast %c0_i32_2 : i32 to vector<128x64xi32>
    %9 = arith.cmpi slt, %5, %8 : vector<128x64xi32>
    %c0_i32_3 = arith.constant 0 : i32
    %10 = arith.cmpi slt, %3, %c0_i32_3 : i32
    %11 = vector.broadcast %10 : i1 to vector<128x64xi1>
    %12 = vector.broadcast %11 : vector<128x64xi1> to vector<128x64xi1>
    %13 = arith.xori %9, %12 : vector<128x64xi1>
    %14 = arith.andi %13, %7 : vector<128x64xi1>
    %15 = vector.broadcast %3 : i32 to vector<128x64xi32>
    %16 = arith.addi %5, %15 : vector<128x64xi32>
    %17 = arith.select %14, %16, %5 : vector<128x64xi1>, vector<128x64xi32>
    %c0_i32_4 = arith.constant 0 : i32
    %18 = vector.broadcast %c0_i32_4 : i32 to vector<128x64xi32>
    %19 = arith.cmpi eq, %17, %18 : vector<128x64xi32>
    %c1_i32_5 = arith.constant 1 : i32
    %20 = tpu.dynamic_rotate %0 by %c1_i32_5 dim 0 : vector<128x64xf32>, i32 -> vector<128x64xf32>
    %cst = arith.constant 0.000000e+00 : f32
    %21 = vector.broadcast %cst : f32 to vector<128x64xf32>
    %22 = arith.select %19, %21, %20 : vector<128x64xi1>, vector<128x64xf32>
    %c15_i32 = arith.constant 15 : i32
    %23 = vector.broadcast %c15_i32 : i32 to vector<128x64xi32>
    %24 = arith.cmpi eq, %17, %23 : vector<128x64xi32>
    %c127_i32 = arith.constant 127 : i32
    %25 = tpu.dynamic_rotate %0 by %c127_i32 dim 0 : vector<128x64xf32>, i32 -> vector<128x64xf32>
    %cst_6 = arith.constant 0.000000e+00 : f32
    %26 = vector.broadcast %cst_6 : f32 to vector<128x64xf32>
    %27 = arith.select %24, %26, %25 : vector<128x64xi1>, vector<128x64xf32>
    %28 = arith.truncf %22 : vector<128x64xf32> to vector<128x64xbf16>
    %c0_7 = arith.constant 0 : index
    %c0_8 = arith.constant 0 : index
    %c0_9 = arith.constant 0 : index
    %29 = vector.load %arg2[%c0_7, %c0_8, %c0_9] : memref<3x64x256xbf16, #tpu.memory_space<vmem>>, vector<1x64x256xbf16>
    %30 = vector.shape_cast %29 : vector<1x64x256xbf16> to vector<64x256xbf16>
    %cst_10 = arith.constant dense<0.000000e+00> : vector<128x256xf32>
    %31 = tpu.matmul %28, %30, %cst_10 {dimension_numbers = #tpu.dot_dimension_numbers<[1], [0], [0], [1], [0, 0, 1, 1], [], []>} : vector<128x64xbf16>, vector<64x256xbf16>, vector<128x256xf32> -> vector<128x256xf32>
    %32 = arith.truncf %0 : vector<128x64xf32> to vector<128x64xbf16>
    %c1 = arith.constant 1 : index
    %c0_11 = arith.constant 0 : index
    %c0_12 = arith.constant 0 : index
    %33 = vector.load %arg2[%c1, %c0_11, %c0_12] : memref<3x64x256xbf16, #tpu.memory_space<vmem>>, vector<1x64x256xbf16>
    %34 = vector.shape_cast %33 : vector<1x64x256xbf16> to vector<64x256xbf16>
    %cst_13 = arith.constant dense<0.000000e+00> : vector<128x256xf32>
    %35 = tpu.matmul %32, %34, %cst_13 {dimension_numbers = #tpu.dot_dimension_numbers<[1], [0], [0], [1], [0, 0, 1, 1], [], []>} : vector<128x64xbf16>, vector<64x256xbf16>, vector<128x256xf32> -> vector<128x256xf32>
    %36 = arith.addf %31, %35 : vector<128x256xf32>
    %37 = arith.truncf %27 : vector<128x64xf32> to vector<128x64xbf16>
    %c2 = arith.constant 2 : index
    %c0_14 = arith.constant 0 : index
    %c0_15 = arith.constant 0 : index
    %38 = vector.load %arg2[%c2, %c0_14, %c0_15] : memref<3x64x256xbf16, #tpu.memory_space<vmem>>, vector<1x64x256xbf16>
    %39 = vector.shape_cast %38 : vector<1x64x256xbf16> to vector<64x256xbf16>
    %cst_16 = arith.constant dense<0.000000e+00> : vector<128x256xf32>
    %40 = tpu.matmul %37, %39, %cst_16 {dimension_numbers = #tpu.dot_dimension_numbers<[1], [0], [0], [1], [0, 0, 1, 1], [], []>} : vector<128x64xbf16>, vector<64x256xbf16>, vector<128x256xf32> -> vector<128x256xf32>
    %41 = arith.addf %36, %40 : vector<128x256xf32>
    %c0_17 = arith.constant 0 : index
    %c0_18 = arith.constant 0 : index
    %42 = vector.load %arg3[%c0_17, %c0_18] : memref<1x256xf32, #tpu.memory_space<vmem>>, vector<1x256xf32>
    %43 = vector.broadcast %42 : vector<1x256xf32> to vector<128x256xf32>
    %44 = arith.addf %41, %43 : vector<128x256xf32>
    %45 = tpu.iota {dimensions = array<i32: 0>} : vector<128x256xi32>
    %c16_i32_19 = arith.constant 16 : i32
    %c0_i32_20 = arith.constant 0 : i32
    %46 = arith.cmpi eq, %c16_i32_19, %c0_i32_20 : i32
    %c1_i32_21 = arith.constant 1 : i32
    %47 = arith.select %46, %c1_i32_21, %c16_i32_19 : i32
    %48 = vector.broadcast %47 : i32 to vector<128x256xi32>
    %49 = arith.remsi %45, %48 : vector<128x256xi32>
    %c0_i32_22 = arith.constant 0 : i32
    %50 = vector.broadcast %c0_i32_22 : i32 to vector<128x256xi32>
    %51 = arith.cmpi ne, %49, %50 : vector<128x256xi32>
    %c0_i32_23 = arith.constant 0 : i32
    %52 = vector.broadcast %c0_i32_23 : i32 to vector<128x256xi32>
    %53 = arith.cmpi slt, %49, %52 : vector<128x256xi32>
    %c0_i32_24 = arith.constant 0 : i32
    %54 = arith.cmpi slt, %47, %c0_i32_24 : i32
    %55 = vector.broadcast %54 : i1 to vector<128x256xi1>
    %56 = vector.broadcast %55 : vector<128x256xi1> to vector<128x256xi1>
    %57 = arith.xori %53, %56 : vector<128x256xi1>
    %58 = arith.andi %57, %51 : vector<128x256xi1>
    %59 = vector.broadcast %47 : i32 to vector<128x256xi32>
    %60 = arith.addi %49, %59 : vector<128x256xi32>
    %61 = arith.select %58, %60, %49 : vector<128x256xi1>, vector<128x256xi32>
    %c0_i32_25 = arith.constant 0 : i32
    %62 = vector.broadcast %c0_i32_25 : i32 to vector<128x256xi32>
    %63 = arith.cmpi eq, %61, %62 : vector<128x256xi32>
    %c1_i32_26 = arith.constant 1 : i32
    %64 = tpu.dynamic_rotate %44 by %c1_i32_26 dim 0 : vector<128x256xf32>, i32 -> vector<128x256xf32>
    %cst_27 = arith.constant 0xFF800000 : f32
    %65 = vector.broadcast %cst_27 : f32 to vector<128x256xf32>
    %66 = arith.select %63, %65, %64 : vector<128x256xi1>, vector<128x256xf32>
    %c15_i32_28 = arith.constant 15 : i32
    %67 = vector.broadcast %c15_i32_28 : i32 to vector<128x256xi32>
    %68 = arith.cmpi eq, %61, %67 : vector<128x256xi32>
    %c127_i32_29 = arith.constant 127 : i32
    %69 = tpu.dynamic_rotate %44 by %c127_i32_29 dim 0 : vector<128x256xf32>, i32 -> vector<128x256xf32>
    %cst_30 = arith.constant 0xFF800000 : f32
    %70 = vector.broadcast %cst_30 : f32 to vector<128x256xf32>
    %71 = arith.select %68, %70, %69 : vector<128x256xi1>, vector<128x256xf32>
    %72 = arith.maximumf %66, %44 : vector<128x256xf32>
    %73 = arith.maximumf %72, %71 : vector<128x256xf32>
    %c0_31 = arith.constant 0 : index
    %c0_32 = arith.constant 0 : index
    %74 = vector.load %arg12[%c0_31, %c0_32] : memref<64x128xbf16, #tpu.memory_space<vmem>>, vector<64x128xbf16>
    %75 = arith.truncf %73 : vector<128x256xf32> to vector<128x256xbf16>
    %cst_33 = arith.constant dense<0.000000e+00> : vector<64x256xf32>
    %76 = tpu.matmul %74, %75, %cst_33 {dimension_numbers = #tpu.dot_dimension_numbers<[1], [0], [0], [1], [0, 0, 1, 1], [], []>} : vector<64x128xbf16>, vector<128x256xbf16>, vector<64x256xf32> -> vector<64x256xf32>
    %77 = tpu.iota {dimensions = array<i32: 1>} : vector<64x256xi32>
    %c16_i32_34 = arith.constant 16 : i32
    %78 = vector.broadcast %c16_i32_34 : i32 to vector<64x256xi32>
    %79 = arith.cmpi slt, %77, %78 : vector<64x256xi32>
    %c16_i32_35 = arith.constant 16 : i32
    %80 = tpu.dynamic_rotate %76 by %c16_i32_35 dim 1 : vector<64x256xf32>, i32 -> vector<64x256xf32>
    %cst_36 = arith.constant 0xFF800000 : f32
    %81 = vector.broadcast %cst_36 : f32 to vector<64x256xf32>
    %82 = arith.select %79, %81, %80 : vector<64x256xi1>, vector<64x256xf32>
    %c240_i32 = arith.constant 240 : i32
    %83 = tpu.dynamic_rotate %76 by %c240_i32 dim 1 : vector<64x256xf32>, i32 -> vector<64x256xf32>
    %84 = arith.maximumf %82, %76 : vector<64x256xf32>
    %85 = arith.maximumf %84, %83 : vector<64x256xf32>
    %86 = arith.truncf %85 : vector<64x256xf32> to vector<64x256xbf16>
    %c0_37 = arith.constant 0 : index
    %c0_38 = arith.constant 0 : index
    %87 = vector.load %arg13[%c0_37, %c0_38] : memref<256x128xbf16, #tpu.memory_space<vmem>>, vector<256x128xbf16>
    %cst_39 = arith.constant dense<0.000000e+00> : vector<64x128xf32>
    %88 = tpu.matmul %86, %87, %cst_39 {dimension_numbers = #tpu.dot_dimension_numbers<[1], [0], [0], [1], [0, 0, 1, 1], [], []>} : vector<64x256xbf16>, vector<256x128xbf16>, vector<64x128xf32> -> vector<64x128xf32>
    %cst_40 = arith.constant 0.000000e+00 : f32
    %89 = vector.broadcast %cst_40 : f32 to vector<64x128xf32>
    %90 = arith.maximumf %88, %89 : vector<64x128xf32>
    %91 = tpu.iota {dimensions = array<i32: 0>} : vector<64x128xi32>
    %c8_i32 = arith.constant 8 : i32
    %c0_i32_41 = arith.constant 0 : i32
    %92 = arith.cmpi eq, %c8_i32, %c0_i32_41 : i32
    %c1_i32_42 = arith.constant 1 : i32
    %93 = arith.select %92, %c1_i32_42, %c8_i32 : i32
    %94 = vector.broadcast %93 : i32 to vector<64x128xi32>
    %95 = arith.remsi %91, %94 : vector<64x128xi32>
    %c0_i32_43 = arith.constant 0 : i32
    %96 = vector.broadcast %c0_i32_43 : i32 to vector<64x128xi32>
    %97 = arith.cmpi ne, %95, %96 : vector<64x128xi32>
    %c0_i32_44 = arith.constant 0 : i32
    %98 = vector.broadcast %c0_i32_44 : i32 to vector<64x128xi32>
    %99 = arith.cmpi slt, %95, %98 : vector<64x128xi32>
    %c0_i32_45 = arith.constant 0 : i32
    %100 = arith.cmpi slt, %93, %c0_i32_45 : i32
    %101 = vector.broadcast %100 : i1 to vector<64x128xi1>
    %102 = vector.broadcast %101 : vector<64x128xi1> to vector<64x128xi1>
    %103 = arith.xori %99, %102 : vector<64x128xi1>
    %104 = arith.andi %103, %97 : vector<64x128xi1>
    %105 = vector.broadcast %93 : i32 to vector<64x128xi32>
    %106 = arith.addi %95, %105 : vector<64x128xi32>
    %107 = arith.select %104, %106, %95 : vector<64x128xi1>, vector<64x128xi32>
    %c0_i32_46 = arith.constant 0 : i32
    %108 = vector.broadcast %c0_i32_46 : i32 to vector<64x128xi32>
    %109 = arith.cmpi eq, %107, %108 : vector<64x128xi32>
    %c1_i32_47 = arith.constant 1 : i32
    %110 = tpu.dynamic_rotate %90 by %c1_i32_47 dim 0 : vector<64x128xf32>, i32 -> vector<64x128xf32>
    %cst_48 = arith.constant 0.000000e+00 : f32
    %111 = vector.broadcast %cst_48 : f32 to vector<64x128xf32>
    %112 = arith.select %109, %111, %110 : vector<64x128xi1>, vector<64x128xf32>
    %c7_i32 = arith.constant 7 : i32
    %113 = vector.broadcast %c7_i32 : i32 to vector<64x128xi32>
    %114 = arith.cmpi eq, %107, %113 : vector<64x128xi32>
    %c63_i32 = arith.constant 63 : i32
    %115 = tpu.dynamic_rotate %90 by %c63_i32 dim 0 : vector<64x128xf32>, i32 -> vector<64x128xf32>
    %cst_49 = arith.constant 0.000000e+00 : f32
    %116 = vector.broadcast %cst_49 : f32 to vector<64x128xf32>
    %117 = arith.select %114, %116, %115 : vector<64x128xi1>, vector<64x128xf32>
    %118 = arith.truncf %112 : vector<64x128xf32> to vector<64x128xbf16>
    %c0_50 = arith.constant 0 : index
    %c0_51 = arith.constant 0 : index
    %c0_52 = arith.constant 0 : index
    %119 = vector.load %arg4[%c0_50, %c0_51, %c0_52] : memref<3x128x128xbf16, #tpu.memory_space<vmem>>, vector<1x128x128xbf16>
    %120 = vector.shape_cast %119 : vector<1x128x128xbf16> to vector<128x128xbf16>
    %cst_53 = arith.constant dense<0.000000e+00> : vector<64x128xf32>
    %121 = tpu.matmul %118, %120, %cst_53 {dimension_numbers = #tpu.dot_dimension_numbers<[1], [0], [0], [1], [0, 0, 1, 1], [], []>} : vector<64x128xbf16>, vector<128x128xbf16>, vector<64x128xf32> -> vector<64x128xf32>
    %122 = arith.truncf %90 : vector<64x128xf32> to vector<64x128xbf16>
    %c1_54 = arith.constant 1 : index
    %c0_55 = arith.constant 0 : index
    %c0_56 = arith.constant 0 : index
    %123 = vector.load %arg4[%c1_54, %c0_55, %c0_56] : memref<3x128x128xbf16, #tpu.memory_space<vmem>>, vector<1x128x128xbf16>
    %124 = vector.shape_cast %123 : vector<1x128x128xbf16> to vector<128x128xbf16>
    %cst_57 = arith.constant dense<0.000000e+00> : vector<64x128xf32>
    %125 = tpu.matmul %122, %124, %cst_57 {dimension_numbers = #tpu.dot_dimension_numbers<[1], [0], [0], [1], [0, 0, 1, 1], [], []>} : vector<64x128xbf16>, vector<128x128xbf16>, vector<64x128xf32> -> vector<64x128xf32>
    %126 = arith.addf %121, %125 : vector<64x128xf32>
    %127 = arith.truncf %117 : vector<64x128xf32> to vector<64x128xbf16>
    %c2_58 = arith.constant 2 : index
    %c0_59 = arith.constant 0 : index
    %c0_60 = arith.constant 0 : index
    %128 = vector.load %arg4[%c2_58, %c0_59, %c0_60] : memref<3x128x128xbf16, #tpu.memory_space<vmem>>, vector<1x128x128xbf16>
    %129 = vector.shape_cast %128 : vector<1x128x128xbf16> to vector<128x128xbf16>
    %cst_61 = arith.constant dense<0.000000e+00> : vector<64x128xf32>
    %130 = tpu.matmul %127, %129, %cst_61 {dimension_numbers = #tpu.dot_dimension_numbers<[1], [0], [0], [1], [0, 0, 1, 1], [], []>} : vector<64x128xbf16>, vector<128x128xbf16>, vector<64x128xf32> -> vector<64x128xf32>
    %131 = arith.addf %126, %130 : vector<64x128xf32>
    %c0_62 = arith.constant 0 : index
    %c0_63 = arith.constant 0 : index
    %132 = vector.load %arg5[%c0_62, %c0_63] : memref<1x128xf32, #tpu.memory_space<vmem>>, vector<1x128xf32>
    %133 = vector.broadcast %132 : vector<1x128xf32> to vector<64x128xf32>
    %134 = arith.addf %131, %133 : vector<64x128xf32>
    %cst_64 = arith.constant 0.000000e+00 : f32
    %135 = vector.broadcast %cst_64 : f32 to vector<64x128xf32>
    %136 = arith.maximumf %134, %135 : vector<64x128xf32>
    %137 = tpu.iota {dimensions = array<i32: 0>} : vector<64x128xi32>
    %c8_i32_65 = arith.constant 8 : i32
    %c0_i32_66 = arith.constant 0 : i32
    %138 = arith.cmpi eq, %c8_i32_65, %c0_i32_66 : i32
    %c1_i32_67 = arith.constant 1 : i32
    %139 = arith.select %138, %c1_i32_67, %c8_i32_65 : i32
    %140 = vector.broadcast %139 : i32 to vector<64x128xi32>
    %141 = arith.remsi %137, %140 : vector<64x128xi32>
    %c0_i32_68 = arith.constant 0 : i32
    %142 = vector.broadcast %c0_i32_68 : i32 to vector<64x128xi32>
    %143 = arith.cmpi ne, %141, %142 : vector<64x128xi32>
    %c0_i32_69 = arith.constant 0 : i32
    %144 = vector.broadcast %c0_i32_69 : i32 to vector<64x128xi32>
    %145 = arith.cmpi slt, %141, %144 : vector<64x128xi32>
    %c0_i32_70 = arith.constant 0 : i32
    %146 = arith.cmpi slt, %139, %c0_i32_70 : i32
    %147 = vector.broadcast %146 : i1 to vector<64x128xi1>
    %148 = vector.broadcast %147 : vector<64x128xi1> to vector<64x128xi1>
    %149 = arith.xori %145, %148 : vector<64x128xi1>
    %150 = arith.andi %149, %143 : vector<64x128xi1>
    %151 = vector.broadcast %139 : i32 to vector<64x128xi32>
    %152 = arith.addi %141, %151 : vector<64x128xi32>
    %153 = arith.select %150, %152, %141 : vector<64x128xi1>, vector<64x128xi32>
    %c0_i32_71 = arith.constant 0 : i32
    %154 = vector.broadcast %c0_i32_71 : i32 to vector<64x128xi32>
    %155 = arith.cmpi eq, %153, %154 : vector<64x128xi32>
    %c1_i32_72 = arith.constant 1 : i32
    %156 = tpu.dynamic_rotate %136 by %c1_i32_72 dim 0 : vector<64x128xf32>, i32 -> vector<64x128xf32>
    %cst_73 = arith.constant 0.000000e+00 : f32
    %157 = vector.broadcast %cst_73 : f32 to vector<64x128xf32>
    %158 = arith.select %155, %157, %156 : vector<64x128xi1>, vector<64x128xf32>
    %c7_i32_74 = arith.constant 7 : i32
    %159 = vector.broadcast %c7_i32_74 : i32 to vector<64x128xi32>
    %160 = arith.cmpi eq, %153, %159 : vector<64x128xi32>
    %c63_i32_75 = arith.constant 63 : i32
    %161 = tpu.dynamic_rotate %136 by %c63_i32_75 dim 0 : vector<64x128xf32>, i32 -> vector<64x128xf32>
    %cst_76 = arith.constant 0.000000e+00 : f32
    %162 = vector.broadcast %cst_76 : f32 to vector<64x128xf32>
    %163 = arith.select %160, %162, %161 : vector<64x128xi1>, vector<64x128xf32>
    %164 = arith.truncf %158 : vector<64x128xf32> to vector<64x128xbf16>
    %c0_77 = arith.constant 0 : index
    %c0_78 = arith.constant 0 : index
    %c0_79 = arith.constant 0 : index
    %165 = vector.load %arg6[%c0_77, %c0_78, %c0_79] : memref<3x128x128xbf16, #tpu.memory_space<vmem>>, vector<1x128x128xbf16>
    %166 = vector.shape_cast %165 : vector<1x128x128xbf16> to vector<128x128xbf16>
    %cst_80 = arith.constant dense<0.000000e+00> : vector<64x128xf32>
    %167 = tpu.matmul %164, %166, %cst_80 {dimension_numbers = #tpu.dot_dimension_numbers<[1], [0], [0], [1], [0, 0, 1, 1], [], []>} : vector<64x128xbf16>, vector<128x128xbf16>, vector<64x128xf32> -> vector<64x128xf32>
    %168 = arith.truncf %136 : vector<64x128xf32> to vector<64x128xbf16>
    %c1_81 = arith.constant 1 : index
    %c0_82 = arith.constant 0 : index
    %c0_83 = arith.constant 0 : index
    %169 = vector.load %arg6[%c1_81, %c0_82, %c0_83] : memref<3x128x128xbf16, #tpu.memory_space<vmem>>, vector<1x128x128xbf16>
    %170 = vector.shape_cast %169 : vector<1x128x128xbf16> to vector<128x128xbf16>
    %cst_84 = arith.constant dense<0.000000e+00> : vector<64x128xf32>
    %171 = tpu.matmul %168, %170, %cst_84 {dimension_numbers = #tpu.dot_dimension_numbers<[1], [0], [0], [1], [0, 0, 1, 1], [], []>} : vector<64x128xbf16>, vector<128x128xbf16>, vector<64x128xf32> -> vector<64x128xf32>
    %172 = arith.addf %167, %171 : vector<64x128xf32>
    %173 = arith.truncf %163 : vector<64x128xf32> to vector<64x128xbf16>
    %c2_85 = arith.constant 2 : index
    %c0_86 = arith.constant 0 : index
    %c0_87 = arith.constant 0 : index
    %174 = vector.load %arg6[%c2_85, %c0_86, %c0_87] : memref<3x128x128xbf16, #tpu.memory_space<vmem>>, vector<1x128x128xbf16>
    %175 = vector.shape_cast %174 : vector<1x128x128xbf16> to vector<128x128xbf16>
    %cst_88 = arith.constant dense<0.000000e+00> : vector<64x128xf32>
    %176 = tpu.matmul %173, %175, %cst_88 {dimension_numbers = #tpu.dot_dimension_numbers<[1], [0], [0], [1], [0, 0, 1, 1], [], []>} : vector<64x128xbf16>, vector<128x128xbf16>, vector<64x128xf32> -> vector<64x128xf32>
    %177 = arith.addf %172, %176 : vector<64x128xf32>
    %c0_89 = arith.constant 0 : index
    %c0_90 = arith.constant 0 : index
    %178 = vector.load %arg7[%c0_89, %c0_90] : memref<1x128xf32, #tpu.memory_space<vmem>>, vector<1x128xf32>
    %179 = vector.broadcast %178 : vector<1x128xf32> to vector<64x128xf32>
    %180 = arith.addf %177, %179 : vector<64x128xf32>
    %181 = arith.addf %88, %180 : vector<64x128xf32>
    %cst_91 = arith.constant 0.000000e+00 : f32
    %182 = vector.broadcast %cst_91 : f32 to vector<64x128xf32>
    %183 = arith.maximumf %181, %182 : vector<64x128xf32>
    %184 = tpu.iota {dimensions = array<i32: 0>} : vector<64x128xi32>
    %c8_i32_92 = arith.constant 8 : i32
    %c0_i32_93 = arith.constant 0 : i32
    %185 = arith.cmpi eq, %c8_i32_92, %c0_i32_93 : i32
    %c1_i32_94 = arith.constant 1 : i32
    %186 = arith.select %185, %c1_i32_94, %c8_i32_92 : i32
    %187 = vector.broadcast %186 : i32 to vector<64x128xi32>
    %188 = arith.remsi %184, %187 : vector<64x128xi32>
    %c0_i32_95 = arith.constant 0 : i32
    %189 = vector.broadcast %c0_i32_95 : i32 to vector<64x128xi32>
    %190 = arith.cmpi ne, %188, %189 : vector<64x128xi32>
    %c0_i32_96 = arith.constant 0 : i32
    %191 = vector.broadcast %c0_i32_96 : i32 to vector<64x128xi32>
    %192 = arith.cmpi slt, %188, %191 : vector<64x128xi32>
    %c0_i32_97 = arith.constant 0 : i32
    %193 = arith.cmpi slt, %186, %c0_i32_97 : i32
    %194 = vector.broadcast %193 : i1 to vector<64x128xi1>
    %195 = vector.broadcast %194 : vector<64x128xi1> to vector<64x128xi1>
    %196 = arith.xori %192, %195 : vector<64x128xi1>
    %197 = arith.andi %196, %190 : vector<64x128xi1>
    %198 = vector.broadcast %186 : i32 to vector<64x128xi32>
    %199 = arith.addi %188, %198 : vector<64x128xi32>
    %200 = arith.select %197, %199, %188 : vector<64x128xi1>, vector<64x128xi32>
    %c0_i32_98 = arith.constant 0 : i32
    %201 = vector.broadcast %c0_i32_98 : i32 to vector<64x128xi32>
    %202 = arith.cmpi eq, %200, %201 : vector<64x128xi32>
    %c1_i32_99 = arith.constant 1 : i32
    %203 = tpu.dynamic_rotate %183 by %c1_i32_99 dim 0 : vector<64x128xf32>, i32 -> vector<64x128xf32>
    %cst_100 = arith.constant 0.000000e+00 : f32
    %204 = vector.broadcast %cst_100 : f32 to vector<64x128xf32>
    %205 = arith.select %202, %204, %203 : vector<64x128xi1>, vector<64x128xf32>
    %c7_i32_101 = arith.constant 7 : i32
    %206 = vector.broadcast %c7_i32_101 : i32 to vector<64x128xi32>
    %207 = arith.cmpi eq, %200, %206 : vector<64x128xi32>
    %c63_i32_102 = arith.constant 63 : i32
    %208 = tpu.dynamic_rotate %183 by %c63_i32_102 dim 0 : vector<64x128xf32>, i32 -> vector<64x128xf32>
    %cst_103 = arith.constant 0.000000e+00 : f32
    %209 = vector.broadcast %cst_103 : f32 to vector<64x128xf32>
    %210 = arith.select %207, %209, %208 : vector<64x128xi1>, vector<64x128xf32>
    %211 = arith.truncf %205 : vector<64x128xf32> to vector<64x128xbf16>
    %c0_104 = arith.constant 0 : index
    %c0_105 = arith.constant 0 : index
    %c0_106 = arith.constant 0 : index
    %212 = vector.load %arg8[%c0_104, %c0_105, %c0_106] : memref<3x128x128xbf16, #tpu.memory_space<vmem>>, vector<1x128x128xbf16>
    %213 = vector.shape_cast %212 : vector<1x128x128xbf16> to vector<128x128xbf16>
    %cst_107 = arith.constant dense<0.000000e+00> : vector<64x128xf32>
    %214 = tpu.matmul %211, %213, %cst_107 {dimension_numbers = #tpu.dot_dimension_numbers<[1], [0], [0], [1], [0, 0, 1, 1], [], []>} : vector<64x128xbf16>, vector<128x128xbf16>, vector<64x128xf32> -> vector<64x128xf32>
    %215 = arith.truncf %183 : vector<64x128xf32> to vector<64x128xbf16>
    %c1_108 = arith.constant 1 : index
    %c0_109 = arith.constant 0 : index
    %c0_110 = arith.constant 0 : index
    %216 = vector.load %arg8[%c1_108, %c0_109, %c0_110] : memref<3x128x128xbf16, #tpu.memory_space<vmem>>, vector<1x128x128xbf16>
    %217 = vector.shape_cast %216 : vector<1x128x128xbf16> to vector<128x128xbf16>
    %cst_111 = arith.constant dense<0.000000e+00> : vector<64x128xf32>
    %218 = tpu.matmul %215, %217, %cst_111 {dimension_numbers = #tpu.dot_dimension_numbers<[1], [0], [0], [1], [0, 0, 1, 1], [], []>} : vector<64x128xbf16>, vector<128x128xbf16>, vector<64x128xf32> -> vector<64x128xf32>
    %219 = arith.addf %214, %218 : vector<64x128xf32>
    %220 = arith.truncf %210 : vector<64x128xf32> to vector<64x128xbf16>
    %c2_112 = arith.constant 2 : index
    %c0_113 = arith.constant 0 : index
    %c0_114 = arith.constant 0 : index
    %221 = vector.load %arg8[%c2_112, %c0_113, %c0_114] : memref<3x128x128xbf16, #tpu.memory_space<vmem>>, vector<1x128x128xbf16>
    %222 = vector.shape_cast %221 : vector<1x128x128xbf16> to vector<128x128xbf16>
    %cst_115 = arith.constant dense<0.000000e+00> : vector<64x128xf32>
    %223 = tpu.matmul %220, %222, %cst_115 {dimension_numbers = #tpu.dot_dimension_numbers<[1], [0], [0], [1], [0, 0, 1, 1], [], []>} : vector<64x128xbf16>, vector<128x128xbf16>, vector<64x128xf32> -> vector<64x128xf32>
    %224 = arith.addf %219, %223 : vector<64x128xf32>
    %c0_116 = arith.constant 0 : index
    %c0_117 = arith.constant 0 : index
    %225 = vector.load %arg9[%c0_116, %c0_117] : memref<1x128xf32, #tpu.memory_space<vmem>>, vector<1x128xf32>
    %226 = vector.broadcast %225 : vector<1x128xf32> to vector<64x128xf32>
    %227 = arith.addf %224, %226 : vector<64x128xf32>
    %cst_118 = arith.constant 0.000000e+00 : f32
    %228 = vector.broadcast %cst_118 : f32 to vector<64x128xf32>
    %229 = arith.maximumf %227, %228 : vector<64x128xf32>
    %230 = tpu.iota {dimensions = array<i32: 0>} : vector<64x128xi32>
    %c8_i32_119 = arith.constant 8 : i32
    %c0_i32_120 = arith.constant 0 : i32
    %231 = arith.cmpi eq, %c8_i32_119, %c0_i32_120 : i32
    %c1_i32_121 = arith.constant 1 : i32
    %232 = arith.select %231, %c1_i32_121, %c8_i32_119 : i32
    %233 = vector.broadcast %232 : i32 to vector<64x128xi32>
    %234 = arith.remsi %230, %233 : vector<64x128xi32>
    %c0_i32_122 = arith.constant 0 : i32
    %235 = vector.broadcast %c0_i32_122 : i32 to vector<64x128xi32>
    %236 = arith.cmpi ne, %234, %235 : vector<64x128xi32>
    %c0_i32_123 = arith.constant 0 : i32
    %237 = vector.broadcast %c0_i32_123 : i32 to vector<64x128xi32>
    %238 = arith.cmpi slt, %234, %237 : vector<64x128xi32>
    %c0_i32_124 = arith.constant 0 : i32
    %239 = arith.cmpi slt, %232, %c0_i32_124 : i32
    %240 = vector.broadcast %239 : i1 to vector<64x128xi1>
    %241 = vector.broadcast %240 : vector<64x128xi1> to vector<64x128xi1>
    %242 = arith.xori %238, %241 : vector<64x128xi1>
    %243 = arith.andi %242, %236 : vector<64x128xi1>
    %244 = vector.broadcast %232 : i32 to vector<64x128xi32>
    %245 = arith.addi %234, %244 : vector<64x128xi32>
    %246 = arith.select %243, %245, %234 : vector<64x128xi1>, vector<64x128xi32>
    %c0_i32_125 = arith.constant 0 : i32
    %247 = vector.broadcast %c0_i32_125 : i32 to vector<64x128xi32>
    %248 = arith.cmpi eq, %246, %247 : vector<64x128xi32>
    %c1_i32_126 = arith.constant 1 : i32
    %249 = tpu.dynamic_rotate %229 by %c1_i32_126 dim 0 : vector<64x128xf32>, i32 -> vector<64x128xf32>
    %cst_127 = arith.constant 0.000000e+00 : f32
    %250 = vector.broadcast %cst_127 : f32 to vector<64x128xf32>
    %251 = arith.select %248, %250, %249 : vector<64x128xi1>, vector<64x128xf32>
    %c7_i32_128 = arith.constant 7 : i32
    %252 = vector.broadcast %c7_i32_128 : i32 to vector<64x128xi32>
    %253 = arith.cmpi eq, %246, %252 : vector<64x128xi32>
    %c63_i32_129 = arith.constant 63 : i32
    %254 = tpu.dynamic_rotate %229 by %c63_i32_129 dim 0 : vector<64x128xf32>, i32 -> vector<64x128xf32>
    %cst_130 = arith.constant 0.000000e+00 : f32
    %255 = vector.broadcast %cst_130 : f32 to vector<64x128xf32>
    %256 = arith.select %253, %255, %254 : vector<64x128xi1>, vector<64x128xf32>
    %257 = arith.truncf %251 : vector<64x128xf32> to vector<64x128xbf16>
    %c0_131 = arith.constant 0 : index
    %c0_132 = arith.constant 0 : index
    %c0_133 = arith.constant 0 : index
    %258 = vector.load %arg10[%c0_131, %c0_132, %c0_133] : memref<3x128x128xbf16, #tpu.memory_space<vmem>>, vector<1x128x128xbf16>
    %259 = vector.shape_cast %258 : vector<1x128x128xbf16> to vector<128x128xbf16>
    %cst_134 = arith.constant dense<0.000000e+00> : vector<64x128xf32>
    %260 = tpu.matmul %257, %259, %cst_134 {dimension_numbers = #tpu.dot_dimension_numbers<[1], [0], [0], [1], [0, 0, 1, 1], [], []>} : vector<64x128xbf16>, vector<128x128xbf16>, vector<64x128xf32> -> vector<64x128xf32>
    %261 = arith.truncf %229 : vector<64x128xf32> to vector<64x128xbf16>
    %c1_135 = arith.constant 1 : index
    %c0_136 = arith.constant 0 : index
    %c0_137 = arith.constant 0 : index
    %262 = vector.load %arg10[%c1_135, %c0_136, %c0_137] : memref<3x128x128xbf16, #tpu.memory_space<vmem>>, vector<1x128x128xbf16>
    %263 = vector.shape_cast %262 : vector<1x128x128xbf16> to vector<128x128xbf16>
    %cst_138 = arith.constant dense<0.000000e+00> : vector<64x128xf32>
    %264 = tpu.matmul %261, %263, %cst_138 {dimension_numbers = #tpu.dot_dimension_numbers<[1], [0], [0], [1], [0, 0, 1, 1], [], []>} : vector<64x128xbf16>, vector<128x128xbf16>, vector<64x128xf32> -> vector<64x128xf32>
    %265 = arith.addf %260, %264 : vector<64x128xf32>
    %266 = arith.truncf %256 : vector<64x128xf32> to vector<64x128xbf16>
    %c2_139 = arith.constant 2 : index
    %c0_140 = arith.constant 0 : index
    %c0_141 = arith.constant 0 : index
    %267 = vector.load %arg10[%c2_139, %c0_140, %c0_141] : memref<3x128x128xbf16, #tpu.memory_space<vmem>>, vector<1x128x128xbf16>
    %268 = vector.shape_cast %267 : vector<1x128x128xbf16> to vector<128x128xbf16>
    %cst_142 = arith.constant dense<0.000000e+00> : vector<64x128xf32>
    %269 = tpu.matmul %266, %268, %cst_142 {dimension_numbers = #tpu.dot_dimension_numbers<[1], [0], [0], [1], [0, 0, 1, 1], [], []>} : vector<64x128xbf16>, vector<128x128xbf16>, vector<64x128xf32> -> vector<64x128xf32>
    %270 = arith.addf %265, %269 : vector<64x128xf32>
    %c0_143 = arith.constant 0 : index
    %c0_144 = arith.constant 0 : index
    %271 = vector.load %arg11[%c0_143, %c0_144] : memref<1x128xf32, #tpu.memory_space<vmem>>, vector<1x128xf32>
    %272 = vector.broadcast %271 : vector<1x128xf32> to vector<64x128xf32>
    %273 = arith.addf %270, %272 : vector<64x128xf32>
    %274 = arith.addf %181, %273 : vector<64x128xf32>
    %275 = tpu.iota {dimensions = array<i32: 0>} : vector<64x128xi32>
    %c8_i32_145 = arith.constant 8 : i32
    %c0_i32_146 = arith.constant 0 : i32
    %276 = arith.cmpi eq, %c8_i32_145, %c0_i32_146 : i32
    %c1_i32_147 = arith.constant 1 : i32
    %277 = arith.select %276, %c1_i32_147, %c8_i32_145 : i32
    %278 = vector.broadcast %277 : i32 to vector<64x128xi32>
    %279 = arith.remsi %275, %278 : vector<64x128xi32>
    %c0_i32_148 = arith.constant 0 : i32
    %280 = vector.broadcast %c0_i32_148 : i32 to vector<64x128xi32>
    %281 = arith.cmpi ne, %279, %280 : vector<64x128xi32>
    %c0_i32_149 = arith.constant 0 : i32
    %282 = vector.broadcast %c0_i32_149 : i32 to vector<64x128xi32>
    %283 = arith.cmpi slt, %279, %282 : vector<64x128xi32>
    %c0_i32_150 = arith.constant 0 : i32
    %284 = arith.cmpi slt, %277, %c0_i32_150 : i32
    %285 = vector.broadcast %284 : i1 to vector<64x128xi1>
    %286 = vector.broadcast %285 : vector<64x128xi1> to vector<64x128xi1>
    %287 = arith.xori %283, %286 : vector<64x128xi1>
    %288 = arith.andi %287, %281 : vector<64x128xi1>
    %289 = vector.broadcast %277 : i32 to vector<64x128xi32>
    %290 = arith.addi %279, %289 : vector<64x128xi32>
    %291 = arith.select %288, %290, %279 : vector<64x128xi1>, vector<64x128xi32>
    %c0_i32_151 = arith.constant 0 : i32
    %292 = vector.broadcast %c0_i32_151 : i32 to vector<64x128xi32>
    %293 = arith.cmpi eq, %291, %292 : vector<64x128xi32>
    %c1_i32_152 = arith.constant 1 : i32
    %294 = tpu.dynamic_rotate %274 by %c1_i32_152 dim 0 : vector<64x128xf32>, i32 -> vector<64x128xf32>
    %cst_153 = arith.constant 0.000000e+00 : f32
    %295 = vector.broadcast %cst_153 : f32 to vector<64x128xf32>
    %296 = arith.select %293, %295, %294 : vector<64x128xi1>, vector<64x128xf32>
    %c7_i32_154 = arith.constant 7 : i32
    %297 = vector.broadcast %c7_i32_154 : i32 to vector<64x128xi32>
    %298 = arith.cmpi eq, %291, %297 : vector<64x128xi32>
    %c63_i32_155 = arith.constant 63 : i32
    %299 = tpu.dynamic_rotate %274 by %c63_i32_155 dim 0 : vector<64x128xf32>, i32 -> vector<64x128xf32>
    %cst_156 = arith.constant 0.000000e+00 : f32
    %300 = vector.broadcast %cst_156 : f32 to vector<64x128xf32>
    %301 = arith.select %298, %300, %299 : vector<64x128xi1>, vector<64x128xf32>
    %302 = arith.truncf %296 : vector<64x128xf32> to vector<64x128xbf16>
    %c0_157 = arith.constant 0 : index
    %c0_158 = arith.constant 0 : index
    %c0_159 = arith.constant 0 : index
    %303 = vector.load %arg14[%c0_157, %c0_158, %c0_159] : memref<3x128x256xbf16, #tpu.memory_space<vmem>>, vector<1x128x256xbf16>
    %304 = vector.shape_cast %303 : vector<1x128x256xbf16> to vector<128x256xbf16>
    %cst_160 = arith.constant dense<0.000000e+00> : vector<64x256xf32>
    %305 = tpu.matmul %302, %304, %cst_160 {dimension_numbers = #tpu.dot_dimension_numbers<[1], [0], [0], [1], [0, 0, 1, 1], [], []>} : vector<64x128xbf16>, vector<128x256xbf16>, vector<64x256xf32> -> vector<64x256xf32>
    %306 = arith.truncf %274 : vector<64x128xf32> to vector<64x128xbf16>
    %c1_161 = arith.constant 1 : index
    %c0_162 = arith.constant 0 : index
    %c0_163 = arith.constant 0 : index
    %307 = vector.load %arg14[%c1_161, %c0_162, %c0_163] : memref<3x128x256xbf16, #tpu.memory_space<vmem>>, vector<1x128x256xbf16>
    %308 = vector.shape_cast %307 : vector<1x128x256xbf16> to vector<128x256xbf16>
    %cst_164 = arith.constant dense<0.000000e+00> : vector<64x256xf32>
    %309 = tpu.matmul %306, %308, %cst_164 {dimension_numbers = #tpu.dot_dimension_numbers<[1], [0], [0], [1], [0, 0, 1, 1], [], []>} : vector<64x128xbf16>, vector<128x256xbf16>, vector<64x256xf32> -> vector<64x256xf32>
    %310 = arith.addf %305, %309 : vector<64x256xf32>
    %311 = arith.truncf %301 : vector<64x128xf32> to vector<64x128xbf16>
    %c2_165 = arith.constant 2 : index
    %c0_166 = arith.constant 0 : index
    %c0_167 = arith.constant 0 : index
    %312 = vector.load %arg14[%c2_165, %c0_166, %c0_167] : memref<3x128x256xbf16, #tpu.memory_space<vmem>>, vector<1x128x256xbf16>
    %313 = vector.shape_cast %312 : vector<1x128x256xbf16> to vector<128x256xbf16>
    %cst_168 = arith.constant dense<0.000000e+00> : vector<64x256xf32>
    %314 = tpu.matmul %311, %313, %cst_168 {dimension_numbers = #tpu.dot_dimension_numbers<[1], [0], [0], [1], [0, 0, 1, 1], [], []>} : vector<64x128xbf16>, vector<128x256xbf16>, vector<64x256xf32> -> vector<64x256xf32>
    %315 = arith.addf %310, %314 : vector<64x256xf32>
    %c0_169 = arith.constant 0 : index
    %c0_170 = arith.constant 0 : index
    %316 = vector.load %arg15[%c0_169, %c0_170] : memref<1x256xf32, #tpu.memory_space<vmem>>, vector<1x256xf32>
    %317 = vector.broadcast %316 : vector<1x256xf32> to vector<64x256xf32>
    %318 = arith.addf %315, %317 : vector<64x256xf32>
    %319 = tpu.iota {dimensions = array<i32: 0>} : vector<64x256xi32>
    %c8_i32_171 = arith.constant 8 : i32
    %c0_i32_172 = arith.constant 0 : i32
    %320 = arith.cmpi eq, %c8_i32_171, %c0_i32_172 : i32
    %c1_i32_173 = arith.constant 1 : i32
    %321 = arith.select %320, %c1_i32_173, %c8_i32_171 : i32
    %322 = vector.broadcast %321 : i32 to vector<64x256xi32>
    %323 = arith.remsi %319, %322 : vector<64x256xi32>
    %c0_i32_174 = arith.constant 0 : i32
    %324 = vector.broadcast %c0_i32_174 : i32 to vector<64x256xi32>
    %325 = arith.cmpi ne, %323, %324 : vector<64x256xi32>
    %c0_i32_175 = arith.constant 0 : i32
    %326 = vector.broadcast %c0_i32_175 : i32 to vector<64x256xi32>
    %327 = arith.cmpi slt, %323, %326 : vector<64x256xi32>
    %c0_i32_176 = arith.constant 0 : i32
    %328 = arith.cmpi slt, %321, %c0_i32_176 : i32
    %329 = vector.broadcast %328 : i1 to vector<64x256xi1>
    %330 = vector.broadcast %329 : vector<64x256xi1> to vector<64x256xi1>
    %331 = arith.xori %327, %330 : vector<64x256xi1>
    %332 = arith.andi %331, %325 : vector<64x256xi1>
    %333 = vector.broadcast %321 : i32 to vector<64x256xi32>
    %334 = arith.addi %323, %333 : vector<64x256xi32>
    %335 = arith.select %332, %334, %323 : vector<64x256xi1>, vector<64x256xi32>
    %c0_i32_177 = arith.constant 0 : i32
    %336 = vector.broadcast %c0_i32_177 : i32 to vector<64x256xi32>
    %337 = arith.cmpi eq, %335, %336 : vector<64x256xi32>
    %c1_i32_178 = arith.constant 1 : i32
    %338 = tpu.dynamic_rotate %318 by %c1_i32_178 dim 0 : vector<64x256xf32>, i32 -> vector<64x256xf32>
    %cst_179 = arith.constant 0xFF800000 : f32
    %339 = vector.broadcast %cst_179 : f32 to vector<64x256xf32>
    %340 = arith.select %337, %339, %338 : vector<64x256xi1>, vector<64x256xf32>
    %c7_i32_180 = arith.constant 7 : i32
    %341 = vector.broadcast %c7_i32_180 : i32 to vector<64x256xi32>
    %342 = arith.cmpi eq, %335, %341 : vector<64x256xi32>
    %c63_i32_181 = arith.constant 63 : i32
    %343 = tpu.dynamic_rotate %318 by %c63_i32_181 dim 0 : vector<64x256xf32>, i32 -> vector<64x256xf32>
    %cst_182 = arith.constant 0xFF800000 : f32
    %344 = vector.broadcast %cst_182 : f32 to vector<64x256xf32>
    %345 = arith.select %342, %344, %343 : vector<64x256xi1>, vector<64x256xf32>
    %346 = arith.maximumf %340, %318 : vector<64x256xf32>
    %347 = arith.maximumf %346, %345 : vector<64x256xf32>
    %c0_183 = arith.constant 0 : index
    %c0_184 = arith.constant 0 : index
    %348 = vector.load %arg24[%c0_183, %c0_184] : memref<32x64xbf16, #tpu.memory_space<vmem>>, vector<32x64xbf16>
    %349 = arith.truncf %347 : vector<64x256xf32> to vector<64x256xbf16>
    %cst_185 = arith.constant dense<0.000000e+00> : vector<32x256xf32>
    %350 = tpu.matmul %348, %349, %cst_185 {dimension_numbers = #tpu.dot_dimension_numbers<[1], [0], [0], [1], [0, 0, 1, 1], [], []>} : vector<32x64xbf16>, vector<64x256xbf16>, vector<32x256xf32> -> vector<32x256xf32>
    %351 = tpu.iota {dimensions = array<i32: 1>} : vector<32x256xi32>
    %c32_i32 = arith.constant 32 : i32
    %352 = vector.broadcast %c32_i32 : i32 to vector<32x256xi32>
    %353 = arith.cmpi slt, %351, %352 : vector<32x256xi32>
    %c32_i32_186 = arith.constant 32 : i32
    %354 = tpu.dynamic_rotate %350 by %c32_i32_186 dim 1 : vector<32x256xf32>, i32 -> vector<32x256xf32>
    %cst_187 = arith.constant 0xFF800000 : f32
    %355 = vector.broadcast %cst_187 : f32 to vector<32x256xf32>
    %356 = arith.select %353, %355, %354 : vector<32x256xi1>, vector<32x256xf32>
    %c224_i32 = arith.constant 224 : i32
    %357 = tpu.dynamic_rotate %350 by %c224_i32 dim 1 : vector<32x256xf32>, i32 -> vector<32x256xf32>
    %358 = arith.maximumf %356, %350 : vector<32x256xf32>
    %359 = arith.maximumf %358, %357 : vector<32x256xf32>
    %360 = arith.truncf %359 : vector<32x256xf32> to vector<32x256xbf16>
    %c0_188 = arith.constant 0 : index
    %c0_189 = arith.constant 0 : index
    %361 = vector.load %arg25[%c0_188, %c0_189] : memref<256x128xbf16, #tpu.memory_space<vmem>>, vector<256x128xbf16>
    %cst_190 = arith.constant dense<0.000000e+00> : vector<32x128xf32>
    %362 = tpu.matmul %360, %361, %cst_190 {dimension_numbers = #tpu.dot_dimension_numbers<[1], [0], [0], [1], [0, 0, 1, 1], [], []>} : vector<32x256xbf16>, vector<256x128xbf16>, vector<32x128xf32> -> vector<32x128xf32>
    %cst_191 = arith.constant 0.000000e+00 : f32
    %363 = vector.broadcast %cst_191 : f32 to vector<32x128xf32>
    %364 = arith.maximumf %362, %363 : vector<32x128xf32>
    %365 = tpu.iota {dimensions = array<i32: 0>} : vector<32x128xi32>
    %c4_i32 = arith.constant 4 : i32
    %c0_i32_192 = arith.constant 0 : i32
    %366 = arith.cmpi eq, %c4_i32, %c0_i32_192 : i32
    %c1_i32_193 = arith.constant 1 : i32
    %367 = arith.select %366, %c1_i32_193, %c4_i32 : i32
    %368 = vector.broadcast %367 : i32 to vector<32x128xi32>
    %369 = arith.remsi %365, %368 : vector<32x128xi32>
    %c0_i32_194 = arith.constant 0 : i32
    %370 = vector.broadcast %c0_i32_194 : i32 to vector<32x128xi32>
    %371 = arith.cmpi ne, %369, %370 : vector<32x128xi32>
    %c0_i32_195 = arith.constant 0 : i32
    %372 = vector.broadcast %c0_i32_195 : i32 to vector<32x128xi32>
    %373 = arith.cmpi slt, %369, %372 : vector<32x128xi32>
    %c0_i32_196 = arith.constant 0 : i32
    %374 = arith.cmpi slt, %367, %c0_i32_196 : i32
    %375 = vector.broadcast %374 : i1 to vector<32x128xi1>
    %376 = vector.broadcast %375 : vector<32x128xi1> to vector<32x128xi1>
    %377 = arith.xori %373, %376 : vector<32x128xi1>
    %378 = arith.andi %377, %371 : vector<32x128xi1>
    %379 = vector.broadcast %367 : i32 to vector<32x128xi32>
    %380 = arith.addi %369, %379 : vector<32x128xi32>
    %381 = arith.select %378, %380, %369 : vector<32x128xi1>, vector<32x128xi32>
    %c0_i32_197 = arith.constant 0 : i32
    %382 = vector.broadcast %c0_i32_197 : i32 to vector<32x128xi32>
    %383 = arith.cmpi eq, %381, %382 : vector<32x128xi32>
    %c1_i32_198 = arith.constant 1 : i32
    %384 = tpu.dynamic_rotate %364 by %c1_i32_198 dim 0 : vector<32x128xf32>, i32 -> vector<32x128xf32>
    %cst_199 = arith.constant 0.000000e+00 : f32
    %385 = vector.broadcast %cst_199 : f32 to vector<32x128xf32>
    %386 = arith.select %383, %385, %384 : vector<32x128xi1>, vector<32x128xf32>
    %c3_i32 = arith.constant 3 : i32
    %387 = vector.broadcast %c3_i32 : i32 to vector<32x128xi32>
    %388 = arith.cmpi eq, %381, %387 : vector<32x128xi32>
    %c31_i32 = arith.constant 31 : i32
    %389 = tpu.dynamic_rotate %364 by %c31_i32 dim 0 : vector<32x128xf32>, i32 -> vector<32x128xf32>
    %cst_200 = arith.constant 0.000000e+00 : f32
    %390 = vector.broadcast %cst_200 : f32 to vector<32x128xf32>
    %391 = arith.select %388, %390, %389 : vector<32x128xi1>, vector<32x128xf32>
    %392 = arith.truncf %386 : vector<32x128xf32> to vector<32x128xbf16>
    %c0_201 = arith.constant 0 : index
    %c0_202 = arith.constant 0 : index
    %c0_203 = arith.constant 0 : index
    %393 = vector.load %arg16[%c0_201, %c0_202, %c0_203] : memref<3x128x128xbf16, #tpu.memory_space<vmem>>, vector<1x128x128xbf16>
    %394 = vector.shape_cast %393 : vector<1x128x128xbf16> to vector<128x128xbf16>
    %cst_204 = arith.constant dense<0.000000e+00> : vector<32x128xf32>
    %395 = tpu.matmul %392, %394, %cst_204 {dimension_numbers = #tpu.dot_dimension_numbers<[1], [0], [0], [1], [0, 0, 1, 1], [], []>} : vector<32x128xbf16>, vector<128x128xbf16>, vector<32x128xf32> -> vector<32x128xf32>
    %396 = arith.truncf %364 : vector<32x128xf32> to vector<32x128xbf16>
    %c1_205 = arith.constant 1 : index
    %c0_206 = arith.constant 0 : index
    %c0_207 = arith.constant 0 : index
    %397 = vector.load %arg16[%c1_205, %c0_206, %c0_207] : memref<3x128x128xbf16, #tpu.memory_space<vmem>>, vector<1x128x128xbf16>
    %398 = vector.shape_cast %397 : vector<1x128x128xbf16> to vector<128x128xbf16>
    %cst_208 = arith.constant dense<0.000000e+00> : vector<32x128xf32>
    %399 = tpu.matmul %396, %398, %cst_208 {dimension_numbers = #tpu.dot_dimension_numbers<[1], [0], [0], [1], [0, 0, 1, 1], [], []>} : vector<32x128xbf16>, vector<128x128xbf16>, vector<32x128xf32> -> vector<32x128xf32>
    %400 = arith.addf %395, %399 : vector<32x128xf32>
    %401 = arith.truncf %391 : vector<32x128xf32> to vector<32x128xbf16>
    %c2_209 = arith.constant 2 : index
    %c0_210 = arith.constant 0 : index
    %c0_211 = arith.constant 0 : index
    %402 = vector.load %arg16[%c2_209, %c0_210, %c0_211] : memref<3x128x128xbf16, #tpu.memory_space<vmem>>, vector<1x128x128xbf16>
    %403 = vector.shape_cast %402 : vector<1x128x128xbf16> to vector<128x128xbf16>
    %cst_212 = arith.constant dense<0.000000e+00> : vector<32x128xf32>
    %404 = tpu.matmul %401, %403, %cst_212 {dimension_numbers = #tpu.dot_dimension_numbers<[1], [0], [0], [1], [0, 0, 1, 1], [], []>} : vector<32x128xbf16>, vector<128x128xbf16>, vector<32x128xf32> -> vector<32x128xf32>
    %405 = arith.addf %400, %404 : vector<32x128xf32>
    %c0_213 = arith.constant 0 : index
    %c0_214 = arith.constant 0 : index
    %406 = vector.load %arg17[%c0_213, %c0_214] : memref<1x128xf32, #tpu.memory_space<vmem>>, vector<1x128xf32>
    %407 = vector.broadcast %406 : vector<1x128xf32> to vector<32x128xf32>
    %408 = arith.addf %405, %407 : vector<32x128xf32>
    %cst_215 = arith.constant 0.000000e+00 : f32
    %409 = vector.broadcast %cst_215 : f32 to vector<32x128xf32>
    %410 = arith.maximumf %408, %409 : vector<32x128xf32>
    %411 = tpu.iota {dimensions = array<i32: 0>} : vector<32x128xi32>
    %c4_i32_216 = arith.constant 4 : i32
    %c0_i32_217 = arith.constant 0 : i32
    %412 = arith.cmpi eq, %c4_i32_216, %c0_i32_217 : i32
    %c1_i32_218 = arith.constant 1 : i32
    %413 = arith.select %412, %c1_i32_218, %c4_i32_216 : i32
    %414 = vector.broadcast %413 : i32 to vector<32x128xi32>
    %415 = arith.remsi %411, %414 : vector<32x128xi32>
    %c0_i32_219 = arith.constant 0 : i32
    %416 = vector.broadcast %c0_i32_219 : i32 to vector<32x128xi32>
    %417 = arith.cmpi ne, %415, %416 : vector<32x128xi32>
    %c0_i32_220 = arith.constant 0 : i32
    %418 = vector.broadcast %c0_i32_220 : i32 to vector<32x128xi32>
    %419 = arith.cmpi slt, %415, %418 : vector<32x128xi32>
    %c0_i32_221 = arith.constant 0 : i32
    %420 = arith.cmpi slt, %413, %c0_i32_221 : i32
    %421 = vector.broadcast %420 : i1 to vector<32x128xi1>
    %422 = vector.broadcast %421 : vector<32x128xi1> to vector<32x128xi1>
    %423 = arith.xori %419, %422 : vector<32x128xi1>
    %424 = arith.andi %423, %417 : vector<32x128xi1>
    %425 = vector.broadcast %413 : i32 to vector<32x128xi32>
    %426 = arith.addi %415, %425 : vector<32x128xi32>
    %427 = arith.select %424, %426, %415 : vector<32x128xi1>, vector<32x128xi32>
    %c0_i32_222 = arith.constant 0 : i32
    %428 = vector.broadcast %c0_i32_222 : i32 to vector<32x128xi32>
    %429 = arith.cmpi eq, %427, %428 : vector<32x128xi32>
    %c1_i32_223 = arith.constant 1 : i32
    %430 = tpu.dynamic_rotate %410 by %c1_i32_223 dim 0 : vector<32x128xf32>, i32 -> vector<32x128xf32>
    %cst_224 = arith.constant 0.000000e+00 : f32
    %431 = vector.broadcast %cst_224 : f32 to vector<32x128xf32>
    %432 = arith.select %429, %431, %430 : vector<32x128xi1>, vector<32x128xf32>
    %c3_i32_225 = arith.constant 3 : i32
    %433 = vector.broadcast %c3_i32_225 : i32 to vector<32x128xi32>
    %434 = arith.cmpi eq, %427, %433 : vector<32x128xi32>
    %c31_i32_226 = arith.constant 31 : i32
    %435 = tpu.dynamic_rotate %410 by %c31_i32_226 dim 0 : vector<32x128xf32>, i32 -> vector<32x128xf32>
    %cst_227 = arith.constant 0.000000e+00 : f32
    %436 = vector.broadcast %cst_227 : f32 to vector<32x128xf32>
    %437 = arith.select %434, %436, %435 : vector<32x128xi1>, vector<32x128xf32>
    %438 = arith.truncf %432 : vector<32x128xf32> to vector<32x128xbf16>
    %c0_228 = arith.constant 0 : index
    %c0_229 = arith.constant 0 : index
    %c0_230 = arith.constant 0 : index
    %439 = vector.load %arg18[%c0_228, %c0_229, %c0_230] : memref<3x128x128xbf16, #tpu.memory_space<vmem>>, vector<1x128x128xbf16>
    %440 = vector.shape_cast %439 : vector<1x128x128xbf16> to vector<128x128xbf16>
    %cst_231 = arith.constant dense<0.000000e+00> : vector<32x128xf32>
    %441 = tpu.matmul %438, %440, %cst_231 {dimension_numbers = #tpu.dot_dimension_numbers<[1], [0], [0], [1], [0, 0, 1, 1], [], []>} : vector<32x128xbf16>, vector<128x128xbf16>, vector<32x128xf32> -> vector<32x128xf32>
    %442 = arith.truncf %410 : vector<32x128xf32> to vector<32x128xbf16>
    %c1_232 = arith.constant 1 : index
    %c0_233 = arith.constant 0 : index
    %c0_234 = arith.constant 0 : index
    %443 = vector.load %arg18[%c1_232, %c0_233, %c0_234] : memref<3x128x128xbf16, #tpu.memory_space<vmem>>, vector<1x128x128xbf16>
    %444 = vector.shape_cast %443 : vector<1x128x128xbf16> to vector<128x128xbf16>
    %cst_235 = arith.constant dense<0.000000e+00> : vector<32x128xf32>
    %445 = tpu.matmul %442, %444, %cst_235 {dimension_numbers = #tpu.dot_dimension_numbers<[1], [0], [0], [1], [0, 0, 1, 1], [], []>} : vector<32x128xbf16>, vector<128x128xbf16>, vector<32x128xf32> -> vector<32x128xf32>
    %446 = arith.addf %441, %445 : vector<32x128xf32>
    %447 = arith.truncf %437 : vector<32x128xf32> to vector<32x128xbf16>
    %c2_236 = arith.constant 2 : index
    %c0_237 = arith.constant 0 : index
    %c0_238 = arith.constant 0 : index
    %448 = vector.load %arg18[%c2_236, %c0_237, %c0_238] : memref<3x128x128xbf16, #tpu.memory_space<vmem>>, vector<1x128x128xbf16>
    %449 = vector.shape_cast %448 : vector<1x128x128xbf16> to vector<128x128xbf16>
    %cst_239 = arith.constant dense<0.000000e+00> : vector<32x128xf32>
    %450 = tpu.matmul %447, %449, %cst_239 {dimension_numbers = #tpu.dot_dimension_numbers<[1], [0], [0], [1], [0, 0, 1, 1], [], []>} : vector<32x128xbf16>, vector<128x128xbf16>, vector<32x128xf32> -> vector<32x128xf32>
    %451 = arith.addf %446, %450 : vector<32x128xf32>
    %c0_240 = arith.constant 0 : index
    %c0_241 = arith.constant 0 : index
    %452 = vector.load %arg19[%c0_240, %c0_241] : memref<1x128xf32, #tpu.memory_space<vmem>>, vector<1x128xf32>
    %453 = vector.broadcast %452 : vector<1x128xf32> to vector<32x128xf32>
    %454 = arith.addf %451, %453 : vector<32x128xf32>
    %455 = arith.addf %362, %454 : vector<32x128xf32>
    %cst_242 = arith.constant 0.000000e+00 : f32
    %456 = vector.broadcast %cst_242 : f32 to vector<32x128xf32>
    %457 = arith.maximumf %455, %456 : vector<32x128xf32>
    %458 = tpu.iota {dimensions = array<i32: 0>} : vector<32x128xi32>
    %c4_i32_243 = arith.constant 4 : i32
    %c0_i32_244 = arith.constant 0 : i32
    %459 = arith.cmpi eq, %c4_i32_243, %c0_i32_244 : i32
    %c1_i32_245 = arith.constant 1 : i32
    %460 = arith.select %459, %c1_i32_245, %c4_i32_243 : i32
    %461 = vector.broadcast %460 : i32 to vector<32x128xi32>
    %462 = arith.remsi %458, %461 : vector<32x128xi32>
    %c0_i32_246 = arith.constant 0 : i32
    %463 = vector.broadcast %c0_i32_246 : i32 to vector<32x128xi32>
    %464 = arith.cmpi ne, %462, %463 : vector<32x128xi32>
    %c0_i32_247 = arith.constant 0 : i32
    %465 = vector.broadcast %c0_i32_247 : i32 to vector<32x128xi32>
    %466 = arith.cmpi slt, %462, %465 : vector<32x128xi32>
    %c0_i32_248 = arith.constant 0 : i32
    %467 = arith.cmpi slt, %460, %c0_i32_248 : i32
    %468 = vector.broadcast %467 : i1 to vector<32x128xi1>
    %469 = vector.broadcast %468 : vector<32x128xi1> to vector<32x128xi1>
    %470 = arith.xori %466, %469 : vector<32x128xi1>
    %471 = arith.andi %470, %464 : vector<32x128xi1>
    %472 = vector.broadcast %460 : i32 to vector<32x128xi32>
    %473 = arith.addi %462, %472 : vector<32x128xi32>
    %474 = arith.select %471, %473, %462 : vector<32x128xi1>, vector<32x128xi32>
    %c0_i32_249 = arith.constant 0 : i32
    %475 = vector.broadcast %c0_i32_249 : i32 to vector<32x128xi32>
    %476 = arith.cmpi eq, %474, %475 : vector<32x128xi32>
    %c1_i32_250 = arith.constant 1 : i32
    %477 = tpu.dynamic_rotate %457 by %c1_i32_250 dim 0 : vector<32x128xf32>, i32 -> vector<32x128xf32>
    %cst_251 = arith.constant 0.000000e+00 : f32
    %478 = vector.broadcast %cst_251 : f32 to vector<32x128xf32>
    %479 = arith.select %476, %478, %477 : vector<32x128xi1>, vector<32x128xf32>
    %c3_i32_252 = arith.constant 3 : i32
    %480 = vector.broadcast %c3_i32_252 : i32 to vector<32x128xi32>
    %481 = arith.cmpi eq, %474, %480 : vector<32x128xi32>
    %c31_i32_253 = arith.constant 31 : i32
    %482 = tpu.dynamic_rotate %457 by %c31_i32_253 dim 0 : vector<32x128xf32>, i32 -> vector<32x128xf32>
    %cst_254 = arith.constant 0.000000e+00 : f32
    %483 = vector.broadcast %cst_254 : f32 to vector<32x128xf32>
    %484 = arith.select %481, %483, %482 : vector<32x128xi1>, vector<32x128xf32>
    %485 = arith.truncf %479 : vector<32x128xf32> to vector<32x128xbf16>
    %c0_255 = arith.constant 0 : index
    %c0_256 = arith.constant 0 : index
    %c0_257 = arith.constant 0 : index
    %486 = vector.load %arg20[%c0_255, %c0_256, %c0_257] : memref<3x128x128xbf16, #tpu.memory_space<vmem>>, vector<1x128x128xbf16>
    %487 = vector.shape_cast %486 : vector<1x128x128xbf16> to vector<128x128xbf16>
    %cst_258 = arith.constant dense<0.000000e+00> : vector<32x128xf32>
    %488 = tpu.matmul %485, %487, %cst_258 {dimension_numbers = #tpu.dot_dimension_numbers<[1], [0], [0], [1], [0, 0, 1, 1], [], []>} : vector<32x128xbf16>, vector<128x128xbf16>, vector<32x128xf32> -> vector<32x128xf32>
    %489 = arith.truncf %457 : vector<32x128xf32> to vector<32x128xbf16>
    %c1_259 = arith.constant 1 : index
    %c0_260 = arith.constant 0 : index
    %c0_261 = arith.constant 0 : index
    %490 = vector.load %arg20[%c1_259, %c0_260, %c0_261] : memref<3x128x128xbf16, #tpu.memory_space<vmem>>, vector<1x128x128xbf16>
    %491 = vector.shape_cast %490 : vector<1x128x128xbf16> to vector<128x128xbf16>
    %cst_262 = arith.constant dense<0.000000e+00> : vector<32x128xf32>
    %492 = tpu.matmul %489, %491, %cst_262 {dimension_numbers = #tpu.dot_dimension_numbers<[1], [0], [0], [1], [0, 0, 1, 1], [], []>} : vector<32x128xbf16>, vector<128x128xbf16>, vector<32x128xf32> -> vector<32x128xf32>
    %493 = arith.addf %488, %492 : vector<32x128xf32>
    %494 = arith.truncf %484 : vector<32x128xf32> to vector<32x128xbf16>
    %c2_263 = arith.constant 2 : index
    %c0_264 = arith.constant 0 : index
    %c0_265 = arith.constant 0 : index
    %495 = vector.load %arg20[%c2_263, %c0_264, %c0_265] : memref<3x128x128xbf16, #tpu.memory_space<vmem>>, vector<1x128x128xbf16>
    %496 = vector.shape_cast %495 : vector<1x128x128xbf16> to vector<128x128xbf16>
    %cst_266 = arith.constant dense<0.000000e+00> : vector<32x128xf32>
    %497 = tpu.matmul %494, %496, %cst_266 {dimension_numbers = #tpu.dot_dimension_numbers<[1], [0], [0], [1], [0, 0, 1, 1], [], []>} : vector<32x128xbf16>, vector<128x128xbf16>, vector<32x128xf32> -> vector<32x128xf32>
    %498 = arith.addf %493, %497 : vector<32x128xf32>
    %c0_267 = arith.constant 0 : index
    %c0_268 = arith.constant 0 : index
    %499 = vector.load %arg21[%c0_267, %c0_268] : memref<1x128xf32, #tpu.memory_space<vmem>>, vector<1x128xf32>
    %500 = vector.broadcast %499 : vector<1x128xf32> to vector<32x128xf32>
    %501 = arith.addf %498, %500 : vector<32x128xf32>
    %cst_269 = arith.constant 0.000000e+00 : f32
    %502 = vector.broadcast %cst_269 : f32 to vector<32x128xf32>
    %503 = arith.maximumf %501, %502 : vector<32x128xf32>
    %504 = tpu.iota {dimensions = array<i32: 0>} : vector<32x128xi32>
    %c4_i32_270 = arith.constant 4 : i32
    %c0_i32_271 = arith.constant 0 : i32
    %505 = arith.cmpi eq, %c4_i32_270, %c0_i32_271 : i32
    %c1_i32_272 = arith.constant 1 : i32
    %506 = arith.select %505, %c1_i32_272, %c4_i32_270 : i32
    %507 = vector.broadcast %506 : i32 to vector<32x128xi32>
    %508 = arith.remsi %504, %507 : vector<32x128xi32>
    %c0_i32_273 = arith.constant 0 : i32
    %509 = vector.broadcast %c0_i32_273 : i32 to vector<32x128xi32>
    %510 = arith.cmpi ne, %508, %509 : vector<32x128xi32>
    %c0_i32_274 = arith.constant 0 : i32
    %511 = vector.broadcast %c0_i32_274 : i32 to vector<32x128xi32>
    %512 = arith.cmpi slt, %508, %511 : vector<32x128xi32>
    %c0_i32_275 = arith.constant 0 : i32
    %513 = arith.cmpi slt, %506, %c0_i32_275 : i32
    %514 = vector.broadcast %513 : i1 to vector<32x128xi1>
    %515 = vector.broadcast %514 : vector<32x128xi1> to vector<32x128xi1>
    %516 = arith.xori %512, %515 : vector<32x128xi1>
    %517 = arith.andi %516, %510 : vector<32x128xi1>
    %518 = vector.broadcast %506 : i32 to vector<32x128xi32>
    %519 = arith.addi %508, %518 : vector<32x128xi32>
    %520 = arith.select %517, %519, %508 : vector<32x128xi1>, vector<32x128xi32>
    %c0_i32_276 = arith.constant 0 : i32
    %521 = vector.broadcast %c0_i32_276 : i32 to vector<32x128xi32>
    %522 = arith.cmpi eq, %520, %521 : vector<32x128xi32>
    %c1_i32_277 = arith.constant 1 : i32
    %523 = tpu.dynamic_rotate %503 by %c1_i32_277 dim 0 : vector<32x128xf32>, i32 -> vector<32x128xf32>
    %cst_278 = arith.constant 0.000000e+00 : f32
    %524 = vector.broadcast %cst_278 : f32 to vector<32x128xf32>
    %525 = arith.select %522, %524, %523 : vector<32x128xi1>, vector<32x128xf32>
    %c3_i32_279 = arith.constant 3 : i32
    %526 = vector.broadcast %c3_i32_279 : i32 to vector<32x128xi32>
    %527 = arith.cmpi eq, %520, %526 : vector<32x128xi32>
    %c31_i32_280 = arith.constant 31 : i32
    %528 = tpu.dynamic_rotate %503 by %c31_i32_280 dim 0 : vector<32x128xf32>, i32 -> vector<32x128xf32>
    %cst_281 = arith.constant 0.000000e+00 : f32
    %529 = vector.broadcast %cst_281 : f32 to vector<32x128xf32>
    %530 = arith.select %527, %529, %528 : vector<32x128xi1>, vector<32x128xf32>
    %531 = arith.truncf %525 : vector<32x128xf32> to vector<32x128xbf16>
    %c0_282 = arith.constant 0 : index
    %c0_283 = arith.constant 0 : index
    %c0_284 = arith.constant 0 : index
    %532 = vector.load %arg22[%c0_282, %c0_283, %c0_284] : memref<3x128x128xbf16, #tpu.memory_space<vmem>>, vector<1x128x128xbf16>
    %533 = vector.shape_cast %532 : vector<1x128x128xbf16> to vector<128x128xbf16>
    %cst_285 = arith.constant dense<0.000000e+00> : vector<32x128xf32>
    %534 = tpu.matmul %531, %533, %cst_285 {dimension_numbers = #tpu.dot_dimension_numbers<[1], [0], [0], [1], [0, 0, 1, 1], [], []>} : vector<32x128xbf16>, vector<128x128xbf16>, vector<32x128xf32> -> vector<32x128xf32>
    %535 = arith.truncf %503 : vector<32x128xf32> to vector<32x128xbf16>
    %c1_286 = arith.constant 1 : index
    %c0_287 = arith.constant 0 : index
    %c0_288 = arith.constant 0 : index
    %536 = vector.load %arg22[%c1_286, %c0_287, %c0_288] : memref<3x128x128xbf16, #tpu.memory_space<vmem>>, vector<1x128x128xbf16>
    %537 = vector.shape_cast %536 : vector<1x128x128xbf16> to vector<128x128xbf16>
    %cst_289 = arith.constant dense<0.000000e+00> : vector<32x128xf32>
    %538 = tpu.matmul %535, %537, %cst_289 {dimension_numbers = #tpu.dot_dimension_numbers<[1], [0], [0], [1], [0, 0, 1, 1], [], []>} : vector<32x128xbf16>, vector<128x128xbf16>, vector<32x128xf32> -> vector<32x128xf32>
    %539 = arith.addf %534, %538 : vector<32x128xf32>
    %540 = arith.truncf %530 : vector<32x128xf32> to vector<32x128xbf16>
    %c2_290 = arith.constant 2 : index
    %c0_291 = arith.constant 0 : index
    %c0_292 = arith.constant 0 : index
    %541 = vector.load %arg22[%c2_290, %c0_291, %c0_292] : memref<3x128x128xbf16, #tpu.memory_space<vmem>>, vector<1x128x128xbf16>
    %542 = vector.shape_cast %541 : vector<1x128x128xbf16> to vector<128x128xbf16>
    %cst_293 = arith.constant dense<0.000000e+00> : vector<32x128xf32>
    %543 = tpu.matmul %540, %542, %cst_293 {dimension_numbers = #tpu.dot_dimension_numbers<[1], [0], [0], [1], [0, 0, 1, 1], [], []>} : vector<32x128xbf16>, vector<128x128xbf16>, vector<32x128xf32> -> vector<32x128xf32>
    %544 = arith.addf %539, %543 : vector<32x128xf32>
    %c0_294 = arith.constant 0 : index
    %c0_295 = arith.constant 0 : index
    %545 = vector.load %arg23[%c0_294, %c0_295] : memref<1x128xf32, #tpu.memory_space<vmem>>, vector<1x128xf32>
    %546 = vector.broadcast %545 : vector<1x128xf32> to vector<32x128xf32>
    %547 = arith.addf %544, %546 : vector<32x128xf32>
    %548 = arith.addf %455, %547 : vector<32x128xf32>
    %549 = tpu.iota {dimensions = array<i32: 0>} : vector<32x128xi32>
    %c4_i32_296 = arith.constant 4 : i32
    %c0_i32_297 = arith.constant 0 : i32
    %550 = arith.cmpi eq, %c4_i32_296, %c0_i32_297 : i32
    %c1_i32_298 = arith.constant 1 : i32
    %551 = arith.select %550, %c1_i32_298, %c4_i32_296 : i32
    %552 = vector.broadcast %551 : i32 to vector<32x128xi32>
    %553 = arith.remsi %549, %552 : vector<32x128xi32>
    %c0_i32_299 = arith.constant 0 : i32
    %554 = vector.broadcast %c0_i32_299 : i32 to vector<32x128xi32>
    %555 = arith.cmpi ne, %553, %554 : vector<32x128xi32>
    %c0_i32_300 = arith.constant 0 : i32
    %556 = vector.broadcast %c0_i32_300 : i32 to vector<32x128xi32>
    %557 = arith.cmpi slt, %553, %556 : vector<32x128xi32>
    %c0_i32_301 = arith.constant 0 : i32
    %558 = arith.cmpi slt, %551, %c0_i32_301 : i32
    %559 = vector.broadcast %558 : i1 to vector<32x128xi1>
    %560 = vector.broadcast %559 : vector<32x128xi1> to vector<32x128xi1>
    %561 = arith.xori %557, %560 : vector<32x128xi1>
    %562 = arith.andi %561, %555 : vector<32x128xi1>
    %563 = vector.broadcast %551 : i32 to vector<32x128xi32>
    %564 = arith.addi %553, %563 : vector<32x128xi32>
    %565 = arith.select %562, %564, %553 : vector<32x128xi1>, vector<32x128xi32>
    %c0_i32_302 = arith.constant 0 : i32
    %566 = vector.broadcast %c0_i32_302 : i32 to vector<32x128xi32>
    %567 = arith.cmpi eq, %565, %566 : vector<32x128xi32>
    %c1_i32_303 = arith.constant 1 : i32
    %568 = tpu.dynamic_rotate %548 by %c1_i32_303 dim 0 : vector<32x128xf32>, i32 -> vector<32x128xf32>
    %cst_304 = arith.constant 0.000000e+00 : f32
    %569 = vector.broadcast %cst_304 : f32 to vector<32x128xf32>
    %570 = arith.select %567, %569, %568 : vector<32x128xi1>, vector<32x128xf32>
    %c3_i32_305 = arith.constant 3 : i32
    %571 = vector.broadcast %c3_i32_305 : i32 to vector<32x128xi32>
    %572 = arith.cmpi eq, %565, %571 : vector<32x128xi32>
    %c31_i32_306 = arith.constant 31 : i32
    %573 = tpu.dynamic_rotate %548 by %c31_i32_306 dim 0 : vector<32x128xf32>, i32 -> vector<32x128xf32>
    %cst_307 = arith.constant 0.000000e+00 : f32
    %574 = vector.broadcast %cst_307 : f32 to vector<32x128xf32>
    %575 = arith.select %572, %574, %573 : vector<32x128xi1>, vector<32x128xf32>
    %576 = arith.truncf %570 : vector<32x128xf32> to vector<32x128xbf16>
    %c0_308 = arith.constant 0 : index
    %c0_309 = arith.constant 0 : index
    %c0_310 = arith.constant 0 : index
    %577 = vector.load %arg26[%c0_308, %c0_309, %c0_310] : memref<3x128x128xbf16, #tpu.memory_space<vmem>>, vector<1x128x128xbf16>
    %578 = vector.shape_cast %577 : vector<1x128x128xbf16> to vector<128x128xbf16>
    %cst_311 = arith.constant dense<0.000000e+00> : vector<32x128xf32>
    %579 = tpu.matmul %576, %578, %cst_311 {dimension_numbers = #tpu.dot_dimension_numbers<[1], [0], [0], [1], [0, 0, 1, 1], [], []>} : vector<32x128xbf16>, vector<128x128xbf16>, vector<32x128xf32> -> vector<32x128xf32>
    %580 = arith.truncf %548 : vector<32x128xf32> to vector<32x128xbf16>
    %c1_312 = arith.constant 1 : index
    %c0_313 = arith.constant 0 : index
    %c0_314 = arith.constant 0 : index
    %581 = vector.load %arg26[%c1_312, %c0_313, %c0_314] : memref<3x128x128xbf16, #tpu.memory_space<vmem>>, vector<1x128x128xbf16>
    %582 = vector.shape_cast %581 : vector<1x128x128xbf16> to vector<128x128xbf16>
    %cst_315 = arith.constant dense<0.000000e+00> : vector<32x128xf32>
    %583 = tpu.matmul %580, %582, %cst_315 {dimension_numbers = #tpu.dot_dimension_numbers<[1], [0], [0], [1], [0, 0, 1, 1], [], []>} : vector<32x128xbf16>, vector<128x128xbf16>, vector<32x128xf32> -> vector<32x128xf32>
    %584 = arith.addf %579, %583 : vector<32x128xf32>
    %585 = arith.truncf %575 : vector<32x128xf32> to vector<32x128xbf16>
    %c2_316 = arith.constant 2 : index
    %c0_317 = arith.constant 0 : index
    %c0_318 = arith.constant 0 : index
    %586 = vector.load %arg26[%c2_316, %c0_317, %c0_318] : memref<3x128x128xbf16, #tpu.memory_space<vmem>>, vector<1x128x128xbf16>
    %587 = vector.shape_cast %586 : vector<1x128x128xbf16> to vector<128x128xbf16>
    %cst_319 = arith.constant dense<0.000000e+00> : vector<32x128xf32>
    %588 = tpu.matmul %585, %587, %cst_319 {dimension_numbers = #tpu.dot_dimension_numbers<[1], [0], [0], [1], [0, 0, 1, 1], [], []>} : vector<32x128xbf16>, vector<128x128xbf16>, vector<32x128xf32> -> vector<32x128xf32>
    %589 = arith.addf %584, %588 : vector<32x128xf32>
    %c0_320 = arith.constant 0 : index
    %c0_321 = arith.constant 0 : index
    %590 = vector.load %arg27[%c0_320, %c0_321] : memref<1x128xf32, #tpu.memory_space<vmem>>, vector<1x128xf32>
    %591 = vector.broadcast %590 : vector<1x128xf32> to vector<32x128xf32>
    %592 = arith.addf %589, %591 : vector<32x128xf32>
    %593 = tpu.iota {dimensions = array<i32: 0>} : vector<32x128xi32>
    %c4_i32_322 = arith.constant 4 : i32
    %c0_i32_323 = arith.constant 0 : i32
    %594 = arith.cmpi eq, %c4_i32_322, %c0_i32_323 : i32
    %c1_i32_324 = arith.constant 1 : i32
    %595 = arith.select %594, %c1_i32_324, %c4_i32_322 : i32
    %596 = vector.broadcast %595 : i32 to vector<32x128xi32>
    %597 = arith.remsi %593, %596 : vector<32x128xi32>
    %c0_i32_325 = arith.constant 0 : i32
    %598 = vector.broadcast %c0_i32_325 : i32 to vector<32x128xi32>
    %599 = arith.cmpi ne, %597, %598 : vector<32x128xi32>
    %c0_i32_326 = arith.constant 0 : i32
    %600 = vector.broadcast %c0_i32_326 : i32 to vector<32x128xi32>
    %601 = arith.cmpi slt, %597, %600 : vector<32x128xi32>
    %c0_i32_327 = arith.constant 0 : i32
    %602 = arith.cmpi slt, %595, %c0_i32_327 : i32
    %603 = vector.broadcast %602 : i1 to vector<32x128xi1>
    %604 = vector.broadcast %603 : vector<32x128xi1> to vector<32x128xi1>
    %605 = arith.xori %601, %604 : vector<32x128xi1>
    %606 = arith.andi %605, %599 : vector<32x128xi1>
    %607 = vector.broadcast %595 : i32 to vector<32x128xi32>
    %608 = arith.addi %597, %607 : vector<32x128xi32>
    %609 = arith.select %606, %608, %597 : vector<32x128xi1>, vector<32x128xi32>
    %c0_i32_328 = arith.constant 0 : i32
    %610 = vector.broadcast %c0_i32_328 : i32 to vector<32x128xi32>
    %611 = arith.cmpi eq, %609, %610 : vector<32x128xi32>
    %c1_i32_329 = arith.constant 1 : i32
    %612 = tpu.dynamic_rotate %592 by %c1_i32_329 dim 0 : vector<32x128xf32>, i32 -> vector<32x128xf32>
    %cst_330 = arith.constant 0xFF800000 : f32
    %613 = vector.broadcast %cst_330 : f32 to vector<32x128xf32>
    %614 = arith.select %611, %613, %612 : vector<32x128xi1>, vector<32x128xf32>
    %c3_i32_331 = arith.constant 3 : i32
    %615 = vector.broadcast %c3_i32_331 : i32 to vector<32x128xi32>
    %616 = arith.cmpi eq, %609, %615 : vector<32x128xi32>
    %c31_i32_332 = arith.constant 31 : i32
    %617 = tpu.dynamic_rotate %592 by %c31_i32_332 dim 0 : vector<32x128xf32>, i32 -> vector<32x128xf32>
    %cst_333 = arith.constant 0xFF800000 : f32
    %618 = vector.broadcast %cst_333 : f32 to vector<32x128xf32>
    %619 = arith.select %616, %618, %617 : vector<32x128xi1>, vector<32x128xf32>
    %620 = arith.maximumf %614, %592 : vector<32x128xf32>
    %621 = arith.maximumf %620, %619 : vector<32x128xf32>
    %c0_334 = arith.constant 0 : index
    %c0_335 = arith.constant 0 : index
    %622 = vector.load %arg36[%c0_334, %c0_335] : memref<16x32xbf16, #tpu.memory_space<vmem>>, vector<16x32xbf16>
    %623 = arith.truncf %621 : vector<32x128xf32> to vector<32x128xbf16>
    %cst_336 = arith.constant dense<0.000000e+00> : vector<16x128xf32>
    %624 = tpu.matmul %622, %623, %cst_336 {dimension_numbers = #tpu.dot_dimension_numbers<[1], [0], [0], [1], [0, 0, 1, 1], [], []>} : vector<16x32xbf16>, vector<32x128xbf16>, vector<16x128xf32> -> vector<16x128xf32>
    %625 = tpu.iota {dimensions = array<i32: 1>} : vector<16x128xi32>
    %c32_i32_337 = arith.constant 32 : i32
    %626 = vector.broadcast %c32_i32_337 : i32 to vector<16x128xi32>
    %627 = arith.cmpi slt, %625, %626 : vector<16x128xi32>
    %c32_i32_338 = arith.constant 32 : i32
    %628 = tpu.dynamic_rotate %624 by %c32_i32_338 dim 1 : vector<16x128xf32>, i32 -> vector<16x128xf32>
    %cst_339 = arith.constant 0xFF800000 : f32
    %629 = vector.broadcast %cst_339 : f32 to vector<16x128xf32>
    %630 = arith.select %627, %629, %628 : vector<16x128xi1>, vector<16x128xf32>
    %c96_i32 = arith.constant 96 : i32
    %631 = tpu.dynamic_rotate %624 by %c96_i32 dim 1 : vector<16x128xf32>, i32 -> vector<16x128xf32>
    %632 = arith.maximumf %630, %624 : vector<16x128xf32>
    %633 = arith.maximumf %632, %631 : vector<16x128xf32>
    %634 = arith.truncf %633 : vector<16x128xf32> to vector<16x128xbf16>
    %c0_340 = arith.constant 0 : index
    %c0_341 = arith.constant 0 : index
    %635 = vector.load %arg37[%c0_340, %c0_341] : memref<128x64xbf16, #tpu.memory_space<vmem>>, vector<128x64xbf16>
    %cst_342 = arith.constant dense<0.000000e+00> : vector<16x64xf32>
    %636 = tpu.matmul %634, %635, %cst_342 {dimension_numbers = #tpu.dot_dimension_numbers<[1], [0], [0], [1], [0, 0, 1, 1], [], []>} : vector<16x128xbf16>, vector<128x64xbf16>, vector<16x64xf32> -> vector<16x64xf32>
    %cst_343 = arith.constant 0.000000e+00 : f32
    %637 = vector.broadcast %cst_343 : f32 to vector<16x64xf32>
    %638 = arith.maximumf %636, %637 : vector<16x64xf32>
    %639 = tpu.iota {dimensions = array<i32: 0>} : vector<16x64xi32>
    %c2_i32 = arith.constant 2 : i32
    %c0_i32_344 = arith.constant 0 : i32
    %640 = arith.cmpi eq, %c2_i32, %c0_i32_344 : i32
    %c1_i32_345 = arith.constant 1 : i32
    %641 = arith.select %640, %c1_i32_345, %c2_i32 : i32
    %642 = vector.broadcast %641 : i32 to vector<16x64xi32>
    %643 = arith.remsi %639, %642 : vector<16x64xi32>
    %c0_i32_346 = arith.constant 0 : i32
    %644 = vector.broadcast %c0_i32_346 : i32 to vector<16x64xi32>
    %645 = arith.cmpi ne, %643, %644 : vector<16x64xi32>
    %c0_i32_347 = arith.constant 0 : i32
    %646 = vector.broadcast %c0_i32_347 : i32 to vector<16x64xi32>
    %647 = arith.cmpi slt, %643, %646 : vector<16x64xi32>
    %c0_i32_348 = arith.constant 0 : i32
    %648 = arith.cmpi slt, %641, %c0_i32_348 : i32
    %649 = vector.broadcast %648 : i1 to vector<16x64xi1>
    %650 = vector.broadcast %649 : vector<16x64xi1> to vector<16x64xi1>
    %651 = arith.xori %647, %650 : vector<16x64xi1>
    %652 = arith.andi %651, %645 : vector<16x64xi1>
    %653 = vector.broadcast %641 : i32 to vector<16x64xi32>
    %654 = arith.addi %643, %653 : vector<16x64xi32>
    %655 = arith.select %652, %654, %643 : vector<16x64xi1>, vector<16x64xi32>
    %c0_i32_349 = arith.constant 0 : i32
    %656 = vector.broadcast %c0_i32_349 : i32 to vector<16x64xi32>
    %657 = arith.cmpi eq, %655, %656 : vector<16x64xi32>
    %c1_i32_350 = arith.constant 1 : i32
    %658 = tpu.dynamic_rotate %638 by %c1_i32_350 dim 0 : vector<16x64xf32>, i32 -> vector<16x64xf32>
    %cst_351 = arith.constant 0.000000e+00 : f32
    %659 = vector.broadcast %cst_351 : f32 to vector<16x64xf32>
    %660 = arith.select %657, %659, %658 : vector<16x64xi1>, vector<16x64xf32>
    %c1_i32_352 = arith.constant 1 : i32
    %661 = vector.broadcast %c1_i32_352 : i32 to vector<16x64xi32>
    %662 = arith.cmpi eq, %655, %661 : vector<16x64xi32>
    %c15_i32_353 = arith.constant 15 : i32
    %663 = tpu.dynamic_rotate %638 by %c15_i32_353 dim 0 : vector<16x64xf32>, i32 -> vector<16x64xf32>
    %cst_354 = arith.constant 0.000000e+00 : f32
    %664 = vector.broadcast %cst_354 : f32 to vector<16x64xf32>
    %665 = arith.select %662, %664, %663 : vector<16x64xi1>, vector<16x64xf32>
    %666 = arith.truncf %660 : vector<16x64xf32> to vector<16x64xbf16>
    %c0_355 = arith.constant 0 : index
    %c0_356 = arith.constant 0 : index
    %c0_357 = arith.constant 0 : index
    %667 = vector.load %arg28[%c0_355, %c0_356, %c0_357] : memref<3x64x64xbf16, #tpu.memory_space<vmem>>, vector<1x64x64xbf16>
    %668 = vector.shape_cast %667 : vector<1x64x64xbf16> to vector<64x64xbf16>
    %cst_358 = arith.constant dense<0.000000e+00> : vector<16x64xf32>
    %669 = tpu.matmul %666, %668, %cst_358 {dimension_numbers = #tpu.dot_dimension_numbers<[1], [0], [0], [1], [0, 0, 1, 1], [], []>} : vector<16x64xbf16>, vector<64x64xbf16>, vector<16x64xf32> -> vector<16x64xf32>
    %670 = arith.truncf %638 : vector<16x64xf32> to vector<16x64xbf16>
    %c1_359 = arith.constant 1 : index
    %c0_360 = arith.constant 0 : index
    %c0_361 = arith.constant 0 : index
    %671 = vector.load %arg28[%c1_359, %c0_360, %c0_361] : memref<3x64x64xbf16, #tpu.memory_space<vmem>>, vector<1x64x64xbf16>
    %672 = vector.shape_cast %671 : vector<1x64x64xbf16> to vector<64x64xbf16>
    %cst_362 = arith.constant dense<0.000000e+00> : vector<16x64xf32>
    %673 = tpu.matmul %670, %672, %cst_362 {dimension_numbers = #tpu.dot_dimension_numbers<[1], [0], [0], [1], [0, 0, 1, 1], [], []>} : vector<16x64xbf16>, vector<64x64xbf16>, vector<16x64xf32> -> vector<16x64xf32>
    %674 = arith.addf %669, %673 : vector<16x64xf32>
    %675 = arith.truncf %665 : vector<16x64xf32> to vector<16x64xbf16>
    %c2_363 = arith.constant 2 : index
    %c0_364 = arith.constant 0 : index
    %c0_365 = arith.constant 0 : index
    %676 = vector.load %arg28[%c2_363, %c0_364, %c0_365] : memref<3x64x64xbf16, #tpu.memory_space<vmem>>, vector<1x64x64xbf16>
    %677 = vector.shape_cast %676 : vector<1x64x64xbf16> to vector<64x64xbf16>
    %cst_366 = arith.constant dense<0.000000e+00> : vector<16x64xf32>
    %678 = tpu.matmul %675, %677, %cst_366 {dimension_numbers = #tpu.dot_dimension_numbers<[1], [0], [0], [1], [0, 0, 1, 1], [], []>} : vector<16x64xbf16>, vector<64x64xbf16>, vector<16x64xf32> -> vector<16x64xf32>
    %679 = arith.addf %674, %678 : vector<16x64xf32>
    %c0_367 = arith.constant 0 : index
    %c0_368 = arith.constant 0 : index
    %680 = vector.load %arg29[%c0_367, %c0_368] : memref<1x64xf32, #tpu.memory_space<vmem>>, vector<1x64xf32>
    %681 = vector.broadcast %680 : vector<1x64xf32> to vector<16x64xf32>
    %682 = arith.addf %679, %681 : vector<16x64xf32>
    %cst_369 = arith.constant 0.000000e+00 : f32
    %683 = vector.broadcast %cst_369 : f32 to vector<16x64xf32>
    %684 = arith.maximumf %682, %683 : vector<16x64xf32>
    %685 = tpu.iota {dimensions = array<i32: 0>} : vector<16x64xi32>
    %c2_i32_370 = arith.constant 2 : i32
    %c0_i32_371 = arith.constant 0 : i32
    %686 = arith.cmpi eq, %c2_i32_370, %c0_i32_371 : i32
    %c1_i32_372 = arith.constant 1 : i32
    %687 = arith.select %686, %c1_i32_372, %c2_i32_370 : i32
    %688 = vector.broadcast %687 : i32 to vector<16x64xi32>
    %689 = arith.remsi %685, %688 : vector<16x64xi32>
    %c0_i32_373 = arith.constant 0 : i32
    %690 = vector.broadcast %c0_i32_373 : i32 to vector<16x64xi32>
    %691 = arith.cmpi ne, %689, %690 : vector<16x64xi32>
    %c0_i32_374 = arith.constant 0 : i32
    %692 = vector.broadcast %c0_i32_374 : i32 to vector<16x64xi32>
    %693 = arith.cmpi slt, %689, %692 : vector<16x64xi32>
    %c0_i32_375 = arith.constant 0 : i32
    %694 = arith.cmpi slt, %687, %c0_i32_375 : i32
    %695 = vector.broadcast %694 : i1 to vector<16x64xi1>
    %696 = vector.broadcast %695 : vector<16x64xi1> to vector<16x64xi1>
    %697 = arith.xori %693, %696 : vector<16x64xi1>
    %698 = arith.andi %697, %691 : vector<16x64xi1>
    %699 = vector.broadcast %687 : i32 to vector<16x64xi32>
    %700 = arith.addi %689, %699 : vector<16x64xi32>
    %701 = arith.select %698, %700, %689 : vector<16x64xi1>, vector<16x64xi32>
    %c0_i32_376 = arith.constant 0 : i32
    %702 = vector.broadcast %c0_i32_376 : i32 to vector<16x64xi32>
    %703 = arith.cmpi eq, %701, %702 : vector<16x64xi32>
    %c1_i32_377 = arith.constant 1 : i32
    %704 = tpu.dynamic_rotate %684 by %c1_i32_377 dim 0 : vector<16x64xf32>, i32 -> vector<16x64xf32>
    %cst_378 = arith.constant 0.000000e+00 : f32
    %705 = vector.broadcast %cst_378 : f32 to vector<16x64xf32>
    %706 = arith.select %703, %705, %704 : vector<16x64xi1>, vector<16x64xf32>
    %c1_i32_379 = arith.constant 1 : i32
    %707 = vector.broadcast %c1_i32_379 : i32 to vector<16x64xi32>
    %708 = arith.cmpi eq, %701, %707 : vector<16x64xi32>
    %c15_i32_380 = arith.constant 15 : i32
    %709 = tpu.dynamic_rotate %684 by %c15_i32_380 dim 0 : vector<16x64xf32>, i32 -> vector<16x64xf32>
    %cst_381 = arith.constant 0.000000e+00 : f32
    %710 = vector.broadcast %cst_381 : f32 to vector<16x64xf32>
    %711 = arith.select %708, %710, %709 : vector<16x64xi1>, vector<16x64xf32>
    %712 = arith.truncf %706 : vector<16x64xf32> to vector<16x64xbf16>
    %c0_382 = arith.constant 0 : index
    %c0_383 = arith.constant 0 : index
    %c0_384 = arith.constant 0 : index
    %713 = vector.load %arg30[%c0_382, %c0_383, %c0_384] : memref<3x64x64xbf16, #tpu.memory_space<vmem>>, vector<1x64x64xbf16>
    %714 = vector.shape_cast %713 : vector<1x64x64xbf16> to vector<64x64xbf16>
    %cst_385 = arith.constant dense<0.000000e+00> : vector<16x64xf32>
    %715 = tpu.matmul %712, %714, %cst_385 {dimension_numbers = #tpu.dot_dimension_numbers<[1], [0], [0], [1], [0, 0, 1, 1], [], []>} : vector<16x64xbf16>, vector<64x64xbf16>, vector<16x64xf32> -> vector<16x64xf32>
    %716 = arith.truncf %684 : vector<16x64xf32> to vector<16x64xbf16>
    %c1_386 = arith.constant 1 : index
    %c0_387 = arith.constant 0 : index
    %c0_388 = arith.constant 0 : index
    %717 = vector.load %arg30[%c1_386, %c0_387, %c0_388] : memref<3x64x64xbf16, #tpu.memory_space<vmem>>, vector<1x64x64xbf16>
    %718 = vector.shape_cast %717 : vector<1x64x64xbf16> to vector<64x64xbf16>
    %cst_389 = arith.constant dense<0.000000e+00> : vector<16x64xf32>
    %719 = tpu.matmul %716, %718, %cst_389 {dimension_numbers = #tpu.dot_dimension_numbers<[1], [0], [0], [1], [0, 0, 1, 1], [], []>} : vector<16x64xbf16>, vector<64x64xbf16>, vector<16x64xf32> -> vector<16x64xf32>
    %720 = arith.addf %715, %719 : vector<16x64xf32>
    %721 = arith.truncf %711 : vector<16x64xf32> to vector<16x64xbf16>
    %c2_390 = arith.constant 2 : index
    %c0_391 = arith.constant 0 : index
    %c0_392 = arith.constant 0 : index
    %722 = vector.load %arg30[%c2_390, %c0_391, %c0_392] : memref<3x64x64xbf16, #tpu.memory_space<vmem>>, vector<1x64x64xbf16>
    %723 = vector.shape_cast %722 : vector<1x64x64xbf16> to vector<64x64xbf16>
    %cst_393 = arith.constant dense<0.000000e+00> : vector<16x64xf32>
    %724 = tpu.matmul %721, %723, %cst_393 {dimension_numbers = #tpu.dot_dimension_numbers<[1], [0], [0], [1], [0, 0, 1, 1], [], []>} : vector<16x64xbf16>, vector<64x64xbf16>, vector<16x64xf32> -> vector<16x64xf32>
    %725 = arith.addf %720, %724 : vector<16x64xf32>
    %c0_394 = arith.constant 0 : index
    %c0_395 = arith.constant 0 : index
    %726 = vector.load %arg31[%c0_394, %c0_395] : memref<1x64xf32, #tpu.memory_space<vmem>>, vector<1x64xf32>
    %727 = vector.broadcast %726 : vector<1x64xf32> to vector<16x64xf32>
    %728 = arith.addf %725, %727 : vector<16x64xf32>
    %729 = arith.addf %636, %728 : vector<16x64xf32>
    %cst_396 = arith.constant 0.000000e+00 : f32
    %730 = vector.broadcast %cst_396 : f32 to vector<16x64xf32>
    %731 = arith.maximumf %729, %730 : vector<16x64xf32>
    %732 = tpu.iota {dimensions = array<i32: 0>} : vector<16x64xi32>
    %c2_i32_397 = arith.constant 2 : i32
    %c0_i32_398 = arith.constant 0 : i32
    %733 = arith.cmpi eq, %c2_i32_397, %c0_i32_398 : i32
    %c1_i32_399 = arith.constant 1 : i32
    %734 = arith.select %733, %c1_i32_399, %c2_i32_397 : i32
    %735 = vector.broadcast %734 : i32 to vector<16x64xi32>
    %736 = arith.remsi %732, %735 : vector<16x64xi32>
    %c0_i32_400 = arith.constant 0 : i32
    %737 = vector.broadcast %c0_i32_400 : i32 to vector<16x64xi32>
    %738 = arith.cmpi ne, %736, %737 : vector<16x64xi32>
    %c0_i32_401 = arith.constant 0 : i32
    %739 = vector.broadcast %c0_i32_401 : i32 to vector<16x64xi32>
    %740 = arith.cmpi slt, %736, %739 : vector<16x64xi32>
    %c0_i32_402 = arith.constant 0 : i32
    %741 = arith.cmpi slt, %734, %c0_i32_402 : i32
    %742 = vector.broadcast %741 : i1 to vector<16x64xi1>
    %743 = vector.broadcast %742 : vector<16x64xi1> to vector<16x64xi1>
    %744 = arith.xori %740, %743 : vector<16x64xi1>
    %745 = arith.andi %744, %738 : vector<16x64xi1>
    %746 = vector.broadcast %734 : i32 to vector<16x64xi32>
    %747 = arith.addi %736, %746 : vector<16x64xi32>
    %748 = arith.select %745, %747, %736 : vector<16x64xi1>, vector<16x64xi32>
    %c0_i32_403 = arith.constant 0 : i32
    %749 = vector.broadcast %c0_i32_403 : i32 to vector<16x64xi32>
    %750 = arith.cmpi eq, %748, %749 : vector<16x64xi32>
    %c1_i32_404 = arith.constant 1 : i32
    %751 = tpu.dynamic_rotate %731 by %c1_i32_404 dim 0 : vector<16x64xf32>, i32 -> vector<16x64xf32>
    %cst_405 = arith.constant 0.000000e+00 : f32
    %752 = vector.broadcast %cst_405 : f32 to vector<16x64xf32>
    %753 = arith.select %750, %752, %751 : vector<16x64xi1>, vector<16x64xf32>
    %c1_i32_406 = arith.constant 1 : i32
    %754 = vector.broadcast %c1_i32_406 : i32 to vector<16x64xi32>
    %755 = arith.cmpi eq, %748, %754 : vector<16x64xi32>
    %c15_i32_407 = arith.constant 15 : i32
    %756 = tpu.dynamic_rotate %731 by %c15_i32_407 dim 0 : vector<16x64xf32>, i32 -> vector<16x64xf32>
    %cst_408 = arith.constant 0.000000e+00 : f32
    %757 = vector.broadcast %cst_408 : f32 to vector<16x64xf32>
    %758 = arith.select %755, %757, %756 : vector<16x64xi1>, vector<16x64xf32>
    %759 = arith.truncf %753 : vector<16x64xf32> to vector<16x64xbf16>
    %c0_409 = arith.constant 0 : index
    %c0_410 = arith.constant 0 : index
    %c0_411 = arith.constant 0 : index
    %760 = vector.load %arg32[%c0_409, %c0_410, %c0_411] : memref<3x64x64xbf16, #tpu.memory_space<vmem>>, vector<1x64x64xbf16>
    %761 = vector.shape_cast %760 : vector<1x64x64xbf16> to vector<64x64xbf16>
    %cst_412 = arith.constant dense<0.000000e+00> : vector<16x64xf32>
    %762 = tpu.matmul %759, %761, %cst_412 {dimension_numbers = #tpu.dot_dimension_numbers<[1], [0], [0], [1], [0, 0, 1, 1], [], []>} : vector<16x64xbf16>, vector<64x64xbf16>, vector<16x64xf32> -> vector<16x64xf32>
    %763 = arith.truncf %731 : vector<16x64xf32> to vector<16x64xbf16>
    %c1_413 = arith.constant 1 : index
    %c0_414 = arith.constant 0 : index
    %c0_415 = arith.constant 0 : index
    %764 = vector.load %arg32[%c1_413, %c0_414, %c0_415] : memref<3x64x64xbf16, #tpu.memory_space<vmem>>, vector<1x64x64xbf16>
    %765 = vector.shape_cast %764 : vector<1x64x64xbf16> to vector<64x64xbf16>
    %cst_416 = arith.constant dense<0.000000e+00> : vector<16x64xf32>
    %766 = tpu.matmul %763, %765, %cst_416 {dimension_numbers = #tpu.dot_dimension_numbers<[1], [0], [0], [1], [0, 0, 1, 1], [], []>} : vector<16x64xbf16>, vector<64x64xbf16>, vector<16x64xf32> -> vector<16x64xf32>
    %767 = arith.addf %762, %766 : vector<16x64xf32>
    %768 = arith.truncf %758 : vector<16x64xf32> to vector<16x64xbf16>
    %c2_417 = arith.constant 2 : index
    %c0_418 = arith.constant 0 : index
    %c0_419 = arith.constant 0 : index
    %769 = vector.load %arg32[%c2_417, %c0_418, %c0_419] : memref<3x64x64xbf16, #tpu.memory_space<vmem>>, vector<1x64x64xbf16>
    %770 = vector.shape_cast %769 : vector<1x64x64xbf16> to vector<64x64xbf16>
    %cst_420 = arith.constant dense<0.000000e+00> : vector<16x64xf32>
    %771 = tpu.matmul %768, %770, %cst_420 {dimension_numbers = #tpu.dot_dimension_numbers<[1], [0], [0], [1], [0, 0, 1, 1], [], []>} : vector<16x64xbf16>, vector<64x64xbf16>, vector<16x64xf32> -> vector<16x64xf32>
    %772 = arith.addf %767, %771 : vector<16x64xf32>
    %c0_421 = arith.constant 0 : index
    %c0_422 = arith.constant 0 : index
    %773 = vector.load %arg33[%c0_421, %c0_422] : memref<1x64xf32, #tpu.memory_space<vmem>>, vector<1x64xf32>
    %774 = vector.broadcast %773 : vector<1x64xf32> to vector<16x64xf32>
    %775 = arith.addf %772, %774 : vector<16x64xf32>
    %cst_423 = arith.constant 0.000000e+00 : f32
    %776 = vector.broadcast %cst_423 : f32 to vector<16x64xf32>
    %777 = arith.maximumf %775, %776 : vector<16x64xf32>
    %778 = tpu.iota {dimensions = array<i32: 0>} : vector<16x64xi32>
    %c2_i32_424 = arith.constant 2 : i32
    %c0_i32_425 = arith.constant 0 : i32
    %779 = arith.cmpi eq, %c2_i32_424, %c0_i32_425 : i32
    %c1_i32_426 = arith.constant 1 : i32
    %780 = arith.select %779, %c1_i32_426, %c2_i32_424 : i32
    %781 = vector.broadcast %780 : i32 to vector<16x64xi32>
    %782 = arith.remsi %778, %781 : vector<16x64xi32>
    %c0_i32_427 = arith.constant 0 : i32
    %783 = vector.broadcast %c0_i32_427 : i32 to vector<16x64xi32>
    %784 = arith.cmpi ne, %782, %783 : vector<16x64xi32>
    %c0_i32_428 = arith.constant 0 : i32
    %785 = vector.broadcast %c0_i32_428 : i32 to vector<16x64xi32>
    %786 = arith.cmpi slt, %782, %785 : vector<16x64xi32>
    %c0_i32_429 = arith.constant 0 : i32
    %787 = arith.cmpi slt, %780, %c0_i32_429 : i32
    %788 = vector.broadcast %787 : i1 to vector<16x64xi1>
    %789 = vector.broadcast %788 : vector<16x64xi1> to vector<16x64xi1>
    %790 = arith.xori %786, %789 : vector<16x64xi1>
    %791 = arith.andi %790, %784 : vector<16x64xi1>
    %792 = vector.broadcast %780 : i32 to vector<16x64xi32>
    %793 = arith.addi %782, %792 : vector<16x64xi32>
    %794 = arith.select %791, %793, %782 : vector<16x64xi1>, vector<16x64xi32>
    %c0_i32_430 = arith.constant 0 : i32
    %795 = vector.broadcast %c0_i32_430 : i32 to vector<16x64xi32>
    %796 = arith.cmpi eq, %794, %795 : vector<16x64xi32>
    %c1_i32_431 = arith.constant 1 : i32
    %797 = tpu.dynamic_rotate %777 by %c1_i32_431 dim 0 : vector<16x64xf32>, i32 -> vector<16x64xf32>
    %cst_432 = arith.constant 0.000000e+00 : f32
    %798 = vector.broadcast %cst_432 : f32 to vector<16x64xf32>
    %799 = arith.select %796, %798, %797 : vector<16x64xi1>, vector<16x64xf32>
    %c1_i32_433 = arith.constant 1 : i32
    %800 = vector.broadcast %c1_i32_433 : i32 to vector<16x64xi32>
    %801 = arith.cmpi eq, %794, %800 : vector<16x64xi32>
    %c15_i32_434 = arith.constant 15 : i32
    %802 = tpu.dynamic_rotate %777 by %c15_i32_434 dim 0 : vector<16x64xf32>, i32 -> vector<16x64xf32>
    %cst_435 = arith.constant 0.000000e+00 : f32
    %803 = vector.broadcast %cst_435 : f32 to vector<16x64xf32>
    %804 = arith.select %801, %803, %802 : vector<16x64xi1>, vector<16x64xf32>
    %805 = arith.truncf %799 : vector<16x64xf32> to vector<16x64xbf16>
    %c0_436 = arith.constant 0 : index
    %c0_437 = arith.constant 0 : index
    %c0_438 = arith.constant 0 : index
    %806 = vector.load %arg34[%c0_436, %c0_437, %c0_438] : memref<3x64x64xbf16, #tpu.memory_space<vmem>>, vector<1x64x64xbf16>
    %807 = vector.shape_cast %806 : vector<1x64x64xbf16> to vector<64x64xbf16>
    %cst_439 = arith.constant dense<0.000000e+00> : vector<16x64xf32>
    %808 = tpu.matmul %805, %807, %cst_439 {dimension_numbers = #tpu.dot_dimension_numbers<[1], [0], [0], [1], [0, 0, 1, 1], [], []>} : vector<16x64xbf16>, vector<64x64xbf16>, vector<16x64xf32> -> vector<16x64xf32>
    %809 = arith.truncf %777 : vector<16x64xf32> to vector<16x64xbf16>
    %c1_440 = arith.constant 1 : index
    %c0_441 = arith.constant 0 : index
    %c0_442 = arith.constant 0 : index
    %810 = vector.load %arg34[%c1_440, %c0_441, %c0_442] : memref<3x64x64xbf16, #tpu.memory_space<vmem>>, vector<1x64x64xbf16>
    %811 = vector.shape_cast %810 : vector<1x64x64xbf16> to vector<64x64xbf16>
    %cst_443 = arith.constant dense<0.000000e+00> : vector<16x64xf32>
    %812 = tpu.matmul %809, %811, %cst_443 {dimension_numbers = #tpu.dot_dimension_numbers<[1], [0], [0], [1], [0, 0, 1, 1], [], []>} : vector<16x64xbf16>, vector<64x64xbf16>, vector<16x64xf32> -> vector<16x64xf32>
    %813 = arith.addf %808, %812 : vector<16x64xf32>
    %814 = arith.truncf %804 : vector<16x64xf32> to vector<16x64xbf16>
    %c2_444 = arith.constant 2 : index
    %c0_445 = arith.constant 0 : index
    %c0_446 = arith.constant 0 : index
    %815 = vector.load %arg34[%c2_444, %c0_445, %c0_446] : memref<3x64x64xbf16, #tpu.memory_space<vmem>>, vector<1x64x64xbf16>
    %816 = vector.shape_cast %815 : vector<1x64x64xbf16> to vector<64x64xbf16>
    %cst_447 = arith.constant dense<0.000000e+00> : vector<16x64xf32>
    %817 = tpu.matmul %814, %816, %cst_447 {dimension_numbers = #tpu.dot_dimension_numbers<[1], [0], [0], [1], [0, 0, 1, 1], [], []>} : vector<16x64xbf16>, vector<64x64xbf16>, vector<16x64xf32> -> vector<16x64xf32>
    %818 = arith.addf %813, %817 : vector<16x64xf32>
    %c0_448 = arith.constant 0 : index
    %c0_449 = arith.constant 0 : index
    %819 = vector.load %arg35[%c0_448, %c0_449] : memref<1x64xf32, #tpu.memory_space<vmem>>, vector<1x64xf32>
    %820 = vector.broadcast %819 : vector<1x64xf32> to vector<16x64xf32>
    %821 = arith.addf %818, %820 : vector<16x64xf32>
    %822 = arith.addf %729, %821 : vector<16x64xf32>
    %cst_450 = arith.constant 0.000000e+00 : f32
    %823 = vector.broadcast %cst_450 : f32 to vector<16x64xf32>
    %824 = arith.maximumf %822, %823 : vector<16x64xf32>
    %c0_451 = arith.constant 0 : index
    %c0_452 = arith.constant 0 : index
    %825 = vector.load %arg38[%c0_451, %c0_452] : memref<16x64xf32, #tpu.memory_space<vmem>>, vector<16x64xf32>
    tpu.vector_store %arg38[%c0_451, %c0_452], %824 {strides = array<i32>} : memref<16x64xf32, #tpu.memory_space<vmem>>, vector<16x64xf32>,
    return
  }
  func.func @transform_0(%arg0: i32) -> (i32, i32) {
    %c0_i32 = arith.constant 0 : i32
    %c0_i32_0 = arith.constant 0 : i32
    return %arg0, %c0_i32 : i32, i32
  }
  func.func @transform_1(%arg0: i32) -> (i32, i32, i32) {
    %c0_i32 = arith.constant 0 : i32
    %c0_i32_0 = arith.constant 0 : i32
    %c0_i32_1 = arith.constant 0 : i32
    %c0_i32_2 = arith.constant 0 : i32
    return %c0_i32, %c0_i32_0, %c0_i32_1 : i32, i32, i32
  }
  func.func @transform_2(%arg0: i32) -> (i32, i32) {
    %c0_i32 = arith.constant 0 : i32
    %c0_i32_0 = arith.constant 0 : i32
    %c0_i32_1 = arith.constant 0 : i32
    return %c0_i32, %c0_i32_0 : i32, i32
  }
  func.func @transform_3(%arg0: i32) -> (i32, i32, i32) {
    %c0_i32 = arith.constant 0 : i32
    %c0_i32_0 = arith.constant 0 : i32
    %c0_i32_1 = arith.constant 0 : i32
    %c0_i32_2 = arith.constant 0 : i32
    return %c0_i32, %c0_i32_0, %c0_i32_1 : i32, i32, i32
  }
  func.func @transform_4(%arg0: i32) -> (i32, i32) {
    %c0_i32 = arith.constant 0 : i32
    %c0_i32_0 = arith.constant 0 : i32
    %c0_i32_1 = arith.constant 0 : i32
    return %c0_i32, %c0_i32_0 : i32, i32
  }
  func.func @transform_5(%arg0: i32) -> (i32, i32, i32) {
    %c0_i32 = arith.constant 0 : i32
    %c0_i32_0 = arith.constant 0 : i32
    %c0_i32_1 = arith.constant 0 : i32
    %c0_i32_2 = arith.constant 0 : i32
    return %c0_i32, %c0_i32_0, %c0_i32_1 : i32, i32, i32
  }
  func.func @transform_6(%arg0: i32) -> (i32, i32) {
    %c0_i32 = arith.constant 0 : i32
    %c0_i32_0 = arith.constant 0 : i32
    %c0_i32_1 = arith.constant 0 : i32
    return %c0_i32, %c0_i32_0 : i32, i32
  }
  func.func @transform_7(%arg0: i32) -> (i32, i32, i32) {
    %c0_i32 = arith.constant 0 : i32
    %c0_i32_0 = arith.constant 0 : i32
    %c0_i32_1 = arith.constant 0 : i32
    %c0_i32_2 = arith.constant 0 : i32
    return %c0_i32, %c0_i32_0, %c0_i32_1 : i32, i32, i32
  }
  func.func @transform_8(%arg0: i32) -> (i32, i32) {
    %c0_i32 = arith.constant 0 : i32
    %c0_i32_0 = arith.constant 0 : i32
    %c0_i32_1 = arith.constant 0 : i32
    return %c0_i32, %c0_i32_0 : i32, i32
  }
  func.func @transform_9(%arg0: i32) -> (i32, i32, i32) {
    %c0_i32 = arith.constant 0 : i32
    %c0_i32_0 = arith.constant 0 : i32
    %c0_i32_1 = arith.constant 0 : i32
    %c0_i32_2 = arith.constant 0 : i32
    return %c0_i32, %c0_i32_0, %c0_i32_1 : i32, i32, i32
  }
  func.func @transform_10(%arg0: i32) -> (i32, i32) {
    %c0_i32 = arith.constant 0 : i32
    %c0_i32_0 = arith.constant 0 : i32
    %c0_i32_1 = arith.constant 0 : i32
    return %c0_i32, %c0_i32_0 : i32, i32
  }
  func.func @transform_11(%arg0: i32) -> (i32, i32) {
    %c0_i32 = arith.constant 0 : i32
    %c0_i32_0 = arith.constant 0 : i32
    %c0_i32_1 = arith.constant 0 : i32
    return %c0_i32, %c0_i32_0 : i32, i32
  }
  func.func @transform_12(%arg0: i32) -> (i32, i32) {
    %c0_i32 = arith.constant 0 : i32
    %c0_i32_0 = arith.constant 0 : i32
    %c0_i32_1 = arith.constant 0 : i32
    return %c0_i32, %c0_i32_0 : i32, i32
  }
  func.func @transform_13(%arg0: i32) -> (i32, i32, i32) {
    %c0_i32 = arith.constant 0 : i32
    %c0_i32_0 = arith.constant 0 : i32
    %c0_i32_1 = arith.constant 0 : i32
    %c0_i32_2 = arith.constant 0 : i32
    return %c0_i32, %c0_i32_0, %c0_i32_1 : i32, i32, i32
  }
  func.func @transform_14(%arg0: i32) -> (i32, i32) {
    %c0_i32 = arith.constant 0 : i32
    %c0_i32_0 = arith.constant 0 : i32
    %c0_i32_1 = arith.constant 0 : i32
    return %c0_i32, %c0_i32_0 : i32, i32
  }
  func.func @transform_15(%arg0: i32) -> (i32, i32, i32) {
    %c0_i32 = arith.constant 0 : i32
    %c0_i32_0 = arith.constant 0 : i32
    %c0_i32_1 = arith.constant 0 : i32
    %c0_i32_2 = arith.constant 0 : i32
    return %c0_i32, %c0_i32_0, %c0_i32_1 : i32, i32, i32
  }
  func.func @transform_16(%arg0: i32) -> (i32, i32) {
    %c0_i32 = arith.constant 0 : i32
    %c0_i32_0 = arith.constant 0 : i32
    %c0_i32_1 = arith.constant 0 : i32
    return %c0_i32, %c0_i32_0 : i32, i32
  }
  func.func @transform_17(%arg0: i32) -> (i32, i32, i32) {
    %c0_i32 = arith.constant 0 : i32
    %c0_i32_0 = arith.constant 0 : i32
    %c0_i32_1 = arith.constant 0 : i32
    %c0_i32_2 = arith.constant 0 : i32
    return %c0_i32, %c0_i32_0, %c0_i32_1 : i32, i32, i32
  }
  func.func @transform_18(%arg0: i32) -> (i32, i32) {
    %c0_i32 = arith.constant 0 : i32
    %c0_i32_0 = arith.constant 0 : i32
    %c0_i32_1 = arith.constant 0 : i32
    return %c0_i32, %c0_i32_0 : i32, i32
  }
  func.func @transform_19(%arg0: i32) -> (i32, i32, i32) {
    %c0_i32 = arith.constant 0 : i32
    %c0_i32_0 = arith.constant 0 : i32
    %c0_i32_1 = arith.constant 0 : i32
    %c0_i32_2 = arith.constant 0 : i32
    return %c0_i32, %c0_i32_0, %c0_i32_1 : i32, i32, i32
  }
  func.func @transform_20(%arg0: i32) -> (i32, i32) {
    %c0_i32 = arith.constant 0 : i32
    %c0_i32_0 = arith.constant 0 : i32
    %c0_i32_1 = arith.constant 0 : i32
    return %c0_i32, %c0_i32_0 : i32, i32
  }
  func.func @transform_21(%arg0: i32) -> (i32, i32, i32) {
    %c0_i32 = arith.constant 0 : i32
    %c0_i32_0 = arith.constant 0 : i32
    %c0_i32_1 = arith.constant 0 : i32
    %c0_i32_2 = arith.constant 0 : i32
    return %c0_i32, %c0_i32_0, %c0_i32_1 : i32, i32, i32
  }
  func.func @transform_22(%arg0: i32) -> (i32, i32) {
    %c0_i32 = arith.constant 0 : i32
    %c0_i32_0 = arith.constant 0 : i32
    %c0_i32_1 = arith.constant 0 : i32
    return %c0_i32, %c0_i32_0 : i32, i32
  }
  func.func @transform_23(%arg0: i32) -> (i32, i32) {
    %c0_i32 = arith.constant 0 : i32
    %c0_i32_0 = arith.constant 0 : i32
    %c0_i32_1 = arith.constant 0 : i32
    return %c0_i32, %c0_i32_0 : i32, i32
  }
  func.func @transform_24(%arg0: i32) -> (i32, i32) {
    %c0_i32 = arith.constant 0 : i32
    %c0_i32_0 = arith.constant 0 : i32
    %c0_i32_1 = arith.constant 0 : i32
    return %c0_i32, %c0_i32_0 : i32, i32
  }
  func.func @transform_25(%arg0: i32) -> (i32, i32, i32) {
    %c0_i32 = arith.constant 0 : i32
    %c0_i32_0 = arith.constant 0 : i32
    %c0_i32_1 = arith.constant 0 : i32
    %c0_i32_2 = arith.constant 0 : i32
    return %c0_i32, %c0_i32_0, %c0_i32_1 : i32, i32, i32
  }
  func.func @transform_26(%arg0: i32) -> (i32, i32) {
    %c0_i32 = arith.constant 0 : i32
    %c0_i32_0 = arith.constant 0 : i32
    %c0_i32_1 = arith.constant 0 : i32
    return %c0_i32, %c0_i32_0 : i32, i32
  }
  func.func @transform_27(%arg0: i32) -> (i32, i32, i32) {
    %c0_i32 = arith.constant 0 : i32
    %c0_i32_0 = arith.constant 0 : i32
    %c0_i32_1 = arith.constant 0 : i32
    %c0_i32_2 = arith.constant 0 : i32
    return %c0_i32, %c0_i32_0, %c0_i32_1 : i32, i32, i32
  }
  func.func @transform_28(%arg0: i32) -> (i32, i32) {
    %c0_i32 = arith.constant 0 : i32
    %c0_i32_0 = arith.constant 0 : i32
    %c0_i32_1 = arith.constant 0 : i32
    return %c0_i32, %c0_i32_0 : i32, i32
  }
  func.func @transform_29(%arg0: i32) -> (i32, i32, i32) {
    %c0_i32 = arith.constant 0 : i32
    %c0_i32_0 = arith.constant 0 : i32
    %c0_i32_1 = arith.constant 0 : i32
    %c0_i32_2 = arith.constant 0 : i32
    return %c0_i32, %c0_i32_0, %c0_i32_1 : i32, i32, i32
  }
  func.func @transform_30(%arg0: i32) -> (i32, i32) {
    %c0_i32 = arith.constant 0 : i32
    %c0_i32_0 = arith.constant 0 : i32
    %c0_i32_1 = arith.constant 0 : i32
    return %c0_i32, %c0_i32_0 : i32, i32
  }
  func.func @transform_31(%arg0: i32) -> (i32, i32, i32) {
    %c0_i32 = arith.constant 0 : i32
    %c0_i32_0 = arith.constant 0 : i32
    %c0_i32_1 = arith.constant 0 : i32
    %c0_i32_2 = arith.constant 0 : i32
    return %c0_i32, %c0_i32_0, %c0_i32_1 : i32, i32, i32
  }
  func.func @transform_32(%arg0: i32) -> (i32, i32) {
    %c0_i32 = arith.constant 0 : i32
    %c0_i32_0 = arith.constant 0 : i32
    %c0_i32_1 = arith.constant 0 : i32
    return %c0_i32, %c0_i32_0 : i32, i32
  }
  func.func @transform_33(%arg0: i32) -> (i32, i32, i32) {
    %c0_i32 = arith.constant 0 : i32
    %c0_i32_0 = arith.constant 0 : i32
    %c0_i32_1 = arith.constant 0 : i32
    %c0_i32_2 = arith.constant 0 : i32
    return %c0_i32, %c0_i32_0, %c0_i32_1 : i32, i32, i32
  }
  func.func @transform_34(%arg0: i32) -> (i32, i32) {
    %c0_i32 = arith.constant 0 : i32
    %c0_i32_0 = arith.constant 0 : i32
    %c0_i32_1 = arith.constant 0 : i32
    return %c0_i32, %c0_i32_0 : i32, i32
  }
  func.func @transform_35(%arg0: i32) -> (i32, i32) {
    %c0_i32 = arith.constant 0 : i32
    %c0_i32_0 = arith.constant 0 : i32
    %c0_i32_1 = arith.constant 0 : i32
    return %c0_i32, %c0_i32_0 : i32, i32
  }
  func.func @transform_36(%arg0: i32) -> (i32, i32) {
    %c0_i32 = arith.constant 0 : i32
    %c0_i32_0 = arith.constant 0 : i32
    %c0_i32_1 = arith.constant 0 : i32
    return %c0_i32, %c0_i32_0 : i32, i32
  }
  func.func @transform_37(%arg0: i32) -> (i32, i32) {
    %c0_i32 = arith.constant 0 : i32
    %c0_i32_0 = arith.constant 0 : i32
    return %arg0, %c0_i32 : i32, i32
  }
}

</mosaic_0001>

<llo_original>
// kernel: _lambda_.1
$region0: #{_lambda_.1}
  #allocation0 [shape = 'u32[]', space=smem, size = 0x4, offset = 0x4, fixed_abs, tag = 'smem constant byte address 0x4 - core index']
  #allocation1 [shape = 'u32[144,128]{1,0:T(1,128)}', space=vmem, size = 0x12000, scoped, tag = 'internal scratch']
  %s0 = inlined_call_operand.smem [shape: u32[38], index: -1, kind: input, shape index: {}]
  %s1 = sld [smem:[%s0]]
  %s2 = scalar_lea.smem %s0, 1
  %s3 = sld [smem:[%s2]]
  %s4 = scalar_lea.smem %s0, 2
  %s5 = sld [smem:[%s4]]
  %s6 = scalar_lea.smem %s0, 3
  %s7 = sld [smem:[%s6]]
  %s8 = scalar_lea.smem %s0, 4
  %s9 = sld [smem:[%s8]]
  %s10 = scalar_lea.smem %s0, 5
  %s11 = sld [smem:[%s10]]
  %s12 = scalar_lea.smem %s0, 6
  %s13 = sld [smem:[%s12]]
  %s14 = scalar_lea.smem %s0, 7
  %s15 = sld [smem:[%s14]]
  %s16 = scalar_lea.smem %s0, 8
  %s17 = sld [smem:[%s16]]
  %s18 = scalar_lea.smem %s0, 9
  %s19 = sld [smem:[%s18]]
  %s20 = scalar_lea.smem %s0, 10
  %s21 = sld [smem:[%s20]]
  %s22 = scalar_lea.smem %s0, 11
  %s23 = sld [smem:[%s22]]
  %s24 = scalar_lea.smem %s0, 12
  %s25 = sld [smem:[%s24]]
  %s26 = scalar_lea.smem %s0, 13
  %s27 = sld [smem:[%s26]]
  %s28 = scalar_lea.smem %s0, 14
  %s29 = sld [smem:[%s28]]
  %s30 = scalar_lea.smem %s0, 15
  %s31 = sld [smem:[%s30]]
  %s32 = scalar_lea.smem %s0, 16
  %s33 = sld [smem:[%s32]]
  %s34 = scalar_lea.smem %s0, 17
  %s35 = sld [smem:[%s34]]
  %s36 = scalar_lea.smem %s0, 18
  %s37 = sld [smem:[%s36]]
  %s38 = scalar_lea.smem %s0, 19
  %s39 = sld [smem:[%s38]]
  %s40 = scalar_lea.smem %s0, 20
  %s41 = sld [smem:[%s40]]
  %s42 = scalar_lea.smem %s0, 21
  %s43 = sld [smem:[%s42]]
  %s44 = scalar_lea.smem %s0, 22
  %s45 = sld [smem:[%s44]]
  %s46 = scalar_lea.smem %s0, 23
  %s47 = sld [smem:[%s46]]
  %s48 = scalar_lea.smem %s0, 24
  %s49 = sld [smem:[%s48]]
  %s50 = scalar_lea.smem %s0, 25
  %s51 = sld [smem:[%s50]]
  %s52 = scalar_lea.smem %s0, 26
  %s53 = sld [smem:[%s52]]
  %s54 = scalar_lea.smem %s0, 27
  %s55 = sld [smem:[%s54]]
  %s56 = scalar_lea.smem %s0, 28
  %s57 = sld [smem:[%s56]]
  %s58 = scalar_lea.smem %s0, 29
  %s59 = sld [smem:[%s58]]
  %s60 = scalar_lea.smem %s0, 30
  %s61 = sld [smem:[%s60]]
  %s62 = scalar_lea.smem %s0, 31
  %s63 = sld [smem:[%s62]]
  %s64 = scalar_lea.smem %s0, 32
  %s65 = sld [smem:[%s64]]
  %s66 = scalar_lea.smem %s0, 33
  %s67 = sld [smem:[%s66]]
  %s68 = scalar_lea.smem %s0, 34
  %s69 = sld [smem:[%s68]]
  %s70 = scalar_lea.smem %s0, 35
  %s71 = sld [smem:[%s70]]
  %s72 = scalar_lea.smem %s0, 36
  %s73 = sld [smem:[%s72]]
  %s74 = scalar_lea.smem %s0, 37
  %s75 = sld [smem:[%s74]]
  %s76 = sld [smem:[#allocation0]]
  $region230: #{_lambda_.1} parent=0
    _
  %s78 = ssub.s32 1, %s76
  %s79 = scalar_select 0, %s78, %s76
  $region1: #{_lambda_.1} parent=0
    #allocation2 [shape = 'u8[98304]{0}', space=vmem, size = 0x18000, scoped, tag = 'input window, operand 1, single buffered']
    #allocation3 [shape = 's32[1]{0}', space=sflag, size = 0x4, scoped, tag = 'scoped memory for _lambda_.1']
    #allocation4 [shape = 'u8[1024]{0}', space=vmem, size = 0x400, scoped, tag = 'input window, operand 2, single buffered']
    #allocation5 [shape = 's32[1]{0}', space=sflag, size = 0x4, scoped, tag = 'scoped memory for _lambda_.1']
    #allocation6 [shape = 'u8[98304]{0}', space=vmem, size = 0x18000, scoped, tag = 'input window, operand 3, single buffered']
    #allocation7 [shape = 'u8[512]{0}', space=vmem, size = 0x400, scoped, tag = 'input window, operand 4, single buffered']
    #allocation8 [shape = 's32[1]{0}', space=sflag, size = 0x4, scoped, tag = 'scoped memory for _lambda_.1']
    #allocation9 [shape = 'u8[98304]{0}', space=vmem, size = 0x18000, scoped, tag = 'input window, operand 5, single buffered']
    #allocation10 [shape = 'u8[512]{0}', space=vmem, size = 0x400, scoped, tag = 'input window, operand 6, single buffered']
    #allocation11 [shape = 's32[1]{0}', space=sflag, size = 0x4, scoped, tag = 'scoped memory for _lambda_.1']
    #allocation12 [shape = 'u8[98304]{0}', space=vmem, size = 0x18000, scoped, tag = 'input window, operand 7, single buffered']
    #allocation13 [shape = 'u8[512]{0}', space=vmem, size = 0x400, scoped, tag = 'input window, operand 8, single buffered']
    #allocation14 [shape = 's32[1]{0}', space=sflag, size = 0x4, scoped, tag = 'scoped memory for _lambda_.1']
    #allocation15 [shape = 'u8[512]{0}', space=vmem, size = 0x400, scoped, tag = 'input window, operand 10, single buffered']
    #allocation16 [shape = 'u8[16384]{0}', space=vmem, size = 0x4000, scoped, tag = 'input window, operand 11, single buffered']
    #allocation17 [shape = 's32[1]{0}', space=sflag, size = 0x4, scoped, tag = 'scoped memory for _lambda_.1']
    #allocation18 [shape = 'u8[65536]{0}', space=vmem, size = 0x10000, scoped, tag = 'input window, operand 12, single buffered']
    #allocation19 [shape = 'u8[512]{0}', space=vmem, size = 0x400, scoped, tag = 'input window, operand 16, single buffered']
    #allocation20 [shape = 's32[1]{0}', space=sflag, size = 0x4, scoped, tag = 'scoped memory for _lambda_.1']
    #allocation21 [shape = 'u8[512]{0}', space=vmem, size = 0x400, scoped, tag = 'input window, operand 18, single buffered']
    #allocation22 [shape = 'u8[49152]{0}', space=vmem, size = 0xc000, scoped, tag = 'input window, operand 27, single buffered']
    #allocation23 [shape = 's32[1]{0}', space=sflag, size = 0x4, scoped, tag = 'scoped memory for _lambda_.1']
    #allocation24 [shape = 'u8[49152]{0}', space=vmem, size = 0xc000, scoped, tag = 'input window, operand 29, single buffered']
    #allocation25 [shape = 'u8[49152]{0}', space=vmem, size = 0xc000, scoped, tag = 'input window, operand 31, single buffered']
    #allocation26 [shape = 's32[1]{0}', space=sflag, size = 0x4, scoped, tag = 'scoped memory for _lambda_.1']
    #allocation27 [shape = 'u8[49152]{0}', space=vmem, size = 0xc000, scoped, tag = 'input window, operand 33, single buffered']
    #allocation28 [shape = 'u8[32768]{0}', space=vmem, size = 0x8000, scoped, tag = 'input window, operand 36, single buffered']
    #allocation29 [shape = 's32[1]{0}', space=sflag, size = 0x4, scoped, tag = 'scoped memory for _lambda_.1']
    %80 = vsyncpa [#allocation3], 0
    %81 = vsyncpa [#allocation5], 0
    %82 = vsyncpa [#allocation8], 0
    %83 = vsyncpa [#allocation11], 0
    %84 = vsyncpa [#allocation14], 0
    %85 = vsyncpa [#allocation17], 0
    %86 = vsyncpa [#allocation20], 0
    %87 = vsyncpa [#allocation23], 0
    %88 = vsyncpa [#allocation26], 0
    %89 = vsyncpa [#allocation29], 0
    // Predicated region
    $region2: #{_lambda_.1} parent=1 // pred_check
      _
    $region3: #{_lambda_.1} parent=1 // pred_check_branch
      %91 = sbr.rel (0) target = $region5
    $region4: #{_lambda_.1} parent=1 // pred_region
      _
    $region5: #{_lambda_.1} parent=1 // pred_fallthru
      _
    // Predicated region
    $region6: #{_lambda_.1} parent=1 // pred_check
      _
    $region7: #{_lambda_.1} parent=1 // pred_check_branch
      %93 = sbr.rel (0) target = $region9
    $region8: #{_lambda_.1} parent=1 // pred_region
      %s95 = ssub.s32 3072, 3072
      %96 = vsyncadd [#allocation3], %s95
      %s97 = sshll.u32 [#allocation2], 4
      %s98 = int_to_ptr.vmem [resolvable:$true] %s97
      %103 = dma.hbm_to_vmem [thread:$0]  %s3, 3072, %s98, [#allocation3], 128, 128, 8
    $region9: #{_lambda_.1} parent=1 // pred_fallthru
      _
    // Predicated region
    $region10: #{_lambda_.1} parent=1 // pred_check
      _
    $region11: #{_lambda_.1} parent=1 // pred_check_branch
      %105 = sbr.rel (0) target = $region13
    $region12: #{_lambda_.1} parent=1 // pred_region
      %s107 = ssub.s32 32, 32
      %108 = vsyncadd [#allocation5], %s107
      %s110 = sshll.u32 [#allocation4], 4
      %s111 = int_to_ptr.vmem [resolvable:$true] %s110
      %113 = dma.hbm_to_vmem [thread:$0]  %s5, 32, %s111, [#allocation5]
    $region13: #{_lambda_.1} parent=1 // pred_fallthru
      _
    // Predicated region
    $region14: #{_lambda_.1} parent=1 // pred_check
      _
    $region15: #{_lambda_.1} parent=1 // pred_check_branch
      %115 = sbr.rel (0) target = $region17
    $region16: #{_lambda_.1} parent=1 // pred_region
      %s117 = ssub.s32 3072, 3072
      %118 = vsyncadd [#allocation5], %s117
      %s119 = sshll.u32 [#allocation6], 4
      %s120 = int_to_ptr.vmem [resolvable:$true] %s119
      %125 = dma.hbm_to_vmem [thread:$0]  %s7, 3072, %s120, [#allocation5], 64, 64, 4
    $region17: #{_lambda_.1} parent=1 // pred_fallthru
      _
    // Predicated region
    $region18: #{_lambda_.1} parent=1 // pred_check
      _
    $region19: #{_lambda_.1} parent=1 // pred_check_branch
      %127 = sbr.rel (0) target = $region21
    $region20: #{_lambda_.1} parent=1 // pred_region
      %s129 = ssub.s32 16, 16
      %130 = vsyncadd [#allocation8], %s129
      %s132 = sshll.u32 [#allocation7], 4
      %s133 = int_to_ptr.vmem [resolvable:$true] %s132
      %135 = dma.hbm_to_vmem [thread:$0]  %s9, 16, %s133, [#allocation8]
    $region21: #{_lambda_.1} parent=1 // pred_fallthru
      _
    // Predicated region
    $region22: #{_lambda_.1} parent=1 // pred_check
      _
    $region23: #{_lambda_.1} parent=1 // pred_check_branch
      %137 = sbr.rel (0) target = $region25
    $region24: #{_lambda_.1} parent=1 // pred_region
      %s139 = ssub.s32 3072, 3072
      %140 = vsyncadd [#allocation8], %s139
      %s141 = sshll.u32 [#allocation9], 4
      %s142 = int_to_ptr.vmem [resolvable:$true] %s141
      %147 = dma.hbm_to_vmem [thread:$0]  %s11, 3072, %s142, [#allocation8], 64, 64, 4
    $region25: #{_lambda_.1} parent=1 // pred_fallthru
      _
    // Predicated region
    $region26: #{_lambda_.1} parent=1 // pred_check
      _
    $region27: #{_lambda_.1} parent=1 // pred_check_branch
      %149 = sbr.rel (0) target = $region29
    $region28: #{_lambda_.1} parent=1 // pred_region
      %s151 = ssub.s32 16, 16
      %152 = vsyncadd [#allocation11], %s151
      %s154 = sshll.u32 [#allocation10], 4
      %s155 = int_to_ptr.vmem [resolvable:$true] %s154
      %157 = dma.hbm_to_vmem [thread:$0]  %s13, 16, %s155, [#allocation11]
    $region29: #{_lambda_.1} parent=1 // pred_fallthru
      _
    // Predicated region
    $region30: #{_lambda_.1} parent=1 // pred_check
      _
    $region31: #{_lambda_.1} parent=1 // pred_check_branch
      %159 = sbr.rel (0) target = $region33
    $region32: #{_lambda_.1} parent=1 // pred_region
      %s161 = ssub.s32 3072, 3072
      %162 = vsyncadd [#allocation11], %s161
      %s163 = sshll.u32 [#allocation12], 4
      %s164 = int_to_ptr.vmem [resolvable:$true] %s163
      %169 = dma.hbm_to_vmem [thread:$0]  %s15, 3072, %s164, [#allocation11], 64, 64, 4
    $region33: #{_lambda_.1} parent=1 // pred_fallthru
      _
    // Predicated region
    $region34: #{_lambda_.1} parent=1 // pred_check
      _
    $region35: #{_lambda_.1} parent=1 // pred_check_branch
      %171 = sbr.rel (0) target = $region37
    $region36: #{_lambda_.1} parent=1 // pred_region
      %s173 = ssub.s32 16, 16
      %174 = vsyncadd [#allocation14], %s173
      %s176 = sshll.u32 [#allocation13], 4
      %s177 = int_to_ptr.vmem [resolvable:$true] %s176
      %179 = dma.hbm_to_vmem [thread:$0]  %s17, 16, %s177, [#allocation14]
    $region37: #{_lambda_.1} parent=1 // pred_fallthru
      _
    // Predicated region
    $region38: #{_lambda_.1} parent=1 // pred_check
      _
    $region39: #{_lambda_.1} parent=1 // pred_check_branch
      %181 = sbr.rel (0) target = $region41
    $region40: #{_lambda_.1} parent=1 // pred_region
      _
    $region41: #{_lambda_.1} parent=1 // pred_fallthru
      _
    // Predicated region
    $region42: #{_lambda_.1} parent=1 // pred_check
      _
    $region43: #{_lambda_.1} parent=1 // pred_check_branch
      %183 = sbr.rel (0) target = $region45
    $region44: #{_lambda_.1} parent=1 // pred_region
      %s185 = ssub.s32 16, 16
      %186 = vsyncadd [#allocation14], %s185
      %s188 = sshll.u32 [#allocation15], 4
      %s189 = int_to_ptr.vmem [resolvable:$true] %s188
      %191 = dma.hbm_to_vmem [thread:$0]  %s21, 16, %s189, [#allocation14]
    $region45: #{_lambda_.1} parent=1 // pred_fallthru
      _
    // Predicated region
    $region46: #{_lambda_.1} parent=1 // pred_check
      _
    $region47: #{_lambda_.1} parent=1 // pred_check_branch
      %193 = sbr.rel (0) target = $region49
    $region48: #{_lambda_.1} parent=1 // pred_region
      %s195 = ssub.s32 512, 512
      %196 = vsyncadd [#allocation17], %s195
      %s197 = sshll.u32 [#allocation16], 4
      %s198 = int_to_ptr.vmem [resolvable:$true] %s197
      %203 = dma.hbm_to_vmem [thread:$0]  %s23, 512, %s198, [#allocation17], 64, 64, 4
    $region49: #{_lambda_.1} parent=1 // pred_fallthru
      _
    // Predicated region
    $region50: #{_lambda_.1} parent=1 // pred_check
      _
    $region51: #{_lambda_.1} parent=1 // pred_check_branch
      %205 = sbr.rel (0) target = $region53
    $region52: #{_lambda_.1} parent=1 // pred_region
      %s207 = ssub.s32 2048, 2048
      %208 = vsyncadd [#allocation17], %s207
      %s209 = sshll.u32 [#allocation18], 4
      %s210 = int_to_ptr.vmem [resolvable:$true] %s209
      %215 = dma.hbm_to_vmem [thread:$0]  %s25, 2048, %s210, [#allocation17], 64, 64, 4
    $region53: #{_lambda_.1} parent=1 // pred_fallthru
      _
    // Predicated region
    $region54: #{_lambda_.1} parent=1 // pred_check
      _
    $region55: #{_lambda_.1} parent=1 // pred_check_branch
      %217 = sbr.rel (0) target = $region57
    $region56: #{_lambda_.1} parent=1 // pred_region
      _
    $region57: #{_lambda_.1} parent=1 // pred_fallthru
      _
    // Predicated region
    $region58: #{_lambda_.1} parent=1 // pred_check
      _
    $region59: #{_lambda_.1} parent=1 // pred_check_branch
      %219 = sbr.rel (0) target = $region61
    $region60: #{_lambda_.1} parent=1 // pred_region
      _
    $region61: #{_lambda_.1} parent=1 // pred_fallthru
      _
    // Predicated region
    $region62: #{_lambda_.1} parent=1 // pred_check
      _
    $region63: #{_lambda_.1} parent=1 // pred_check_branch
      %221 = sbr.rel (0) target = $region65
    $region64: #{_lambda_.1} parent=1 // pred_region
      _
    $region65: #{_lambda_.1} parent=1 // pred_fallthru
      _
    // Predicated region
    $region66: #{_lambda_.1} parent=1 // pred_check
      _
    $region67: #{_lambda_.1} parent=1 // pred_check_branch
      %223 = sbr.rel (0) target = $region69
    $region68: #{_lambda_.1} parent=1 // pred_region
      %s225 = ssub.s32 16, 16
      %226 = vsyncadd [#allocation20], %s225
      %s228 = sshll.u32 [#allocation19], 4
      %s229 = int_to_ptr.vmem [resolvable:$true] %s228
      %231 = dma.hbm_to_vmem [thread:$0]  %s33, 16, %s229, [#allocation20]
    $region69: #{_lambda_.1} parent=1 // pred_fallthru
      _
    // Predicated region
    $region70: #{_lambda_.1} parent=1 // pred_check
      _
    $region71: #{_lambda_.1} parent=1 // pred_check_branch
      %233 = sbr.rel (0) target = $region73
    $region72: #{_lambda_.1} parent=1 // pred_region
      _
    $region73: #{_lambda_.1} parent=1 // pred_fallthru
      _
    // Predicated region
    $region74: #{_lambda_.1} parent=1 // pred_check
      _
    $region75: #{_lambda_.1} parent=1 // pred_check_branch
      %235 = sbr.rel (0) target = $region77
    $region76: #{_lambda_.1} parent=1 // pred_region
      %s237 = ssub.s32 16, 16
      %238 = vsyncadd [#allocation20], %s237
      %s240 = sshll.u32 [#allocation21], 4
      %s241 = int_to_ptr.vmem [resolvable:$true] %s240
      %243 = dma.hbm_to_vmem [thread:$0]  %s37, 16, %s241, [#allocation20]
    $region77: #{_lambda_.1} parent=1 // pred_fallthru
      _
    // Predicated region
    $region78: #{_lambda_.1} parent=1 // pred_check
      _
    $region79: #{_lambda_.1} parent=1 // pred_check_branch
      %245 = sbr.rel (0) target = $region81
    $region80: #{_lambda_.1} parent=1 // pred_region
      _
    $region81: #{_lambda_.1} parent=1 // pred_fallthru
      _
    // Predicated region
    $region82: #{_lambda_.1} parent=1 // pred_check
      _
    $region83: #{_lambda_.1} parent=1 // pred_check_branch
      %247 = sbr.rel (0) target = $region85
    $region84: #{_lambda_.1} parent=1 // pred_region
      _
    $region85: #{_lambda_.1} parent=1 // pred_fallthru
      _
    // Predicated region
    $region86: #{_lambda_.1} parent=1 // pred_check
      _
    $region87: #{_lambda_.1} parent=1 // pred_check_branch
      %249 = sbr.rel (0) target = $region89
    $region88: #{_lambda_.1} parent=1 // pred_region
      _
    $region89: #{_lambda_.1} parent=1 // pred_fallthru
      _
    // Predicated region
    $region90: #{_lambda_.1} parent=1 // pred_check
      _
    $region91: #{_lambda_.1} parent=1 // pred_check_branch
      %251 = sbr.rel (0) target = $region93
    $region92: #{_lambda_.1} parent=1 // pred_region
      _
    $region93: #{_lambda_.1} parent=1 // pred_fallthru
      _
    // Predicated region
    $region94: #{_lambda_.1} parent=1 // pred_check
      _
    $region95: #{_lambda_.1} parent=1 // pred_check_branch
      %253 = sbr.rel (0) target = $region97
    $region96: #{_lambda_.1} parent=1 // pred_region
      _
    $region97: #{_lambda_.1} parent=1 // pred_fallthru
      _
    // Predicated region
    $region98: #{_lambda_.1} parent=1 // pred_check
      _
    $region99: #{_lambda_.1} parent=1 // pred_check_branch
      %255 = sbr.rel (0) target = $region101
    $region100: #{_lambda_.1} parent=1 // pred_region
      _
    $region101: #{_lambda_.1} parent=1 // pred_fallthru
      _
    // Predicated region
    $region102: #{_lambda_.1} parent=1 // pred_check
      _
    $region103: #{_lambda_.1} parent=1 // pred_check_branch
      %257 = sbr.rel (0) target = $region105
    $region104: #{_lambda_.1} parent=1 // pred_region
      _
    $region105: #{_lambda_.1} parent=1 // pred_fallthru
      _
    // Predicated region
    $region106: #{_lambda_.1} parent=1 // pred_check
      _
    $region107: #{_lambda_.1} parent=1 // pred_check_branch
      %259 = sbr.rel (0) target = $region109
    $region108: #{_lambda_.1} parent=1 // pred_region
      _
    $region109: #{_lambda_.1} parent=1 // pred_fallthru
      _
    // Predicated region
    $region110: #{_lambda_.1} parent=1 // pred_check
      _
    $region111: #{_lambda_.1} parent=1 // pred_check_branch
      %261 = sbr.rel (0) target = $region113
    $region112: #{_lambda_.1} parent=1 // pred_region
      %s263 = ssub.s32 1536, 1536
      %264 = vsyncadd [#allocation23], %s263
      %s265 = sshll.u32 [#allocation22], 4
      %s266 = int_to_ptr.vmem [resolvable:$true] %s265
      %271 = dma.hbm_to_vmem [thread:$0]  %s55, 1536, %s266, [#allocation23], 64, 64, 4
    $region113: #{_lambda_.1} parent=1 // pred_fallthru
      _
    // Predicated region
    $region114: #{_lambda_.1} parent=1 // pred_check
      _
    $region115: #{_lambda_.1} parent=1 // pred_check_branch
      %273 = sbr.rel (0) target = $region117
    $region116: #{_lambda_.1} parent=1 // pred_region
      _
    $region117: #{_lambda_.1} parent=1 // pred_fallthru
      _
    // Predicated region
    $region118: #{_lambda_.1} parent=1 // pred_check
      _
    $region119: #{_lambda_.1} parent=1 // pred_check_branch
      %275 = sbr.rel (0) target = $region121
    $region120: #{_lambda_.1} parent=1 // pred_region
      %s277 = ssub.s32 1536, 1536
      %278 = vsyncadd [#allocation23], %s277
      %s279 = sshll.u32 [#allocation24], 4
      %s280 = int_to_ptr.vmem [resolvable:$true] %s279
      %285 = dma.hbm_to_vmem [thread:$0]  %s59, 1536, %s280, [#allocation23], 64, 64, 4
    $region121: #{_lambda_.1} parent=1 // pred_fallthru
      _
    // Predicated region
    $region122: #{_lambda_.1} parent=1 // pred_check
      _
    $region123: #{_lambda_.1} parent=1 // pred_check_branch
      %287 = sbr.rel (0) target = $region125
    $region124: #{_lambda_.1} parent=1 // pred_region
      _
    $region125: #{_lambda_.1} parent=1 // pred_fallthru
      _
    // Predicated region
    $region126: #{_lambda_.1} parent=1 // pred_check
      _
    $region127: #{_lambda_.1} parent=1 // pred_check_branch
      %289 = sbr.rel (0) target = $region129
    $region128: #{_lambda_.1} parent=1 // pred_region
      %s291 = ssub.s32 1536, 1536
      %292 = vsyncadd [#allocation26], %s291
      %s293 = sshll.u32 [#allocation25], 4
      %s294 = int_to_ptr.vmem [resolvable:$true] %s293
      %299 = dma.hbm_to_vmem [thread:$0]  %s63, 1536, %s294, [#allocation26], 64, 64, 4
    $region129: #{_lambda_.1} parent=1 // pred_fallthru
      _
    // Predicated region
    $region130: #{_lambda_.1} parent=1 // pred_check
      _
    $region131: #{_lambda_.1} parent=1 // pred_check_branch
      %301 = sbr.rel (0) target = $region133
    $region132: #{_lambda_.1} parent=1 // pred_region
      _
    $region133: #{_lambda_.1} parent=1 // pred_fallthru
      _
    // Predicated region
    $region134: #{_lambda_.1} parent=1 // pred_check
      _
    $region135: #{_lambda_.1} parent=1 // pred_check_branch
      %303 = sbr.rel (0) target = $region137
    $region136: #{_lambda_.1} parent=1 // pred_region
      %s305 = ssub.s32 1536, 1536
      %306 = vsyncadd [#allocation26], %s305
      %s307 = sshll.u32 [#allocation27], 4
      %s308 = int_to_ptr.vmem [resolvable:$true] %s307
      %313 = dma.hbm_to_vmem [thread:$0]  %s67, 1536, %s308, [#allocation26], 64, 64, 4
    $region137: #{_lambda_.1} parent=1 // pred_fallthru
      _
    // Predicated region
    $region138: #{_lambda_.1} parent=1 // pred_check
      _
    $region139: #{_lambda_.1} parent=1 // pred_check_branch
      %315 = sbr.rel (0) target = $region141
    $region140: #{_lambda_.1} parent=1 // pred_region
      _
    $region141: #{_lambda_.1} parent=1 // pred_fallthru
      _
    // Predicated region
    $region142: #{_lambda_.1} parent=1 // pred_check
      _
    $region143: #{_lambda_.1} parent=1 // pred_check_branch
      %317 = sbr.rel (0) target = $region145
    $region144: #{_lambda_.1} parent=1 // pred_region
      _
    $region145: #{_lambda_.1} parent=1 // pred_fallthru
      _
    // Predicated region
    $region146: #{_lambda_.1} parent=1 // pred_check
      _
    $region147: #{_lambda_.1} parent=1 // pred_check_branch
      %319 = sbr.rel (0) target = $region149
    $region148: #{_lambda_.1} parent=1 // pred_region
      %s321 = ssub.s32 1024, 1024
      %322 = vsyncadd [#allocation29], %s321
      %s323 = sshll.u32 [#allocation28], 4
      %s324 = int_to_ptr.vmem [resolvable:$true] %s323
      %329 = dma.hbm_to_vmem [thread:$0]  %s73, 1024, %s324, [#allocation29], 64, 64, 4
    $region149: #{_lambda_.1} parent=1 // pred_fallthru
      _
    // Predicated region
    $region150: #{_lambda_.1} parent=1 // pred_check
      _
    $region151: #{_lambda_.1} parent=1 // pred_check_branch
      %331 = sbr.rel (0) target = $region153
    $region152: #{_lambda_.1} parent=1 // pred_region
      %332 = dma.done [#allocation3], 3072
    $region153: #{_lambda_.1} parent=1 // pred_fallthru
      _
    // Predicated region
    $region154: #{_lambda_.1} parent=1 // pred_check
      _
    $region155: #{_lambda_.1} parent=1 // pred_check_branch
      %334 = sbr.rel (0) target = $region157
    $region156: #{_lambda_.1} parent=1 // pred_region
      %335 = dma.done [#allocation5], 32
    $region157: #{_lambda_.1} parent=1 // pred_fallthru
      _
    // Predicated region
    $region158: #{_lambda_.1} parent=1 // pred_check
      _
    $region159: #{_lambda_.1} parent=1 // pred_check_branch
      %337 = sbr.rel (0) target = $region161
    $region160: #{_lambda_.1} parent=1 // pred_region
      %338 = dma.done [#allocation5], 3072
    $region161: #{_lambda_.1} parent=1 // pred_fallthru
      _
    // Predicated region
    $region162: #{_lambda_.1} parent=1 // pred_check
      _
    $region163: #{_lambda_.1} parent=1 // pred_check_branch
      %340 = sbr.rel (0) target = $region165
    $region164: #{_lambda_.1} parent=1 // pred_region
      %341 = dma.done [#allocation8], 16
    $region165: #{_lambda_.1} parent=1 // pred_fallthru
      _
    // Predicated region
    $region166: #{_lambda_.1} parent=1 // pred_check
      _
    $region167: #{_lambda_.1} parent=1 // pred_check_branch
      %343 = sbr.rel (0) target = $region169
    $region168: #{_lambda_.1} parent=1 // pred_region
      %344 = dma.done [#allocation8], 3072
    $region169: #{_lambda_.1} parent=1 // pred_fallthru
      _
    // Predicated region
    $region170: #{_lambda_.1} parent=1 // pred_check
      _
    $region171: #{_lambda_.1} parent=1 // pred_check_branch
      %346 = sbr.rel (0) target = $region173
    $region172: #{_lambda_.1} parent=1 // pred_region
      %347 = dma.done [#allocation11], 16
    $region173: #{_lambda_.1} parent=1 // pred_fallthru
      _
    // Predicated region
    $region174: #{_lambda_.1} parent=1 // pred_check
      _
    $region175: #{_lambda_.1} parent=1 // pred_check_branch
      %349 = sbr.rel (0) target = $region177
    $region176: #{_lambda_.1} parent=1 // pred_region
      %350 = dma.done [#allocation11], 3072
    $region177: #{_lambda_.1} parent=1 // pred_fallthru
      _
    // Predicated region
    $region178: #{_lambda_.1} parent=1 // pred_check
      _
    $region179: #{_lambda_.1} parent=1 // pred_check_branch
      %352 = sbr.rel (0) target = $region181
    $region180: #{_lambda_.1} parent=1 // pred_region
      %353 = dma.done [#allocation14], 16
    $region181: #{_lambda_.1} parent=1 // pred_fallthru
      _
    // Predicated region
    $region182: #{_lambda_.1} parent=1 // pred_check
      _
    $region183: #{_lambda_.1} parent=1 // pred_check_branch
      %355 = sbr.rel (0) target = $region185
    $region184: #{_lambda_.1} parent=1 // pred_region
      %356 = dma.done [#allocation14], 16
    $region185: #{_lambda_.1} parent=1 // pred_fallthru
      _
    // Predicated region
    $region186: #{_lambda_.1} parent=1 // pred_check
      _
    $region187: #{_lambda_.1} parent=1 // pred_check_branch
      %358 = sbr.rel (0) target = $region189
    $region188: #{_lambda_.1} parent=1 // pred_region
      %359 = dma.done [#allocation17], 512
    $region189: #{_lambda_.1} parent=1 // pred_fallthru
      _
    // Predicated region
    $region190: #{_lambda_.1} parent=1 // pred_check
      _
    $region191: #{_lambda_.1} parent=1 // pred_check_branch
      %361 = sbr.rel (0) target = $region193
    $region192: #{_lambda_.1} parent=1 // pred_region
      %362 = dma.done [#allocation17], 2048
    $region193: #{_lambda_.1} parent=1 // pred_fallthru
      _
    // Predicated region
    $region194: #{_lambda_.1} parent=1 // pred_check
      _
    $region195: #{_lambda_.1} parent=1 // pred_check_branch
      %364 = sbr.rel (0) target = $region197
    $region196: #{_lambda_.1} parent=1 // pred_region
      %365 = dma.done [#allocation20], 16
    $region197: #{_lambda_.1} parent=1 // pred_fallthru
      _
    // Predicated region
    $region198: #{_lambda_.1} parent=1 // pred_check
      _
    $region199: #{_lambda_.1} parent=1 // pred_check_branch
      %367 = sbr.rel (0) target = $region201
    $region200: #{_lambda_.1} parent=1 // pred_region
      %368 = dma.done [#allocation20], 16
    $region201: #{_lambda_.1} parent=1 // pred_fallthru
      _
    // Predicated region
    $region202: #{_lambda_.1} parent=1 // pred_check
      _
    $region203: #{_lambda_.1} parent=1 // pred_check_branch
      %370 = sbr.rel (0) target = $region205
    $region204: #{_lambda_.1} parent=1 // pred_region
      %371 = dma.done [#allocation23], 1536
    $region205: #{_lambda_.1} parent=1 // pred_fallthru
      _
    // Predicated region
    $region206: #{_lambda_.1} parent=1 // pred_check
      _
    $region207: #{_lambda_.1} parent=1 // pred_check_branch
      %373 = sbr.rel (0) target = $region209
    $region208: #{_lambda_.1} parent=1 // pred_region
      %374 = dma.done [#allocation23], 1536
    $region209: #{_lambda_.1} parent=1 // pred_fallthru
      _
    // Predicated region
    $region210: #{_lambda_.1} parent=1 // pred_check
      _
    $region211: #{_lambda_.1} parent=1 // pred_check_branch
      %376 = sbr.rel (0) target = $region213
    $region212: #{_lambda_.1} parent=1 // pred_region
      %377 = dma.done [#allocation26], 1536
    $region213: #{_lambda_.1} parent=1 // pred_fallthru
      _
    // Predicated region
    $region214: #{_lambda_.1} parent=1 // pred_check
      _
    $region215: #{_lambda_.1} parent=1 // pred_check_branch
      %379 = sbr.rel (0) target = $region217
    $region216: #{_lambda_.1} parent=1 // pred_region
      %380 = dma.done [#allocation26], 1536
    $region217: #{_lambda_.1} parent=1 // pred_fallthru
      _
    // Predicated region
    $region218: #{_lambda_.1} parent=1 // pred_check
      _
    $region219: #{_lambda_.1} parent=1 // pred_check_branch
      %382 = sbr.rel (0) target = $region221
    $region220: #{_lambda_.1} parent=1 // pred_region
      %383 = dma.done [#allocation29], 1024
    $region221: #{_lambda_.1} parent=1 // pred_fallthru
      _
    %v385 = vld [vmem:[%s1] sm:$0xff]
    %v386 = vld [vmem:[%s1 + $0x8] sm:$0xff]
    %v387 = vld [vmem:[%s1 + $0x10] sm:$0xff]
    %v388 = vld [vmem:[%s1 + $0x18] sm:$0xff]
    %v389 = vld [vmem:[%s1 + $0x20] sm:$0xff]
    %v390 = vld [vmem:[%s1 + $0x28] sm:$0xff]
    %v391 = vld [vmem:[%s1 + $0x30] sm:$0xff]
    %v392 = vld [vmem:[%s1 + $0x38] sm:$0xff]
    %v393 = vld [vmem:[%s1 + $0x40] sm:$0xff]
    %v394 = vld [vmem:[%s1 + $0x48] sm:$0xff]
    %v395 = vld [vmem:[%s1 + $0x50] sm:$0xff]
    %v396 = vld [vmem:[%s1 + $0x58] sm:$0xff]
    %v397 = vld [vmem:[%s1 + $0x60] sm:$0xff]
    %v398 = vld [vmem:[%s1 + $0x68] sm:$0xff]
    %v399 = vld [vmem:[%s1 + $0x70] sm:$0xff]
    %v400 = vld [vmem:[%s1 + $0x78] sm:$0xff]
    %v401 = vlaneseq
    %v402 = vshrl.u32 %v401, 7
    %v403 = vadd.s32 %v402, 8
    %v404 = vadd.s32 %v402, 16
    %v405 = vadd.s32 %v402, 24
    %v406 = vadd.s32 %v402, 32
    %v407 = vadd.s32 %v402, 40
    %v408 = vadd.s32 %v402, 48
    %v409 = vadd.s32 %v402, 56
    %v410 = vadd.s32 %v402, 64
    %v411 = vadd.s32 %v402, 72
    %v412 = vadd.s32 %v402, 80
    %v413 = vadd.s32 %v402, 88
    %v414 = vadd.s32 %v402, 96
    %v415 = vadd.s32 %v402, 104
    %v416 = vadd.s32 %v402, 112
    %v417 = vadd.s32 %v402, 120
    %vm418 = vcmp.lt.s32.totalorder %v402, 0
    %v419 = vsub.s32 0, %v402
    %v420 = vsel %vm418, %v419, %v402
    %v421 = vshrl.u32 %v420, 4
    %v422 = vand.u32 %v420, 15
    %v423 = vsub.s32 0, %v422
    %v424 = vsel %vm418, %v423, %v422
    %vm425 = vcmp.lt.s32.totalorder %v403, 0
    %v426 = vsub.s32 0, %v403
    %v427 = vsel %vm425, %v426, %v403
    %v428 = vshrl.u32 %v427, 4
    %v429 = vand.u32 %v427, 15
    %v430 = vsub.s32 0, %v429
    %v431 = vsel %vm425, %v430, %v429
    %vm432 = vcmp.lt.s32.totalorder %v404, 0
    %v433 = vsub.s32 0, %v404
    %v434 = vsel %vm432, %v433, %v404
    %v435 = vshrl.u32 %v434, 4
    %v436 = vand.u32 %v434, 15
    %v437 = vsub.s32 0, %v436
    %v438 = vsel %vm432, %v437, %v436
    %vm439 = vcmp.lt.s32.totalorder %v405, 0
    %v440 = vsub.s32 0, %v405
    %v441 = vsel %vm439, %v440, %v405
    %v442 = vshrl.u32 %v441, 4
    %v443 = vand.u32 %v441, 15
    %v444 = vsub.s32 0, %v443
    %v445 = vsel %vm439, %v444, %v443
    %vm446 = vcmp.lt.s32.totalorder %v406, 0
    %v447 = vsub.s32 0, %v406
    %v448 = vsel %vm446, %v447, %v406
    %v449 = vshrl.u32 %v448, 4
    %v450 = vand.u32 %v448, 15
    %v451 = vsub.s32 0, %v450
    %v452 = vsel %vm446, %v451, %v450
    %vm453 = vcmp.lt.s32.totalorder %v407, 0
    %v454 = vsub.s32 0, %v407
    %v455 = vsel %vm453, %v454, %v407
    %v456 = vshrl.u32 %v455, 4
    %v457 = vand.u32 %v455, 15
    %v458 = vsub.s32 0, %v457
    %v459 = vsel %vm453, %v458, %v457
    %vm460 = vcmp.lt.s32.totalorder %v408, 0
    %v461 = vsub.s32 0, %v408
    %v462 = vsel %vm460, %v461, %v408
    %v463 = vshrl.u32 %v462, 4
    %v464 = vand.u32 %v462, 15
    %v465 = vsub.s32 0, %v464
    %v466 = vsel %vm460, %v465, %v464
    %vm467 = vcmp.lt.s32.totalorder %v409, 0
    %v468 = vsub.s32 0, %v409
    %v469 = vsel %vm467, %v468, %v409
    %v470 = vshrl.u32 %v469, 4
    %v471 = vand.u32 %v469, 15
    %v472 = vsub.s32 0, %v471
    %v473 = vsel %vm467, %v472, %v471
    %vm474 = vcmp.lt.s32.totalorder %v410, 0
    %v475 = vsub.s32 0, %v410
    %v476 = vsel %vm474, %v475, %v410
    %v477 = vshrl.u32 %v476, 4
    %v478 = vand.u32 %v476, 15
    %v479 = vsub.s32 0, %v478
    %v480 = vsel %vm474, %v479, %v478
    %vm481 = vcmp.lt.s32.totalorder %v411, 0
    %v482 = vsub.s32 0, %v411
    %v483 = vsel %vm481, %v482, %v411
    %v484 = vshrl.u32 %v483, 4
    %v485 = vand.u32 %v483, 15
    %v486 = vsub.s32 0, %v485
    %v487 = vsel %vm481, %v486, %v485
    %vm488 = vcmp.lt.s32.totalorder %v412, 0
    %v489 = vsub.s32 0, %v412
    %v490 = vsel %vm488, %v489, %v412
    %v491 = vshrl.u32 %v490, 4
    %v492 = vand.u32 %v490, 15
    %v493 = vsub.s32 0, %v492
    %v494 = vsel %vm488, %v493, %v492
    %vm495 = vcmp.lt.s32.totalorder %v413, 0
    %v496 = vsub.s32 0, %v413
    %v497 = vsel %vm495, %v496, %v413
    %v498 = vshrl.u32 %v497, 4
    %v499 = vand.u32 %v497, 15
    %v500 = vsub.s32 0, %v499
    %v501 = vsel %vm495, %v500, %v499
    %vm502 = vcmp.lt.s32.totalorder %v414, 0
    %v503 = vsub.s32 0, %v414
    %v504 = vsel %vm502, %v503, %v414
    %v505 = vshrl.u32 %v504, 4
    %v506 = vand.u32 %v504, 15
    %v507 = vsub.s32 0, %v506
    %v508 = vsel %vm502, %v507, %v506
    %vm509 = vcmp.lt.s32.totalorder %v415, 0
    %v510 = vsub.s32 0, %v415
    %v511 = vsel %vm509, %v510, %v415
    %v512 = vshrl.u32 %v511, 4
    %v513 = vand.u32 %v511, 15
    %v514 = vsub.s32 0, %v513
    %v515 = vsel %vm509, %v514, %v513
    %vm516 = vcmp.lt.s32.totalorder %v416, 0
    %v517 = vsub.s32 0, %v416
    %v518 = vsel %vm516, %v517, %v416
    %v519 = vshrl.u32 %v518, 4
    %v520 = vand.u32 %v518, 15
    %v521 = vsub.s32 0, %v520
    %v522 = vsel %vm516, %v521, %v520
    %vm523 = vcmp.lt.s32.totalorder %v417, 0
    %v524 = vsub.s32 0, %v417
    %v525 = vsel %vm523, %v524, %v417
    %v526 = vshrl.u32 %v525, 4
    %v527 = vand.u32 %v525, 15
    %v528 = vsub.s32 0, %v527
    %v529 = vsel %vm523, %v528, %v527
    %vm530 = vcmp.ne.s32.totalorder %v424, 0
    %vm531 = vcmp.ne.s32.totalorder %v431, 0
    %vm532 = vcmp.ne.s32.totalorder %v438, 0
    %vm533 = vcmp.ne.s32.totalorder %v445, 0
    %vm534 = vcmp.ne.s32.totalorder %v452, 0
    %vm535 = vcmp.ne.s32.totalorder %v459, 0
    %vm536 = vcmp.ne.s32.totalorder %v466, 0
    %vm537 = vcmp.ne.s32.totalorder %v473, 0
    %vm538 = vcmp.ne.s32.totalorder %v480, 0
    %vm539 = vcmp.ne.s32.totalorder %v487, 0
    %vm540 = vcmp.ne.s32.totalorder %v494, 0
    %vm541 = vcmp.ne.s32.totalorder %v501, 0
    %vm542 = vcmp.ne.s32.totalorder %v508, 0
    %vm543 = vcmp.ne.s32.totalorder %v515, 0
    %vm544 = vcmp.ne.s32.totalorder %v522, 0
    %vm545 = vcmp.ne.s32.totalorder %v529, 0
    %vm546 = vcmp.lt.s32.totalorder %v424, 0
    %vm547 = vcmp.lt.s32.totalorder %v431, 0
    %vm548 = vcmp.lt.s32.totalorder %v438, 0
    %vm549 = vcmp.lt.s32.totalorder %v445, 0
    %vm550 = vcmp.lt.s32.totalorder %v452, 0
    %vm551 = vcmp.lt.s32.totalorder %v459, 0
    %vm552 = vcmp.lt.s32.totalorder %v466, 0
    %vm553 = vcmp.lt.s32.totalorder %v473, 0
    %vm554 = vcmp.lt.s32.totalorder %v480, 0
    %vm555 = vcmp.lt.s32.totalorder %v487, 0
    %vm556 = vcmp.lt.s32.totalorder %v494, 0
    %vm557 = vcmp.lt.s32.totalorder %v501, 0
    %vm558 = vcmp.lt.s32.totalorder %v508, 0
    %vm559 = vcmp.lt.s32.totalorder %v515, 0
    %vm560 = vcmp.lt.s32.totalorder %v522, 0
    %vm561 = vcmp.lt.s32.totalorder %v529, 0
    %vm562 = vmand %vm546, %vm530
    %vm563 = vmand %vm547, %vm531
    %vm564 = vmand %vm548, %vm532
    %vm565 = vmand %vm549, %vm533
    %vm566 = vmand %vm550, %vm534
    %vm567 = vmand %vm551, %vm535
    %vm568 = vmand %vm552, %vm536
    %vm569 = vmand %vm553, %vm537
    %vm570 = vmand %vm554, %vm538
    %vm571 = vmand %vm555, %vm539
    %vm572 = vmand %vm556, %vm540
    %vm573 = vmand %vm557, %vm541
    %vm574 = vmand %vm558, %vm542
    %vm575 = vmand %vm559, %vm543
    %vm576 = vmand %vm560, %vm544
    %vm577 = vmand %vm561, %vm545
    %v578 = vadd.s32 %v424, 16
    %v579 = vadd.s32 %v431, 16
    %v580 = vadd.s32 %v438, 16
    %v581 = vadd.s32 %v445, 16
    %v582 = vadd.s32 %v452, 16
    %v583 = vadd.s32 %v459, 16
    %v584 = vadd.s32 %v466, 16
    %v585 = vadd.s32 %v473, 16
    %v586 = vadd.s32 %v480, 16
    %v587 = vadd.s32 %v487, 16
    %v588 = vadd.s32 %v494, 16
    %v589 = vadd.s32 %v501, 16
    %v590 = vadd.s32 %v508, 16
    %v591 = vadd.s32 %v515, 16
    %v592 = vadd.s32 %v522, 16
    %v593 = vadd.s32 %v529, 16
    %v594 = vsel %vm562, %v578, %v424
    %v595 = vsel %vm563, %v579, %v431
    %v596 = vsel %vm564, %v580, %v438
    %v597 = vsel %vm565, %v581, %v445
    %v598 = vsel %vm566, %v582, %v452
    %v599 = vsel %vm567, %v583, %v459
    %v600 = vsel %vm568, %v584, %v466
    %v601 = vsel %vm569, %v585, %v473
    %v602 = vsel %vm570, %v586, %v480
    %v603 = vsel %vm571, %v587, %v487
    %v604 = vsel %vm572, %v588, %v494
    %v605 = vsel %vm573, %v589, %v501
    %v606 = vsel %vm574, %v590, %v508
    %v607 = vsel %vm575, %v591, %v515
    %v608 = vsel %vm576, %v592, %v522
    %v609 = vsel %vm577, %v593, %v529
    %vm610 = vcmp.eq.s32.totalorder %v594, 0
    %vm611 = vcmp.eq.s32.totalorder %v595, 0
    %vm612 = vcmp.eq.s32.totalorder %v596, 0
    %vm613 = vcmp.eq.s32.totalorder %v597, 0
    %vm614 = vcmp.eq.s32.totalorder %v598, 0
    %vm615 = vcmp.eq.s32.totalorder %v599, 0
    %vm616 = vcmp.eq.s32.totalorder %v600, 0
    %vm617 = vcmp.eq.s32.totalorder %v601, 0
    %vm618 = vcmp.eq.s32.totalorder %v602, 0
    %vm619 = vcmp.eq.s32.totalorder %v603, 0
    %vm620 = vcmp.eq.s32.totalorder %v604, 0
    %vm621 = vcmp.eq.s32.totalorder %v605, 0
    %vm622 = vcmp.eq.s32.totalorder %v606, 0
    %vm623 = vcmp.eq.s32.totalorder %v607, 0
    %vm624 = vcmp.eq.s32.totalorder %v608, 0
    %vm625 = vcmp.eq.s32.totalorder %v609, 0
    %v626 = vrot.slane %v385, 7
    %v627 = vrot.slane %v386, 7
    %v628 = vrot.slane %v387, 7
    %v629 = vrot.slane %v388, 7
    %v630 = vrot.slane %v389, 7
    %v631 = vrot.slane %v390, 7
    %v632 = vrot.slane %v391, 7
    %v633 = vrot.slane %v392, 7
    %v634 = vrot.slane %v393, 7
    %v635 = vrot.slane %v394, 7
    %v636 = vrot.slane %v395, 7
    %v637 = vrot.slane %v396, 7
    %v638 = vrot.slane %v397, 7
    %v639 = vrot.slane %v398, 7
    %v640 = vrot.slane %v399, 7
    %v641 = vrot.slane %v400, 7
    %vm642 = vcmp.lt.s32.totalorder %v402, 1
    %v643 = vsel %vm642, %v640, %v641
    %v644 = vsel %vm642, %v639, %v640
    %v645 = vsel %vm642, %v638, %v639
    %v646 = vsel %vm642, %v637, %v638
    %v647 = vsel %vm642, %v636, %v637
    %v648 = vsel %vm642, %v635, %v636
    %v649 = vsel %vm642, %v634, %v635
    %v650 = vsel %vm642, %v633, %v634
    %v651 = vsel %vm642, %v632, %v633
    %v652 = vsel %vm642, %v631, %v632
    %v653 = vsel %vm642, %v630, %v631
    %v654 = vsel %vm642, %v629, %v630
    %v655 = vsel %vm642, %v628, %v629
    %v656 = vsel %vm642, %v627, %v628
    %v657 = vsel %vm642, %v626, %v627
    %v658 = vsel %vm642, %v641, %v626
    %v659 = vsel %vm610, 0.0, %v658
    %v660 = vsel %vm611, 0.0, %v657
    %v661 = vsel %vm612, 0.0, %v656
    %v662 = vsel %vm613, 0.0, %v655
    %v663 = vsel %vm614, 0.0, %v654
    %v664 = vsel %vm615, 0.0, %v653
    %v665 = vsel %vm616, 0.0, %v652
    %v666 = vsel %vm617, 0.0, %v651
    %v667 = vsel %vm618, 0.0, %v650
    %v668 = vsel %vm619, 0.0, %v649
    %v669 = vsel %vm620, 0.0, %v648
    %v670 = vsel %vm621, 0.0, %v647
    %v671 = vsel %vm622, 0.0, %v646
    %v672 = vsel %vm623, 0.0, %v645
    %v673 = vsel %vm624, 0.0, %v644
    %v674 = vsel %vm625, 0.0, %v643
    %vm675 = vcmp.eq.s32.totalorder %v594, 15
    %vm676 = vcmp.eq.s32.totalorder %v595, 15
    %vm677 = vcmp.eq.s32.totalorder %v596, 15
    %vm678 = vcmp.eq.s32.totalorder %v597, 15
    %vm679 = vcmp.eq.s32.totalorder %v598, 15
    %vm680 = vcmp.eq.s32.totalorder %v599, 15
    %vm681 = vcmp.eq.s32.totalorder %v600, 15
    %vm682 = vcmp.eq.s32.totalorder %v601, 15
    %vm683 = vcmp.eq.s32.totalorder %v602, 15
    %vm684 = vcmp.eq.s32.totalorder %v603, 15
    %vm685 = vcmp.eq.s32.totalorder %v604, 15
    %vm686 = vcmp.eq.s32.totalorder %v605, 15
    %vm687 = vcmp.eq.s32.totalorder %v606, 15
    %vm688 = vcmp.eq.s32.totalorder %v607, 15
    %vm689 = vcmp.eq.s32.totalorder %v608, 15
    %vm690 = vcmp.eq.s32.totalorder %v609, 15
    %v691 = vrot.slane %v385, 1
    %v692 = vrot.slane %v386, 1
    %v693 = vrot.slane %v387, 1
    %v694 = vrot.slane %v388, 1
    %v695 = vrot.slane %v389, 1
    %v696 = vrot.slane %v390, 1
    %v697 = vrot.slane %v391, 1
    %v698 = vrot.slane %v392, 1
    %v699 = vrot.slane %v393, 1
    %v700 = vrot.slane %v394, 1
    %v701 = vrot.slane %v395, 1
    %v702 = vrot.slane %v396, 1
    %v703 = vrot.slane %v397, 1
    %v704 = vrot.slane %v398, 1
    %v705 = vrot.slane %v399, 1
    %v706 = vrot.slane %v400, 1
    %vm707 = vcmp.lt.s32.totalorder %v402, 7
    %v708 = vsel %vm707, %v705, %v706
    %v709 = vsel %vm707, %v704, %v705
    %v710 = vsel %vm707, %v703, %v704
    %v711 = vsel %vm707, %v702, %v703
    %v712 = vsel %vm707, %v701, %v702
    %v713 = vsel %vm707, %v700, %v701
    %v714 = vsel %vm707, %v699, %v700
    %v715 = vsel %vm707, %v698, %v699
    %v716 = vsel %vm707, %v697, %v698
    %v717 = vsel %vm707, %v696, %v697
    %v718 = vsel %vm707, %v695, %v696
    %v719 = vsel %vm707, %v694, %v695
    %v720 = vsel %vm707, %v693, %v694
    %v721 = vsel %vm707, %v692, %v693
    %v722 = vsel %vm707, %v691, %v692
    %v723 = vsel %vm707, %v706, %v691
    %v724 = vsel %vm675, 0.0, %v722
    %v725 = vsel %vm676, 0.0, %v721
    %v726 = vsel %vm677, 0.0, %v720
    %v727 = vsel %vm678, 0.0, %v719
    %v728 = vsel %vm679, 0.0, %v718
    %v729 = vsel %vm680, 0.0, %v717
    %v730 = vsel %vm681, 0.0, %v716
    %v731 = vsel %vm682, 0.0, %v715
    %v732 = vsel %vm683, 0.0, %v714
    %v733 = vsel %vm684, 0.0, %v713
    %v734 = vsel %vm685, 0.0, %v712
    %v735 = vsel %vm686, 0.0, %v711
    %v736 = vsel %vm687, 0.0, %v710
    %v737 = vsel %vm688, 0.0, %v709
    %v738 = vsel %vm689, 0.0, %v708
    %v739 = vsel %vm690, 0.0, %v723
    %v740 = vpack.c.bf16 %v660, %v659
    %v741 = vpack.c.bf16 %v662, %v661
    %v742 = vpack.c.bf16 %v664, %v663
    %v743 = vpack.c.bf16 %v666, %v665
    %v744 = vpack.c.bf16 %v668, %v667
    %v745 = vpack.c.bf16 %v670, %v669
    %v746 = vpack.c.bf16 %v672, %v671
    %v747 = vpack.c.bf16 %v674, %v673
    %v748 = vld [vmem:[#allocation2] sm:$0xff]
    %v749 = vld [vmem:[#allocation2 + $0x8] sm:$0xff]
    %v750 = vld [vmem:[#allocation2 + $0x10] sm:$0xff]
    %v751 = vld [vmem:[#allocation2 + $0x18] sm:$0xff]
    %v752 = vld [vmem:[#allocation2 + $0x20] sm:$0xff]
    %v753 = vld [vmem:[#allocation2 + $0x28] sm:$0xff]
    %v754 = vld [vmem:[#allocation2 + $0x30] sm:$0xff]
    %v755 = vld [vmem:[#allocation2 + $0x38] sm:$0xff]
    %v756 = vpack.c.bf16 %v386, %v385
    %v757 = vpack.c.bf16 %v388, %v387
    %v758 = vpack.c.bf16 %v390, %v389
    %v759 = vpack.c.bf16 %v392, %v391
    %v760 = vpack.c.bf16 %v394, %v393
    %v761 = vpack.c.bf16 %v396, %v395
    %v762 = vpack.c.bf16 %v398, %v397
    %v763 = vpack.c.bf16 %v400, %v399
    %s764 = scalar_lea.vmem [#allocation2], 64
    %v765 = vld [vmem:[%s764] sm:$0xff]
    %v766 = vld [vmem:[%s764 + $0x8] sm:$0xff]
    %v767 = vld [vmem:[%s764 + $0x10] sm:$0xff]
    %v768 = vld [vmem:[%s764 + $0x18] sm:$0xff]
    %v769 = vld [vmem:[%s764 + $0x20] sm:$0xff]
    %v770 = vld [vmem:[%s764 + $0x28] sm:$0xff]
    %v771 = vld [vmem:[%s764 + $0x30] sm:$0xff]
    %v772 = vld [vmem:[%s764 + $0x38] sm:$0xff]
    %v781 = vunpack.c.l.b16 %v765
    %v782 = vunpack.c.h.b16 %v765
    %v783 = vunpack.c.l.b16 %v766
    %v784 = vunpack.c.h.b16 %v766
    %v785 = vunpack.c.l.b16 %v767
    %v786 = vunpack.c.h.b16 %v767
    %v787 = vunpack.c.l.b16 %v768
    %v788 = vunpack.c.h.b16 %v768
    %v789 = vunpack.c.l.b16 %v769
    %v790 = vunpack.c.h.b16 %v769
    %v791 = vunpack.c.l.b16 %v770
    %v792 = vunpack.c.h.b16 %v770
    %v793 = vunpack.c.l.b16 %v771
    %v794 = vunpack.c.h.b16 %v771
    %v795 = vunpack.c.l.b16 %v772
    %v796 = vunpack.c.h.b16 %v772
    %v797 = vpack.c.b16 %v783, %v781
    %v798 = vpack.c.b16 %v784, %v782
    %v799 = vpack.c.b16 %v787, %v785
    %v800 = vpack.c.b16 %v788, %v786
    %v801 = vpack.c.b16 %v791, %v789
    %v802 = vpack.c.b16 %v792, %v790
    %v803 = vpack.c.b16 %v795, %v793
    %v804 = vpack.c.b16 %v796, %v794
    %vm813 = vcmask 523264
    %v815 = vsel %vm813, %v756, 0
    %v818 = vsel %vm813, %v757, 0
    %v821 = vsel %vm813, %v758, 0
    %v824 = vsel %vm813, %v759, 0
    %v827 = vsel %vm813, %v760, 0
    %v830 = vsel %vm813, %v761, 0
    %v833 = vsel %vm813, %v762, 0
    %v836 = vsel %vm813, %v763, 0
    %838 = vmatprep.subr.bf16.mxu0 0
    %839 = vmatpush1.bf16.msra.mxu0 0
    %840 = vmatprep.subr.bf16.mxu0 0
    %841 = vmatpush1.bf16.msra.mxu0 0
    %842 = vmatprep.subr.bf16.mxu0 0
    %843 = vmatpush1.bf16.msra.mxu0 0
    %844 = vmatprep.subr.bf16.mxu0 0
    %845 = vmatpush1.bf16.msra.mxu0 0
    %846 = vmatprep.subr.bf16.mxu0 %v804
    %847 = vmatpush1.bf16.msra.mxu0 %v803
    %848 = vmatprep.subr.bf16.mxu0 %v802
    %849 = vmatpush1.bf16.msra.mxu0 %v801
    %850 = vmatprep.subr.bf16.mxu0 %v800
    %851 = vmatpush1.bf16.msra.mxu0 %v799
    %852 = vmatprep.subr.bf16.mxu0 %v798
    %853 = vmatpush1.bf16.msra.mxu0 %v797
    %854 = vmatprep.subr.bf16.mxu0 0
    %855 = vmatpush2.bf16.msra.mxu0 0
    %856 = vmatprep.subr.bf16.mxu0 0
    %857 = vmatpush2.bf16.msra.mxu0 0
    %858 = vmatprep.subr.bf16.mxu0 0
    %859 = vmatpush2.bf16.msra.mxu0 0
    %860 = vmatprep.subr.bf16.mxu0 0
    %861 = vmatpush2.bf16.msra.mxu0 0
    %862 = vmatprep.subr.bf16.mxu0 0
    %863 = vmatpush2.bf16.msra.mxu0 0
    %864 = vmatprep.subr.bf16.mxu0 0
    %865 = vmatpush2.bf16.msra.mxu0 0
    %866 = vmatprep.subr.bf16.mxu0 0
    %867 = vmatpush2.bf16.msra.mxu0 0
    %868 = vmatprep.subr.bf16.mxu0 0
    %869 = vmatpush2.bf16.msra.mxu0 0
    %870 = vmatprep.mubr.bf16.mxu0 0
    %871 = vmatmul.mubr.bf16.gmra.mxu0 %v815
    %v872 = vpop.f32.mrf.mxu0
    %v873 = vadd.f32 0.0, %v872
    %v874 = vpop.f32.mrf.mxu0
    %v875 = vadd.f32 0.0, %v874
    %v876 = vpop.f32.mrf.mxu0
    %v877 = vadd.f32 0.0, %v876
    %v878 = vpop.f32.mrf.mxu0
    %v879 = vadd.f32 0.0, %v878
    %880 = vmatprep.mubr.bf16.mxu0 0
    %881 = vmatmul.mubr.bf16.gmra.mxu0 %v818
    %v882 = vpop.f32.mrf.mxu0
    %v883 = vadd.f32 0.0, %v882
    %v884 = vpop.f32.mrf.mxu0
    %v885 = vadd.f32 0.0, %v884
    %v886 = vpop.f32.mrf.mxu0
    %v887 = vadd.f32 0.0, %v886
    %v888 = vpop.f32.mrf.mxu0
    %v889 = vadd.f32 0.0, %v888
    %890 = vmatprep.mubr.bf16.mxu0 0
    %891 = vmatmul.mubr.bf16.gmra.mxu0 %v821
    %v892 = vpop.f32.mrf.mxu0
    %v893 = vadd.f32 0.0, %v892
    %v894 = vpop.f32.mrf.mxu0
    %v895 = vadd.f32 0.0, %v894
    %v896 = vpop.f32.mrf.mxu0
    %v897 = vadd.f32 0.0, %v896
    %v898 = vpop.f32.mrf.mxu0
    %v899 = vadd.f32 0.0, %v898
    %900 = vmatprep.mubr.bf16.mxu0 0
    %901 = vmatmul.mubr.bf16.gmra.mxu0 %v824
    %v902 = vpop.f32.mrf.mxu0
    %v903 = vadd.f32 0.0, %v902
    %v904 = vpop.f32.mrf.mxu0
    %v905 = vadd.f32 0.0, %v904
    %v906 = vpop.f32.mrf.mxu0
    %v907 = vadd.f32 0.0, %v906
    %v908 = vpop.f32.mrf.mxu0
    %v909 = vadd.f32 0.0, %v908
    %910 = vmatprep.mubr.bf16.mxu0 0
    %911 = vmatmul.mubr.bf16.gmra.mxu0 %v827
    %v912 = vpop.f32.mrf.mxu0
    %v913 = vadd.f32 0.0, %v912
    %v914 = vpop.f32.mrf.mxu0
    %v915 = vadd.f32 0.0, %v914
    %v916 = vpop.f32.mrf.mxu0
    %v917 = vadd.f32 0.0, %v916
    %v918 = vpop.f32.mrf.mxu0
    %v919 = vadd.f32 0.0, %v918
    %920 = vmatprep.mubr.bf16.mxu0 0
    %921 = vmatmul.mubr.bf16.gmra.mxu0 %v830
    %v922 = vpop.f32.mrf.mxu0
    %v923 = vadd.f32 0.0, %v922
    %v924 = vpop.f32.mrf.mxu0
    %v925 = vadd.f32 0.0, %v924
    %v926 = vpop.f32.mrf.mxu0
    %v927 = vadd.f32 0.0, %v926
    %v928 = vpop.f32.mrf.mxu0
    %v929 = vadd.f32 0.0, %v928
    %930 = vmatprep.mubr.bf16.mxu0 0
    %931 = vmatmul.mubr.bf16.gmra.mxu0 %v833
    %v932 = vpop.f32.mrf.mxu0
    %v933 = vadd.f32 0.0, %v932
    %v934 = vpop.f32.mrf.mxu0
    %v935 = vadd.f32 0.0, %v934
    %v936 = vpop.f32.mrf.mxu0
    %v937 = vadd.f32 0.0, %v936
    %v938 = vpop.f32.mrf.mxu0
    %v939 = vadd.f32 0.0, %v938
    %940 = vmatprep.mubr.bf16.mxu0 0
    %941 = vmatmul.mubr.bf16.gmra.mxu0 %v836
    %v942 = vpop.f32.mrf.mxu0
    %v943 = vadd.f32 0.0, %v942
    %v944 = vpop.f32.mrf.mxu0
    %v945 = vadd.f32 0.0, %v944
    %v946 = vpop.f32.mrf.mxu0
    %v947 = vadd.f32 0.0, %v946
    %v948 = vpop.f32.mrf.mxu0
    %v949 = vadd.f32 0.0, %v948
    %950 = vdwg.mxu0
    %v959 = vunpack.c.l.b16 %v748
    %v960 = vunpack.c.h.b16 %v748
    %v961 = vunpack.c.l.b16 %v749
    %v962 = vunpack.c.h.b16 %v749
    %v963 = vunpack.c.l.b16 %v750
    %v964 = vunpack.c.h.b16 %v750
    %v965 = vunpack.c.l.b16 %v751
    %v966 = vunpack.c.h.b16 %v751
    %v967 = vunpack.c.l.b16 %v752
    %v968 = vunpack.c.h.b16 %v752
    %v969 = vunpack.c.l.b16 %v753
    %v970 = vunpack.c.h.b16 %v753
    %v971 = vunpack.c.l.b16 %v754
    %v972 = vunpack.c.h.b16 %v754
    %v973 = vunpack.c.l.b16 %v755
    %v974 = vunpack.c.h.b16 %v755
    %v975 = vpack.c.b16 %v961, %v959
    %v976 = vpack.c.b16 %v962, %v960
    %v977 = vpack.c.b16 %v965, %v963
    %v978 = vpack.c.b16 %v966, %v964
    %v979 = vpack.c.b16 %v969, %v967
    %v980 = vpack.c.b16 %v970, %v968
    %v981 = vpack.c.b16 %v973, %v971
    %v982 = vpack.c.b16 %v974, %v972
    %v992 = vsel %vm813, %v740, 0
    %v995 = vsel %vm813, %v741, 0
    %v998 = vsel %vm813, %v742, 0
    %v1001 = vsel %vm813, %v743, 0
    %v1004 = vsel %vm813, %v744, 0
    %v1007 = vsel %vm813, %v745, 0
    %v1010 = vsel %vm813, %v746, 0
    %v1013 = vsel %vm813, %v747, 0
    %1015 = vmatprep.subr.bf16.mxu0 0
    %1016 = vmatpush1.bf16.msra.mxu0 0
    %1017 = vmatprep.subr.bf16.mxu0 0
    %1018 = vmatpush1.bf16.msra.mxu0 0
    %1019 = vmatprep.subr.bf16.mxu0 0
    %1020 = vmatpush1.bf16.msra.mxu0 0
    %1021 = vmatprep.subr.bf16.mxu0 0
    %1022 = vmatpush1.bf16.msra.mxu0 0
    %1023 = vmatprep.subr.bf16.mxu0 %v982
    %1024 = vmatpush1.bf16.msra.mxu0 %v981
    %1025 = vmatprep.subr.bf16.mxu0 %v980
    %1026 = vmatpush1.bf16.msra.mxu0 %v979
    %1027 = vmatprep.subr.bf16.mxu0 %v978
    %1028 = vmatpush1.bf16.msra.mxu0 %v977
    %1029 = vmatprep.subr.bf16.mxu0 %v976
    %1030 = vmatpush1.bf16.msra.mxu0 %v975
    %1031 = vmatprep.subr.bf16.mxu0 0
    %1032 = vmatpush2.bf16.msra.mxu0 0
    %1033 = vmatprep.subr.bf16.mxu0 0
    %1034 = vmatpush2.bf16.msra.mxu0 0
    %1035 = vmatprep.subr.bf16.mxu0 0
    %1036 = vmatpush2.bf16.msra.mxu0 0
    %1037 = vmatprep.subr.bf16.mxu0 0
    %1038 = vmatpush2.bf16.msra.mxu0 0
    %1039 = vmatprep.subr.bf16.mxu0 0
    %1040 = vmatpush2.bf16.msra.mxu0 0
    %1041 = vmatprep.subr.bf16.mxu0 0
    %1042 = vmatpush2.bf16.msra.mxu0 0
    %1043 = vmatprep.subr.bf16.mxu0 0
    %1044 = vmatpush2.bf16.msra.mxu0 0
    %1045 = vmatprep.subr.bf16.mxu0 0
    %1046 = vmatpush2.bf16.msra.mxu0 0
    %1047 = vmatprep.mubr.bf16.mxu0 0
    %1048 = vmatmul.mubr.bf16.gmra.mxu0 %v992
    %v1049 = vpop.f32.mrf.mxu0
    %v1050 = vadd.f32 %v873, %v1049
    %v1051 = vpop.f32.mrf.mxu0
    %v1052 = vadd.f32 %v875, %v1051
    %v1053 = vpop.f32.mrf.mxu0
    %v1054 = vadd.f32 %v877, %v1053
    %v1055 = vpop.f32.mrf.mxu0
    %v1056 = vadd.f32 %v879, %v1055
    %1057 = vmatprep.mubr.bf16.mxu0 0
    %1058 = vmatmul.mubr.bf16.gmra.mxu0 %v995
    %v1059 = vpop.f32.mrf.mxu0
    %v1060 = vadd.f32 %v883, %v1059
    %v1061 = vpop.f32.mrf.mxu0
    %v1062 = vadd.f32 %v885, %v1061
    %v1063 = vpop.f32.mrf.mxu0
    %v1064 = vadd.f32 %v887, %v1063
    %v1065 = vpop.f32.mrf.mxu0
    %v1066 = vadd.f32 %v889, %v1065
    %1067 = vmatprep.mubr.bf16.mxu0 0
    %1068 = vmatmul.mubr.bf16.gmra.mxu0 %v998
    %v1069 = vpop.f32.mrf.mxu0
    %v1070 = vadd.f32 %v893, %v1069
    %v1071 = vpop.f32.mrf.mxu0
    %v1072 = vadd.f32 %v895, %v1071
    %v1073 = vpop.f32.mrf.mxu0
    %v1074 = vadd.f32 %v897, %v1073
    %v1075 = vpop.f32.mrf.mxu0
    %v1076 = vadd.f32 %v899, %v1075
    %1077 = vmatprep.mubr.bf16.mxu0 0
    %1078 = vmatmul.mubr.bf16.gmra.mxu0 %v1001
    %v1079 = vpop.f32.mrf.mxu0
    %v1080 = vadd.f32 %v903, %v1079
    %v1081 = vpop.f32.mrf.mxu0
    %v1082 = vadd.f32 %v905, %v1081
    %v1083 = vpop.f32.mrf.mxu0
    %v1084 = vadd.f32 %v907, %v1083
    %v1085 = vpop.f32.mrf.mxu0
    %v1086 = vadd.f32 %v909, %v1085
    %1087 = vmatprep.mubr.bf16.mxu0 0
    %1088 = vmatmul.mubr.bf16.gmra.mxu0 %v1004
    %v1089 = vpop.f32.mrf.mxu0
    %v1090 = vadd.f32 %v913, %v1089
    %v1091 = vpop.f32.mrf.mxu0
    %v1092 = vadd.f32 %v915, %v1091
    %v1093 = vpop.f32.mrf.mxu0
    %v1094 = vadd.f32 %v917, %v1093
    %v1095 = vpop.f32.mrf.mxu0
    %v1096 = vadd.f32 %v919, %v1095
    %1097 = vmatprep.mubr.bf16.mxu0 0
    %1098 = vmatmul.mubr.bf16.gmra.mxu0 %v1007
    %v1099 = vpop.f32.mrf.mxu0
    %v1100 = vadd.f32 %v923, %v1099
    %v1101 = vpop.f32.mrf.mxu0
    %v1102 = vadd.f32 %v925, %v1101
    %v1103 = vpop.f32.mrf.mxu0
    %v1104 = vadd.f32 %v927, %v1103
    %v1105 = vpop.f32.mrf.mxu0
    %v1106 = vadd.f32 %v929, %v1105
    %1107 = vmatprep.mubr.bf16.mxu0 0
    %1108 = vmatmul.mubr.bf16.gmra.mxu0 %v1010
    %v1109 = vpop.f32.mrf.mxu0
    %v1110 = vadd.f32 %v933, %v1109
    %v1111 = vpop.f32.mrf.mxu0
    %v1112 = vadd.f32 %v935, %v1111
    %v1113 = vpop.f32.mrf.mxu0
    %v1114 = vadd.f32 %v937, %v1113
    %v1115 = vpop.f32.mrf.mxu0
    %v1116 = vadd.f32 %v939, %v1115
    %1117 = vmatprep.mubr.bf16.mxu0 0
    %1118 = vmatmul.mubr.bf16.gmra.mxu0 %v1013
    %v1119 = vpop.f32.mrf.mxu0
    %v1120 = vadd.f32 %v943, %v1119
    %v1121 = vpop.f32.mrf.mxu0
    %v1122 = vadd.f32 %v945, %v1121
    %v1123 = vpop.f32.mrf.mxu0
    %v1124 = vadd.f32 %v947, %v1123
    %v1125 = vpop.f32.mrf.mxu0
    %v1126 = vadd.f32 %v949, %v1125
    %1127 = vdwg.mxu0
    %v1128 = vpack.c.bf16 %v725, %v724
    %v1129 = vpack.c.bf16 %v727, %v726
    %v1130 = vpack.c.bf16 %v729, %v728
    %v1131 = vpack.c.bf16 %v731, %v730
    %v1132 = vpack.c.bf16 %v733, %v732
    %v1133 = vpack.c.bf16 %v735, %v734
    %v1134 = vpack.c.bf16 %v737, %v736
    %v1135 = vpack.c.bf16 %v739, %v738
    %s1136 = scalar_lea.vmem [#allocation2], 128
    %v1137 = vld [vmem:[%s1136] sm:$0xff]
    %v1138 = vld [vmem:[%s1136 + $0x8] sm:$0xff]
    %v1139 = vld [vmem:[%s1136 + $0x10] sm:$0xff]
    %v1140 = vld [vmem:[%s1136 + $0x18] sm:$0xff]
    %v1141 = vld [vmem:[%s1136 + $0x20] sm:$0xff]
    %v1142 = vld [vmem:[%s1136 + $0x28] sm:$0xff]
    %v1143 = vld [vmem:[%s1136 + $0x30] sm:$0xff]
    %v1144 = vld [vmem:[%s1136 + $0x38] sm:$0xff]
    %v1153 = vunpack.c.l.b16 %v1137
    %v1154 = vunpack.c.h.b16 %v1137
    %v1155 = vunpack.c.l.b16 %v1138
    %v1156 = vunpack.c.h.b16 %v1138
    %v1157 = vunpack.c.l.b16 %v1139
    %v1158 = vunpack.c.h.b16 %v1139
    %v1159 = vunpack.c.l.b16 %v1140
    %v1160 = vunpack.c.h.b16 %v1140
    %v1161 = vunpack.c.l.b16 %v1141
    %v1162 = vunpack.c.h.b16 %v1141
    %v1163 = vunpack.c.l.b16 %v1142
    %v1164 = vunpack.c.h.b16 %v1142
    %v1165 = vunpack.c.l.b16 %v1143
    %v1166 = vunpack.c.h.b16 %v1143
    %v1167 = vunpack.c.l.b16 %v1144
    %v1168 = vunpack.c.h.b16 %v1144
    %v1169 = vpack.c.b16 %v1155, %v1153
    %v1170 = vpack.c.b16 %v1156, %v1154
    %v1171 = vpack.c.b16 %v1159, %v1157
    %v1172 = vpack.c.b16 %v1160, %v1158
    %v1173 = vpack.c.b16 %v1163, %v1161
    %v1174 = vpack.c.b16 %v1164, %v1162
    %v1175 = vpack.c.b16 %v1167, %v1165
    %v1176 = vpack.c.b16 %v1168, %v1166
    %v1186 = vsel %vm813, %v1128, 0
    %v1189 = vsel %vm813, %v1129, 0
    %v1192 = vsel %vm813, %v1130, 0
    %v1195 = vsel %vm813, %v1131, 0
    %v1198 = vsel %vm813, %v1132, 0
    %v1201 = vsel %vm813, %v1133, 0
    %v1204 = vsel %vm813, %v1134, 0
    %v1207 = vsel %vm813, %v1135, 0
    %1209 = vmatprep.subr.bf16.mxu0 0
    %1210 = vmatpush1.bf16.msra.mxu0 0
    %1211 = vmatprep.subr.bf16.mxu0 0
    %1212 = vmatpush1.bf16.msra.mxu0 0
    %1213 = vmatprep.subr.bf16.mxu0 0
    %1214 = vmatpush1.bf16.msra.mxu0 0
    %1215 = vmatprep.subr.bf16.mxu0 0
    %1216 = vmatpush1.bf16.msra.mxu0 0
    %1217 = vmatprep.subr.bf16.mxu0 %v1176
    %1218 = vmatpush1.bf16.msra.mxu0 %v1175
    %1219 = vmatprep.subr.bf16.mxu0 %v1174
    %1220 = vmatpush1.bf16.msra.mxu0 %v1173
    %1221 = vmatprep.subr.bf16.mxu0 %v1172
    %1222 = vmatpush1.bf16.msra.mxu0 %v1171
    %1223 = vmatprep.subr.bf16.mxu0 %v1170
    %1224 = vmatpush1.bf16.msra.mxu0 %v1169
    %1225 = vmatprep.subr.bf16.mxu0 0
    %1226 = vmatpush2.bf16.msra.mxu0 0
    %1227 = vmatprep.subr.bf16.mxu0 0
    %1228 = vmatpush2.bf16.msra.mxu0 0
    %1229 = vmatprep.subr.bf16.mxu0 0
    %1230 = vmatpush2.bf16.msra.mxu0 0
    %1231 = vmatprep.subr.bf16.mxu0 0
    %1232 = vmatpush2.bf16.msra.mxu0 0
    %1233 = vmatprep.subr.bf16.mxu0 0
    %1234 = vmatpush2.bf16.msra.mxu0 0
    %1235 = vmatprep.subr.bf16.mxu0 0
    %1236 = vmatpush2.bf16.msra.mxu0 0
    %1237 = vmatprep.subr.bf16.mxu0 0
    %1238 = vmatpush2.bf16.msra.mxu0 0
    %1239 = vmatprep.subr.bf16.mxu0 0
    %1240 = vmatpush2.bf16.msra.mxu0 0
    %1241 = vmatprep.mubr.bf16.mxu0 0
    %1242 = vmatmul.mubr.bf16.gmra.mxu0 %v1186
    %v1243 = vpop.f32.mrf.mxu0
    %v1244 = vadd.f32 0.0, %v1243
    %v1245 = vpop.f32.mrf.mxu0
    %v1246 = vadd.f32 0.0, %v1245
    %v1247 = vpop.f32.mrf.mxu0
    %v1248 = vadd.f32 0.0, %v1247
    %v1249 = vpop.f32.mrf.mxu0
    %v1250 = vadd.f32 0.0, %v1249
    %1251 = vmatprep.mubr.bf16.mxu0 0
    %1252 = vmatmul.mubr.bf16.gmra.mxu0 %v1189
    %v1253 = vpop.f32.mrf.mxu0
    %v1254 = vadd.f32 0.0, %v1253
    %v1255 = vpop.f32.mrf.mxu0
    %v1256 = vadd.f32 0.0, %v1255
    %v1257 = vpop.f32.mrf.mxu0
    %v1258 = vadd.f32 0.0, %v1257
    %v1259 = vpop.f32.mrf.mxu0
    %v1260 = vadd.f32 0.0, %v1259
    %1261 = vmatprep.mubr.bf16.mxu0 0
    %1262 = vmatmul.mubr.bf16.gmra.mxu0 %v1192
    %v1263 = vpop.f32.mrf.mxu0
    %v1264 = vadd.f32 0.0, %v1263
    %v1265 = vpop.f32.mrf.mxu0
    %v1266 = vadd.f32 0.0, %v1265
    %v1267 = vpop.f32.mrf.mxu0
    %v1268 = vadd.f32 0.0, %v1267
    %v1269 = vpop.f32.mrf.mxu0
    %v1270 = vadd.f32 0.0, %v1269
    %1271 = vmatprep.mubr.bf16.mxu0 0
    %1272 = vmatmul.mubr.bf16.gmra.mxu0 %v1195
    %v1273 = vpop.f32.mrf.mxu0
    %v1274 = vadd.f32 0.0, %v1273
    %v1275 = vpop.f32.mrf.mxu0
    %v1276 = vadd.f32 0.0, %v1275
    %v1277 = vpop.f32.mrf.mxu0
    %v1278 = vadd.f32 0.0, %v1277
    %v1279 = vpop.f32.mrf.mxu0
    %v1280 = vadd.f32 0.0, %v1279
    %1281 = vmatprep.mubr.bf16.mxu0 0
    %1282 = vmatmul.mubr.bf16.gmra.mxu0 %v1198
    %v1283 = vpop.f32.mrf.mxu0
    %v1284 = vadd.f32 0.0, %v1283
    %v1285 = vpop.f32.mrf.mxu0
    %v1286 = vadd.f32 0.0, %v1285
    %v1287 = vpop.f32.mrf.mxu0
    %v1288 = vadd.f32 0.0, %v1287
    %v1289 = vpop.f32.mrf.mxu0
    %v1290 = vadd.f32 0.0, %v1289
    %1291 = vmatprep.mubr.bf16.mxu0 0
    %1292 = vmatmul.mubr.bf16.gmra.mxu0 %v1201
    %v1293 = vpop.f32.mrf.mxu0
    %v1294 = vadd.f32 0.0, %v1293
    %v1295 = vpop.f32.mrf.mxu0
    %v1296 = vadd.f32 0.0, %v1295
    %v1297 = vpop.f32.mrf.mxu0
    %v1298 = vadd.f32 0.0, %v1297
    %v1299 = vpop.f32.mrf.mxu0
    %v1300 = vadd.f32 0.0, %v1299
    %1301 = vmatprep.mubr.bf16.mxu0 0
    %1302 = vmatmul.mubr.bf16.gmra.mxu0 %v1204
    %v1303 = vpop.f32.mrf.mxu0
    %v1304 = vadd.f32 0.0, %v1303
    %v1305 = vpop.f32.mrf.mxu0
    %v1306 = vadd.f32 0.0, %v1305
    %v1307 = vpop.f32.mrf.mxu0
    %v1308 = vadd.f32 0.0, %v1307
    %v1309 = vpop.f32.mrf.mxu0
    %v1310 = vadd.f32 0.0, %v1309
    %1311 = vmatprep.mubr.bf16.mxu0 0
    %1312 = vmatmul.mubr.bf16.gmra.mxu0 %v1207
    %v1313 = vpop.f32.mrf.mxu0
    %v1314 = vadd.f32 0.0, %v1313
    %v1315 = vpop.f32.mrf.mxu0
    %v1316 = vadd.f32 0.0, %v1315
    %v1317 = vpop.f32.mrf.mxu0
    %v1318 = vadd.f32 0.0, %v1317
    %v1319 = vpop.f32.mrf.mxu0
    %v1320 = vadd.f32 0.0, %v1319
    %1321 = vdwg.mxu0
    %v1322 = vadd.f32 %v1050, %v1244
    %v1323 = vadd.f32 %v1052, %v1246
    %v1324 = vadd.f32 %v1054, %v1248
    %v1325 = vadd.f32 %v1056, %v1250
    %v1326 = vadd.f32 %v1060, %v1254
    %v1327 = vadd.f32 %v1062, %v1256
    %v1328 = vadd.f32 %v1064, %v1258
    %v1329 = vadd.f32 %v1066, %v1260
    %v1330 = vadd.f32 %v1070, %v1264
    %v1331 = vadd.f32 %v1072, %v1266
    %v1332 = vadd.f32 %v1074, %v1268
    %v1333 = vadd.f32 %v1076, %v1270
    %v1334 = vadd.f32 %v1080, %v1274
    %v1335 = vadd.f32 %v1082, %v1276
    %v1336 = vadd.f32 %v1084, %v1278
    %v1337 = vadd.f32 %v1086, %v1280
    %v1338 = vadd.f32 %v1090, %v1284
    %v1339 = vadd.f32 %v1092, %v1286
    %v1340 = vadd.f32 %v1094, %v1288
    %v1341 = vadd.f32 %v1096, %v1290
    %v1342 = vadd.f32 %v1100, %v1294
    %v1343 = vadd.f32 %v1102, %v1296
    %v1344 = vadd.f32 %v1104, %v1298
    %v1345 = vadd.f32 %v1106, %v1300
    %v1346 = vadd.f32 %v1110, %v1304
    %v1347 = vadd.f32 %v1112, %v1306
    %v1348 = vadd.f32 %v1114, %v1308
    %v1349 = vadd.f32 %v1116, %v1310
    %v1350 = vadd.f32 %v1120, %v1314
    %v1351 = vadd.f32 %v1122, %v1316
    %v1352 = vadd.f32 %v1124, %v1318
    %v1353 = vadd.f32 %v1126, %v1320
    %v1354 = vld [vmem:[#allocation4] sm:$0x3]
    %v1356 = vlaneseq
    %v1357 = vshrl.u32 %v1356, 7
    %v1358 = vsub.s32 0, %v1357
    %v1359 = vrot.slane %v1354, %v1358
    %v1360 = vlaneseq
    %v1361 = vshrl.u32 %v1360, 7
    %v1362 = vsub.s32 1, %v1361
    %v1363 = vrot.slane %v1354, %v1362
    %v1366 = vadd.f32 %v1322, %v1359
    %v1367 = vadd.f32 %v1323, %v1363
    %v1368 = vadd.f32 %v1324, %v1359
    %v1369 = vadd.f32 %v1325, %v1363
    %v1370 = vadd.f32 %v1326, %v1359
    %v1371 = vadd.f32 %v1327, %v1363
    %v1372 = vadd.f32 %v1328, %v1359
    %v1373 = vadd.f32 %v1329, %v1363
    %v1374 = vadd.f32 %v1330, %v1359
    %v1375 = vadd.f32 %v1331, %v1363
    %v1376 = vadd.f32 %v1332, %v1359
    %v1377 = vadd.f32 %v1333, %v1363
    %v1378 = vadd.f32 %v1334, %v1359
    %v1379 = vadd.f32 %v1335, %v1363
    %v1380 = vadd.f32 %v1336, %v1359
    %v1381 = vadd.f32 %v1337, %v1363
    %v1382 = vadd.f32 %v1338, %v1359
    %v1383 = vadd.f32 %v1339, %v1363
    %v1384 = vadd.f32 %v1340, %v1359
    %v1385 = vadd.f32 %v1341, %v1363
    %v1386 = vadd.f32 %v1342, %v1359
    %v1387 = vadd.f32 %v1343, %v1363
    %v1388 = vadd.f32 %v1344, %v1359
    %v1389 = vadd.f32 %v1345, %v1363
    %v1390 = vadd.f32 %v1346, %v1359
    %v1391 = vadd.f32 %v1347, %v1363
    %v1392 = vadd.f32 %v1348, %v1359
    %v1393 = vadd.f32 %v1349, %v1363
    %v1394 = vadd.f32 %v1350, %v1359
    %v1395 = vadd.f32 %v1351, %v1363
    %v1396 = vadd.f32 %v1352, %v1359
    %v1397 = vadd.f32 %v1353, %v1363
    %v1398 = vrot.slane %v1366, 7
    %v1399 = vrot.slane %v1367, 7
    %v1400 = vrot.slane %v1368, 7
    %v1401 = vrot.slane %v1369, 7
    %v1402 = vrot.slane %v1370, 7
    %v1403 = vrot.slane %v1371, 7
    %v1404 = vrot.slane %v1372, 7
    %v1405 = vrot.slane %v1373, 7
    %v1406 = vrot.slane %v1374, 7
    %v1407 = vrot.slane %v1375, 7
    %v1408 = vrot.slane %v1376, 7
    %v1409 = vrot.slane %v1377, 7
    %v1410 = vrot.slane %v1378, 7
    %v1411 = vrot.slane %v1379, 7
    %v1412 = vrot.slane %v1380, 7
    %v1413 = vrot.slane %v1381, 7
    %v1414 = vrot.slane %v1382, 7
    %v1415 = vrot.slane %v1383, 7
    %v1416 = vrot.slane %v1384, 7
    %v1417 = vrot.slane %v1385, 7
    %v1418 = vrot.slane %v1386, 7
    %v1419 = vrot.slane %v1387, 7
    %v1420 = vrot.slane %v1388, 7
    %v1421 = vrot.slane %v1389, 7
    %v1422 = vrot.slane %v1390, 7
    %v1423 = vrot.slane %v1391, 7
    %v1424 = vrot.slane %v1392, 7
    %v1425 = vrot.slane %v1393, 7
    %v1426 = vrot.slane %v1394, 7
    %v1427 = vrot.slane %v1395, 7
    %v1428 = vrot.slane %v1396, 7
    %v1429 = vrot.slane %v1397, 7
    %v1430 = vsel %vm642, %v1426, %v1428
    %v1431 = vsel %vm642, %v1427, %v1429
    %v1432 = vsel %vm642, %v1424, %v1426
    %v1433 = vsel %vm642, %v1425, %v1427
    %v1434 = vsel %vm642, %v1422, %v1424
    %v1435 = vsel %vm642, %v1423, %v1425
    %v1436 = vsel %vm642, %v1420, %v1422
    %v1437 = vsel %vm642, %v1421, %v1423
    %v1438 = vsel %vm642, %v1418, %v1420
    %v1439 = vsel %vm642, %v1419, %v1421
    %v1440 = vsel %vm642, %v1416, %v1418
    %v1441 = vsel %vm642, %v1417, %v1419
    %v1442 = vsel %vm642, %v1414, %v1416
    %v1443 = vsel %vm642, %v1415, %v1417
    %v1444 = vsel %vm642, %v1412, %v1414
    %v1445 = vsel %vm642, %v1413, %v1415
    %v1446 = vsel %vm642, %v1410, %v1412
    %v1447 = vsel %vm642, %v1411, %v1413
    %v1448 = vsel %vm642, %v1408, %v1410
    %v1449 = vsel %vm642, %v1409, %v1411
    %v1450 = vsel %vm642, %v1406, %v1408
    %v1451 = vsel %vm642, %v1407, %v1409
    %v1452 = vsel %vm642, %v1404, %v1406
    %v1453 = vsel %vm642, %v1405, %v1407
    %v1454 = vsel %vm642, %v1402, %v1404
    %v1455 = vsel %vm642, %v1403, %v1405
    %v1456 = vsel %vm642, %v1400, %v1402
    %v1457 = vsel %vm642, %v1401, %v1403
    %v1458 = vsel %vm642, %v1398, %v1400
    %v1459 = vsel %vm642, %v1399, %v1401
    %v1460 = vsel %vm642, %v1428, %v1398
    %v1461 = vsel %vm642, %v1429, %v1399
    %v1462 = vsel %vm610, -inf, %v1460
    %v1463 = vsel %vm610, -inf, %v1461
    %v1464 = vsel %vm611, -inf, %v1458
    %v1465 = vsel %vm611, -inf, %v1459
    %v1466 = vsel %vm612, -inf, %v1456
    %v1467 = vsel %vm612, -inf, %v1457
    %v1468 = vsel %vm613, -inf, %v1454
    %v1469 = vsel %vm613, -inf, %v1455
    %v1470 = vsel %vm614, -inf, %v1452
    %v1471 = vsel %vm614, -inf, %v1453
    %v1472 = vsel %vm615, -inf, %v1450
    %v1473 = vsel %vm615, -inf, %v1451
    %v1474 = vsel %vm616, -inf, %v1448
    %v1475 = vsel %vm616, -inf, %v1449
    %v1476 = vsel %vm617, -inf, %v1446
    %v1477 = vsel %vm617, -inf, %v1447
    %v1478 = vsel %vm618, -inf, %v1444
    %v1479 = vsel %vm618, -inf, %v1445
    %v1480 = vsel %vm619, -inf, %v1442
    %v1481 = vsel %vm619, -inf, %v1443
    %v1482 = vsel %vm620, -inf, %v1440
    %v1483 = vsel %vm620, -inf, %v1441
    %v1484 = vsel %vm621, -inf, %v1438
    %v1485 = vsel %vm621, -inf, %v1439
    %v1486 = vsel %vm622, -inf, %v1436
    %v1487 = vsel %vm622, -inf, %v1437
    %v1488 = vsel %vm623, -inf, %v1434
    %v1489 = vsel %vm623, -inf, %v1435
    %v1490 = vsel %vm624, -inf, %v1432
    %v1491 = vsel %vm624, -inf, %v1433
    %v1492 = vsel %vm625, -inf, %v1430
    %v1493 = vsel %vm625, -inf, %v1431
    %v1494 = vrot.slane %v1366, 1
    %v1495 = vrot.slane %v1367, 1
    %v1496 = vrot.slane %v1368, 1
    %v1497 = vrot.slane %v1369, 1
    %v1498 = vrot.slane %v1370, 1
    %v1499 = vrot.slane %v1371, 1
    %v1500 = vrot.slane %v1372, 1
    %v1501 = vrot.slane %v1373, 1
    %v1502 = vrot.slane %v1374, 1
    %v1503 = vrot.slane %v1375, 1
    %v1504 = vrot.slane %v1376, 1
    %v1505 = vrot.slane %v1377, 1
    %v1506 = vrot.slane %v1378, 1
    %v1507 = vrot.slane %v1379, 1
    %v1508 = vrot.slane %v1380, 1
    %v1509 = vrot.slane %v1381, 1
    %v1510 = vrot.slane %v1382, 1
    %v1511 = vrot.slane %v1383, 1
    %v1512 = vrot.slane %v1384, 1
    %v1513 = vrot.slane %v1385, 1
    %v1514 = vrot.slane %v1386, 1
    %v1515 = vrot.slane %v1387, 1
    %v1516 = vrot.slane %v1388, 1
    %v1517 = vrot.slane %v1389, 1
    %v1518 = vrot.slane %v1390, 1
    %v1519 = vrot.slane %v1391, 1
    %v1520 = vrot.slane %v1392, 1
    %v1521 = vrot.slane %v1393, 1
    %v1522 = vrot.slane %v1394, 1
    %v1523 = vrot.slane %v1395, 1
    %v1524 = vrot.slane %v1396, 1
    %v1525 = vrot.slane %v1397, 1
    %v1526 = vsel %vm707, %v1522, %v1524
    %v1527 = vsel %vm707, %v1523, %v1525
    %v1528 = vsel %vm707, %v1520, %v1522
    %v1529 = vsel %vm707, %v1521, %v1523
    %v1530 = vsel %vm707, %v1518, %v1520
    %v1531 = vsel %vm707, %v1519, %v1521
    %v1532 = vsel %vm707, %v1516, %v1518
    %v1533 = vsel %vm707, %v1517, %v1519
    %v1534 = vsel %vm707, %v1514, %v1516
    %v1535 = vsel %vm707, %v1515, %v1517
    %v1536 = vsel %vm707, %v1512, %v1514
    %v1537 = vsel %vm707, %v1513, %v1515
    %v1538 = vsel %vm707, %v1510, %v1512
    %v1539 = vsel %vm707, %v1511, %v1513
    %v1540 = vsel %vm707, %v1508, %v1510
    %v1541 = vsel %vm707, %v1509, %v1511
    %v1542 = vsel %vm707, %v1506, %v1508
    %v1543 = vsel %vm707, %v1507, %v1509
    %v1544 = vsel %vm707, %v1504, %v1506
    %v1545 = vsel %vm707, %v1505, %v1507
    %v1546 = vsel %vm707, %v1502, %v1504
    %v1547 = vsel %vm707, %v1503, %v1505
    %v1548 = vsel %vm707, %v1500, %v1502
    %v1549 = vsel %vm707, %v1501, %v1503
    %v1550 = vsel %vm707, %v1498, %v1500
    %v1551 = vsel %vm707, %v1499, %v1501
    %v1552 = vsel %vm707, %v1496, %v1498
    %v1553 = vsel %vm707, %v1497, %v1499
    %v1554 = vsel %vm707, %v1494, %v1496
    %v1555 = vsel %vm707, %v1495, %v1497
    %v1556 = vsel %vm707, %v1524, %v1494
    %v1557 = vsel %vm707, %v1525, %v1495
    %v1558 = vsel %vm675, -inf, %v1554
    %v1559 = vsel %vm675, -inf, %v1555
    %v1560 = vsel %vm676, -inf, %v1552
    %v1561 = vsel %vm676, -inf, %v1553
    %v1562 = vsel %vm677, -inf, %v1550
    %v1563 = vsel %vm677, -inf, %v1551
    %v1564 = vsel %vm678, -inf, %v1548
    %v1565 = vsel %vm678, -inf, %v1549
    %v1566 = vsel %vm679, -inf, %v1546
    %v1567 = vsel %vm679, -inf, %v1547
    %v1568 = vsel %vm680, -inf, %v1544
    %v1569 = vsel %vm680, -inf, %v1545
    %v1570 = vsel %vm681, -inf, %v1542
    %v1571 = vsel %vm681, -inf, %v1543
    %v1572 = vsel %vm682, -inf, %v1540
    %v1573 = vsel %vm682, -inf, %v1541
    %v1574 = vsel %vm683, -inf, %v1538
    %v1575 = vsel %vm683, -inf, %v1539
    %v1576 = vsel %vm684, -inf, %v1536
    %v1577 = vsel %vm684, -inf, %v1537
    %v1578 = vsel %vm685, -inf, %v1534
    %v1579 = vsel %vm685, -inf, %v1535
    %v1580 = vsel %vm686, -inf, %v1532
    %v1581 = vsel %vm686, -inf, %v1533
    %v1582 = vsel %vm687, -inf, %v1530
    %v1583 = vsel %vm687, -inf, %v1531
    %v1584 = vsel %vm688, -inf, %v1528
    %v1585 = vsel %vm688, -inf, %v1529
    %v1586 = vsel %vm689, -inf, %v1526
    %v1587 = vsel %vm689, -inf, %v1527
    %v1588 = vsel %vm690, -inf, %v1556
    %v1589 = vsel %vm690, -inf, %v1557
    %v1590 = vmax.f32 %v1462, %v1366
    %v1591 = vmax.f32 %v1463, %v1367
    %v1592 = vmax.f32 %v1464, %v1368
    %v1593 = vmax.f32 %v1465, %v1369
    %v1594 = vmax.f32 %v1466, %v1370
    %v1595 = vmax.f32 %v1467, %v1371
    %v1596 = vmax.f32 %v1468, %v1372
    %v1597 = vmax.f32 %v1469, %v1373
    %v1598 = vmax.f32 %v1470, %v1374
    %v1599 = vmax.f32 %v1471, %v1375
    %v1600 = vmax.f32 %v1472, %v1376
    %v1601 = vmax.f32 %v1473, %v1377
    %v1602 = vmax.f32 %v1474, %v1378
    %v1603 = vmax.f32 %v1475, %v1379
    %v1604 = vmax.f32 %v1476, %v1380
    %v1605 = vmax.f32 %v1477, %v1381
    %v1606 = vmax.f32 %v1478, %v1382
    %v1607 = vmax.f32 %v1479, %v1383
    %v1608 = vmax.f32 %v1480, %v1384
    %v1609 = vmax.f32 %v1481, %v1385
    %v1610 = vmax.f32 %v1482, %v1386
    %v1611 = vmax.f32 %v1483, %v1387
    %v1612 = vmax.f32 %v1484, %v1388
    %v1613 = vmax.f32 %v1485, %v1389
    %v1614 = vmax.f32 %v1486, %v1390
    %v1615 = vmax.f32 %v1487, %v1391
    %v1616 = vmax.f32 %v1488, %v1392
    %v1617 = vmax.f32 %v1489, %v1393
    %v1618 = vmax.f32 %v1490, %v1394
    %v1619 = vmax.f32 %v1491, %v1395
    %v1620 = vmax.f32 %v1492, %v1396
    %v1621 = vmax.f32 %v1493, %v1397
    %v1622 = vmax.f32 %v1590, %v1558
    %v1623 = vmax.f32 %v1591, %v1559
    %v1624 = vmax.f32 %v1592, %v1560
    %v1625 = vmax.f32 %v1593, %v1561
    %v1626 = vmax.f32 %v1594, %v1562
    %v1627 = vmax.f32 %v1595, %v1563
    %v1628 = vmax.f32 %v1596, %v1564
    %v1629 = vmax.f32 %v1597, %v1565
    %v1630 = vmax.f32 %v1598, %v1566
    %v1631 = vmax.f32 %v1599, %v1567
    %v1632 = vmax.f32 %v1600, %v1568
    %v1633 = vmax.f32 %v1601, %v1569
    %v1634 = vmax.f32 %v1602, %v1570
    %v1635 = vmax.f32 %v1603, %v1571
    %v1636 = vmax.f32 %v1604, %v1572
    %v1637 = vmax.f32 %v1605, %v1573
    %v1638 = vmax.f32 %v1606, %v1574
    %v1639 = vmax.f32 %v1607, %v1575
    %v1640 = vmax.f32 %v1608, %v1576
    %v1641 = vmax.f32 %v1609, %v1577
    %v1642 = vmax.f32 %v1610, %v1578
    %v1643 = vmax.f32 %v1611, %v1579
    %v1644 = vmax.f32 %v1612, %v1580
    %v1645 = vmax.f32 %v1613, %v1581
    %v1646 = vmax.f32 %v1614, %v1582
    %v1647 = vmax.f32 %v1615, %v1583
    %v1648 = vmax.f32 %v1616, %v1584
    %v1649 = vmax.f32 %v1617, %v1585
    %v1650 = vmax.f32 %v1618, %v1586
    %v1651 = vmax.f32 %v1619, %v1587
    %v1652 = vmax.f32 %v1620, %v1588
    %v1653 = vmax.f32 %v1621, %v1589
    %v1654 = vld [vmem:[#allocation16] sm:$0xf]
    %v1655 = vld [vmem:[#allocation16 + $0x4] sm:$0xf]
    %v1656 = vld [vmem:[#allocation16 + $0x8] sm:$0xf]
    %v1657 = vld [vmem:[#allocation16 + $0xc] sm:$0xf]
    %v1658 = vld [vmem:[#allocation16 + $0x10] sm:$0xf]
    %v1659 = vld [vmem:[#allocation16 + $0x14] sm:$0xf]
    %v1660 = vld [vmem:[#allocation16 + $0x18] sm:$0xf]
    %v1661 = vld [vmem:[#allocation16 + $0x1c] sm:$0xf]
    %v1662 = vpack.c.bf16 %v1624, %v1622
    %v1663 = vpack.c.bf16 %v1625, %v1623
    %v1664 = vpack.c.bf16 %v1628, %v1626
    %v1665 = vpack.c.bf16 %v1629, %v1627
    %v1666 = vpack.c.bf16 %v1632, %v1630
    %v1667 = vpack.c.bf16 %v1633, %v1631
    %v1668 = vpack.c.bf16 %v1636, %v1634
    %v1669 = vpack.c.bf16 %v1637, %v1635
    %v1670 = vpack.c.bf16 %v1640, %v1638
    %v1671 = vpack.c.bf16 %v1641, %v1639
    %v1672 = vpack.c.bf16 %v1644, %v1642
    %v1673 = vpack.c.bf16 %v1645, %v1643
    %v1674 = vpack.c.bf16 %v1648, %v1646
    %v1675 = vpack.c.bf16 %v1649, %v1647
    %v1676 = vpack.c.bf16 %v1652, %v1650
    %v1677 = vpack.c.bf16 %v1653, %v1651
    %v1686 = vunpack.c.l.b16 %v1654
    %v1687 = vunpack.c.l.b16 %v1655
    %v1688 = vunpack.c.l.b16 %v1656
    %v1689 = vunpack.c.l.b16 %v1657
    %v1690 = vunpack.c.l.b16 %v1658
    %v1691 = vunpack.c.l.b16 %v1659
    %v1692 = vunpack.c.l.b16 %v1660
    %v1693 = vunpack.c.l.b16 %v1661
    %v1694 = vpack.c.b16 %v1687, %v1686
    %v1695 = vpack.c.b16 %v1689, %v1688
    %v1696 = vpack.c.b16 %v1691, %v1690
    %v1697 = vpack.c.b16 %v1693, %v1692
    %1702 = vmatprep.subr.bf16.mxu0 %v1677
    %1703 = vmatpush1.bf16.msra.mxu0 %v1676
    %1704 = vmatprep.subr.bf16.mxu0 %v1675
    %1705 = vmatpush1.bf16.msra.mxu0 %v1674
    %1706 = vmatprep.subr.bf16.mxu0 %v1673
    %1707 = vmatpush1.bf16.msra.mxu0 %v1672
    %1708 = vmatprep.subr.bf16.mxu0 %v1671
    %1709 = vmatpush1.bf16.msra.mxu0 %v1670
    %1710 = vmatprep.subr.bf16.mxu0 %v1669
    %1711 = vmatpush1.bf16.msra.mxu0 %v1668
    %1712 = vmatprep.subr.bf16.mxu0 %v1667
    %1713 = vmatpush1.bf16.msra.mxu0 %v1666
    %1714 = vmatprep.subr.bf16.mxu0 %v1665
    %1715 = vmatpush1.bf16.msra.mxu0 %v1664
    %1716 = vmatprep.subr.bf16.mxu0 %v1663
    %1717 = vmatpush1.bf16.msra.mxu0 %v1662
    %1718 = vmatprep.subr.bf16.mxu0 0
    %1719 = vmatpush2.bf16.msra.mxu0 0
    %1720 = vmatprep.subr.bf16.mxu0 0
    %1721 = vmatpush2.bf16.msra.mxu0 0
    %1722 = vmatprep.subr.bf16.mxu0 0
    %1723 = vmatpush2.bf16.msra.mxu0 0
    %1724 = vmatprep.subr.bf16.mxu0 0
    %1725 = vmatpush2.bf16.msra.mxu0 0
    %1726 = vmatprep.subr.bf16.mxu0 0
    %1727 = vmatpush2.bf16.msra.mxu0 0
    %1728 = vmatprep.subr.bf16.mxu0 0
    %1729 = vmatpush2.bf16.msra.mxu0 0
    %1730 = vmatprep.subr.bf16.mxu0 0
    %1731 = vmatpush2.bf16.msra.mxu0 0
    %1732 = vmatprep.subr.bf16.mxu0 0
    %1733 = vmatpush2.bf16.msra.mxu0 0
    %1734 = vmatprep.mubr.bf16.mxu0 0
    %1735 = vmatmul.mubr.bf16.gmra.mxu0 %v1694
    %v1736 = vpop.f32.mrf.mxu0
    %v1737 = vadd.f32 0.0, %v1736
    %v1738 = vpop.f32.mrf.mxu0
    %v1739 = vadd.f32 0.0, %v1738
    %v1740 = vpop.f32.mrf.mxu0
    %v1741 = vadd.f32 0.0, %v1740
    %v1742 = vpop.f32.mrf.mxu0
    %v1743 = vadd.f32 0.0, %v1742
    %1744 = vmatprep.mubr.bf16.mxu0 0
    %1745 = vmatmul.mubr.bf16.gmra.mxu0 %v1695
    %v1746 = vpop.f32.mrf.mxu0
    %v1747 = vadd.f32 0.0, %v1746
    %v1748 = vpop.f32.mrf.mxu0
    %v1749 = vadd.f32 0.0, %v1748
    %v1750 = vpop.f32.mrf.mxu0
    %v1751 = vadd.f32 0.0, %v1750
    %v1752 = vpop.f32.mrf.mxu0
    %v1753 = vadd.f32 0.0, %v1752
    %1754 = vmatprep.mubr.bf16.mxu0 0
    %1755 = vmatmul.mubr.bf16.gmra.mxu0 %v1696
    %v1756 = vpop.f32.mrf.mxu0
    %v1757 = vadd.f32 0.0, %v1756
    %v1758 = vpop.f32.mrf.mxu0
    %v1759 = vadd.f32 0.0, %v1758
    %v1760 = vpop.f32.mrf.mxu0
    %v1761 = vadd.f32 0.0, %v1760
    %v1762 = vpop.f32.mrf.mxu0
    %v1763 = vadd.f32 0.0, %v1762
    %1764 = vmatprep.mubr.bf16.mxu0 0
    %1765 = vmatmul.mubr.bf16.gmra.mxu0 %v1697
    %v1766 = vpop.f32.mrf.mxu0
    %v1767 = vadd.f32 0.0, %v1766
    %v1768 = vpop.f32.mrf.mxu0
    %v1769 = vadd.f32 0.0, %v1768
    %v1770 = vpop.f32.mrf.mxu0
    %v1771 = vadd.f32 0.0, %v1770
    %v1772 = vpop.f32.mrf.mxu0
    %v1773 = vadd.f32 0.0, %v1772
    %1774 = vdwg.mxu0
    %v1775 = vlaneseq
    %v1776 = vand.u32 %v1775, 127
    %v1777 = vadd.s32 %v1776, 128
    %vm1778 = vcmp.lt.s32.totalorder %v1776, 16
    %vm1779 = vcmp.lt.s32.totalorder %v1777, 16
    %1780 = vrot.lane.b32.xlu0 %v1737, 16
    %v1781 = vpop.permute.xlu0 %1780
    %1782 = vrot.lane.b32.xlu0 %v1741, 16
    %v1783 = vpop.permute.xlu0 %1782
    %1784 = vrot.lane.b32.xlu0 %v1747, 16
    %v1785 = vpop.permute.xlu0 %1784
    %1786 = vrot.lane.b32.xlu0 %v1751, 16
    %v1787 = vpop.permute.xlu0 %1786
    %1788 = vrot.lane.b32.xlu0 %v1757, 16
    %v1789 = vpop.permute.xlu0 %1788
    %1790 = vrot.lane.b32.xlu0 %v1761, 16
    %v1791 = vpop.permute.xlu0 %1790
    %1792 = vrot.lane.b32.xlu0 %v1767, 16
    %v1793 = vpop.permute.xlu0 %1792
    %1794 = vrot.lane.b32.xlu0 %v1771, 16
    %v1795 = vpop.permute.xlu0 %1794
    %1796 = vrot.lane.b32.xlu0 %v1739, 16
    %v1797 = vpop.permute.xlu0 %1796
    %1798 = vrot.lane.b32.xlu0 %v1743, 16
    %v1799 = vpop.permute.xlu0 %1798
    %1800 = vrot.lane.b32.xlu0 %v1749, 16
    %v1801 = vpop.permute.xlu0 %1800
    %1802 = vrot.lane.b32.xlu0 %v1753, 16
    %v1803 = vpop.permute.xlu0 %1802
    %1804 = vrot.lane.b32.xlu0 %v1759, 16
    %v1805 = vpop.permute.xlu0 %1804
    %1806 = vrot.lane.b32.xlu0 %v1763, 16
    %v1807 = vpop.permute.xlu0 %1806
    %1808 = vrot.lane.b32.xlu0 %v1769, 16
    %v1809 = vpop.permute.xlu0 %1808
    %1810 = vrot.lane.b32.xlu0 %v1773, 16
    %v1811 = vpop.permute.xlu0 %1810
    %v1812 = vsel %vm1778, %v1781, %v1797
    %v1813 = vsel %vm1778, %v1783, %v1799
    %v1814 = vsel %vm1778, %v1785, %v1801
    %v1815 = vsel %vm1778, %v1787, %v1803
    %v1816 = vsel %vm1778, %v1789, %v1805
    %v1817 = vsel %vm1778, %v1791, %v1807
    %v1818 = vsel %vm1778, %v1793, %v1809
    %v1819 = vsel %vm1778, %v1795, %v1811
    %v1820 = vsel %vm1778, %v1797, %v1781
    %v1821 = vsel %vm1778, %v1799, %v1783
    %v1822 = vsel %vm1778, %v1801, %v1785
    %v1823 = vsel %vm1778, %v1803, %v1787
    %v1824 = vsel %vm1778, %v1805, %v1789
    %v1825 = vsel %vm1778, %v1807, %v1791
    %v1826 = vsel %vm1778, %v1809, %v1793
    %v1827 = vsel %vm1778, %v1811, %v1795
    %v1828 = vsel %vm1778, -inf, %v1820
    %v1829 = vsel %vm1779, -inf, %v1812
    %v1830 = vsel %vm1778, -inf, %v1821
    %v1831 = vsel %vm1779, -inf, %v1813
    %v1832 = vsel %vm1778, -inf, %v1822
    %v1833 = vsel %vm1779, -inf, %v1814
    %v1834 = vsel %vm1778, -inf, %v1823
    %v1835 = vsel %vm1779, -inf, %v1815
    %v1836 = vsel %vm1778, -inf, %v1824
    %v1837 = vsel %vm1779, -inf, %v1816
    %v1838 = vsel %vm1778, -inf, %v1825
    %v1839 = vsel %vm1779, -inf, %v1817
    %v1840 = vsel %vm1778, -inf, %v1826
    %v1841 = vsel %vm1779, -inf, %v1818
    %v1842 = vsel %vm1778, -inf, %v1827
    %v1843 = vsel %vm1779, -inf, %v1819
    %1844 = vrot.lane.b32.xlu0 %v1737, 112
    %v1845 = vpop.permute.xlu0 %1844
    %1846 = vrot.lane.b32.xlu0 %v1741, 112
    %v1847 = vpop.permute.xlu0 %1846
    %1848 = vrot.lane.b32.xlu0 %v1747, 112
    %v1849 = vpop.permute.xlu0 %1848
    %1850 = vrot.lane.b32.xlu0 %v1751, 112
    %v1851 = vpop.permute.xlu0 %1850
    %1852 = vrot.lane.b32.xlu0 %v1757, 112
    %v1853 = vpop.permute.xlu0 %1852
    %1854 = vrot.lane.b32.xlu0 %v1761, 112
    %v1855 = vpop.permute.xlu0 %1854
    %1856 = vrot.lane.b32.xlu0 %v1767, 112
    %v1857 = vpop.permute.xlu0 %1856
    %1858 = vrot.lane.b32.xlu0 %v1771, 112
    %v1859 = vpop.permute.xlu0 %1858
    %1860 = vrot.lane.b32.xlu0 %v1739, 112
    %v1861 = vpop.permute.xlu0 %1860
    %1862 = vrot.lane.b32.xlu0 %v1743, 112
    %v1863 = vpop.permute.xlu0 %1862
    %1864 = vrot.lane.b32.xlu0 %v1749, 112
    %v1865 = vpop.permute.xlu0 %1864
    %1866 = vrot.lane.b32.xlu0 %v1753, 112
    %v1867 = vpop.permute.xlu0 %1866
    %1868 = vrot.lane.b32.xlu0 %v1759, 112
    %v1869 = vpop.permute.xlu0 %1868
    %1870 = vrot.lane.b32.xlu0 %v1763, 112
    %v1871 = vpop.permute.xlu0 %1870
    %1872 = vrot.lane.b32.xlu0 %v1769, 112
    %v1873 = vpop.permute.xlu0 %1872
    %1874 = vrot.lane.b32.xlu0 %v1773, 112
    %v1875 = vpop.permute.xlu0 %1874
    %vm1876 = vcmp.lt.s32.totalorder %v1776, 112
    %v1877 = vsel %vm1876, %v1845, %v1861
    %v1878 = vsel %vm1876, %v1847, %v1863
    %v1879 = vsel %vm1876, %v1849, %v1865
    %v1880 = vsel %vm1876, %v1851, %v1867
    %v1881 = vsel %vm1876, %v1853, %v1869
    %v1882 = vsel %vm1876, %v1855, %v1871
    %v1883 = vsel %vm1876, %v1857, %v1873
    %v1884 = vsel %vm1876, %v1859, %v1875
    %v1885 = vsel %vm1876, %v1861, %v1845
    %v1886 = vsel %vm1876, %v1863, %v1847
    %v1887 = vsel %vm1876, %v1865, %v1849
    %v1888 = vsel %vm1876, %v1867, %v1851
    %v1889 = vsel %vm1876, %v1869, %v1853
    %v1890 = vsel %vm1876, %v1871, %v1855
    %v1891 = vsel %vm1876, %v1873, %v1857
    %v1892 = vsel %vm1876, %v1875, %v1859
    %v1893 = vmax.f32 %v1828, %v1737
    %v1894 = vmax.f32 %v1829, %v1739
    %v1895 = vmax.f32 %v1830, %v1741
    %v1896 = vmax.f32 %v1831, %v1743
    %v1897 = vmax.f32 %v1832, %v1747
    %v1898 = vmax.f32 %v1833, %v1749
    %v1899 = vmax.f32 %v1834, %v1751
    %v1900 = vmax.f32 %v1835, %v1753
    %v1901 = vmax.f32 %v1836, %v1757
    %v1902 = vmax.f32 %v1837, %v1759
    %v1903 = vmax.f32 %v1838, %v1761
    %v1904 = vmax.f32 %v1839, %v1763
    %v1905 = vmax.f32 %v1840, %v1767
    %v1906 = vmax.f32 %v1841, %v1769
    %v1907 = vmax.f32 %v1842, %v1771
    %v1908 = vmax.f32 %v1843, %v1773
    %v1909 = vmax.f32 %v1893, %v1877
    %v1910 = vmax.f32 %v1894, %v1885
    %v1911 = vmax.f32 %v1895, %v1878
    %v1912 = vmax.f32 %v1896, %v1886
    %v1913 = vmax.f32 %v1897, %v1879
    %v1914 = vmax.f32 %v1898, %v1887
    %v1915 = vmax.f32 %v1899, %v1880
    %v1916 = vmax.f32 %v1900, %v1888
    %v1917 = vmax.f32 %v1901, %v1881
    %v1918 = vmax.f32 %v1902, %v1889
    %v1919 = vmax.f32 %v1903, %v1882
    %v1920 = vmax.f32 %v1904, %v1890
    %v1921 = vmax.f32 %v1905, %v1883
    %v1922 = vmax.f32 %v1906, %v1891
    %v1923 = vmax.f32 %v1907, %v1884
    %v1924 = vmax.f32 %v1908, %v1892
    %v1925 = vpack.c.bf16 %v1911, %v1909
    %v1926 = vpack.c.bf16 %v1912, %v1910
    %v1927 = vpack.c.bf16 %v1915, %v1913
    %v1928 = vpack.c.bf16 %v1916, %v1914
    %v1929 = vpack.c.bf16 %v1919, %v1917
    %v1930 = vpack.c.bf16 %v1920, %v1918
    %v1931 = vpack.c.bf16 %v1923, %v1921
    %v1932 = vpack.c.bf16 %v1924, %v1922
    %v1933 = vld [vmem:[#allocation18] sm:$0xf]
    %v1934 = vld [vmem:[#allocation18 + $0x4] sm:$0xf]
    %v1935 = vld [vmem:[#allocation18 + $0x8] sm:$0xf]
    %v1936 = vld [vmem:[#allocation18 + $0xc] sm:$0xf]
    %v1937 = vld [vmem:[#allocation18 + $0x10] sm:$0xf]
    %v1938 = vld [vmem:[#allocation18 + $0x14] sm:$0xf]
    %v1939 = vld [vmem:[#allocation18 + $0x18] sm:$0xf]
    %v1940 = vld [vmem:[#allocation18 + $0x1c] sm:$0xf]
    %v1941 = vld [vmem:[#allocation18 + $0x20] sm:$0xf]
    %v1942 = vld [vmem:[#allocation18 + $0x24] sm:$0xf]
    %v1943 = vld [vmem:[#allocation18 + $0x28] sm:$0xf]
    %v1944 = vld [vmem:[#allocation18 + $0x2c] sm:$0xf]
    %v1945 = vld [vmem:[#allocation18 + $0x30] sm:$0xf]
    %v1946 = vld [vmem:[#allocation18 + $0x34] sm:$0xf]
    %v1947 = vld [vmem:[#allocation18 + $0x38] sm:$0xf]
    %v1948 = vld [vmem:[#allocation18 + $0x3c] sm:$0xf]
    %v1949 = vld [vmem:[#allocation18 + $0x40] sm:$0xf]
    %v1950 = vld [vmem:[#allocation18 + $0x44] sm:$0xf]
    %v1951 = vld [vmem:[#allocation18 + $0x48] sm:$0xf]
    %v1952 = vld [vmem:[#allocation18 + $0x4c] sm:$0xf]
    %v1953 = vld [vmem:[#allocation18 + $0x50] sm:$0xf]
    %v1954 = vld [vmem:[#allocation18 + $0x54] sm:$0xf]
    %v1955 = vld [vmem:[#allocation18 + $0x58] sm:$0xf]
    %v1956 = vld [vmem:[#allocation18 + $0x5c] sm:$0xf]
    %v1957 = vld [vmem:[#allocation18 + $0x60] sm:$0xf]
    %v1958 = vld [vmem:[#allocation18 + $0x64] sm:$0xf]
    %v1959 = vld [vmem:[#allocation18 + $0x68] sm:$0xf]
    %v1960 = vld [vmem:[#allocation18 + $0x6c] sm:$0xf]
    %v1961 = vld [vmem:[#allocation18 + $0x70] sm:$0xf]
    %v1962 = vld [vmem:[#allocation18 + $0x74] sm:$0xf]
    %v1963 = vld [vmem:[#allocation18 + $0x78] sm:$0xf]
    %v1964 = vld [vmem:[#allocation18 + $0x7c] sm:$0xf]
    %v1997 = vunpack.c.l.b16 %v1933
    %v1998 = vunpack.c.l.b16 %v1934
    %v1999 = vunpack.c.l.b16 %v1935
    %v2000 = vunpack.c.l.b16 %v1936
    %v2001 = vunpack.c.l.b16 %v1937
    %v2002 = vunpack.c.l.b16 %v1938
    %v2003 = vunpack.c.l.b16 %v1939
    %v2004 = vunpack.c.l.b16 %v1940
    %v2005 = vunpack.c.l.b16 %v1941
    %v2006 = vunpack.c.l.b16 %v1942
    %v2007 = vunpack.c.l.b16 %v1943
    %v2008 = vunpack.c.l.b16 %v1944
    %v2009 = vunpack.c.l.b16 %v1945
    %v2010 = vunpack.c.l.b16 %v1946
    %v2011 = vunpack.c.l.b16 %v1947
    %v2012 = vunpack.c.l.b16 %v1948
    %v2013 = vunpack.c.l.b16 %v1949
    %v2014 = vunpack.c.l.b16 %v1950
    %v2015 = vunpack.c.l.b16 %v1951
    %v2016 = vunpack.c.l.b16 %v1952
    %v2017 = vunpack.c.l.b16 %v1953
    %v2018 = vunpack.c.l.b16 %v1954
    %v2019 = vunpack.c.l.b16 %v1955
    %v2020 = vunpack.c.l.b16 %v1956
    %v2021 = vunpack.c.l.b16 %v1957
    %v2022 = vunpack.c.l.b16 %v1958
    %v2023 = vunpack.c.l.b16 %v1959
    %v2024 = vunpack.c.l.b16 %v1960
    %v2025 = vunpack.c.l.b16 %v1961
    %v2026 = vunpack.c.l.b16 %v1962
    %v2027 = vunpack.c.l.b16 %v1963
    %v2028 = vunpack.c.l.b16 %v1964
    %v2029 = vpack.c.b16 %v1998, %v1997
    %v2030 = vpack.c.b16 %v2000, %v1999
    %v2031 = vpack.c.b16 %v2002, %v2001
    %v2032 = vpack.c.b16 %v2004, %v2003
    %v2033 = vpack.c.b16 %v2006, %v2005
    %v2034 = vpack.c.b16 %v2008, %v2007
    %v2035 = vpack.c.b16 %v2010, %v2009
    %v2036 = vpack.c.b16 %v2012, %v2011
    %v2037 = vpack.c.b16 %v2014, %v2013
    %v2038 = vpack.c.b16 %v2016, %v2015
    %v2039 = vpack.c.b16 %v2018, %v2017
    %v2040 = vpack.c.b16 %v2020, %v2019
    %v2041 = vpack.c.b16 %v2022, %v2021
    %v2042 = vpack.c.b16 %v2024, %v2023
    %v2043 = vpack.c.b16 %v2026, %v2025
    %v2044 = vpack.c.b16 %v2028, %v2027
    %2061 = vmatprep.subr.bf16.mxu0 0
    %2062 = vmatpush1.bf16.msra.mxu0 %v2036
    %2063 = vmatprep.subr.bf16.mxu0 0
    %2064 = vmatpush1.bf16.msra.mxu0 %v2035
    %2065 = vmatprep.subr.bf16.mxu0 0
    %2066 = vmatpush1.bf16.msra.mxu0 %v2034
    %2067 = vmatprep.subr.bf16.mxu0 0
    %2068 = vmatpush1.bf16.msra.mxu0 %v2033
    %2069 = vmatprep.subr.bf16.mxu0 0
    %2070 = vmatpush1.bf16.msra.mxu0 %v2032
    %2071 = vmatprep.subr.bf16.mxu0 0
    %2072 = vmatpush1.bf16.msra.mxu0 %v2031
    %2073 = vmatprep.subr.bf16.mxu0 0
    %2074 = vmatpush1.bf16.msra.mxu0 %v2030
    %2075 = vmatprep.subr.bf16.mxu0 0
    %2076 = vmatpush1.bf16.msra.mxu0 %v2029
    %2077 = vmatprep.subr.bf16.mxu0 0
    %2078 = vmatpush2.bf16.msra.mxu0 %v2044
    %2079 = vmatprep.subr.bf16.mxu0 0
    %2080 = vmatpush2.bf16.msra.mxu0 %v2043
    %2081 = vmatprep.subr.bf16.mxu0 0
    %2082 = vmatpush2.bf16.msra.mxu0 %v2042
    %2083 = vmatprep.subr.bf16.mxu0 0
    %2084 = vmatpush2.bf16.msra.mxu0 %v2041
    %2085 = vmatprep.subr.bf16.mxu0 0
    %2086 = vmatpush2.bf16.msra.mxu0 %v2040
    %2087 = vmatprep.subr.bf16.mxu0 0
    %2088 = vmatpush2.bf16.msra.mxu0 %v2039
    %2089 = vmatprep.subr.bf16.mxu0 0
    %2090 = vmatpush2.bf16.msra.mxu0 %v2038
    %2091 = vmatprep.subr.bf16.mxu0 0
    %2092 = vmatpush2.bf16.msra.mxu0 %v2037
    %2093 = vmatprep.mubr.bf16.mxu0 %v1926
    %2094 = vmatmul.mubr.bf16.gmra.mxu0 %v1925
    %v2095 = vpop.f32.mrf.mxu0
    %v2096 = vadd.f32 0.0, %v2095
    %v2097 = vpop.f32.mrf.mxu0
    %v2098 = vpop.f32.mrf.mxu0
    %v2099 = vadd.f32 0.0, %v2098
    %v2100 = vpop.f32.mrf.mxu0
    %2101 = vmatprep.mubr.bf16.mxu0 %v1928
    %2102 = vmatmul.mubr.bf16.gmra.mxu0 %v1927
    %v2103 = vpop.f32.mrf.mxu0
    %v2104 = vadd.f32 0.0, %v2103
    %v2105 = vpop.f32.mrf.mxu0
    %v2106 = vpop.f32.mrf.mxu0
    %v2107 = vadd.f32 0.0, %v2106
    %v2108 = vpop.f32.mrf.mxu0
    %2109 = vmatprep.mubr.bf16.mxu0 %v1930
    %2110 = vmatmul.mubr.bf16.gmra.mxu0 %v1929
    %v2111 = vpop.f32.mrf.mxu0
    %v2112 = vadd.f32 0.0, %v2111
    %v2113 = vpop.f32.mrf.mxu0
    %v2114 = vpop.f32.mrf.mxu0
    %v2115 = vadd.f32 0.0, %v2114
    %v2116 = vpop.f32.mrf.mxu0
    %2117 = vmatprep.mubr.bf16.mxu0 %v1932
    %2118 = vmatmul.mubr.bf16.gmra.mxu0 %v1931
    %v2119 = vpop.f32.mrf.mxu0
    %v2120 = vadd.f32 0.0, %v2119
    %v2121 = vpop.f32.mrf.mxu0
    %v2122 = vpop.f32.mrf.mxu0
    %v2123 = vadd.f32 0.0, %v2122
    %v2124 = vpop.f32.mrf.mxu0
    %2125 = vdwg.mxu0
    %v2126 = vmax.f32 %v2096, 0.0
    %v2127 = vmax.f32 %v2099, 0.0
    %v2128 = vmax.f32 %v2104, 0.0
    %v2129 = vmax.f32 %v2107, 0.0
    %v2130 = vmax.f32 %v2112, 0.0
    %v2131 = vmax.f32 %v2115, 0.0
    %v2132 = vmax.f32 %v2120, 0.0
    %v2133 = vmax.f32 %v2123, 0.0
    %vm2134 = vcmp.lt.s32.totalorder %v402, 0
    %v2135 = vsub.s32 0, %v402
    %v2136 = vsel %vm2134, %v2135, %v402
    %v2137 = vshrl.u32 %v2136, 3
    %v2138 = vand.u32 %v2136, 7
    %v2139 = vsub.s32 0, %v2138
    %v2140 = vsel %vm2134, %v2139, %v2138
    %vm2141 = vcmp.lt.s32.totalorder %v403, 0
    %v2142 = vsub.s32 0, %v403
    %v2143 = vsel %vm2141, %v2142, %v403
    %v2144 = vshrl.u32 %v2143, 3
    %v2145 = vand.u32 %v2143, 7
    %v2146 = vsub.s32 0, %v2145
    %v2147 = vsel %vm2141, %v2146, %v2145
    %vm2148 = vcmp.lt.s32.totalorder %v404, 0
    %v2149 = vsub.s32 0, %v404
    %v2150 = vsel %vm2148, %v2149, %v404
    %v2151 = vshrl.u32 %v2150, 3
    %v2152 = vand.u32 %v2150, 7
    %v2153 = vsub.s32 0, %v2152
    %v2154 = vsel %vm2148, %v2153, %v2152
    %vm2155 = vcmp.lt.s32.totalorder %v405, 0
    %v2156 = vsub.s32 0, %v405
    %v2157 = vsel %vm2155, %v2156, %v405
    %v2158 = vshrl.u32 %v2157, 3
    %v2159 = vand.u32 %v2157, 7
    %v2160 = vsub.s32 0, %v2159
    %v2161 = vsel %vm2155, %v2160, %v2159
    %vm2162 = vcmp.lt.s32.totalorder %v406, 0
    %v2163 = vsub.s32 0, %v406
    %v2164 = vsel %vm2162, %v2163, %v406
    %v2165 = vshrl.u32 %v2164, 3
    %v2166 = vand.u32 %v2164, 7
    %v2167 = vsub.s32 0, %v2166
    %v2168 = vsel %vm2162, %v2167, %v2166
    %vm2169 = vcmp.lt.s32.totalorder %v407, 0
    %v2170 = vsub.s32 0, %v407
    %v2171 = vsel %vm2169, %v2170, %v407
    %v2172 = vshrl.u32 %v2171, 3
    %v2173 = vand.u32 %v2171, 7
    %v2174 = vsub.s32 0, %v2173
    %v2175 = vsel %vm2169, %v2174, %v2173
    %vm2176 = vcmp.lt.s32.totalorder %v408, 0
    %v2177 = vsub.s32 0, %v408
    %v2178 = vsel %vm2176, %v2177, %v408
    %v2179 = vshrl.u32 %v2178, 3
    %v2180 = vand.u32 %v2178, 7
    %v2181 = vsub.s32 0, %v2180
    %v2182 = vsel %vm2176, %v2181, %v2180
    %vm2183 = vcmp.lt.s32.totalorder %v409, 0
    %v2184 = vsub.s32 0, %v409
    %v2185 = vsel %vm2183, %v2184, %v409
    %v2186 = vshrl.u32 %v2185, 3
    %v2187 = vand.u32 %v2185, 7
    %v2188 = vsub.s32 0, %v2187
    %v2189 = vsel %vm2183, %v2188, %v2187
    %vm2190 = vcmp.ne.s32.totalorder %v2140, 0
    %vm2191 = vcmp.ne.s32.totalorder %v2147, 0
    %vm2192 = vcmp.ne.s32.totalorder %v2154, 0
    %vm2193 = vcmp.ne.s32.totalorder %v2161, 0
    %vm2194 = vcmp.ne.s32.totalorder %v2168, 0
    %vm2195 = vcmp.ne.s32.totalorder %v2175, 0
    %vm2196 = vcmp.ne.s32.totalorder %v2182, 0
    %vm2197 = vcmp.ne.s32.totalorder %v2189, 0
    %vm2198 = vcmp.lt.s32.totalorder %v2140, 0
    %vm2199 = vcmp.lt.s32.totalorder %v2147, 0
    %vm2200 = vcmp.lt.s32.totalorder %v2154, 0
    %vm2201 = vcmp.lt.s32.totalorder %v2161, 0
    %vm2202 = vcmp.lt.s32.totalorder %v2168, 0
    %vm2203 = vcmp.lt.s32.totalorder %v2175, 0
    %vm2204 = vcmp.lt.s32.totalorder %v2182, 0
    %vm2205 = vcmp.lt.s32.totalorder %v2189, 0
    %vm2206 = vmand %vm2198, %vm2190
    %vm2207 = vmand %vm2199, %vm2191
    %vm2208 = vmand %vm2200, %vm2192
    %vm2209 = vmand %vm2201, %vm2193
    %vm2210 = vmand %vm2202, %vm2194
    %vm2211 = vmand %vm2203, %vm2195
    %vm2212 = vmand %vm2204, %vm2196
    %vm2213 = vmand %vm2205, %vm2197
    %v2214 = vadd.s32 %v2140, 8
    %v2215 = vadd.s32 %v2147, 8
    %v2216 = vadd.s32 %v2154, 8
    %v2217 = vadd.s32 %v2161, 8
    %v2218 = vadd.s32 %v2168, 8
    %v2219 = vadd.s32 %v2175, 8
    %v2220 = vadd.s32 %v2182, 8
    %v2221 = vadd.s32 %v2189, 8
    %v2222 = vsel %vm2206, %v2214, %v2140
    %v2223 = vsel %vm2207, %v2215, %v2147
    %v2224 = vsel %vm2208, %v2216, %v2154
    %v2225 = vsel %vm2209, %v2217, %v2161
    %v2226 = vsel %vm2210, %v2218, %v2168
    %v2227 = vsel %vm2211, %v2219, %v2175
    %v2228 = vsel %vm2212, %v2220, %v2182
    %v2229 = vsel %vm2213, %v2221, %v2189
    %vm2230 = vcmp.eq.s32.totalorder %v2222, 0
    %vm2231 = vcmp.eq.s32.totalorder %v2223, 0
    %vm2232 = vcmp.eq.s32.totalorder %v2224, 0
    %vm2233 = vcmp.eq.s32.totalorder %v2225, 0
    %vm2234 = vcmp.eq.s32.totalorder %v2226, 0
    %vm2235 = vcmp.eq.s32.totalorder %v2227, 0
    %vm2236 = vcmp.eq.s32.totalorder %v2228, 0
    %vm2237 = vcmp.eq.s32.totalorder %v2229, 0
    %v2238 = vrot.slane %v2126, 7
    %v2239 = vrot.slane %v2127, 7
    %v2240 = vrot.slane %v2128, 7
    %v2241 = vrot.slane %v2129, 7
    %v2242 = vrot.slane %v2130, 7
    %v2243 = vrot.slane %v2131, 7
    %v2244 = vrot.slane %v2132, 7
    %v2245 = vrot.slane %v2133, 7
    %v2246 = vsel %vm642, %v2244, %v2245
    %v2247 = vsel %vm642, %v2243, %v2244
    %v2248 = vsel %vm642, %v2242, %v2243
    %v2249 = vsel %vm642, %v2241, %v2242
    %v2250 = vsel %vm642, %v2240, %v2241
    %v2251 = vsel %vm642, %v2239, %v2240
    %v2252 = vsel %vm642, %v2238, %v2239
    %v2253 = vsel %vm642, %v2245, %v2238
    %v2254 = vsel %vm2230, 0.0, %v2253
    %v2255 = vsel %vm2231, 0.0, %v2252
    %v2256 = vsel %vm2232, 0.0, %v2251
    %v2257 = vsel %vm2233, 0.0, %v2250
    %v2258 = vsel %vm2234, 0.0, %v2249
    %v2259 = vsel %vm2235, 0.0, %v2248
    %v2260 = vsel %vm2236, 0.0, %v2247
    %v2261 = vsel %vm2237, 0.0, %v2246
    %vm2262 = vcmp.eq.s32.totalorder %v2222, 7
    %vm2263 = vcmp.eq.s32.totalorder %v2223, 7
    %vm2264 = vcmp.eq.s32.totalorder %v2224, 7
    %vm2265 = vcmp.eq.s32.totalorder %v2225, 7
    %vm2266 = vcmp.eq.s32.totalorder %v2226, 7
    %vm2267 = vcmp.eq.s32.totalorder %v2227, 7
    %vm2268 = vcmp.eq.s32.totalorder %v2228, 7
    %vm2269 = vcmp.eq.s32.totalorder %v2229, 7
    %v2270 = vrot.slane %v2126, 1
    %v2271 = vrot.slane %v2127, 1
    %v2272 = vrot.slane %v2128, 1
    %v2273 = vrot.slane %v2129, 1
    %v2274 = vrot.slane %v2130, 1
    %v2275 = vrot.slane %v2131, 1
    %v2276 = vrot.slane %v2132, 1
    %v2277 = vrot.slane %v2133, 1
    %v2278 = vsel %vm707, %v2276, %v2277
    %v2279 = vsel %vm707, %v2275, %v2276
    %v2280 = vsel %vm707, %v2274, %v2275
    %v2281 = vsel %vm707, %v2273, %v2274
    %v2282 = vsel %vm707, %v2272, %v2273
    %v2283 = vsel %vm707, %v2271, %v2272
    %v2284 = vsel %vm707, %v2270, %v2271
    %v2285 = vsel %vm707, %v2277, %v2270
    %v2286 = vsel %vm2262, 0.0, %v2284
    %v2287 = vsel %vm2263, 0.0, %v2283
    %v2288 = vsel %vm2264, 0.0, %v2282
    %v2289 = vsel %vm2265, 0.0, %v2281
    %v2290 = vsel %vm2266, 0.0, %v2280
    %v2291 = vsel %vm2267, 0.0, %v2279
    %v2292 = vsel %vm2268, 0.0, %v2278
    %v2293 = vsel %vm2269, 0.0, %v2285
    %v2294 = vpack.c.bf16 %v2255, %v2254
    %v2295 = vpack.c.bf16 %v2257, %v2256
    %v2296 = vpack.c.bf16 %v2259, %v2258
    %v2297 = vpack.c.bf16 %v2261, %v2260
    %v2298 = vld [vmem:[#allocation6] sm:$0xf]
    %v2299 = vld [vmem:[#allocation6 + $0x4] sm:$0xf]
    %v2300 = vld [vmem:[#allocation6 + $0x8] sm:$0xf]
    %v2301 = vld [vmem:[#allocation6 + $0xc] sm:$0xf]
    %v2302 = vld [vmem:[#allocation6 + $0x10] sm:$0xf]
    %v2303 = vld [vmem:[#allocation6 + $0x14] sm:$0xf]
    %v2304 = vld [vmem:[#allocation6 + $0x18] sm:$0xf]
    %v2305 = vld [vmem:[#allocation6 + $0x1c] sm:$0xf]
    %v2306 = vld [vmem:[#allocation6 + $0x20] sm:$0xf]
    %v2307 = vld [vmem:[#allocation6 + $0x24] sm:$0xf]
    %v2308 = vld [vmem:[#allocation6 + $0x28] sm:$0xf]
    %v2309 = vld [vmem:[#allocation6 + $0x2c] sm:$0xf]
    %v2310 = vld [vmem:[#allocation6 + $0x30] sm:$0xf]
    %v2311 = vld [vmem:[#allocation6 + $0x34] sm:$0xf]
    %v2312 = vld [vmem:[#allocation6 + $0x38] sm:$0xf]
    %v2313 = vld [vmem:[#allocation6 + $0x3c] sm:$0xf]
    %v2314 = vpack.c.bf16 %v2127, %v2126
    %v2315 = vpack.c.bf16 %v2129, %v2128
    %v2316 = vpack.c.bf16 %v2131, %v2130
    %v2317 = vpack.c.bf16 %v2133, %v2132
    %s2318 = scalar_lea.vmem [#allocation6], 64
    %v2319 = vld [vmem:[%s2318] sm:$0xf]
    %v2320 = vld [vmem:[%s2318 + $0x4] sm:$0xf]
    %v2321 = vld [vmem:[%s2318 + $0x8] sm:$0xf]
    %v2322 = vld [vmem:[%s2318 + $0xc] sm:$0xf]
    %v2323 = vld [vmem:[%s2318 + $0x10] sm:$0xf]
    %v2324 = vld [vmem:[%s2318 + $0x14] sm:$0xf]
    %v2325 = vld [vmem:[%s2318 + $0x18] sm:$0xf]
    %v2326 = vld [vmem:[%s2318 + $0x1c] sm:$0xf]
    %v2327 = vld [vmem:[%s2318 + $0x20] sm:$0xf]
    %v2328 = vld [vmem:[%s2318 + $0x24] sm:$0xf]
    %v2329 = vld [vmem:[%s2318 + $0x28] sm:$0xf]
    %v2330 = vld [vmem:[%s2318 + $0x2c] sm:$0xf]
    %v2331 = vld [vmem:[%s2318 + $0x30] sm:$0xf]
    %v2332 = vld [vmem:[%s2318 + $0x34] sm:$0xf]
    %v2333 = vld [vmem:[%s2318 + $0x38] sm:$0xf]
    %v2334 = vld [vmem:[%s2318 + $0x3c] sm:$0xf]
    %v2351 = vunpack.c.l.b16 %v2319
    %v2352 = vunpack.c.l.b16 %v2320
    %v2353 = vunpack.c.l.b16 %v2321
    %v2354 = vunpack.c.l.b16 %v2322
    %v2355 = vunpack.c.l.b16 %v2323
    %v2356 = vunpack.c.l.b16 %v2324
    %v2357 = vunpack.c.l.b16 %v2325
    %v2358 = vunpack.c.l.b16 %v2326
    %v2359 = vunpack.c.l.b16 %v2327
    %v2360 = vunpack.c.l.b16 %v2328
    %v2361 = vunpack.c.l.b16 %v2329
    %v2362 = vunpack.c.l.b16 %v2330
    %v2363 = vunpack.c.l.b16 %v2331
    %v2364 = vunpack.c.l.b16 %v2332
    %v2365 = vunpack.c.l.b16 %v2333
    %v2366 = vunpack.c.l.b16 %v2334
    %v2367 = vpack.c.b16 %v2352, %v2351
    %v2368 = vpack.c.b16 %v2354, %v2353
    %v2369 = vpack.c.b16 %v2356, %v2355
    %v2370 = vpack.c.b16 %v2358, %v2357
    %v2371 = vpack.c.b16 %v2360, %v2359
    %v2372 = vpack.c.b16 %v2362, %v2361
    %v2373 = vpack.c.b16 %v2364, %v2363
    %v2374 = vpack.c.b16 %v2366, %v2365
    %2383 = vmatprep.subr.bf16.mxu0 0
    %2384 = vmatpush1.bf16.msra.mxu0 %v2374
    %2385 = vmatprep.subr.bf16.mxu0 0
    %2386 = vmatpush1.bf16.msra.mxu0 %v2373
    %2387 = vmatprep.subr.bf16.mxu0 0
    %2388 = vmatpush1.bf16.msra.mxu0 %v2372
    %2389 = vmatprep.subr.bf16.mxu0 0
    %2390 = vmatpush1.bf16.msra.mxu0 %v2371
    %2391 = vmatprep.subr.bf16.mxu0 0
    %2392 = vmatpush1.bf16.msra.mxu0 %v2370
    %2393 = vmatprep.subr.bf16.mxu0 0
    %2394 = vmatpush1.bf16.msra.mxu0 %v2369
    %2395 = vmatprep.subr.bf16.mxu0 0
    %2396 = vmatpush1.bf16.msra.mxu0 %v2368
    %2397 = vmatprep.subr.bf16.mxu0 0
    %2398 = vmatpush1.bf16.msra.mxu0 %v2367
    %2399 = vmatprep.subr.bf16.mxu0 0
    %2400 = vmatpush2.bf16.msra.mxu0 0
    %2401 = vmatprep.subr.bf16.mxu0 0
    %2402 = vmatpush2.bf16.msra.mxu0 0
    %2403 = vmatprep.subr.bf16.mxu0 0
    %2404 = vmatpush2.bf16.msra.mxu0 0
    %2405 = vmatprep.subr.bf16.mxu0 0
    %2406 = vmatpush2.bf16.msra.mxu0 0
    %2407 = vmatprep.subr.bf16.mxu0 0
    %2408 = vmatpush2.bf16.msra.mxu0 0
    %2409 = vmatprep.subr.bf16.mxu0 0
    %2410 = vmatpush2.bf16.msra.mxu0 0
    %2411 = vmatprep.subr.bf16.mxu0 0
    %2412 = vmatpush2.bf16.msra.mxu0 0
    %2413 = vmatprep.subr.bf16.mxu0 0
    %2414 = vmatpush2.bf16.msra.mxu0 0
    %2415 = vmatprep.mubr.bf16.mxu0 0
    %2416 = vmatmul.mubr.bf16.gmra.mxu0 %v2314
    %v2417 = vpop.f32.mrf.mxu0
    %v2418 = vadd.f32 0.0, %v2417
    %v2419 = vpop.f32.mrf.mxu0
    %v2420 = vpop.f32.mrf.mxu0
    %v2421 = vadd.f32 0.0, %v2420
    %v2422 = vpop.f32.mrf.mxu0
    %2423 = vmatprep.mubr.bf16.mxu0 0
    %2424 = vmatmul.mubr.bf16.gmra.mxu0 %v2315
    %v2425 = vpop.f32.mrf.mxu0
    %v2426 = vadd.f32 0.0, %v2425
    %v2427 = vpop.f32.mrf.mxu0
    %v2428 = vpop.f32.mrf.mxu0
    %v2429 = vadd.f32 0.0, %v2428
    %v2430 = vpop.f32.mrf.mxu0
    %2431 = vmatprep.mubr.bf16.mxu0 0
    %2432 = vmatmul.mubr.bf16.gmra.mxu0 %v2316
    %v2433 = vpop.f32.mrf.mxu0
    %v2434 = vadd.f32 0.0, %v2433
    %v2435 = vpop.f32.mrf.mxu0
    %v2436 = vpop.f32.mrf.mxu0
    %v2437 = vadd.f32 0.0, %v2436
    %v2438 = vpop.f32.mrf.mxu0
    %2439 = vmatprep.mubr.bf16.mxu0 0
    %2440 = vmatmul.mubr.bf16.gmra.mxu0 %v2317
    %v2441 = vpop.f32.mrf.mxu0
    %v2442 = vadd.f32 0.0, %v2441
    %v2443 = vpop.f32.mrf.mxu0
    %v2444 = vpop.f32.mrf.mxu0
    %v2445 = vadd.f32 0.0, %v2444
    %v2446 = vpop.f32.mrf.mxu0
    %2447 = vdwg.mxu0
    %v2464 = vunpack.c.l.b16 %v2298
    %v2465 = vunpack.c.l.b16 %v2299
    %v2466 = vunpack.c.l.b16 %v2300
    %v2467 = vunpack.c.l.b16 %v2301
    %v2468 = vunpack.c.l.b16 %v2302
    %v2469 = vunpack.c.l.b16 %v2303
    %v2470 = vunpack.c.l.b16 %v2304
    %v2471 = vunpack.c.l.b16 %v2305
    %v2472 = vunpack.c.l.b16 %v2306
    %v2473 = vunpack.c.l.b16 %v2307
    %v2474 = vunpack.c.l.b16 %v2308
    %v2475 = vunpack.c.l.b16 %v2309
    %v2476 = vunpack.c.l.b16 %v2310
    %v2477 = vunpack.c.l.b16 %v2311
    %v2478 = vunpack.c.l.b16 %v2312
    %v2479 = vunpack.c.l.b16 %v2313
    %v2480 = vpack.c.b16 %v2465, %v2464
    %v2481 = vpack.c.b16 %v2467, %v2466
    %v2482 = vpack.c.b16 %v2469, %v2468
    %v2483 = vpack.c.b16 %v2471, %v2470
    %v2484 = vpack.c.b16 %v2473, %v2472
    %v2485 = vpack.c.b16 %v2475, %v2474
    %v2486 = vpack.c.b16 %v2477, %v2476
    %v2487 = vpack.c.b16 %v2479, %v2478
    %2496 = vmatprep.subr.bf16.mxu0 0
    %2497 = vmatpush1.bf16.msra.mxu0 %v2487
    %2498 = vmatprep.subr.bf16.mxu0 0
    %2499 = vmatpush1.bf16.msra.mxu0 %v2486
    %2500 = vmatprep.subr.bf16.mxu0 0
    %2501 = vmatpush1.bf16.msra.mxu0 %v2485
    %2502 = vmatprep.subr.bf16.mxu0 0
    %2503 = vmatpush1.bf16.msra.mxu0 %v2484
    %2504 = vmatprep.subr.bf16.mxu0 0
    %2505 = vmatpush1.bf16.msra.mxu0 %v2483
    %2506 = vmatprep.subr.bf16.mxu0 0
    %2507 = vmatpush1.bf16.msra.mxu0 %v2482
    %2508 = vmatprep.subr.bf16.mxu0 0
    %2509 = vmatpush1.bf16.msra.mxu0 %v2481
    %2510 = vmatprep.subr.bf16.mxu0 0
    %2511 = vmatpush1.bf16.msra.mxu0 %v2480
    %2512 = vmatprep.subr.bf16.mxu0 0
    %2513 = vmatpush2.bf16.msra.mxu0 0
    %2514 = vmatprep.subr.bf16.mxu0 0
    %2515 = vmatpush2.bf16.msra.mxu0 0
    %2516 = vmatprep.subr.bf16.mxu0 0
    %2517 = vmatpush2.bf16.msra.mxu0 0
    %2518 = vmatprep.subr.bf16.mxu0 0
    %2519 = vmatpush2.bf16.msra.mxu0 0
    %2520 = vmatprep.subr.bf16.mxu0 0
    %2521 = vmatpush2.bf16.msra.mxu0 0
    %2522 = vmatprep.subr.bf16.mxu0 0
    %2523 = vmatpush2.bf16.msra.mxu0 0
    %2524 = vmatprep.subr.bf16.mxu0 0
    %2525 = vmatpush2.bf16.msra.mxu0 0
    %2526 = vmatprep.subr.bf16.mxu0 0
    %2527 = vmatpush2.bf16.msra.mxu0 0
    %2528 = vmatprep.mubr.bf16.mxu0 0
    %2529 = vmatmul.mubr.bf16.gmra.mxu0 %v2294
    %v2530 = vpop.f32.mrf.mxu0
    %v2531 = vadd.f32 %v2418, %v2530
    %v2532 = vpop.f32.mrf.mxu0
    %v2533 = vpop.f32.mrf.mxu0
    %v2534 = vadd.f32 %v2421, %v2533
    %v2535 = vpop.f32.mrf.mxu0
    %2536 = vmatprep.mubr.bf16.mxu0 0
    %2537 = vmatmul.mubr.bf16.gmra.mxu0 %v2295
    %v2538 = vpop.f32.mrf.mxu0
    %v2539 = vadd.f32 %v2426, %v2538
    %v2540 = vpop.f32.mrf.mxu0
    %v2541 = vpop.f32.mrf.mxu0
    %v2542 = vadd.f32 %v2429, %v2541
    %v2543 = vpop.f32.mrf.mxu0
    %2544 = vmatprep.mubr.bf16.mxu0 0
    %2545 = vmatmul.mubr.bf16.gmra.mxu0 %v2296
    %v2546 = vpop.f32.mrf.mxu0
    %v2547 = vadd.f32 %v2434, %v2546
    %v2548 = vpop.f32.mrf.mxu0
    %v2549 = vpop.f32.mrf.mxu0
    %v2550 = vadd.f32 %v2437, %v2549
    %v2551 = vpop.f32.mrf.mxu0
    %2552 = vmatprep.mubr.bf16.mxu0 0
    %2553 = vmatmul.mubr.bf16.gmra.mxu0 %v2297
    %v2554 = vpop.f32.mrf.mxu0
    %v2555 = vadd.f32 %v2442, %v2554
    %v2556 = vpop.f32.mrf.mxu0
    %v2557 = vpop.f32.mrf.mxu0
    %v2558 = vadd.f32 %v2445, %v2557
    %v2559 = vpop.f32.mrf.mxu0
    %2560 = vdwg.mxu0
    %v2561 = vpack.c.bf16 %v2287, %v2286
    %v2562 = vpack.c.bf16 %v2289, %v2288
    %v2563 = vpack.c.bf16 %v2291, %v2290
    %v2564 = vpack.c.bf16 %v2293, %v2292
    %s2565 = scalar_lea.vmem [#allocation6], 128
    %v2566 = vld [vmem:[%s2565] sm:$0xf]
    %v2567 = vld [vmem:[%s2565 + $0x4] sm:$0xf]
    %v2568 = vld [vmem:[%s2565 + $0x8] sm:$0xf]
    %v2569 = vld [vmem:[%s2565 + $0xc] sm:$0xf]
    %v2570 = vld [vmem:[%s2565 + $0x10] sm:$0xf]
    %v2571 = vld [vmem:[%s2565 + $0x14] sm:$0xf]
    %v2572 = vld [vmem:[%s2565 + $0x18] sm:$0xf]
    %v2573 = vld [vmem:[%s2565 + $0x1c] sm:$0xf]
    %v2574 = vld [vmem:[%s2565 + $0x20] sm:$0xf]
    %v2575 = vld [vmem:[%s2565 + $0x24] sm:$0xf]
    %v2576 = vld [vmem:[%s2565 + $0x28] sm:$0xf]
    %v2577 = vld [vmem:[%s2565 + $0x2c] sm:$0xf]
    %v2578 = vld [vmem:[%s2565 + $0x30] sm:$0xf]
    %v2579 = vld [vmem:[%s2565 + $0x34] sm:$0xf]
    %v2580 = vld [vmem:[%s2565 + $0x38] sm:$0xf]
    %v2581 = vld [vmem:[%s2565 + $0x3c] sm:$0xf]
    %v2598 = vunpack.c.l.b16 %v2566
    %v2599 = vunpack.c.l.b16 %v2567
    %v2600 = vunpack.c.l.b16 %v2568
    %v2601 = vunpack.c.l.b16 %v2569
    %v2602 = vunpack.c.l.b16 %v2570
    %v2603 = vunpack.c.l.b16 %v2571
    %v2604 = vunpack.c.l.b16 %v2572
    %v2605 = vunpack.c.l.b16 %v2573
    %v2606 = vunpack.c.l.b16 %v2574
    %v2607 = vunpack.c.l.b16 %v2575
    %v2608 = vunpack.c.l.b16 %v2576
    %v2609 = vunpack.c.l.b16 %v2577
    %v2610 = vunpack.c.l.b16 %v2578
    %v2611 = vunpack.c.l.b16 %v2579
    %v2612 = vunpack.c.l.b16 %v2580
    %v2613 = vunpack.c.l.b16 %v2581
    %v2614 = vpack.c.b16 %v2599, %v2598
    %v2615 = vpack.c.b16 %v2601, %v2600
    %v2616 = vpack.c.b16 %v2603, %v2602
    %v2617 = vpack.c.b16 %v2605, %v2604
    %v2618 = vpack.c.b16 %v2607, %v2606
    %v2619 = vpack.c.b16 %v2609, %v2608
    %v2620 = vpack.c.b16 %v2611, %v2610
    %v2621 = vpack.c.b16 %v2613, %v2612
    %2630 = vmatprep.subr.bf16.mxu0 0
    %2631 = vmatpush1.bf16.msra.mxu0 %v2621
    %2632 = vmatprep.subr.bf16.mxu0 0
    %2633 = vmatpush1.bf16.msra.mxu0 %v2620
    %2634 = vmatprep.subr.bf16.mxu0 0
    %2635 = vmatpush1.bf16.msra.mxu0 %v2619
    %2636 = vmatprep.subr.bf16.mxu0 0
    %2637 = vmatpush1.bf16.msra.mxu0 %v2618
    %2638 = vmatprep.subr.bf16.mxu0 0
    %2639 = vmatpush1.bf16.msra.mxu0 %v2617
    %2640 = vmatprep.subr.bf16.mxu0 0
    %2641 = vmatpush1.bf16.msra.mxu0 %v2616
    %2642 = vmatprep.subr.bf16.mxu0 0
    %2643 = vmatpush1.bf16.msra.mxu0 %v2615
    %2644 = vmatprep.subr.bf16.mxu0 0
    %2645 = vmatpush1.bf16.msra.mxu0 %v2614
    %2646 = vmatprep.subr.bf16.mxu0 0
    %2647 = vmatpush2.bf16.msra.mxu0 0
    %2648 = vmatprep.subr.bf16.mxu0 0
    %2649 = vmatpush2.bf16.msra.mxu0 0
    %2650 = vmatprep.subr.bf16.mxu0 0
    %2651 = vmatpush2.bf16.msra.mxu0 0
    %2652 = vmatprep.subr.bf16.mxu0 0
    %2653 = vmatpush2.bf16.msra.mxu0 0
    %2654 = vmatprep.subr.bf16.mxu0 0
    %2655 = vmatpush2.bf16.msra.mxu0 0
    %2656 = vmatprep.subr.bf16.mxu0 0
    %2657 = vmatpush2.bf16.msra.mxu0 0
    %2658 = vmatprep.subr.bf16.mxu0 0
    %2659 = vmatpush2.bf16.msra.mxu0 0
    %2660 = vmatprep.subr.bf16.mxu0 0
    %2661 = vmatpush2.bf16.msra.mxu0 0
    %2662 = vmatprep.mubr.bf16.mxu0 0
    %2663 = vmatmul.mubr.bf16.gmra.mxu0 %v2561
    %v2664 = vpop.f32.mrf.mxu0
    %v2665 = vadd.f32 0.0, %v2664
    %v2666 = vpop.f32.mrf.mxu0
    %v2667 = vpop.f32.mrf.mxu0
    %v2668 = vadd.f32 0.0, %v2667
    %v2669 = vpop.f32.mrf.mxu0
    %2670 = vmatprep.mubr.bf16.mxu0 0
    %2671 = vmatmul.mubr.bf16.gmra.mxu0 %v2562
    %v2672 = vpop.f32.mrf.mxu0
    %v2673 = vadd.f32 0.0, %v2672
    %v2674 = vpop.f32.mrf.mxu0
    %v2675 = vpop.f32.mrf.mxu0
    %v2676 = vadd.f32 0.0, %v2675
    %v2677 = vpop.f32.mrf.mxu0
    %2678 = vmatprep.mubr.bf16.mxu0 0
    %2679 = vmatmul.mubr.bf16.gmra.mxu0 %v2563
    %v2680 = vpop.f32.mrf.mxu0
    %v2681 = vadd.f32 0.0, %v2680
    %v2682 = vpop.f32.mrf.mxu0
    %v2683 = vpop.f32.mrf.mxu0
    %v2684 = vadd.f32 0.0, %v2683
    %v2685 = vpop.f32.mrf.mxu0
    %2686 = vmatprep.mubr.bf16.mxu0 0
    %2687 = vmatmul.mubr.bf16.gmra.mxu0 %v2564
    %v2688 = vpop.f32.mrf.mxu0
    %v2689 = vadd.f32 0.0, %v2688
    %v2690 = vpop.f32.mrf.mxu0
    %v2691 = vpop.f32.mrf.mxu0
    %v2692 = vadd.f32 0.0, %v2691
    %v2693 = vpop.f32.mrf.mxu0
    %2694 = vdwg.mxu0
    %v2695 = vadd.f32 %v2531, %v2665
    %v2696 = vadd.f32 %v2534, %v2668
    %v2697 = vadd.f32 %v2539, %v2673
    %v2698 = vadd.f32 %v2542, %v2676
    %v2699 = vadd.f32 %v2547, %v2681
    %v2700 = vadd.f32 %v2550, %v2684
    %v2701 = vadd.f32 %v2555, %v2689
    %v2702 = vadd.f32 %v2558, %v2692
    %v2703 = vld [vmem:[#allocation7] sm:$0x1]
    %v2705 = vlaneseq
    %v2706 = vshrl.u32 %v2705, 7
    %v2707 = vsub.s32 0, %v2706
    %v2708 = vrot.slane %v2703, %v2707
    %v2710 = vadd.f32 %v2695, %v2708
    %v2711 = vadd.f32 %v2696, %v2708
    %v2712 = vadd.f32 %v2697, %v2708
    %v2713 = vadd.f32 %v2698, %v2708
    %v2714 = vadd.f32 %v2699, %v2708
    %v2715 = vadd.f32 %v2700, %v2708
    %v2716 = vadd.f32 %v2701, %v2708
    %v2717 = vadd.f32 %v2702, %v2708
    %v2718 = vmax.f32 %v2710, 0.0
    %v2719 = vmax.f32 %v2711, 0.0
    %v2720 = vmax.f32 %v2712, 0.0
    %v2721 = vmax.f32 %v2713, 0.0
    %v2722 = vmax.f32 %v2714, 0.0
    %v2723 = vmax.f32 %v2715, 0.0
    %v2724 = vmax.f32 %v2716, 0.0
    %v2725 = vmax.f32 %v2717, 0.0
    %v2726 = vrot.slane %v2718, 7
    %v2727 = vrot.slane %v2719, 7
    %v2728 = vrot.slane %v2720, 7
    %v2729 = vrot.slane %v2721, 7
    %v2730 = vrot.slane %v2722, 7
    %v2731 = vrot.slane %v2723, 7
    %v2732 = vrot.slane %v2724, 7
    %v2733 = vrot.slane %v2725, 7
    %v2734 = vsel %vm642, %v2732, %v2733
    %v2735 = vsel %vm642, %v2731, %v2732
    %v2736 = vsel %vm642, %v2730, %v2731
    %v2737 = vsel %vm642, %v2729, %v2730
    %v2738 = vsel %vm642, %v2728, %v2729
    %v2739 = vsel %vm642, %v2727, %v2728
    %v2740 = vsel %vm642, %v2726, %v2727
    %v2741 = vsel %vm642, %v2733, %v2726
    %v2742 = vsel %vm2230, 0.0, %v2741
    %v2743 = vsel %vm2231, 0.0, %v2740
    %v2744 = vsel %vm2232, 0.0, %v2739
    %v2745 = vsel %vm2233, 0.0, %v2738
    %v2746 = vsel %vm2234, 0.0, %v2737
    %v2747 = vsel %vm2235, 0.0, %v2736
    %v2748 = vsel %vm2236, 0.0, %v2735
    %v2749 = vsel %vm2237, 0.0, %v2734
    %v2750 = vrot.slane %v2718, 1
    %v2751 = vrot.slane %v2719, 1
    %v2752 = vrot.slane %v2720, 1
    %v2753 = vrot.slane %v2721, 1
    %v2754 = vrot.slane %v2722, 1
    %v2755 = vrot.slane %v2723, 1
    %v2756 = vrot.slane %v2724, 1
    %v2757 = vrot.slane %v2725, 1
    %v2758 = vsel %vm707, %v2756, %v2757
    %v2759 = vsel %vm707, %v2755, %v2756
    %v2760 = vsel %vm707, %v2754, %v2755
    %v2761 = vsel %vm707, %v2753, %v2754
    %v2762 = vsel %vm707, %v2752, %v2753
    %v2763 = vsel %vm707, %v2751, %v2752
    %v2764 = vsel %vm707, %v2750, %v2751
    %v2765 = vsel %vm707, %v2757, %v2750
    %v2766 = vsel %vm2262, 0.0, %v2764
    %v2767 = vsel %vm2263, 0.0, %v2763
    %v2768 = vsel %vm2264, 0.0, %v2762
    %v2769 = vsel %vm2265, 0.0, %v2761
    %v2770 = vsel %vm2266, 0.0, %v2760
    %v2771 = vsel %vm2267, 0.0, %v2759
    %v2772 = vsel %vm2268, 0.0, %v2758
    %v2773 = vsel %vm2269, 0.0, %v2765
    %v2774 = vpack.c.bf16 %v2743, %v2742
    %v2775 = vpack.c.bf16 %v2745, %v2744
    %v2776 = vpack.c.bf16 %v2747, %v2746
    %v2777 = vpack.c.bf16 %v2749, %v2748
    %v2778 = vld [vmem:[#allocation9] sm:$0xf]
    %v2779 = vld [vmem:[#allocation9 + $0x4] sm:$0xf]
    %v2780 = vld [vmem:[#allocation9 + $0x8] sm:$0xf]
    %v2781 = vld [vmem:[#allocation9 + $0xc] sm:$0xf]
    %v2782 = vld [vmem:[#allocation9 + $0x10] sm:$0xf]
    %v2783 = vld [vmem:[#allocation9 + $0x14] sm:$0xf]
    %v2784 = vld [vmem:[#allocation9 + $0x18] sm:$0xf]
    %v2785 = vld [vmem:[#allocation9 + $0x1c] sm:$0xf]
    %v2786 = vld [vmem:[#allocation9 + $0x20] sm:$0xf]
    %v2787 = vld [vmem:[#allocation9 + $0x24] sm:$0xf]
    %v2788 = vld [vmem:[#allocation9 + $0x28] sm:$0xf]
    %v2789 = vld [vmem:[#allocation9 + $0x2c] sm:$0xf]
    %v2790 = vld [vmem:[#allocation9 + $0x30] sm:$0xf]
    %v2791 = vld [vmem:[#allocation9 + $0x34] sm:$0xf]
    %v2792 = vld [vmem:[#allocation9 + $0x38] sm:$0xf]
    %v2793 = vld [vmem:[#allocation9 + $0x3c] sm:$0xf]
    %v2794 = vpack.c.bf16 %v2719, %v2718
    %v2795 = vpack.c.bf16 %v2721, %v2720
    %v2796 = vpack.c.bf16 %v2723, %v2722
    %v2797 = vpack.c.bf16 %v2725, %v2724
    %s2798 = scalar_lea.vmem [#allocation9], 64
    %v2799 = vld [vmem:[%s2798] sm:$0xf]
    %v2800 = vld [vmem:[%s2798 + $0x4] sm:$0xf]
    %v2801 = vld [vmem:[%s2798 + $0x8] sm:$0xf]
    %v2802 = vld [vmem:[%s2798 + $0xc] sm:$0xf]
    %v2803 = vld [vmem:[%s2798 + $0x10] sm:$0xf]
    %v2804 = vld [vmem:[%s2798 + $0x14] sm:$0xf]
    %v2805 = vld [vmem:[%s2798 + $0x18] sm:$0xf]
    %v2806 = vld [vmem:[%s2798 + $0x1c] sm:$0xf]
    %v2807 = vld [vmem:[%s2798 + $0x20] sm:$0xf]
    %v2808 = vld [vmem:[%s2798 + $0x24] sm:$0xf]
    %v2809 = vld [vmem:[%s2798 + $0x28] sm:$0xf]
    %v2810 = vld [vmem:[%s2798 + $0x2c] sm:$0xf]
    %v2811 = vld [vmem:[%s2798 + $0x30] sm:$0xf]
    %v2812 = vld [vmem:[%s2798 + $0x34] sm:$0xf]
    %v2813 = vld [vmem:[%s2798 + $0x38] sm:$0xf]
    %v2814 = vld [vmem:[%s2798 + $0x3c] sm:$0xf]
    %v2831 = vunpack.c.l.b16 %v2799
    %v2832 = vunpack.c.l.b16 %v2800
    %v2833 = vunpack.c.l.b16 %v2801
    %v2834 = vunpack.c.l.b16 %v2802
    %v2835 = vunpack.c.l.b16 %v2803
    %v2836 = vunpack.c.l.b16 %v2804
    %v2837 = vunpack.c.l.b16 %v2805
    %v2838 = vunpack.c.l.b16 %v2806
    %v2839 = vunpack.c.l.b16 %v2807
    %v2840 = vunpack.c.l.b16 %v2808
    %v2841 = vunpack.c.l.b16 %v2809
    %v2842 = vunpack.c.l.b16 %v2810
    %v2843 = vunpack.c.l.b16 %v2811
    %v2844 = vunpack.c.l.b16 %v2812
    %v2845 = vunpack.c.l.b16 %v2813
    %v2846 = vunpack.c.l.b16 %v2814
    %v2847 = vpack.c.b16 %v2832, %v2831
    %v2848 = vpack.c.b16 %v2834, %v2833
    %v2849 = vpack.c.b16 %v2836, %v2835
    %v2850 = vpack.c.b16 %v2838, %v2837
    %v2851 = vpack.c.b16 %v2840, %v2839
    %v2852 = vpack.c.b16 %v2842, %v2841
    %v2853 = vpack.c.b16 %v2844, %v2843
    %v2854 = vpack.c.b16 %v2846, %v2845
    %2863 = vmatprep.subr.bf16.mxu0 0
    %2864 = vmatpush1.bf16.msra.mxu0 %v2854
    %2865 = vmatprep.subr.bf16.mxu0 0
    %2866 = vmatpush1.bf16.msra.mxu0 %v2853
    %2867 = vmatprep.subr.bf16.mxu0 0
    %2868 = vmatpush1.bf16.msra.mxu0 %v2852
    %2869 = vmatprep.subr.bf16.mxu0 0
    %2870 = vmatpush1.bf16.msra.mxu0 %v2851
    %2871 = vmatprep.subr.bf16.mxu0 0
    %2872 = vmatpush1.bf16.msra.mxu0 %v2850
    %2873 = vmatprep.subr.bf16.mxu0 0
    %2874 = vmatpush1.bf16.msra.mxu0 %v2849
    %2875 = vmatprep.subr.bf16.mxu0 0
    %2876 = vmatpush1.bf16.msra.mxu0 %v2848
    %2877 = vmatprep.subr.bf16.mxu0 0
    %2878 = vmatpush1.bf16.msra.mxu0 %v2847
    %2879 = vmatprep.subr.bf16.mxu0 0
    %2880 = vmatpush2.bf16.msra.mxu0 0
    %2881 = vmatprep.subr.bf16.mxu0 0
    %2882 = vmatpush2.bf16.msra.mxu0 0
    %2883 = vmatprep.subr.bf16.mxu0 0
    %2884 = vmatpush2.bf16.msra.mxu0 0
    %2885 = vmatprep.subr.bf16.mxu0 0
    %2886 = vmatpush2.bf16.msra.mxu0 0
    %2887 = vmatprep.subr.bf16.mxu0 0
    %2888 = vmatpush2.bf16.msra.mxu0 0
    %2889 = vmatprep.subr.bf16.mxu0 0
    %2890 = vmatpush2.bf16.msra.mxu0 0
    %2891 = vmatprep.subr.bf16.mxu0 0
    %2892 = vmatpush2.bf16.msra.mxu0 0
    %2893 = vmatprep.subr.bf16.mxu0 0
    %2894 = vmatpush2.bf16.msra.mxu0 0
    %2895 = vmatprep.mubr.bf16.mxu0 0
    %2896 = vmatmul.mubr.bf16.gmra.mxu0 %v2794
    %v2897 = vpop.f32.mrf.mxu0
    %v2898 = vadd.f32 0.0, %v2897
    %v2899 = vpop.f32.mrf.mxu0
    %v2900 = vpop.f32.mrf.mxu0
    %v2901 = vadd.f32 0.0, %v2900
    %v2902 = vpop.f32.mrf.mxu0
    %2903 = vmatprep.mubr.bf16.mxu0 0
    %2904 = vmatmul.mubr.bf16.gmra.mxu0 %v2795
    %v2905 = vpop.f32.mrf.mxu0
    %v2906 = vadd.f32 0.0, %v2905
    %v2907 = vpop.f32.mrf.mxu0
    %v2908 = vpop.f32.mrf.mxu0
    %v2909 = vadd.f32 0.0, %v2908
    %v2910 = vpop.f32.mrf.mxu0
    %2911 = vmatprep.mubr.bf16.mxu0 0
    %2912 = vmatmul.mubr.bf16.gmra.mxu0 %v2796
    %v2913 = vpop.f32.mrf.mxu0
    %v2914 = vadd.f32 0.0, %v2913
    %v2915 = vpop.f32.mrf.mxu0
    %v2916 = vpop.f32.mrf.mxu0
    %v2917 = vadd.f32 0.0, %v2916
    %v2918 = vpop.f32.mrf.mxu0
    %2919 = vmatprep.mubr.bf16.mxu0 0
    %2920 = vmatmul.mubr.bf16.gmra.mxu0 %v2797
    %v2921 = vpop.f32.mrf.mxu0
    %v2922 = vadd.f32 0.0, %v2921
    %v2923 = vpop.f32.mrf.mxu0
    %v2924 = vpop.f32.mrf.mxu0
    %v2925 = vadd.f32 0.0, %v2924
    %v2926 = vpop.f32.mrf.mxu0
    %2927 = vdwg.mxu0
    %v2944 = vunpack.c.l.b16 %v2778
    %v2945 = vunpack.c.l.b16 %v2779
    %v2946 = vunpack.c.l.b16 %v2780
    %v2947 = vunpack.c.l.b16 %v2781
    %v2948 = vunpack.c.l.b16 %v2782
    %v2949 = vunpack.c.l.b16 %v2783
    %v2950 = vunpack.c.l.b16 %v2784
    %v2951 = vunpack.c.l.b16 %v2785
    %v2952 = vunpack.c.l.b16 %v2786
    %v2953 = vunpack.c.l.b16 %v2787
    %v2954 = vunpack.c.l.b16 %v2788
    %v2955 = vunpack.c.l.b16 %v2789
    %v2956 = vunpack.c.l.b16 %v2790
    %v2957 = vunpack.c.l.b16 %v2791
    %v2958 = vunpack.c.l.b16 %v2792
    %v2959 = vunpack.c.l.b16 %v2793
    %v2960 = vpack.c.b16 %v2945, %v2944
    %v2961 = vpack.c.b16 %v2947, %v2946
    %v2962 = vpack.c.b16 %v2949, %v2948
    %v2963 = vpack.c.b16 %v2951, %v2950
    %v2964 = vpack.c.b16 %v2953, %v2952
    %v2965 = vpack.c.b16 %v2955, %v2954
    %v2966 = vpack.c.b16 %v2957, %v2956
    %v2967 = vpack.c.b16 %v2959, %v2958
    %2976 = vmatprep.subr.bf16.mxu0 0
    %2977 = vmatpush1.bf16.msra.mxu0 %v2967
    %2978 = vmatprep.subr.bf16.mxu0 0
    %2979 = vmatpush1.bf16.msra.mxu0 %v2966
    %2980 = vmatprep.subr.bf16.mxu0 0
    %2981 = vmatpush1.bf16.msra.mxu0 %v2965
    %2982 = vmatprep.subr.bf16.mxu0 0
    %2983 = vmatpush1.bf16.msra.mxu0 %v2964
    %2984 = vmatprep.subr.bf16.mxu0 0
    %2985 = vmatpush1.bf16.msra.mxu0 %v2963
    %2986 = vmatprep.subr.bf16.mxu0 0
    %2987 = vmatpush1.bf16.msra.mxu0 %v2962
    %2988 = vmatprep.subr.bf16.mxu0 0
    %2989 = vmatpush1.bf16.msra.mxu0 %v2961
    %2990 = vmatprep.subr.bf16.mxu0 0
    %2991 = vmatpush1.bf16.msra.mxu0 %v2960
    %2992 = vmatprep.subr.bf16.mxu0 0
    %2993 = vmatpush2.bf16.msra.mxu0 0
    %2994 = vmatprep.subr.bf16.mxu0 0
    %2995 = vmatpush2.bf16.msra.mxu0 0
    %2996 = vmatprep.subr.bf16.mxu0 0
    %2997 = vmatpush2.bf16.msra.mxu0 0
    %2998 = vmatprep.subr.bf16.mxu0 0
    %2999 = vmatpush2.bf16.msra.mxu0 0
    %3000 = vmatprep.subr.bf16.mxu0 0
    %3001 = vmatpush2.bf16.msra.mxu0 0
    %3002 = vmatprep.subr.bf16.mxu0 0
    %3003 = vmatpush2.bf16.msra.mxu0 0
    %3004 = vmatprep.subr.bf16.mxu0 0
    %3005 = vmatpush2.bf16.msra.mxu0 0
    %3006 = vmatprep.subr.bf16.mxu0 0
    %3007 = vmatpush2.bf16.msra.mxu0 0
    %3008 = vmatprep.mubr.bf16.mxu0 0
    %3009 = vmatmul.mubr.bf16.gmra.mxu0 %v2774
    %v3010 = vpop.f32.mrf.mxu0
    %v3011 = vadd.f32 %v2898, %v3010
    %v3012 = vpop.f32.mrf.mxu0
    %v3013 = vpop.f32.mrf.mxu0
    %v3014 = vadd.f32 %v2901, %v3013
    %v3015 = vpop.f32.mrf.mxu0
    %3016 = vmatprep.mubr.bf16.mxu0 0
    %3017 = vmatmul.mubr.bf16.gmra.mxu0 %v2775
    %v3018 = vpop.f32.mrf.mxu0
    %v3019 = vadd.f32 %v2906, %v3018
    %v3020 = vpop.f32.mrf.mxu0
    %v3021 = vpop.f32.mrf.mxu0
    %v3022 = vadd.f32 %v2909, %v3021
    %v3023 = vpop.f32.mrf.mxu0
    %3024 = vmatprep.mubr.bf16.mxu0 0
    %3025 = vmatmul.mubr.bf16.gmra.mxu0 %v2776
    %v3026 = vpop.f32.mrf.mxu0
    %v3027 = vadd.f32 %v2914, %v3026
    %v3028 = vpop.f32.mrf.mxu0
    %v3029 = vpop.f32.mrf.mxu0
    %v3030 = vadd.f32 %v2917, %v3029
    %v3031 = vpop.f32.mrf.mxu0
    %3032 = vmatprep.mubr.bf16.mxu0 0
    %3033 = vmatmul.mubr.bf16.gmra.mxu0 %v2777
    %v3034 = vpop.f32.mrf.mxu0
    %v3035 = vadd.f32 %v2922, %v3034
    %v3036 = vpop.f32.mrf.mxu0
    %v3037 = vpop.f32.mrf.mxu0
    %v3038 = vadd.f32 %v2925, %v3037
    %v3039 = vpop.f32.mrf.mxu0
    %3040 = vdwg.mxu0
    %v3041 = vpack.c.bf16 %v2767, %v2766
    %v3042 = vpack.c.bf16 %v2769, %v2768
    %v3043 = vpack.c.bf16 %v2771, %v2770
    %v3044 = vpack.c.bf16 %v2773, %v2772
    %s3045 = scalar_lea.vmem [#allocation9], 128
    %v3046 = vld [vmem:[%s3045] sm:$0xf]
    %v3047 = vld [vmem:[%s3045 + $0x4] sm:$0xf]
    %v3048 = vld [vmem:[%s3045 + $0x8] sm:$0xf]
    %v3049 = vld [vmem:[%s3045 + $0xc] sm:$0xf]
    %v3050 = vld [vmem:[%s3045 + $0x10] sm:$0xf]
    %v3051 = vld [vmem:[%s3045 + $0x14] sm:$0xf]
    %v3052 = vld [vmem:[%s3045 + $0x18] sm:$0xf]
    %v3053 = vld [vmem:[%s3045 + $0x1c] sm:$0xf]
    %v3054 = vld [vmem:[%s3045 + $0x20] sm:$0xf]
    %v3055 = vld [vmem:[%s3045 + $0x24] sm:$0xf]
    %v3056 = vld [vmem:[%s3045 + $0x28] sm:$0xf]
    %v3057 = vld [vmem:[%s3045 + $0x2c] sm:$0xf]
    %v3058 = vld [vmem:[%s3045 + $0x30] sm:$0xf]
    %v3059 = vld [vmem:[%s3045 + $0x34] sm:$0xf]
    %v3060 = vld [vmem:[%s3045 + $0x38] sm:$0xf]
    %v3061 = vld [vmem:[%s3045 + $0x3c] sm:$0xf]
    %v3078 = vunpack.c.l.b16 %v3046
    %v3079 = vunpack.c.l.b16 %v3047
    %v3080 = vunpack.c.l.b16 %v3048
    %v3081 = vunpack.c.l.b16 %v3049
    %v3082 = vunpack.c.l.b16 %v3050
    %v3083 = vunpack.c.l.b16 %v3051
    %v3084 = vunpack.c.l.b16 %v3052
    %v3085 = vunpack.c.l.b16 %v3053
    %v3086 = vunpack.c.l.b16 %v3054
    %v3087 = vunpack.c.l.b16 %v3055
    %v3088 = vunpack.c.l.b16 %v3056
    %v3089 = vunpack.c.l.b16 %v3057
    %v3090 = vunpack.c.l.b16 %v3058
    %v3091 = vunpack.c.l.b16 %v3059
    %v3092 = vunpack.c.l.b16 %v3060
    %v3093 = vunpack.c.l.b16 %v3061
    %v3094 = vpack.c.b16 %v3079, %v3078
    %v3095 = vpack.c.b16 %v3081, %v3080
    %v3096 = vpack.c.b16 %v3083, %v3082
    %v3097 = vpack.c.b16 %v3085, %v3084
    %v3098 = vpack.c.b16 %v3087, %v3086
    %v3099 = vpack.c.b16 %v3089, %v3088
    %v3100 = vpack.c.b16 %v3091, %v3090
    %v3101 = vpack.c.b16 %v3093, %v3092
    %3110 = vmatprep.subr.bf16.mxu0 0
    %3111 = vmatpush1.bf16.msra.mxu0 %v3101
    %3112 = vmatprep.subr.bf16.mxu0 0
    %3113 = vmatpush1.bf16.msra.mxu0 %v3100
    %3114 = vmatprep.subr.bf16.mxu0 0
    %3115 = vmatpush1.bf16.msra.mxu0 %v3099
    %3116 = vmatprep.subr.bf16.mxu0 0
    %3117 = vmatpush1.bf16.msra.mxu0 %v3098
    %3118 = vmatprep.subr.bf16.mxu0 0
    %3119 = vmatpush1.bf16.msra.mxu0 %v3097
    %3120 = vmatprep.subr.bf16.mxu0 0
    %3121 = vmatpush1.bf16.msra.mxu0 %v3096
    %3122 = vmatprep.subr.bf16.mxu0 0
    %3123 = vmatpush1.bf16.msra.mxu0 %v3095
    %3124 = vmatprep.subr.bf16.mxu0 0
    %3125 = vmatpush1.bf16.msra.mxu0 %v3094
    %3126 = vmatprep.subr.bf16.mxu0 0
    %3127 = vmatpush2.bf16.msra.mxu0 0
    %3128 = vmatprep.subr.bf16.mxu0 0
    %3129 = vmatpush2.bf16.msra.mxu0 0
    %3130 = vmatprep.subr.bf16.mxu0 0
    %3131 = vmatpush2.bf16.msra.mxu0 0
    %3132 = vmatprep.subr.bf16.mxu0 0
    %3133 = vmatpush2.bf16.msra.mxu0 0
    %3134 = vmatprep.subr.bf16.mxu0 0
    %3135 = vmatpush2.bf16.msra.mxu0 0
    %3136 = vmatprep.subr.bf16.mxu0 0
    %3137 = vmatpush2.bf16.msra.mxu0 0
    %3138 = vmatprep.subr.bf16.mxu0 0
    %3139 = vmatpush2.bf16.msra.mxu0 0
    %3140 = vmatprep.subr.bf16.mxu0 0
    %3141 = vmatpush2.bf16.msra.mxu0 0
    %3142 = vmatprep.mubr.bf16.mxu0 0
    %3143 = vmatmul.mubr.bf16.gmra.mxu0 %v3041
    %v3144 = vpop.f32.mrf.mxu0
    %v3145 = vadd.f32 0.0, %v3144
    %v3146 = vpop.f32.mrf.mxu0
    %v3147 = vpop.f32.mrf.mxu0
    %v3148 = vadd.f32 0.0, %v3147
    %v3149 = vpop.f32.mrf.mxu0
    %3150 = vmatprep.mubr.bf16.mxu0 0
    %3151 = vmatmul.mubr.bf16.gmra.mxu0 %v3042
    %v3152 = vpop.f32.mrf.mxu0
    %v3153 = vadd.f32 0.0, %v3152
    %v3154 = vpop.f32.mrf.mxu0
    %v3155 = vpop.f32.mrf.mxu0
    %v3156 = vadd.f32 0.0, %v3155
    %v3157 = vpop.f32.mrf.mxu0
    %3158 = vmatprep.mubr.bf16.mxu0 0
    %3159 = vmatmul.mubr.bf16.gmra.mxu0 %v3043
    %v3160 = vpop.f32.mrf.mxu0
    %v3161 = vadd.f32 0.0, %v3160
    %v3162 = vpop.f32.mrf.mxu0
    %v3163 = vpop.f32.mrf.mxu0
    %v3164 = vadd.f32 0.0, %v3163
    %v3165 = vpop.f32.mrf.mxu0
    %3166 = vmatprep.mubr.bf16.mxu0 0
    %3167 = vmatmul.mubr.bf16.gmra.mxu0 %v3044
    %v3168 = vpop.f32.mrf.mxu0
    %v3169 = vadd.f32 0.0, %v3168
    %v3170 = vpop.f32.mrf.mxu0
    %v3171 = vpop.f32.mrf.mxu0
    %v3172 = vadd.f32 0.0, %v3171
    %v3173 = vpop.f32.mrf.mxu0
    %3174 = vdwg.mxu0
    %v3175 = vadd.f32 %v3011, %v3145
    %v3176 = vadd.f32 %v3014, %v3148
    %v3177 = vadd.f32 %v3019, %v3153
    %v3178 = vadd.f32 %v3022, %v3156
    %v3179 = vadd.f32 %v3027, %v3161
    %v3180 = vadd.f32 %v3030, %v3164
    %v3181 = vadd.f32 %v3035, %v3169
    %v3182 = vadd.f32 %v3038, %v3172
    %v3183 = vld [vmem:[#allocation10] sm:$0x1]
    %v3185 = vlaneseq
    %v3186 = vshrl.u32 %v3185, 7
    %v3187 = vsub.s32 0, %v3186
    %v3188 = vrot.slane %v3183, %v3187
    %v3190 = vadd.f32 %v3175, %v3188
    %v3191 = vadd.f32 %v3176, %v3188
    %v3192 = vadd.f32 %v3177, %v3188
    %v3193 = vadd.f32 %v3178, %v3188
    %v3194 = vadd.f32 %v3179, %v3188
    %v3195 = vadd.f32 %v3180, %v3188
    %v3196 = vadd.f32 %v3181, %v3188
    %v3197 = vadd.f32 %v3182, %v3188
    %v3198 = vadd.f32 %v2096, %v3190
    %v3199 = vadd.f32 %v2099, %v3191
    %v3200 = vadd.f32 %v2104, %v3192
    %v3201 = vadd.f32 %v2107, %v3193
    %v3202 = vadd.f32 %v2112, %v3194
    %v3203 = vadd.f32 %v2115, %v3195
    %v3204 = vadd.f32 %v2120, %v3196
    %v3205 = vadd.f32 %v2123, %v3197
    %v3206 = vmax.f32 %v3198, 0.0
    %v3207 = vmax.f32 %v3199, 0.0
    %v3208 = vmax.f32 %v3200, 0.0
    %v3209 = vmax.f32 %v3201, 0.0
    %v3210 = vmax.f32 %v3202, 0.0
    %v3211 = vmax.f32 %v3203, 0.0
    %v3212 = vmax.f32 %v3204, 0.0
    %v3213 = vmax.f32 %v3205, 0.0
    %v3214 = vrot.slane %v3206, 7
    %v3215 = vrot.slane %v3207, 7
    %v3216 = vrot.slane %v3208, 7
    %v3217 = vrot.slane %v3209, 7
    %v3218 = vrot.slane %v3210, 7
    %v3219 = vrot.slane %v3211, 7
    %v3220 = vrot.slane %v3212, 7
    %v3221 = vrot.slane %v3213, 7
    %v3222 = vsel %vm642, %v3220, %v3221
    %v3223 = vsel %vm642, %v3219, %v3220
    %v3224 = vsel %vm642, %v3218, %v3219
    %v3225 = vsel %vm642, %v3217, %v3218
    %v3226 = vsel %vm642, %v3216, %v3217
    %v3227 = vsel %vm642, %v3215, %v3216
    %v3228 = vsel %vm642, %v3214, %v3215
    %v3229 = vsel %vm642, %v3221, %v3214
    %v3230 = vsel %vm2230, 0.0, %v3229
    %v3231 = vsel %vm2231, 0.0, %v3228
    %v3232 = vsel %vm2232, 0.0, %v3227
    %v3233 = vsel %vm2233, 0.0, %v3226
    %v3234 = vsel %vm2234, 0.0, %v3225
    %v3235 = vsel %vm2235, 0.0, %v3224
    %v3236 = vsel %vm2236, 0.0, %v3223
    %v3237 = vsel %vm2237, 0.0, %v3222
    %v3238 = vrot.slane %v3206, 1
    %v3239 = vrot.slane %v3207, 1
    %v3240 = vrot.slane %v3208, 1
    %v3241 = vrot.slane %v3209, 1
    %v3242 = vrot.slane %v3210, 1
    %v3243 = vrot.slane %v3211, 1
    %v3244 = vrot.slane %v3212, 1
    %v3245 = vrot.slane %v3213, 1
    %v3246 = vsel %vm707, %v3244, %v3245
    %v3247 = vsel %vm707, %v3243, %v3244
    %v3248 = vsel %vm707, %v3242, %v3243
    %v3249 = vsel %vm707, %v3241, %v3242
    %v3250 = vsel %vm707, %v3240, %v3241
    %v3251 = vsel %vm707, %v3239, %v3240
    %v3252 = vsel %vm707, %v3238, %v3239
    %v3253 = vsel %vm707, %v3245, %v3238
    %v3254 = vsel %vm2262, 0.0, %v3252
    %v3255 = vsel %vm2263, 0.0, %v3251
    %v3256 = vsel %vm2264, 0.0, %v3250
    %v3257 = vsel %vm2265, 0.0, %v3249
    %v3258 = vsel %vm2266, 0.0, %v3248
    %v3259 = vsel %vm2267, 0.0, %v3247
    %v3260 = vsel %vm2268, 0.0, %v3246
    %v3261 = vsel %vm2269, 0.0, %v3253
    %v3262 = vpack.c.bf16 %v3231, %v3230
    %v3263 = vpack.c.bf16 %v3233, %v3232
    %v3264 = vpack.c.bf16 %v3235, %v3234
    %v3265 = vpack.c.bf16 %v3237, %v3236
    %v3266 = vld [vmem:[#allocation12] sm:$0xf]
    %v3267 = vld [vmem:[#allocation12 + $0x4] sm:$0xf]
    %v3268 = vld [vmem:[#allocation12 + $0x8] sm:$0xf]
    %v3269 = vld [vmem:[#allocation12 + $0xc] sm:$0xf]
    %v3270 = vld [vmem:[#allocation12 + $0x10] sm:$0xf]
    %v3271 = vld [vmem:[#allocation12 + $0x14] sm:$0xf]
    %v3272 = vld [vmem:[#allocation12 + $0x18] sm:$0xf]
    %v3273 = vld [vmem:[#allocation12 + $0x1c] sm:$0xf]
    %v3274 = vld [vmem:[#allocation12 + $0x20] sm:$0xf]
    %v3275 = vld [vmem:[#allocation12 + $0x24] sm:$0xf]
    %v3276 = vld [vmem:[#allocation12 + $0x28] sm:$0xf]
    %v3277 = vld [vmem:[#allocation12 + $0x2c] sm:$0xf]
    %v3278 = vld [vmem:[#allocation12 + $0x30] sm:$0xf]
    %v3279 = vld [vmem:[#allocation12 + $0x34] sm:$0xf]
    %v3280 = vld [vmem:[#allocation12 + $0x38] sm:$0xf]
    %v3281 = vld [vmem:[#allocation12 + $0x3c] sm:$0xf]
    %v3282 = vpack.c.bf16 %v3207, %v3206
    %v3283 = vpack.c.bf16 %v3209, %v3208
    %v3284 = vpack.c.bf16 %v3211, %v3210
    %v3285 = vpack.c.bf16 %v3213, %v3212
    %s3286 = scalar_lea.vmem [#allocation12], 64
    %v3287 = vld [vmem:[%s3286] sm:$0xf]
    %v3288 = vld [vmem:[%s3286 + $0x4] sm:$0xf]
    %v3289 = vld [vmem:[%s3286 + $0x8] sm:$0xf]
    %v3290 = vld [vmem:[%s3286 + $0xc] sm:$0xf]
    %v3291 = vld [vmem:[%s3286 + $0x10] sm:$0xf]
    %v3292 = vld [vmem:[%s3286 + $0x14] sm:$0xf]
    %v3293 = vld [vmem:[%s3286 + $0x18] sm:$0xf]
    %v3294 = vld [vmem:[%s3286 + $0x1c] sm:$0xf]
    %v3295 = vld [vmem:[%s3286 + $0x20] sm:$0xf]
    %v3296 = vld [vmem:[%s3286 + $0x24] sm:$0xf]
    %v3297 = vld [vmem:[%s3286 + $0x28] sm:$0xf]
    %v3298 = vld [vmem:[%s3286 + $0x2c] sm:$0xf]
    %v3299 = vld [vmem:[%s3286 + $0x30] sm:$0xf]
    %v3300 = vld [vmem:[%s3286 + $0x34] sm:$0xf]
    %v3301 = vld [vmem:[%s3286 + $0x38] sm:$0xf]
    %v3302 = vld [vmem:[%s3286 + $0x3c] sm:$0xf]
    %v3319 = vunpack.c.l.b16 %v3287
    %v3320 = vunpack.c.l.b16 %v3288
    %v3321 = vunpack.c.l.b16 %v3289
    %v3322 = vunpack.c.l.b16 %v3290
    %v3323 = vunpack.c.l.b16 %v3291
    %v3324 = vunpack.c.l.b16 %v3292
    %v3325 = vunpack.c.l.b16 %v3293
    %v3326 = vunpack.c.l.b16 %v3294
    %v3327 = vunpack.c.l.b16 %v3295
    %v3328 = vunpack.c.l.b16 %v3296
    %v3329 = vunpack.c.l.b16 %v3297
    %v3330 = vunpack.c.l.b16 %v3298
    %v3331 = vunpack.c.l.b16 %v3299
    %v3332 = vunpack.c.l.b16 %v3300
    %v3333 = vunpack.c.l.b16 %v3301
    %v3334 = vunpack.c.l.b16 %v3302
    %v3335 = vpack.c.b16 %v3320, %v3319
    %v3336 = vpack.c.b16 %v3322, %v3321
    %v3337 = vpack.c.b16 %v3324, %v3323
    %v3338 = vpack.c.b16 %v3326, %v3325
    %v3339 = vpack.c.b16 %v3328, %v3327
    %v3340 = vpack.c.b16 %v3330, %v3329
    %v3341 = vpack.c.b16 %v3332, %v3331
    %v3342 = vpack.c.b16 %v3334, %v3333
    %3351 = vmatprep.subr.bf16.mxu0 0
    %3352 = vmatpush1.bf16.msra.mxu0 %v3342
    %3353 = vmatprep.subr.bf16.mxu0 0
    %3354 = vmatpush1.bf16.msra.mxu0 %v3341
    %3355 = vmatprep.subr.bf16.mxu0 0
    %3356 = vmatpush1.bf16.msra.mxu0 %v3340
    %3357 = vmatprep.subr.bf16.mxu0 0
    %3358 = vmatpush1.bf16.msra.mxu0 %v3339
    %3359 = vmatprep.subr.bf16.mxu0 0
    %3360 = vmatpush1.bf16.msra.mxu0 %v3338
    %3361 = vmatprep.subr.bf16.mxu0 0
    %3362 = vmatpush1.bf16.msra.mxu0 %v3337
    %3363 = vmatprep.subr.bf16.mxu0 0
    %3364 = vmatpush1.bf16.msra.mxu0 %v3336
    %3365 = vmatprep.subr.bf16.mxu0 0
    %3366 = vmatpush1.bf16.msra.mxu0 %v3335
    %3367 = vmatprep.subr.bf16.mxu0 0
    %3368 = vmatpush2.bf16.msra.mxu0 0
    %3369 = vmatprep.subr.bf16.mxu0 0
    %3370 = vmatpush2.bf16.msra.mxu0 0
    %3371 = vmatprep.subr.bf16.mxu0 0
    %3372 = vmatpush2.bf16.msra.mxu0 0
    %3373 = vmatprep.subr.bf16.mxu0 0
    %3374 = vmatpush2.bf16.msra.mxu0 0
    %3375 = vmatprep.subr.bf16.mxu0 0
    %3376 = vmatpush2.bf16.msra.mxu0 0
    %3377 = vmatprep.subr.bf16.mxu0 0
    %3378 = vmatpush2.bf16.msra.mxu0 0
    %3379 = vmatprep.subr.bf16.mxu0 0
    %3380 = vmatpush2.bf16.msra.mxu0 0
    %3381 = vmatprep.subr.bf16.mxu0 0
    %3382 = vmatpush2.bf16.msra.mxu0 0
    %3383 = vmatprep.mubr.bf16.mxu0 0
    %3384 = vmatmul.mubr.bf16.gmra.mxu0 %v3282
    %v3385 = vpop.f32.mrf.mxu0
    %v3386 = vadd.f32 0.0, %v3385
    %v3387 = vpop.f32.mrf.mxu0
    %v3388 = vpop.f32.mrf.mxu0
    %v3389 = vadd.f32 0.0, %v3388
    %v3390 = vpop.f32.mrf.mxu0
    %3391 = vmatprep.mubr.bf16.mxu0 0
    %3392 = vmatmul.mubr.bf16.gmra.mxu0 %v3283
    %v3393 = vpop.f32.mrf.mxu0
    %v3394 = vadd.f32 0.0, %v3393
    %v3395 = vpop.f32.mrf.mxu0
    %v3396 = vpop.f32.mrf.mxu0
    %v3397 = vadd.f32 0.0, %v3396
    %v3398 = vpop.f32.mrf.mxu0
    %3399 = vmatprep.mubr.bf16.mxu0 0
    %3400 = vmatmul.mubr.bf16.gmra.mxu0 %v3284
    %v3401 = vpop.f32.mrf.mxu0
    %v3402 = vadd.f32 0.0, %v3401
    %v3403 = vpop.f32.mrf.mxu0
    %v3404 = vpop.f32.mrf.mxu0
    %v3405 = vadd.f32 0.0, %v3404
    %v3406 = vpop.f32.mrf.mxu0
    %3407 = vmatprep.mubr.bf16.mxu0 0
    %3408 = vmatmul.mubr.bf16.gmra.mxu0 %v3285
    %v3409 = vpop.f32.mrf.mxu0
    %v3410 = vadd.f32 0.0, %v3409
    %v3411 = vpop.f32.mrf.mxu0
    %v3412 = vpop.f32.mrf.mxu0
    %v3413 = vadd.f32 0.0, %v3412
    %v3414 = vpop.f32.mrf.mxu0
    %3415 = vdwg.mxu0
    %v3432 = vunpack.c.l.b16 %v3266
    %v3433 = vunpack.c.l.b16 %v3267
    %v3434 = vunpack.c.l.b16 %v3268
    %v3435 = vunpack.c.l.b16 %v3269
    %v3436 = vunpack.c.l.b16 %v3270
    %v3437 = vunpack.c.l.b16 %v3271
    %v3438 = vunpack.c.l.b16 %v3272
    %v3439 = vunpack.c.l.b16 %v3273
    %v3440 = vunpack.c.l.b16 %v3274
    %v3441 = vunpack.c.l.b16 %v3275
    %v3442 = vunpack.c.l.b16 %v3276
    %v3443 = vunpack.c.l.b16 %v3277
    %v3444 = vunpack.c.l.b16 %v3278
    %v3445 = vunpack.c.l.b16 %v3279
    %v3446 = vunpack.c.l.b16 %v3280
    %v3447 = vunpack.c.l.b16 %v3281
    %v3448 = vpack.c.b16 %v3433, %v3432
    %v3449 = vpack.c.b16 %v3435, %v3434
    %v3450 = vpack.c.b16 %v3437, %v3436
    %v3451 = vpack.c.b16 %v3439, %v3438
    %v3452 = vpack.c.b16 %v3441, %v3440
    %v3453 = vpack.c.b16 %v3443, %v3442
    %v3454 = vpack.c.b16 %v3445, %v3444
    %v3455 = vpack.c.b16 %v3447, %v3446
    %3464 = vmatprep.subr.bf16.mxu0 0
    %3465 = vmatpush1.bf16.msra.mxu0 %v3455
    %3466 = vmatprep.subr.bf16.mxu0 0
    %3467 = vmatpush1.bf16.msra.mxu0 %v3454
    %3468 = vmatprep.subr.bf16.mxu0 0
    %3469 = vmatpush1.bf16.msra.mxu0 %v3453
    %3470 = vmatprep.subr.bf16.mxu0 0
    %3471 = vmatpush1.bf16.msra.mxu0 %v3452
    %3472 = vmatprep.subr.bf16.mxu0 0
    %3473 = vmatpush1.bf16.msra.mxu0 %v3451
    %3474 = vmatprep.subr.bf16.mxu0 0
    %3475 = vmatpush1.bf16.msra.mxu0 %v3450
    %3476 = vmatprep.subr.bf16.mxu0 0
    %3477 = vmatpush1.bf16.msra.mxu0 %v3449
    %3478 = vmatprep.subr.bf16.mxu0 0
    %3479 = vmatpush1.bf16.msra.mxu0 %v3448
    %3480 = vmatprep.subr.bf16.mxu0 0
    %3481 = vmatpush2.bf16.msra.mxu0 0
    %3482 = vmatprep.subr.bf16.mxu0 0
    %3483 = vmatpush2.bf16.msra.mxu0 0
    %3484 = vmatprep.subr.bf16.mxu0 0
    %3485 = vmatpush2.bf16.msra.mxu0 0
    %3486 = vmatprep.subr.bf16.mxu0 0
    %3487 = vmatpush2.bf16.msra.mxu0 0
    %3488 = vmatprep.subr.bf16.mxu0 0
    %3489 = vmatpush2.bf16.msra.mxu0 0
    %3490 = vmatprep.subr.bf16.mxu0 0
    %3491 = vmatpush2.bf16.msra.mxu0 0
    %3492 = vmatprep.subr.bf16.mxu0 0
    %3493 = vmatpush2.bf16.msra.mxu0 0
    %3494 = vmatprep.subr.bf16.mxu0 0
    %3495 = vmatpush2.bf16.msra.mxu0 0
    %3496 = vmatprep.mubr.bf16.mxu0 0
    %3497 = vmatmul.mubr.bf16.gmra.mxu0 %v3262
    %v3498 = vpop.f32.mrf.mxu0
    %v3499 = vadd.f32 %v3386, %v3498
    %v3500 = vpop.f32.mrf.mxu0
    %v3501 = vpop.f32.mrf.mxu0
    %v3502 = vadd.f32 %v3389, %v3501
    %v3503 = vpop.f32.mrf.mxu0
    %3504 = vmatprep.mubr.bf16.mxu0 0
    %3505 = vmatmul.mubr.bf16.gmra.mxu0 %v3263
    %v3506 = vpop.f32.mrf.mxu0
    %v3507 = vadd.f32 %v3394, %v3506
    %v3508 = vpop.f32.mrf.mxu0
    %v3509 = vpop.f32.mrf.mxu0
    %v3510 = vadd.f32 %v3397, %v3509
    %v3511 = vpop.f32.mrf.mxu0
    %3512 = vmatprep.mubr.bf16.mxu0 0
    %3513 = vmatmul.mubr.bf16.gmra.mxu0 %v3264
    %v3514 = vpop.f32.mrf.mxu0
    %v3515 = vadd.f32 %v3402, %v3514
    %v3516 = vpop.f32.mrf.mxu0
    %v3517 = vpop.f32.mrf.mxu0
    %v3518 = vadd.f32 %v3405, %v3517
    %v3519 = vpop.f32.mrf.mxu0
    %3520 = vmatprep.mubr.bf16.mxu0 0
    %3521 = vmatmul.mubr.bf16.gmra.mxu0 %v3265
    %v3522 = vpop.f32.mrf.mxu0
    %v3523 = vadd.f32 %v3410, %v3522
    %v3524 = vpop.f32.mrf.mxu0
    %v3525 = vpop.f32.mrf.mxu0
    %v3526 = vadd.f32 %v3413, %v3525
    %v3527 = vpop.f32.mrf.mxu0
    %3528 = vdwg.mxu0
    %v3529 = vpack.c.bf16 %v3255, %v3254
    %v3530 = vpack.c.bf16 %v3257, %v3256
    %v3531 = vpack.c.bf16 %v3259, %v3258
    %v3532 = vpack.c.bf16 %v3261, %v3260
    %s3533 = scalar_lea.vmem [#allocation12], 128
    %v3534 = vld [vmem:[%s3533] sm:$0xf]
    %v3535 = vld [vmem:[%s3533 + $0x4] sm:$0xf]
    %v3536 = vld [vmem:[%s3533 + $0x8] sm:$0xf]
    %v3537 = vld [vmem:[%s3533 + $0xc] sm:$0xf]
    %v3538 = vld [vmem:[%s3533 + $0x10] sm:$0xf]
    %v3539 = vld [vmem:[%s3533 + $0x14] sm:$0xf]
    %v3540 = vld [vmem:[%s3533 + $0x18] sm:$0xf]
    %v3541 = vld [vmem:[%s3533 + $0x1c] sm:$0xf]
    %v3542 = vld [vmem:[%s3533 + $0x20] sm:$0xf]
    %v3543 = vld [vmem:[%s3533 + $0x24] sm:$0xf]
    %v3544 = vld [vmem:[%s3533 + $0x28] sm:$0xf]
    %v3545 = vld [vmem:[%s3533 + $0x2c] sm:$0xf]
    %v3546 = vld [vmem:[%s3533 + $0x30] sm:$0xf]
    %v3547 = vld [vmem:[%s3533 + $0x34] sm:$0xf]
    %v3548 = vld [vmem:[%s3533 + $0x38] sm:$0xf]
    %v3549 = vld [vmem:[%s3533 + $0x3c] sm:$0xf]
    %v3566 = vunpack.c.l.b16 %v3534
    %v3567 = vunpack.c.l.b16 %v3535
    %v3568 = vunpack.c.l.b16 %v3536
    %v3569 = vunpack.c.l.b16 %v3537
    %v3570 = vunpack.c.l.b16 %v3538
    %v3571 = vunpack.c.l.b16 %v3539
    %v3572 = vunpack.c.l.b16 %v3540
    %v3573 = vunpack.c.l.b16 %v3541
    %v3574 = vunpack.c.l.b16 %v3542
    %v3575 = vunpack.c.l.b16 %v3543
    %v3576 = vunpack.c.l.b16 %v3544
    %v3577 = vunpack.c.l.b16 %v3545
    %v3578 = vunpack.c.l.b16 %v3546
    %v3579 = vunpack.c.l.b16 %v3547
    %v3580 = vunpack.c.l.b16 %v3548
    %v3581 = vunpack.c.l.b16 %v3549
    %v3582 = vpack.c.b16 %v3567, %v3566
    %v3583 = vpack.c.b16 %v3569, %v3568
    %v3584 = vpack.c.b16 %v3571, %v3570
    %v3585 = vpack.c.b16 %v3573, %v3572
    %v3586 = vpack.c.b16 %v3575, %v3574
    %v3587 = vpack.c.b16 %v3577, %v3576
    %v3588 = vpack.c.b16 %v3579, %v3578
    %v3589 = vpack.c.b16 %v3581, %v3580
    %3598 = vmatprep.subr.bf16.mxu0 0
    %3599 = vmatpush1.bf16.msra.mxu0 %v3589
    %3600 = vmatprep.subr.bf16.mxu0 0
    %3601 = vmatpush1.bf16.msra.mxu0 %v3588
    %3602 = vmatprep.subr.bf16.mxu0 0
    %3603 = vmatpush1.bf16.msra.mxu0 %v3587
    %3604 = vmatprep.subr.bf16.mxu0 0
    %3605 = vmatpush1.bf16.msra.mxu0 %v3586
    %3606 = vmatprep.subr.bf16.mxu0 0
    %3607 = vmatpush1.bf16.msra.mxu0 %v3585
    %3608 = vmatprep.subr.bf16.mxu0 0
    %3609 = vmatpush1.bf16.msra.mxu0 %v3584
    %3610 = vmatprep.subr.bf16.mxu0 0
    %3611 = vmatpush1.bf16.msra.mxu0 %v3583
    %3612 = vmatprep.subr.bf16.mxu0 0
    %3613 = vmatpush1.bf16.msra.mxu0 %v3582
    %3614 = vmatprep.subr.bf16.mxu0 0
    %3615 = vmatpush2.bf16.msra.mxu0 0
    %3616 = vmatprep.subr.bf16.mxu0 0
    %3617 = vmatpush2.bf16.msra.mxu0 0
    %3618 = vmatprep.subr.bf16.mxu0 0
    %3619 = vmatpush2.bf16.msra.mxu0 0
    %3620 = vmatprep.subr.bf16.mxu0 0
    %3621 = vmatpush2.bf16.msra.mxu0 0
    %3622 = vmatprep.subr.bf16.mxu0 0
    %3623 = vmatpush2.bf16.msra.mxu0 0
    %3624 = vmatprep.subr.bf16.mxu0 0
    %3625 = vmatpush2.bf16.msra.mxu0 0
    %3626 = vmatprep.subr.bf16.mxu0 0
    %3627 = vmatpush2.bf16.msra.mxu0 0
    %3628 = vmatprep.subr.bf16.mxu0 0
    %3629 = vmatpush2.bf16.msra.mxu0 0
    %3630 = vmatprep.mubr.bf16.mxu0 0
    %3631 = vmatmul.mubr.bf16.gmra.mxu0 %v3529
    %v3632 = vpop.f32.mrf.mxu0
    %v3633 = vadd.f32 0.0, %v3632
    %v3634 = vpop.f32.mrf.mxu0
    %v3635 = vpop.f32.mrf.mxu0
    %v3636 = vadd.f32 0.0, %v3635
    %v3637 = vpop.f32.mrf.mxu0
    %3638 = vmatprep.mubr.bf16.mxu0 0
    %3639 = vmatmul.mubr.bf16.gmra.mxu0 %v3530
    %v3640 = vpop.f32.mrf.mxu0
    %v3641 = vadd.f32 0.0, %v3640
    %v3642 = vpop.f32.mrf.mxu0
    %v3643 = vpop.f32.mrf.mxu0
    %v3644 = vadd.f32 0.0, %v3643
    %v3645 = vpop.f32.mrf.mxu0
    %3646 = vmatprep.mubr.bf16.mxu0 0
    %3647 = vmatmul.mubr.bf16.gmra.mxu0 %v3531
    %v3648 = vpop.f32.mrf.mxu0
    %v3649 = vadd.f32 0.0, %v3648
    %v3650 = vpop.f32.mrf.mxu0
    %v3651 = vpop.f32.mrf.mxu0
    %v3652 = vadd.f32 0.0, %v3651
    %v3653 = vpop.f32.mrf.mxu0
    %3654 = vmatprep.mubr.bf16.mxu0 0
    %3655 = vmatmul.mubr.bf16.gmra.mxu0 %v3532
    %v3656 = vpop.f32.mrf.mxu0
    %v3657 = vadd.f32 0.0, %v3656
    %v3658 = vpop.f32.mrf.mxu0
    %v3659 = vpop.f32.mrf.mxu0
    %v3660 = vadd.f32 0.0, %v3659
    %v3661 = vpop.f32.mrf.mxu0
    %3662 = vdwg.mxu0
    %v3663 = vadd.f32 %v3499, %v3633
    %v3664 = vadd.f32 %v3502, %v3636
    %v3665 = vadd.f32 %v3507, %v3641
    %v3666 = vadd.f32 %v3510, %v3644
    %v3667 = vadd.f32 %v3515, %v3649
    %v3668 = vadd.f32 %v3518, %v3652
    %v3669 = vadd.f32 %v3523, %v3657
    %v3670 = vadd.f32 %v3526, %v3660
    %v3671 = vld [vmem:[#allocation13] sm:$0x1]
    %v3673 = vlaneseq
    %v3674 = vshrl.u32 %v3673, 7
    %v3675 = vsub.s32 0, %v3674
    %v3676 = vrot.slane %v3671, %v3675
    %v3678 = vadd.f32 %v3663, %v3676
    %v3679 = vadd.f32 %v3664, %v3676
    %v3680 = vadd.f32 %v3665, %v3676
    %v3681 = vadd.f32 %v3666, %v3676
    %v3682 = vadd.f32 %v3667, %v3676
    %v3683 = vadd.f32 %v3668, %v3676
    %v3684 = vadd.f32 %v3669, %v3676
    %v3685 = vadd.f32 %v3670, %v3676
    %v3686 = vmax.f32 %v3678, 0.0
    %v3687 = vmax.f32 %v3679, 0.0
    %v3688 = vmax.f32 %v3680, 0.0
    %v3689 = vmax.f32 %v3681, 0.0
    %v3690 = vmax.f32 %v3682, 0.0
    %v3691 = vmax.f32 %v3683, 0.0
    %v3692 = vmax.f32 %v3684, 0.0
    %v3693 = vmax.f32 %v3685, 0.0
    %v3694 = vrot.slane %v3686, 7
    %v3695 = vrot.slane %v3687, 7
    %v3696 = vrot.slane %v3688, 7
    %v3697 = vrot.slane %v3689, 7
    %v3698 = vrot.slane %v3690, 7
    %v3699 = vrot.slane %v3691, 7
    %v3700 = vrot.slane %v3692, 7
    %v3701 = vrot.slane %v3693, 7
    %v3702 = vsel %vm642, %v3700, %v3701
    %v3703 = vsel %vm642, %v3699, %v3700
    %v3704 = vsel %vm642, %v3698, %v3699
    %v3705 = vsel %vm642, %v3697, %v3698
    %v3706 = vsel %vm642, %v3696, %v3697
    %v3707 = vsel %vm642, %v3695, %v3696
    %v3708 = vsel %vm642, %v3694, %v3695
    %v3709 = vsel %vm642, %v3701, %v3694
    %v3710 = vsel %vm2230, 0.0, %v3709
    %v3711 = vsel %vm2231, 0.0, %v3708
    %v3712 = vsel %vm2232, 0.0, %v3707
    %v3713 = vsel %vm2233, 0.0, %v3706
    %v3714 = vsel %vm2234, 0.0, %v3705
    %v3715 = vsel %vm2235, 0.0, %v3704
    %v3716 = vsel %vm2236, 0.0, %v3703
    %v3717 = vsel %vm2237, 0.0, %v3702
    %v3718 = vrot.slane %v3686, 1
    %v3719 = vrot.slane %v3687, 1
    %v3720 = vrot.slane %v3688, 1
    %v3721 = vrot.slane %v3689, 1
    %v3722 = vrot.slane %v3690, 1
    %v3723 = vrot.slane %v3691, 1
    %v3724 = vrot.slane %v3692, 1
    %v3725 = vrot.slane %v3693, 1
    %v3726 = vsel %vm707, %v3724, %v3725
    %v3727 = vsel %vm707, %v3723, %v3724
    %v3728 = vsel %vm707, %v3722, %v3723
    %v3729 = vsel %vm707, %v3721, %v3722
    %v3730 = vsel %vm707, %v3720, %v3721
    %v3731 = vsel %vm707, %v3719, %v3720
    %v3732 = vsel %vm707, %v3718, %v3719
    %v3733 = vsel %vm707, %v3725, %v3718
    %v3734 = vsel %vm2262, 0.0, %v3732
    %v3735 = vsel %vm2263, 0.0, %v3731
    %v3736 = vsel %vm2264, 0.0, %v3730
    %v3737 = vsel %vm2265, 0.0, %v3729
    %v3738 = vsel %vm2266, 0.0, %v3728
    %v3739 = vsel %vm2267, 0.0, %v3727
    %v3740 = vsel %vm2268, 0.0, %v3726
    %v3741 = vsel %vm2269, 0.0, %v3733
    %v3742 = vpack.c.bf16 %v3711, %v3710
    %v3743 = vpack.c.bf16 %v3713, %v3712
    %v3744 = vpack.c.bf16 %v3715, %v3714
    %v3745 = vpack.c.bf16 %v3717, %v3716
    %v3746 = vld [vmem:[%s19] sm:$0xf]
    %v3747 = vld [vmem:[%s19 + $0x4] sm:$0xf]
    %v3748 = vld [vmem:[%s19 + $0x8] sm:$0xf]
    %v3749 = vld [vmem:[%s19 + $0xc] sm:$0xf]
    %v3750 = vld [vmem:[%s19 + $0x10] sm:$0xf]
    %v3751 = vld [vmem:[%s19 + $0x14] sm:$0xf]
    %v3752 = vld [vmem:[%s19 + $0x18] sm:$0xf]
    %v3753 = vld [vmem:[%s19 + $0x1c] sm:$0xf]
    %v3754 = vld [vmem:[%s19 + $0x20] sm:$0xf]
    %v3755 = vld [vmem:[%s19 + $0x24] sm:$0xf]
    %v3756 = vld [vmem:[%s19 + $0x28] sm:$0xf]
    %v3757 = vld [vmem:[%s19 + $0x2c] sm:$0xf]
    %v3758 = vld [vmem:[%s19 + $0x30] sm:$0xf]
    %v3759 = vld [vmem:[%s19 + $0x34] sm:$0xf]
    %v3760 = vld [vmem:[%s19 + $0x38] sm:$0xf]
    %v3761 = vld [vmem:[%s19 + $0x3c] sm:$0xf]
    %v3762 = vpack.c.bf16 %v3687, %v3686
    %v3763 = vpack.c.bf16 %v3689, %v3688
    %v3764 = vpack.c.bf16 %v3691, %v3690
    %v3765 = vpack.c.bf16 %v3693, %v3692
    %s3766 = scalar_lea.vmem %s19, 64
    %v3767 = vld [vmem:[%s3766] sm:$0xf]
    %v3768 = vld [vmem:[%s3766 + $0x4] sm:$0xf]
    %v3769 = vld [vmem:[%s3766 + $0x8] sm:$0xf]
    %v3770 = vld [vmem:[%s3766 + $0xc] sm:$0xf]
    %v3771 = vld [vmem:[%s3766 + $0x10] sm:$0xf]
    %v3772 = vld [vmem:[%s3766 + $0x14] sm:$0xf]
    %v3773 = vld [vmem:[%s3766 + $0x18] sm:$0xf]
    %v3774 = vld [vmem:[%s3766 + $0x1c] sm:$0xf]
    %v3775 = vld [vmem:[%s3766 + $0x20] sm:$0xf]
    %v3776 = vld [vmem:[%s3766 + $0x24] sm:$0xf]
    %v3777 = vld [vmem:[%s3766 + $0x28] sm:$0xf]
    %v3778 = vld [vmem:[%s3766 + $0x2c] sm:$0xf]
    %v3779 = vld [vmem:[%s3766 + $0x30] sm:$0xf]
    %v3780 = vld [vmem:[%s3766 + $0x34] sm:$0xf]
    %v3781 = vld [vmem:[%s3766 + $0x38] sm:$0xf]
    %v3782 = vld [vmem:[%s3766 + $0x3c] sm:$0xf]
    %v3799 = vunpack.c.l.b16 %v3767
    %v3800 = vunpack.c.l.b16 %v3768
    %v3801 = vunpack.c.l.b16 %v3769
    %v3802 = vunpack.c.l.b16 %v3770
    %v3803 = vunpack.c.l.b16 %v3771
    %v3804 = vunpack.c.l.b16 %v3772
    %v3805 = vunpack.c.l.b16 %v3773
    %v3806 = vunpack.c.l.b16 %v3774
    %v3807 = vunpack.c.l.b16 %v3775
    %v3808 = vunpack.c.l.b16 %v3776
    %v3809 = vunpack.c.l.b16 %v3777
    %v3810 = vunpack.c.l.b16 %v3778
    %v3811 = vunpack.c.l.b16 %v3779
    %v3812 = vunpack.c.l.b16 %v3780
    %v3813 = vunpack.c.l.b16 %v3781
    %v3814 = vunpack.c.l.b16 %v3782
    %v3815 = vpack.c.b16 %v3800, %v3799
    %v3816 = vpack.c.b16 %v3802, %v3801
    %v3817 = vpack.c.b16 %v3804, %v3803
    %v3818 = vpack.c.b16 %v3806, %v3805
    %v3819 = vpack.c.b16 %v3808, %v3807
    %v3820 = vpack.c.b16 %v3810, %v3809
    %v3821 = vpack.c.b16 %v3812, %v3811
    %v3822 = vpack.c.b16 %v3814, %v3813
    %3831 = vmatprep.subr.bf16.mxu0 0
    %3832 = vmatpush1.bf16.msra.mxu0 %v3822
    %3833 = vmatprep.subr.bf16.mxu0 0
    %3834 = vmatpush1.bf16.msra.mxu0 %v3821
    %3835 = vmatprep.subr.bf16.mxu0 0
    %3836 = vmatpush1.bf16.msra.mxu0 %v3820
    %3837 = vmatprep.subr.bf16.mxu0 0
    %3838 = vmatpush1.bf16.msra.mxu0 %v3819
    %3839 = vmatprep.subr.bf16.mxu0 0
    %3840 = vmatpush1.bf16.msra.mxu0 %v3818
    %3841 = vmatprep.subr.bf16.mxu0 0
    %3842 = vmatpush1.bf16.msra.mxu0 %v3817
    %3843 = vmatprep.subr.bf16.mxu0 0
    %3844 = vmatpush1.bf16.msra.mxu0 %v3816
    %3845 = vmatprep.subr.bf16.mxu0 0
    %3846 = vmatpush1.bf16.msra.mxu0 %v3815
    %3847 = vmatprep.subr.bf16.mxu0 0
    %3848 = vmatpush2.bf16.msra.mxu0 0
    %3849 = vmatprep.subr.bf16.mxu0 0
    %3850 = vmatpush2.bf16.msra.mxu0 0
    %3851 = vmatprep.subr.bf16.mxu0 0
    %3852 = vmatpush2.bf16.msra.mxu0 0
    %3853 = vmatprep.subr.bf16.mxu0 0
    %3854 = vmatpush2.bf16.msra.mxu0 0
    %3855 = vmatprep.subr.bf16.mxu0 0
    %3856 = vmatpush2.bf16.msra.mxu0 0
    %3857 = vmatprep.subr.bf16.mxu0 0
    %3858 = vmatpush2.bf16.msra.mxu0 0
    %3859 = vmatprep.subr.bf16.mxu0 0
    %3860 = vmatpush2.bf16.msra.mxu0 0
    %3861 = vmatprep.subr.bf16.mxu0 0
    %3862 = vmatpush2.bf16.msra.mxu0 0
    %3863 = vmatprep.mubr.bf16.mxu0 0
    %3864 = vmatmul.mubr.bf16.gmra.mxu0 %v3762
    %v3865 = vpop.f32.mrf.mxu0
    %v3866 = vadd.f32 0.0, %v3865
    %v3867 = vpop.f32.mrf.mxu0
    %v3868 = vpop.f32.mrf.mxu0
    %v3869 = vadd.f32 0.0, %v3868
    %v3870 = vpop.f32.mrf.mxu0
    %3871 = vmatprep.mubr.bf16.mxu0 0
    %3872 = vmatmul.mubr.bf16.gmra.mxu0 %v3763
    %v3873 = vpop.f32.mrf.mxu0
    %v3874 = vadd.f32 0.0, %v3873
    %v3875 = vpop.f32.mrf.mxu0
    %v3876 = vpop.f32.mrf.mxu0
    %v3877 = vadd.f32 0.0, %v3876
    %v3878 = vpop.f32.mrf.mxu0
    %3879 = vmatprep.mubr.bf16.mxu0 0
    %3880 = vmatmul.mubr.bf16.gmra.mxu0 %v3764
    %v3881 = vpop.f32.mrf.mxu0
    %v3882 = vadd.f32 0.0, %v3881
    %v3883 = vpop.f32.mrf.mxu0
    %v3884 = vpop.f32.mrf.mxu0
    %v3885 = vadd.f32 0.0, %v3884
    %v3886 = vpop.f32.mrf.mxu0
    %3887 = vmatprep.mubr.bf16.mxu0 0
    %3888 = vmatmul.mubr.bf16.gmra.mxu0 %v3765
    %v3889 = vpop.f32.mrf.mxu0
    %v3890 = vadd.f32 0.0, %v3889
    %v3891 = vpop.f32.mrf.mxu0
    %v3892 = vpop.f32.mrf.mxu0
    %v3893 = vadd.f32 0.0, %v3892
    %v3894 = vpop.f32.mrf.mxu0
    %3895 = vdwg.mxu0
    %v3912 = vunpack.c.l.b16 %v3746
    %v3913 = vunpack.c.l.b16 %v3747
    %v3914 = vunpack.c.l.b16 %v3748
    %v3915 = vunpack.c.l.b16 %v3749
    %v3916 = vunpack.c.l.b16 %v3750
    %v3917 = vunpack.c.l.b16 %v3751
    %v3918 = vunpack.c.l.b16 %v3752
    %v3919 = vunpack.c.l.b16 %v3753
    %v3920 = vunpack.c.l.b16 %v3754
    %v3921 = vunpack.c.l.b16 %v3755
    %v3922 = vunpack.c.l.b16 %v3756
    %v3923 = vunpack.c.l.b16 %v3757
    %v3924 = vunpack.c.l.b16 %v3758
    %v3925 = vunpack.c.l.b16 %v3759
    %v3926 = vunpack.c.l.b16 %v3760
    %v3927 = vunpack.c.l.b16 %v3761
    %v3928 = vpack.c.b16 %v3913, %v3912
    %v3929 = vpack.c.b16 %v3915, %v3914
    %v3930 = vpack.c.b16 %v3917, %v3916
    %v3931 = vpack.c.b16 %v3919, %v3918
    %v3932 = vpack.c.b16 %v3921, %v3920
    %v3933 = vpack.c.b16 %v3923, %v3922
    %v3934 = vpack.c.b16 %v3925, %v3924
    %v3935 = vpack.c.b16 %v3927, %v3926
    %3944 = vmatprep.subr.bf16.mxu0 0
    %3945 = vmatpush1.bf16.msra.mxu0 %v3935
    %3946 = vmatprep.subr.bf16.mxu0 0
    %3947 = vmatpush1.bf16.msra.mxu0 %v3934
    %3948 = vmatprep.subr.bf16.mxu0 0
    %3949 = vmatpush1.bf16.msra.mxu0 %v3933
    %3950 = vmatprep.subr.bf16.mxu0 0
    %3951 = vmatpush1.bf16.msra.mxu0 %v3932
    %3952 = vmatprep.subr.bf16.mxu0 0
    %3953 = vmatpush1.bf16.msra.mxu0 %v3931
    %3954 = vmatprep.subr.bf16.mxu0 0
    %3955 = vmatpush1.bf16.msra.mxu0 %v3930
    %3956 = vmatprep.subr.bf16.mxu0 0
    %3957 = vmatpush1.bf16.msra.mxu0 %v3929
    %3958 = vmatprep.subr.bf16.mxu0 0
    %3959 = vmatpush1.bf16.msra.mxu0 %v3928
    %3960 = vmatprep.subr.bf16.mxu0 0
    %3961 = vmatpush2.bf16.msra.mxu0 0
    %3962 = vmatprep.subr.bf16.mxu0 0
    %3963 = vmatpush2.bf16.msra.mxu0 0
    %3964 = vmatprep.subr.bf16.mxu0 0
    %3965 = vmatpush2.bf16.msra.mxu0 0
    %3966 = vmatprep.subr.bf16.mxu0 0
    %3967 = vmatpush2.bf16.msra.mxu0 0
    %3968 = vmatprep.subr.bf16.mxu0 0
    %3969 = vmatpush2.bf16.msra.mxu0 0
    %3970 = vmatprep.subr.bf16.mxu0 0
    %3971 = vmatpush2.bf16.msra.mxu0 0
    %3972 = vmatprep.subr.bf16.mxu0 0
    %3973 = vmatpush2.bf16.msra.mxu0 0
    %3974 = vmatprep.subr.bf16.mxu0 0
    %3975 = vmatpush2.bf16.msra.mxu0 0
    %3976 = vmatprep.mubr.bf16.mxu0 0
    %3977 = vmatmul.mubr.bf16.gmra.mxu0 %v3742
    %v3978 = vpop.f32.mrf.mxu0
    %v3979 = vadd.f32 %v3866, %v3978
    %v3980 = vpop.f32.mrf.mxu0
    %v3981 = vpop.f32.mrf.mxu0
    %v3982 = vadd.f32 %v3869, %v3981
    %v3983 = vpop.f32.mrf.mxu0
    %3984 = vmatprep.mubr.bf16.mxu0 0
    %3985 = vmatmul.mubr.bf16.gmra.mxu0 %v3743
    %v3986 = vpop.f32.mrf.mxu0
    %v3987 = vadd.f32 %v3874, %v3986
    %v3988 = vpop.f32.mrf.mxu0
    %v3989 = vpop.f32.mrf.mxu0
    %v3990 = vadd.f32 %v3877, %v3989
    %v3991 = vpop.f32.mrf.mxu0
    %3992 = vmatprep.mubr.bf16.mxu0 0
    %3993 = vmatmul.mubr.bf16.gmra.mxu0 %v3744
    %v3994 = vpop.f32.mrf.mxu0
    %v3995 = vadd.f32 %v3882, %v3994
    %v3996 = vpop.f32.mrf.mxu0
    %v3997 = vpop.f32.mrf.mxu0
    %v3998 = vadd.f32 %v3885, %v3997
    %v3999 = vpop.f32.mrf.mxu0
    %4000 = vmatprep.mubr.bf16.mxu0 0
    %4001 = vmatmul.mubr.bf16.gmra.mxu0 %v3745
    %v4002 = vpop.f32.mrf.mxu0
    %v4003 = vadd.f32 %v3890, %v4002
    %v4004 = vpop.f32.mrf.mxu0
    %v4005 = vpop.f32.mrf.mxu0
    %v4006 = vadd.f32 %v3893, %v4005
    %v4007 = vpop.f32.mrf.mxu0
    %4008 = vdwg.mxu0
    %v4009 = vpack.c.bf16 %v3735, %v3734
    %v4010 = vpack.c.bf16 %v3737, %v3736
    %v4011 = vpack.c.bf16 %v3739, %v3738
    %v4012 = vpack.c.bf16 %v3741, %v3740
    %s4013 = scalar_lea.vmem %s19, 128
    %v4014 = vld [vmem:[%s4013] sm:$0xf]
    %v4015 = vld [vmem:[%s4013 + $0x4] sm:$0xf]
    %v4016 = vld [vmem:[%s4013 + $0x8] sm:$0xf]
    %v4017 = vld [vmem:[%s4013 + $0xc] sm:$0xf]
    %v4018 = vld [vmem:[%s4013 + $0x10] sm:$0xf]
    %v4019 = vld [vmem:[%s4013 + $0x14] sm:$0xf]
    %v4020 = vld [vmem:[%s4013 + $0x18] sm:$0xf]
    %v4021 = vld [vmem:[%s4013 + $0x1c] sm:$0xf]
    %v4022 = vld [vmem:[%s4013 + $0x20] sm:$0xf]
    %v4023 = vld [vmem:[%s4013 + $0x24] sm:$0xf]
    %v4024 = vld [vmem:[%s4013 + $0x28] sm:$0xf]
    %v4025 = vld [vmem:[%s4013 + $0x2c] sm:$0xf]
    %v4026 = vld [vmem:[%s4013 + $0x30] sm:$0xf]
    %v4027 = vld [vmem:[%s4013 + $0x34] sm:$0xf]
    %v4028 = vld [vmem:[%s4013 + $0x38] sm:$0xf]
    %v4029 = vld [vmem:[%s4013 + $0x3c] sm:$0xf]
    %v4046 = vunpack.c.l.b16 %v4014
    %v4047 = vunpack.c.l.b16 %v4015
    %v4048 = vunpack.c.l.b16 %v4016
    %v4049 = vunpack.c.l.b16 %v4017
    %v4050 = vunpack.c.l.b16 %v4018
    %v4051 = vunpack.c.l.b16 %v4019
    %v4052 = vunpack.c.l.b16 %v4020
    %v4053 = vunpack.c.l.b16 %v4021
    %v4054 = vunpack.c.l.b16 %v4022
    %v4055 = vunpack.c.l.b16 %v4023
    %v4056 = vunpack.c.l.b16 %v4024
    %v4057 = vunpack.c.l.b16 %v4025
    %v4058 = vunpack.c.l.b16 %v4026
    %v4059 = vunpack.c.l.b16 %v4027
    %v4060 = vunpack.c.l.b16 %v4028
    %v4061 = vunpack.c.l.b16 %v4029
    %v4062 = vpack.c.b16 %v4047, %v4046
    %v4063 = vpack.c.b16 %v4049, %v4048
    %v4064 = vpack.c.b16 %v4051, %v4050
    %v4065 = vpack.c.b16 %v4053, %v4052
    %v4066 = vpack.c.b16 %v4055, %v4054
    %v4067 = vpack.c.b16 %v4057, %v4056
    %v4068 = vpack.c.b16 %v4059, %v4058
    %v4069 = vpack.c.b16 %v4061, %v4060
    %4078 = vmatprep.subr.bf16.mxu0 0
    %4079 = vmatpush1.bf16.msra.mxu0 %v4069
    %4080 = vmatprep.subr.bf16.mxu0 0
    %4081 = vmatpush1.bf16.msra.mxu0 %v4068
    %4082 = vmatprep.subr.bf16.mxu0 0
    %4083 = vmatpush1.bf16.msra.mxu0 %v4067
    %4084 = vmatprep.subr.bf16.mxu0 0
    %4085 = vmatpush1.bf16.msra.mxu0 %v4066
    %4086 = vmatprep.subr.bf16.mxu0 0
    %4087 = vmatpush1.bf16.msra.mxu0 %v4065
    %4088 = vmatprep.subr.bf16.mxu0 0
    %4089 = vmatpush1.bf16.msra.mxu0 %v4064
    %4090 = vmatprep.subr.bf16.mxu0 0
    %4091 = vmatpush1.bf16.msra.mxu0 %v4063
    %4092 = vmatprep.subr.bf16.mxu0 0
    %4093 = vmatpush1.bf16.msra.mxu0 %v4062
    %4094 = vmatprep.subr.bf16.mxu0 0
    %4095 = vmatpush2.bf16.msra.mxu0 0
    %4096 = vmatprep.subr.bf16.mxu0 0
    %4097 = vmatpush2.bf16.msra.mxu0 0
    %4098 = vmatprep.subr.bf16.mxu0 0
    %4099 = vmatpush2.bf16.msra.mxu0 0
    %4100 = vmatprep.subr.bf16.mxu0 0
    %4101 = vmatpush2.bf16.msra.mxu0 0
    %4102 = vmatprep.subr.bf16.mxu0 0
    %4103 = vmatpush2.bf16.msra.mxu0 0
    %4104 = vmatprep.subr.bf16.mxu0 0
    %4105 = vmatpush2.bf16.msra.mxu0 0
    %4106 = vmatprep.subr.bf16.mxu0 0
    %4107 = vmatpush2.bf16.msra.mxu0 0
    %4108 = vmatprep.subr.bf16.mxu0 0
    %4109 = vmatpush2.bf16.msra.mxu0 0
    %4110 = vmatprep.mubr.bf16.mxu0 0
    %4111 = vmatmul.mubr.bf16.gmra.mxu0 %v4009
    %v4112 = vpop.f32.mrf.mxu0
    %v4113 = vadd.f32 0.0, %v4112
    %v4114 = vpop.f32.mrf.mxu0
    %v4115 = vpop.f32.mrf.mxu0
    %v4116 = vadd.f32 0.0, %v4115
    %v4117 = vpop.f32.mrf.mxu0
    %4118 = vmatprep.mubr.bf16.mxu0 0
    %4119 = vmatmul.mubr.bf16.gmra.mxu0 %v4010
    %v4120 = vpop.f32.mrf.mxu0
    %v4121 = vadd.f32 0.0, %v4120
    %v4122 = vpop.f32.mrf.mxu0
    %v4123 = vpop.f32.mrf.mxu0
    %v4124 = vadd.f32 0.0, %v4123
    %v4125 = vpop.f32.mrf.mxu0
    %4126 = vmatprep.mubr.bf16.mxu0 0
    %4127 = vmatmul.mubr.bf16.gmra.mxu0 %v4011
    %v4128 = vpop.f32.mrf.mxu0
    %v4129 = vadd.f32 0.0, %v4128
    %v4130 = vpop.f32.mrf.mxu0
    %v4131 = vpop.f32.mrf.mxu0
    %v4132 = vadd.f32 0.0, %v4131
    %v4133 = vpop.f32.mrf.mxu0
    %4134 = vmatprep.mubr.bf16.mxu0 0
    %4135 = vmatmul.mubr.bf16.gmra.mxu0 %v4012
    %v4136 = vpop.f32.mrf.mxu0
    %v4137 = vadd.f32 0.0, %v4136
    %v4138 = vpop.f32.mrf.mxu0
    %v4139 = vpop.f32.mrf.mxu0
    %v4140 = vadd.f32 0.0, %v4139
    %v4141 = vpop.f32.mrf.mxu0
    %4142 = vdwg.mxu0
    %v4143 = vadd.f32 %v3979, %v4113
    %v4144 = vadd.f32 %v3982, %v4116
    %v4145 = vadd.f32 %v3987, %v4121
    %v4146 = vadd.f32 %v3990, %v4124
    %v4147 = vadd.f32 %v3995, %v4129
    %v4148 = vadd.f32 %v3998, %v4132
    %v4149 = vadd.f32 %v4003, %v4137
    %v4150 = vadd.f32 %v4006, %v4140
    %v4151 = vld [vmem:[#allocation15] sm:$0x1]
    %v4153 = vlaneseq
    %v4154 = vshrl.u32 %v4153, 7
    %v4155 = vsub.s32 0, %v4154
    %v4156 = vrot.slane %v4151, %v4155
    %v4158 = vadd.f32 %v4143, %v4156
    %v4159 = vadd.f32 %v4144, %v4156
    %v4160 = vadd.f32 %v4145, %v4156
    %v4161 = vadd.f32 %v4146, %v4156
    %v4162 = vadd.f32 %v4147, %v4156
    %v4163 = vadd.f32 %v4148, %v4156
    %v4164 = vadd.f32 %v4149, %v4156
    %v4165 = vadd.f32 %v4150, %v4156
    %v4166 = vadd.f32 %v3198, %v4158
    %v4167 = vadd.f32 %v3199, %v4159
    %v4168 = vadd.f32 %v3200, %v4160
    %v4169 = vadd.f32 %v3201, %v4161
    %v4170 = vadd.f32 %v3202, %v4162
    %v4171 = vadd.f32 %v3203, %v4163
    %v4172 = vadd.f32 %v3204, %v4164
    %v4173 = vadd.f32 %v3205, %v4165
    %v4174 = vrot.slane %v4166, 7
    %v4175 = vrot.slane %v4167, 7
    %v4176 = vrot.slane %v4168, 7
    %v4177 = vrot.slane %v4169, 7
    %v4178 = vrot.slane %v4170, 7
    %v4179 = vrot.slane %v4171, 7
    %v4180 = vrot.slane %v4172, 7
    %v4181 = vrot.slane %v4173, 7
    %v4182 = vsel %vm642, %v4180, %v4181
    %v4183 = vsel %vm642, %v4179, %v4180
    %v4184 = vsel %vm642, %v4178, %v4179
    %v4185 = vsel %vm642, %v4177, %v4178
    %v4186 = vsel %vm642, %v4176, %v4177
    %v4187 = vsel %vm642, %v4175, %v4176
    %v4188 = vsel %vm642, %v4174, %v4175
    %v4189 = vsel %vm642, %v4181, %v4174
    %v4190 = vsel %vm2230, 0.0, %v4189
    %v4191 = vsel %vm2231, 0.0, %v4188
    %v4192 = vsel %vm2232, 0.0, %v4187
    %v4193 = vsel %vm2233, 0.0, %v4186
    %v4194 = vsel %vm2234, 0.0, %v4185
    %v4195 = vsel %vm2235, 0.0, %v4184
    %v4196 = vsel %vm2236, 0.0, %v4183
    %v4197 = vsel %vm2237, 0.0, %v4182
    %v4198 = vrot.slane %v4166, 1
    %v4199 = vrot.slane %v4167, 1
    %v4200 = vrot.slane %v4168, 1
    %v4201 = vrot.slane %v4169, 1
    %v4202 = vrot.slane %v4170, 1
    %v4203 = vrot.slane %v4171, 1
    %v4204 = vrot.slane %v4172, 1
    %v4205 = vrot.slane %v4173, 1
    %v4206 = vsel %vm707, %v4204, %v4205
    %v4207 = vsel %vm707, %v4203, %v4204
    %v4208 = vsel %vm707, %v4202, %v4203
    %v4209 = vsel %vm707, %v4201, %v4202
    %v4210 = vsel %vm707, %v4200, %v4201
    %v4211 = vsel %vm707, %v4199, %v4200
    %v4212 = vsel %vm707, %v4198, %v4199
    %v4213 = vsel %vm707, %v4205, %v4198
    %v4214 = vsel %vm2262, 0.0, %v4212
    %v4215 = vsel %vm2263, 0.0, %v4211
    %v4216 = vsel %vm2264, 0.0, %v4210
    %v4217 = vsel %vm2265, 0.0, %v4209
    %v4218 = vsel %vm2266, 0.0, %v4208
    %v4219 = vsel %vm2267, 0.0, %v4207
    %v4220 = vsel %vm2268, 0.0, %v4206
    %v4221 = vsel %vm2269, 0.0, %v4213
    %v4222 = vpack.c.bf16 %v4191, %v4190
    %v4223 = vpack.c.bf16 %v4193, %v4192
    %v4224 = vpack.c.bf16 %v4195, %v4194
    %v4225 = vpack.c.bf16 %v4197, %v4196
    %v4226 = vld [vmem:[%s27] sm:$0xff]
    %v4227 = vld [vmem:[%s27 + $0x8] sm:$0xff]
    %v4228 = vld [vmem:[%s27 + $0x10] sm:$0xff]
    %v4229 = vld [vmem:[%s27 + $0x18] sm:$0xff]
    %v4230 = vld [vmem:[%s27 + $0x20] sm:$0xff]
    %v4231 = vld [vmem:[%s27 + $0x28] sm:$0xff]
    %v4232 = vld [vmem:[%s27 + $0x30] sm:$0xff]
    %v4233 = vld [vmem:[%s27 + $0x38] sm:$0xff]
    %v4234 = vld [vmem:[%s27 + $0x40] sm:$0xff]
    %v4235 = vld [vmem:[%s27 + $0x48] sm:$0xff]
    %v4236 = vld [vmem:[%s27 + $0x50] sm:$0xff]
    %v4237 = vld [vmem:[%s27 + $0x58] sm:$0xff]
    %v4238 = vld [vmem:[%s27 + $0x60] sm:$0xff]
    %v4239 = vld [vmem:[%s27 + $0x68] sm:$0xff]
    %v4240 = vld [vmem:[%s27 + $0x70] sm:$0xff]
    %v4241 = vld [vmem:[%s27 + $0x78] sm:$0xff]
    %v4242 = vpack.c.bf16 %v4167, %v4166
    %v4243 = vpack.c.bf16 %v4169, %v4168
    %v4244 = vpack.c.bf16 %v4171, %v4170
    %v4245 = vpack.c.bf16 %v4173, %v4172
    %s4246 = scalar_lea.vmem %s27, 128
    %v4247 = vld [vmem:[%s4246] sm:$0xff]
    %v4248 = vld [vmem:[%s4246 + $0x8] sm:$0xff]
    %v4249 = vld [vmem:[%s4246 + $0x10] sm:$0xff]
    %v4250 = vld [vmem:[%s4246 + $0x18] sm:$0xff]
    %v4251 = vld [vmem:[%s4246 + $0x20] sm:$0xff]
    %v4252 = vld [vmem:[%s4246 + $0x28] sm:$0xff]
    %v4253 = vld [vmem:[%s4246 + $0x30] sm:$0xff]
    %v4254 = vld [vmem:[%s4246 + $0x38] sm:$0xff]
    %v4255 = vld [vmem:[%s4246 + $0x40] sm:$0xff]
    %v4256 = vld [vmem:[%s4246 + $0x48] sm:$0xff]
    %v4257 = vld [vmem:[%s4246 + $0x50] sm:$0xff]
    %v4258 = vld [vmem:[%s4246 + $0x58] sm:$0xff]
    %v4259 = vld [vmem:[%s4246 + $0x60] sm:$0xff]
    %v4260 = vld [vmem:[%s4246 + $0x68] sm:$0xff]
    %v4261 = vld [vmem:[%s4246 + $0x70] sm:$0xff]
    %v4262 = vld [vmem:[%s4246 + $0x78] sm:$0xff]
    %v4279 = vunpack.c.l.b16 %v4247
    %v4280 = vunpack.c.h.b16 %v4247
    %v4281 = vunpack.c.l.b16 %v4248
    %v4282 = vunpack.c.h.b16 %v4248
    %v4283 = vunpack.c.l.b16 %v4249
    %v4284 = vunpack.c.h.b16 %v4249
    %v4285 = vunpack.c.l.b16 %v4250
    %v4286 = vunpack.c.h.b16 %v4250
    %v4287 = vunpack.c.l.b16 %v4251
    %v4288 = vunpack.c.h.b16 %v4251
    %v4289 = vunpack.c.l.b16 %v4252
    %v4290 = vunpack.c.h.b16 %v4252
    %v4291 = vunpack.c.l.b16 %v4253
    %v4292 = vunpack.c.h.b16 %v4253
    %v4293 = vunpack.c.l.b16 %v4254
    %v4294 = vunpack.c.h.b16 %v4254
    %v4295 = vunpack.c.l.b16 %v4255
    %v4296 = vunpack.c.h.b16 %v4255
    %v4297 = vunpack.c.l.b16 %v4256
    %v4298 = vunpack.c.h.b16 %v4256
    %v4299 = vunpack.c.l.b16 %v4257
    %v4300 = vunpack.c.h.b16 %v4257
    %v4301 = vunpack.c.l.b16 %v4258
    %v4302 = vunpack.c.h.b16 %v4258
    %v4303 = vunpack.c.l.b16 %v4259
    %v4304 = vunpack.c.h.b16 %v4259
    %v4305 = vunpack.c.l.b16 %v4260
    %v4306 = vunpack.c.h.b16 %v4260
    %v4307 = vunpack.c.l.b16 %v4261
    %v4308 = vunpack.c.h.b16 %v4261
    %v4309 = vunpack.c.l.b16 %v4262
    %v4310 = vunpack.c.h.b16 %v4262
    %v4311 = vpack.c.b16 %v4281, %v4279
    %v4312 = vpack.c.b16 %v4282, %v4280
    %v4313 = vpack.c.b16 %v4285, %v4283
    %v4314 = vpack.c.b16 %v4286, %v4284
    %v4315 = vpack.c.b16 %v4289, %v4287
    %v4316 = vpack.c.b16 %v4290, %v4288
    %v4317 = vpack.c.b16 %v4293, %v4291
    %v4318 = vpack.c.b16 %v4294, %v4292
    %v4319 = vpack.c.b16 %v4297, %v4295
    %v4320 = vpack.c.b16 %v4298, %v4296
    %v4321 = vpack.c.b16 %v4301, %v4299
    %v4322 = vpack.c.b16 %v4302, %v4300
    %v4323 = vpack.c.b16 %v4305, %v4303
    %v4324 = vpack.c.b16 %v4306, %v4304
    %v4325 = vpack.c.b16 %v4309, %v4307
    %v4326 = vpack.c.b16 %v4310, %v4308
    %4343 = vmatprep.subr.bf16.mxu0 %v4326
    %4344 = vmatpush1.bf16.msra.mxu0 %v4325
    %4345 = vmatprep.subr.bf16.mxu0 %v4324
    %4346 = vmatpush1.bf16.msra.mxu0 %v4323
    %4347 = vmatprep.subr.bf16.mxu0 %v4322
    %4348 = vmatpush1.bf16.msra.mxu0 %v4321
    %4349 = vmatprep.subr.bf16.mxu0 %v4320
    %4350 = vmatpush1.bf16.msra.mxu0 %v4319
    %4351 = vmatprep.subr.bf16.mxu0 %v4318
    %4352 = vmatpush1.bf16.msra.mxu0 %v4317
    %4353 = vmatprep.subr.bf16.mxu0 %v4316
    %4354 = vmatpush1.bf16.msra.mxu0 %v4315
    %4355 = vmatprep.subr.bf16.mxu0 %v4314
    %4356 = vmatpush1.bf16.msra.mxu0 %v4313
    %4357 = vmatprep.subr.bf16.mxu0 %v4312
    %4358 = vmatpush1.bf16.msra.mxu0 %v4311
    %4359 = vmatprep.subr.bf16.mxu0 0
    %4360 = vmatpush2.bf16.msra.mxu0 0
    %4361 = vmatprep.subr.bf16.mxu0 0
    %4362 = vmatpush2.bf16.msra.mxu0 0
    %4363 = vmatprep.subr.bf16.mxu0 0
    %4364 = vmatpush2.bf16.msra.mxu0 0
    %4365 = vmatprep.subr.bf16.mxu0 0
    %4366 = vmatpush2.bf16.msra.mxu0 0
    %4367 = vmatprep.subr.bf16.mxu0 0
    %4368 = vmatpush2.bf16.msra.mxu0 0
    %4369 = vmatprep.subr.bf16.mxu0 0
    %4370 = vmatpush2.bf16.msra.mxu0 0
    %4371 = vmatprep.subr.bf16.mxu0 0
    %4372 = vmatpush2.bf16.msra.mxu0 0
    %4373 = vmatprep.subr.bf16.mxu0 0
    %4374 = vmatpush2.bf16.msra.mxu0 0
    %4375 = vmatprep.mubr.bf16.mxu0 0
    %4376 = vmatmul.mubr.bf16.gmra.mxu0 %v4242
    %v4377 = vpop.f32.mrf.mxu0
    %v4378 = vadd.f32 0.0, %v4377
    %v4379 = vpop.f32.mrf.mxu0
    %v4380 = vadd.f32 0.0, %v4379
    %v4381 = vpop.f32.mrf.mxu0
    %v4382 = vadd.f32 0.0, %v4381
    %v4383 = vpop.f32.mrf.mxu0
    %v4384 = vadd.f32 0.0, %v4383
    %4385 = vmatprep.mubr.bf16.mxu0 0
    %4386 = vmatmul.mubr.bf16.gmra.mxu0 %v4243
    %v4387 = vpop.f32.mrf.mxu0
    %v4388 = vadd.f32 0.0, %v4387
    %v4389 = vpop.f32.mrf.mxu0
    %v4390 = vadd.f32 0.0, %v4389
    %v4391 = vpop.f32.mrf.mxu0
    %v4392 = vadd.f32 0.0, %v4391
    %v4393 = vpop.f32.mrf.mxu0
    %v4394 = vadd.f32 0.0, %v4393
    %4395 = vmatprep.mubr.bf16.mxu0 0
    %4396 = vmatmul.mubr.bf16.gmra.mxu0 %v4244
    %v4397 = vpop.f32.mrf.mxu0
    %v4398 = vadd.f32 0.0, %v4397
    %v4399 = vpop.f32.mrf.mxu0
    %v4400 = vadd.f32 0.0, %v4399
    %v4401 = vpop.f32.mrf.mxu0
    %v4402 = vadd.f32 0.0, %v4401
    %v4403 = vpop.f32.mrf.mxu0
    %v4404 = vadd.f32 0.0, %v4403
    %4405 = vmatprep.mubr.bf16.mxu0 0
    %4406 = vmatmul.mubr.bf16.gmra.mxu0 %v4245
    %v4407 = vpop.f32.mrf.mxu0
    %v4408 = vadd.f32 0.0, %v4407
    %v4409 = vpop.f32.mrf.mxu0
    %v4410 = vadd.f32 0.0, %v4409
    %v4411 = vpop.f32.mrf.mxu0
    %v4412 = vadd.f32 0.0, %v4411
    %v4413 = vpop.f32.mrf.mxu0
    %v4414 = vadd.f32 0.0, %v4413
    %4415 = vdwg.mxu0
    %v4432 = vunpack.c.l.b16 %v4226
    %v4433 = vunpack.c.h.b16 %v4226
    %v4434 = vunpack.c.l.b16 %v4227
    %v4435 = vunpack.c.h.b16 %v4227
    %v4436 = vunpack.c.l.b16 %v4228
    %v4437 = vunpack.c.h.b16 %v4228
    %v4438 = vunpack.c.l.b16 %v4229
    %v4439 = vunpack.c.h.b16 %v4229
    %v4440 = vunpack.c.l.b16 %v4230
    %v4441 = vunpack.c.h.b16 %v4230
    %v4442 = vunpack.c.l.b16 %v4231
    %v4443 = vunpack.c.h.b16 %v4231
    %v4444 = vunpack.c.l.b16 %v4232
    %v4445 = vunpack.c.h.b16 %v4232
    %v4446 = vunpack.c.l.b16 %v4233
    %v4447 = vunpack.c.h.b16 %v4233
    %v4448 = vunpack.c.l.b16 %v4234
    %v4449 = vunpack.c.h.b16 %v4234
    %v4450 = vunpack.c.l.b16 %v4235
    %v4451 = vunpack.c.h.b16 %v4235
    %v4452 = vunpack.c.l.b16 %v4236
    %v4453 = vunpack.c.h.b16 %v4236
    %v4454 = vunpack.c.l.b16 %v4237
    %v4455 = vunpack.c.h.b16 %v4237
    %v4456 = vunpack.c.l.b16 %v4238
    %v4457 = vunpack.c.h.b16 %v4238
    %v4458 = vunpack.c.l.b16 %v4239
    %v4459 = vunpack.c.h.b16 %v4239
    %v4460 = vunpack.c.l.b16 %v4240
    %v4461 = vunpack.c.h.b16 %v4240
    %v4462 = vunpack.c.l.b16 %v4241
    %v4463 = vunpack.c.h.b16 %v4241
    %v4464 = vpack.c.b16 %v4434, %v4432
    %v4465 = vpack.c.b16 %v4435, %v4433
    %v4466 = vpack.c.b16 %v4438, %v4436
    %v4467 = vpack.c.b16 %v4439, %v4437
    %v4468 = vpack.c.b16 %v4442, %v4440
    %v4469 = vpack.c.b16 %v4443, %v4441
    %v4470 = vpack.c.b16 %v4446, %v4444
    %v4471 = vpack.c.b16 %v4447, %v4445
    %v4472 = vpack.c.b16 %v4450, %v4448
    %v4473 = vpack.c.b16 %v4451, %v4449
    %v4474 = vpack.c.b16 %v4454, %v4452
    %v4475 = vpack.c.b16 %v4455, %v4453
    %v4476 = vpack.c.b16 %v4458, %v4456
    %v4477 = vpack.c.b16 %v4459, %v4457
    %v4478 = vpack.c.b16 %v4462, %v4460
    %v4479 = vpack.c.b16 %v4463, %v4461
    %4496 = vmatprep.subr.bf16.mxu0 %v4479
    %4497 = vmatpush1.bf16.msra.mxu0 %v4478
    %4498 = vmatprep.subr.bf16.mxu0 %v4477
    %4499 = vmatpush1.bf16.msra.mxu0 %v4476
    %4500 = vmatprep.subr.bf16.mxu0 %v4475
    %4501 = vmatpush1.bf16.msra.mxu0 %v4474
    %4502 = vmatprep.subr.bf16.mxu0 %v4473
    %4503 = vmatpush1.bf16.msra.mxu0 %v4472
    %4504 = vmatprep.subr.bf16.mxu0 %v4471
    %4505 = vmatpush1.bf16.msra.mxu0 %v4470
    %4506 = vmatprep.subr.bf16.mxu0 %v4469
    %4507 = vmatpush1.bf16.msra.mxu0 %v4468
    %4508 = vmatprep.subr.bf16.mxu0 %v4467
    %4509 = vmatpush1.bf16.msra.mxu0 %v4466
    %4510 = vmatprep.subr.bf16.mxu0 %v4465
    %4511 = vmatpush1.bf16.msra.mxu0 %v4464
    %4512 = vmatprep.subr.bf16.mxu0 0
    %4513 = vmatpush2.bf16.msra.mxu0 0
    %4514 = vmatprep.subr.bf16.mxu0 0
    %4515 = vmatpush2.bf16.msra.mxu0 0
    %4516 = vmatprep.subr.bf16.mxu0 0
    %4517 = vmatpush2.bf16.msra.mxu0 0
    %4518 = vmatprep.subr.bf16.mxu0 0
    %4519 = vmatpush2.bf16.msra.mxu0 0
    %4520 = vmatprep.subr.bf16.mxu0 0
    %4521 = vmatpush2.bf16.msra.mxu0 0
    %4522 = vmatprep.subr.bf16.mxu0 0
    %4523 = vmatpush2.bf16.msra.mxu0 0
    %4524 = vmatprep.subr.bf16.mxu0 0
    %4525 = vmatpush2.bf16.msra.mxu0 0
    %4526 = vmatprep.subr.bf16.mxu0 0
    %4527 = vmatpush2.bf16.msra.mxu0 0
    %4528 = vmatprep.mubr.bf16.mxu0 0
    %4529 = vmatmul.mubr.bf16.gmra.mxu0 %v4222
    %v4530 = vpop.f32.mrf.mxu0
    %v4531 = vadd.f32 %v4378, %v4530
    %v4532 = vpop.f32.mrf.mxu0
    %v4533 = vadd.f32 %v4380, %v4532
    %v4534 = vpop.f32.mrf.mxu0
    %v4535 = vadd.f32 %v4382, %v4534
    %v4536 = vpop.f32.mrf.mxu0
    %v4537 = vadd.f32 %v4384, %v4536
    %4538 = vmatprep.mubr.bf16.mxu0 0
    %4539 = vmatmul.mubr.bf16.gmra.mxu0 %v4223
    %v4540 = vpop.f32.mrf.mxu0
    %v4541 = vadd.f32 %v4388, %v4540
    %v4542 = vpop.f32.mrf.mxu0
    %v4543 = vadd.f32 %v4390, %v4542
    %v4544 = vpop.f32.mrf.mxu0
    %v4545 = vadd.f32 %v4392, %v4544
    %v4546 = vpop.f32.mrf.mxu0
    %v4547 = vadd.f32 %v4394, %v4546
    %4548 = vmatprep.mubr.bf16.mxu0 0
    %4549 = vmatmul.mubr.bf16.gmra.mxu0 %v4224
    %v4550 = vpop.f32.mrf.mxu0
    %v4551 = vadd.f32 %v4398, %v4550
    %v4552 = vpop.f32.mrf.mxu0
    %v4553 = vadd.f32 %v4400, %v4552
    %v4554 = vpop.f32.mrf.mxu0
    %v4555 = vadd.f32 %v4402, %v4554
    %v4556 = vpop.f32.mrf.mxu0
    %v4557 = vadd.f32 %v4404, %v4556
    %4558 = vmatprep.mubr.bf16.mxu0 0
    %4559 = vmatmul.mubr.bf16.gmra.mxu0 %v4225
    %v4560 = vpop.f32.mrf.mxu0
    %v4561 = vadd.f32 %v4408, %v4560
    %v4562 = vpop.f32.mrf.mxu0
    %v4563 = vadd.f32 %v4410, %v4562
    %v4564 = vpop.f32.mrf.mxu0
    %v4565 = vadd.f32 %v4412, %v4564
    %v4566 = vpop.f32.mrf.mxu0
    %v4567 = vadd.f32 %v4414, %v4566
    %4568 = vdwg.mxu0
    %v4569 = vpack.c.bf16 %v4215, %v4214
    %v4570 = vpack.c.bf16 %v4217, %v4216
    %v4571 = vpack.c.bf16 %v4219, %v4218
    %v4572 = vpack.c.bf16 %v4221, %v4220
    %s4573 = scalar_lea.vmem %s27, 256
    %v4574 = vld [vmem:[%s4573] sm:$0xff]
    %v4575 = vld [vmem:[%s4573 + $0x8] sm:$0xff]
    %v4576 = vld [vmem:[%s4573 + $0x10] sm:$0xff]
    %v4577 = vld [vmem:[%s4573 + $0x18] sm:$0xff]
    %v4578 = vld [vmem:[%s4573 + $0x20] sm:$0xff]
    %v4579 = vld [vmem:[%s4573 + $0x28] sm:$0xff]
    %v4580 = vld [vmem:[%s4573 + $0x30] sm:$0xff]
    %v4581 = vld [vmem:[%s4573 + $0x38] sm:$0xff]
    %v4582 = vld [vmem:[%s4573 + $0x40] sm:$0xff]
    %v4583 = vld [vmem:[%s4573 + $0x48] sm:$0xff]
    %v4584 = vld [vmem:[%s4573 + $0x50] sm:$0xff]
    %v4585 = vld [vmem:[%s4573 + $0x58] sm:$0xff]
    %v4586 = vld [vmem:[%s4573 + $0x60] sm:$0xff]
    %v4587 = vld [vmem:[%s4573 + $0x68] sm:$0xff]
    %v4588 = vld [vmem:[%s4573 + $0x70] sm:$0xff]
    %v4589 = vld [vmem:[%s4573 + $0x78] sm:$0xff]
    %v4606 = vunpack.c.l.b16 %v4574
    %v4607 = vunpack.c.h.b16 %v4574
    %v4608 = vunpack.c.l.b16 %v4575
    %v4609 = vunpack.c.h.b16 %v4575
    %v4610 = vunpack.c.l.b16 %v4576
    %v4611 = vunpack.c.h.b16 %v4576
    %v4612 = vunpack.c.l.b16 %v4577
    %v4613 = vunpack.c.h.b16 %v4577
    %v4614 = vunpack.c.l.b16 %v4578
    %v4615 = vunpack.c.h.b16 %v4578
    %v4616 = vunpack.c.l.b16 %v4579
    %v4617 = vunpack.c.h.b16 %v4579
    %v4618 = vunpack.c.l.b16 %v4580
    %v4619 = vunpack.c.h.b16 %v4580
    %v4620 = vunpack.c.l.b16 %v4581
    %v4621 = vunpack.c.h.b16 %v4581
    %v4622 = vunpack.c.l.b16 %v4582
    %v4623 = vunpack.c.h.b16 %v4582
    %v4624 = vunpack.c.l.b16 %v4583
    %v4625 = vunpack.c.h.b16 %v4583
    %v4626 = vunpack.c.l.b16 %v4584
    %v4627 = vunpack.c.h.b16 %v4584
    %v4628 = vunpack.c.l.b16 %v4585
    %v4629 = vunpack.c.h.b16 %v4585
    %v4630 = vunpack.c.l.b16 %v4586
    %v4631 = vunpack.c.h.b16 %v4586
    %v4632 = vunpack.c.l.b16 %v4587
    %v4633 = vunpack.c.h.b16 %v4587
    %v4634 = vunpack.c.l.b16 %v4588
    %v4635 = vunpack.c.h.b16 %v4588
    %v4636 = vunpack.c.l.b16 %v4589
    %v4637 = vunpack.c.h.b16 %v4589
    %v4638 = vpack.c.b16 %v4608, %v4606
    %v4639 = vpack.c.b16 %v4609, %v4607
    %v4640 = vpack.c.b16 %v4612, %v4610
    %v4641 = vpack.c.b16 %v4613, %v4611
    %v4642 = vpack.c.b16 %v4616, %v4614
    %v4643 = vpack.c.b16 %v4617, %v4615
    %v4644 = vpack.c.b16 %v4620, %v4618
    %v4645 = vpack.c.b16 %v4621, %v4619
    %v4646 = vpack.c.b16 %v4624, %v4622
    %v4647 = vpack.c.b16 %v4625, %v4623
    %v4648 = vpack.c.b16 %v4628, %v4626
    %v4649 = vpack.c.b16 %v4629, %v4627
    %v4650 = vpack.c.b16 %v4632, %v4630
    %v4651 = vpack.c.b16 %v4633, %v4631
    %v4652 = vpack.c.b16 %v4636, %v4634
    %v4653 = vpack.c.b16 %v4637, %v4635
    %4670 = vmatprep.subr.bf16.mxu0 %v4653
    %4671 = vmatpush1.bf16.msra.mxu0 %v4652
    %4672 = vmatprep.subr.bf16.mxu0 %v4651
    %4673 = vmatpush1.bf16.msra.mxu0 %v4650
    %4674 = vmatprep.subr.bf16.mxu0 %v4649
    %4675 = vmatpush1.bf16.msra.mxu0 %v4648
    %4676 = vmatprep.subr.bf16.mxu0 %v4647
    %4677 = vmatpush1.bf16.msra.mxu0 %v4646
    %4678 = vmatprep.subr.bf16.mxu0 %v4645
    %4679 = vmatpush1.bf16.msra.mxu0 %v4644
    %4680 = vmatprep.subr.bf16.mxu0 %v4643
    %4681 = vmatpush1.bf16.msra.mxu0 %v4642
    %4682 = vmatprep.subr.bf16.mxu0 %v4641
    %4683 = vmatpush1.bf16.msra.mxu0 %v4640
    %4684 = vmatprep.subr.bf16.mxu0 %v4639
    %4685 = vmatpush1.bf16.msra.mxu0 %v4638
    %4686 = vmatprep.subr.bf16.mxu0 0
    %4687 = vmatpush2.bf16.msra.mxu0 0
    %4688 = vmatprep.subr.bf16.mxu0 0
    %4689 = vmatpush2.bf16.msra.mxu0 0
    %4690 = vmatprep.subr.bf16.mxu0 0
    %4691 = vmatpush2.bf16.msra.mxu0 0
    %4692 = vmatprep.subr.bf16.mxu0 0
    %4693 = vmatpush2.bf16.msra.mxu0 0
    %4694 = vmatprep.subr.bf16.mxu0 0
    %4695 = vmatpush2.bf16.msra.mxu0 0
    %4696 = vmatprep.subr.bf16.mxu0 0
    %4697 = vmatpush2.bf16.msra.mxu0 0
    %4698 = vmatprep.subr.bf16.mxu0 0
    %4699 = vmatpush2.bf16.msra.mxu0 0
    %4700 = vmatprep.subr.bf16.mxu0 0
    %4701 = vmatpush2.bf16.msra.mxu0 0
    %4702 = vmatprep.mubr.bf16.mxu0 0
    %4703 = vmatmul.mubr.bf16.gmra.mxu0 %v4569
    %v4704 = vpop.f32.mrf.mxu0
    %v4705 = vadd.f32 0.0, %v4704
    %v4706 = vpop.f32.mrf.mxu0
    %v4707 = vadd.f32 0.0, %v4706
    %v4708 = vpop.f32.mrf.mxu0
    %v4709 = vadd.f32 0.0, %v4708
    %v4710 = vpop.f32.mrf.mxu0
    %v4711 = vadd.f32 0.0, %v4710
    %4712 = vmatprep.mubr.bf16.mxu0 0
    %4713 = vmatmul.mubr.bf16.gmra.mxu0 %v4570
    %v4714 = vpop.f32.mrf.mxu0
    %v4715 = vadd.f32 0.0, %v4714
    %v4716 = vpop.f32.mrf.mxu0
    %v4717 = vadd.f32 0.0, %v4716
    %v4718 = vpop.f32.mrf.mxu0
    %v4719 = vadd.f32 0.0, %v4718
    %v4720 = vpop.f32.mrf.mxu0
    %v4721 = vadd.f32 0.0, %v4720
    %4722 = vmatprep.mubr.bf16.mxu0 0
    %4723 = vmatmul.mubr.bf16.gmra.mxu0 %v4571
    %v4724 = vpop.f32.mrf.mxu0
    %v4725 = vadd.f32 0.0, %v4724
    %v4726 = vpop.f32.mrf.mxu0
    %v4727 = vadd.f32 0.0, %v4726
    %v4728 = vpop.f32.mrf.mxu0
    %v4729 = vadd.f32 0.0, %v4728
    %v4730 = vpop.f32.mrf.mxu0
    %v4731 = vadd.f32 0.0, %v4730
    %4732 = vmatprep.mubr.bf16.mxu0 0
    %4733 = vmatmul.mubr.bf16.gmra.mxu0 %v4572
    %v4734 = vpop.f32.mrf.mxu0
    %v4735 = vadd.f32 0.0, %v4734
    %v4736 = vpop.f32.mrf.mxu0
    %v4737 = vadd.f32 0.0, %v4736
    %v4738 = vpop.f32.mrf.mxu0
    %v4739 = vadd.f32 0.0, %v4738
    %v4740 = vpop.f32.mrf.mxu0
    %v4741 = vadd.f32 0.0, %v4740
    %4742 = vdwg.mxu0
    %v4743 = vadd.f32 %v4531, %v4705
    %v4744 = vadd.f32 %v4533, %v4707
    %v4745 = vadd.f32 %v4535, %v4709
    %v4746 = vadd.f32 %v4537, %v4711
    %v4747 = vadd.f32 %v4541, %v4715
    %v4748 = vadd.f32 %v4543, %v4717
    %v4749 = vadd.f32 %v4545, %v4719
    %v4750 = vadd.f32 %v4547, %v4721
    %v4751 = vadd.f32 %v4551, %v4725
    %v4752 = vadd.f32 %v4553, %v4727
    %v4753 = vadd.f32 %v4555, %v4729
    %v4754 = vadd.f32 %v4557, %v4731
    %v4755 = vadd.f32 %v4561, %v4735
    %v4756 = vadd.f32 %v4563, %v4737
    %v4757 = vadd.f32 %v4565, %v4739
    %v4758 = vadd.f32 %v4567, %v4741
    %v4759 = vld [vmem:[%s29] sm:$0x3]
    %v4761 = vlaneseq
    %v4762 = vshrl.u32 %v4761, 7
    %v4763 = vsub.s32 0, %v4762
    %v4764 = vrot.slane %v4759, %v4763
    %v4765 = vlaneseq
    %v4766 = vshrl.u32 %v4765, 7
    %v4767 = vsub.s32 1, %v4766
    %v4768 = vrot.slane %v4759, %v4767
    %v4771 = vadd.f32 %v4743, %v4764
    %v4772 = vadd.f32 %v4744, %v4768
    %v4773 = vadd.f32 %v4745, %v4764
    %v4774 = vadd.f32 %v4746, %v4768
    %v4775 = vadd.f32 %v4747, %v4764
    %v4776 = vadd.f32 %v4748, %v4768
    %v4777 = vadd.f32 %v4749, %v4764
    %v4778 = vadd.f32 %v4750, %v4768
    %v4779 = vadd.f32 %v4751, %v4764
    %v4780 = vadd.f32 %v4752, %v4768
    %v4781 = vadd.f32 %v4753, %v4764
    %v4782 = vadd.f32 %v4754, %v4768
    %v4783 = vadd.f32 %v4755, %v4764
    %v4784 = vadd.f32 %v4756, %v4768
    %v4785 = vadd.f32 %v4757, %v4764
    %v4786 = vadd.f32 %v4758, %v4768
    %v4787 = vrot.slane %v4771, 7
    %v4788 = vrot.slane %v4772, 7
    %v4789 = vrot.slane %v4773, 7
    %v4790 = vrot.slane %v4774, 7
    %v4791 = vrot.slane %v4775, 7
    %v4792 = vrot.slane %v4776, 7
    %v4793 = vrot.slane %v4777, 7
    %v4794 = vrot.slane %v4778, 7
    %v4795 = vrot.slane %v4779, 7
    %v4796 = vrot.slane %v4780, 7
    %v4797 = vrot.slane %v4781, 7
    %v4798 = vrot.slane %v4782, 7
    %v4799 = vrot.slane %v4783, 7
    %v4800 = vrot.slane %v4784, 7
    %v4801 = vrot.slane %v4785, 7
    %v4802 = vrot.slane %v4786, 7
    %v4803 = vsel %vm642, %v4799, %v4801
    %v4804 = vsel %vm642, %v4800, %v4802
    %v4805 = vsel %vm642, %v4797, %v4799
    %v4806 = vsel %vm642, %v4798, %v4800
    %v4807 = vsel %vm642, %v4795, %v4797
    %v4808 = vsel %vm642, %v4796, %v4798
    %v4809 = vsel %vm642, %v4793, %v4795
    %v4810 = vsel %vm642, %v4794, %v4796
    %v4811 = vsel %vm642, %v4791, %v4793
    %v4812 = vsel %vm642, %v4792, %v4794
    %v4813 = vsel %vm642, %v4789, %v4791
    %v4814 = vsel %vm642, %v4790, %v4792
    %v4815 = vsel %vm642, %v4787, %v4789
    %v4816 = vsel %vm642, %v4788, %v4790
    %v4817 = vsel %vm642, %v4801, %v4787
    %v4818 = vsel %vm642, %v4802, %v4788
    %v4819 = vsel %vm2230, -inf, %v4817
    %v4820 = vsel %vm2230, -inf, %v4818
    %v4821 = vsel %vm2231, -inf, %v4815
    %v4822 = vsel %vm2231, -inf, %v4816
    %v4823 = vsel %vm2232, -inf, %v4813
    %v4824 = vsel %vm2232, -inf, %v4814
    %v4825 = vsel %vm2233, -inf, %v4811
    %v4826 = vsel %vm2233, -inf, %v4812
    %v4827 = vsel %vm2234, -inf, %v4809
    %v4828 = vsel %vm2234, -inf, %v4810
    %v4829 = vsel %vm2235, -inf, %v4807
    %v4830 = vsel %vm2235, -inf, %v4808
    %v4831 = vsel %vm2236, -inf, %v4805
    %v4832 = vsel %vm2236, -inf, %v4806
    %v4833 = vsel %vm2237, -inf, %v4803
    %v4834 = vsel %vm2237, -inf, %v4804
    %v4835 = vrot.slane %v4771, 1
    %v4836 = vrot.slane %v4772, 1
    %v4837 = vrot.slane %v4773, 1
    %v4838 = vrot.slane %v4774, 1
    %v4839 = vrot.slane %v4775, 1
    %v4840 = vrot.slane %v4776, 1
    %v4841 = vrot.slane %v4777, 1
    %v4842 = vrot.slane %v4778, 1
    %v4843 = vrot.slane %v4779, 1
    %v4844 = vrot.slane %v4780, 1
    %v4845 = vrot.slane %v4781, 1
    %v4846 = vrot.slane %v4782, 1
    %v4847 = vrot.slane %v4783, 1
    %v4848 = vrot.slane %v4784, 1
    %v4849 = vrot.slane %v4785, 1
    %v4850 = vrot.slane %v4786, 1
    %v4851 = vsel %vm707, %v4847, %v4849
    %v4852 = vsel %vm707, %v4848, %v4850
    %v4853 = vsel %vm707, %v4845, %v4847
    %v4854 = vsel %vm707, %v4846, %v4848
    %v4855 = vsel %vm707, %v4843, %v4845
    %v4856 = vsel %vm707, %v4844, %v4846
    %v4857 = vsel %vm707, %v4841, %v4843
    %v4858 = vsel %vm707, %v4842, %v4844
    %v4859 = vsel %vm707, %v4839, %v4841
    %v4860 = vsel %vm707, %v4840, %v4842
    %v4861 = vsel %vm707, %v4837, %v4839
    %v4862 = vsel %vm707, %v4838, %v4840
    %v4863 = vsel %vm707, %v4835, %v4837
    %v4864 = vsel %vm707, %v4836, %v4838
    %v4865 = vsel %vm707, %v4849, %v4835
    %v4866 = vsel %vm707, %v4850, %v4836
    %v4867 = vsel %vm2262, -inf, %v4863
    %v4868 = vsel %vm2262, -inf, %v4864
    %v4869 = vsel %vm2263, -inf, %v4861
    %v4870 = vsel %vm2263, -inf, %v4862
    %v4871 = vsel %vm2264, -inf, %v4859
    %v4872 = vsel %vm2264, -inf, %v4860
    %v4873 = vsel %vm2265, -inf, %v4857
    %v4874 = vsel %vm2265, -inf, %v4858
    %v4875 = vsel %vm2266, -inf, %v4855
    %v4876 = vsel %vm2266, -inf, %v4856
    %v4877 = vsel %vm2267, -inf, %v4853
    %v4878 = vsel %vm2267, -inf, %v4854
    %v4879 = vsel %vm2268, -inf, %v4851
    %v4880 = vsel %vm2268, -inf, %v4852
    %v4881 = vsel %vm2269, -inf, %v4865
    %v4882 = vsel %vm2269, -inf, %v4866
    %v4883 = vmax.f32 %v4819, %v4771
    %v4884 = vmax.f32 %v4820, %v4772
    %v4885 = vmax.f32 %v4821, %v4773
    %v4886 = vmax.f32 %v4822, %v4774
    %v4887 = vmax.f32 %v4823, %v4775
    %v4888 = vmax.f32 %v4824, %v4776
    %v4889 = vmax.f32 %v4825, %v4777
    %v4890 = vmax.f32 %v4826, %v4778
    %v4891 = vmax.f32 %v4827, %v4779
    %v4892 = vmax.f32 %v4828, %v4780
    %v4893 = vmax.f32 %v4829, %v4781
    %v4894 = vmax.f32 %v4830, %v4782
    %v4895 = vmax.f32 %v4831, %v4783
    %v4896 = vmax.f32 %v4832, %v4784
    %v4897 = vmax.f32 %v4833, %v4785
    %v4898 = vmax.f32 %v4834, %v4786
    %v4899 = vmax.f32 %v4883, %v4867
    %v4900 = vmax.f32 %v4884, %v4868
    %v4901 = vmax.f32 %v4885, %v4869
    %v4902 = vmax.f32 %v4886, %v4870
    %v4903 = vmax.f32 %v4887, %v4871
    %v4904 = vmax.f32 %v4888, %v4872
    %v4905 = vmax.f32 %v4889, %v4873
    %v4906 = vmax.f32 %v4890, %v4874
    %v4907 = vmax.f32 %v4891, %v4875
    %v4908 = vmax.f32 %v4892, %v4876
    %v4909 = vmax.f32 %v4893, %v4877
    %v4910 = vmax.f32 %v4894, %v4878
    %v4911 = vmax.f32 %v4895, %v4879
    %v4912 = vmax.f32 %v4896, %v4880
    %v4913 = vmax.f32 %v4897, %v4881
    %v4914 = vmax.f32 %v4898, %v4882
    %v4915 = vld [vmem:[%s47] sm:$0xf]
    %v4916 = vld [vmem:[%s47 + $0x4] sm:$0xf]
    %v4917 = vld [vmem:[%s47 + $0x8] sm:$0xf]
    %v4918 = vld [vmem:[%s47 + $0xc] sm:$0xf]
    %v4919 = vpack.c.bf16 %v4901, %v4899
    %v4920 = vpack.c.bf16 %v4902, %v4900
    %v4921 = vpack.c.bf16 %v4905, %v4903
    %v4922 = vpack.c.bf16 %v4906, %v4904
    %v4923 = vpack.c.bf16 %v4909, %v4907
    %v4924 = vpack.c.bf16 %v4910, %v4908
    %v4925 = vpack.c.bf16 %v4913, %v4911
    %v4926 = vpack.c.bf16 %v4914, %v4912
    %v4931 = vunpack.c.l.b16 %v4915
    %v4932 = vunpack.c.l.b16 %v4916
    %v4933 = vunpack.c.l.b16 %v4917
    %v4934 = vunpack.c.l.b16 %v4918
    %v4935 = vpack.c.b16 %v4932, %v4931
    %v4936 = vpack.c.b16 %v4934, %v4933
    %v4938 = vsel %vm813, %v4935, 0
    %v4941 = vsel %vm813, %v4936, 0
    %4943 = vmatprep.subr.bf16.mxu0 0
    %4944 = vmatpush1.bf16.msra.mxu0 0
    %4945 = vmatprep.subr.bf16.mxu0 0
    %4946 = vmatpush1.bf16.msra.mxu0 0
    %4947 = vmatprep.subr.bf16.mxu0 0
    %4948 = vmatpush1.bf16.msra.mxu0 0
    %4949 = vmatprep.subr.bf16.mxu0 0
    %4950 = vmatpush1.bf16.msra.mxu0 0
    %4951 = vmatprep.subr.bf16.mxu0 %v4926
    %4952 = vmatpush1.bf16.msra.mxu0 %v4925
    %4953 = vmatprep.subr.bf16.mxu0 %v4924
    %4954 = vmatpush1.bf16.msra.mxu0 %v4923
    %4955 = vmatprep.subr.bf16.mxu0 %v4922
    %4956 = vmatpush1.bf16.msra.mxu0 %v4921
    %4957 = vmatprep.subr.bf16.mxu0 %v4920
    %4958 = vmatpush1.bf16.msra.mxu0 %v4919
    %4959 = vmatprep.subr.bf16.mxu0 0
    %4960 = vmatpush2.bf16.msra.mxu0 0
    %4961 = vmatprep.subr.bf16.mxu0 0
    %4962 = vmatpush2.bf16.msra.mxu0 0
    %4963 = vmatprep.subr.bf16.mxu0 0
    %4964 = vmatpush2.bf16.msra.mxu0 0
    %4965 = vmatprep.subr.bf16.mxu0 0
    %4966 = vmatpush2.bf16.msra.mxu0 0
    %4967 = vmatprep.subr.bf16.mxu0 0
    %4968 = vmatpush2.bf16.msra.mxu0 0
    %4969 = vmatprep.subr.bf16.mxu0 0
    %4970 = vmatpush2.bf16.msra.mxu0 0
    %4971 = vmatprep.subr.bf16.mxu0 0
    %4972 = vmatpush2.bf16.msra.mxu0 0
    %4973 = vmatprep.subr.bf16.mxu0 0
    %4974 = vmatpush2.bf16.msra.mxu0 0
    %4975 = vmatprep.mubr.bf16.mxu0 0
    %4976 = vmatmul.mubr.bf16.gmra.mxu0 %v4938
    %v4977 = vpop.f32.mrf.mxu0
    %v4978 = vadd.f32 0.0, %v4977
    %v4979 = vpop.f32.mrf.mxu0
    %v4980 = vadd.f32 0.0, %v4979
    %v4981 = vpop.f32.mrf.mxu0
    %v4982 = vadd.f32 0.0, %v4981
    %v4983 = vpop.f32.mrf.mxu0
    %v4984 = vadd.f32 0.0, %v4983
    %4985 = vmatprep.mubr.bf16.mxu0 0
    %4986 = vmatmul.mubr.bf16.gmra.mxu0 %v4941
    %v4987 = vpop.f32.mrf.mxu0
    %v4988 = vadd.f32 0.0, %v4987
    %v4989 = vpop.f32.mrf.mxu0
    %v4990 = vadd.f32 0.0, %v4989
    %v4991 = vpop.f32.mrf.mxu0
    %v4992 = vadd.f32 0.0, %v4991
    %v4993 = vpop.f32.mrf.mxu0
    %v4994 = vadd.f32 0.0, %v4993
    %4995 = vdwg.mxu0
    %vm4996 = vcmp.lt.s32.totalorder %v1776, 32
    %vm4997 = vcmp.lt.s32.totalorder %v1777, 32
    %4998 = vrot.lane.b32.xlu0 %v4978, 32
    %v4999 = vpop.permute.xlu0 %4998
    %5000 = vrot.lane.b32.xlu0 %v4982, 32
    %v5001 = vpop.permute.xlu0 %5000
    %5002 = vrot.lane.b32.xlu0 %v4988, 32
    %v5003 = vpop.permute.xlu0 %5002
    %5004 = vrot.lane.b32.xlu0 %v4992, 32
    %v5005 = vpop.permute.xlu0 %5004
    %5006 = vrot.lane.b32.xlu0 %v4980, 32
    %v5007 = vpop.permute.xlu0 %5006
    %5008 = vrot.lane.b32.xlu0 %v4984, 32
    %v5009 = vpop.permute.xlu0 %5008
    %5010 = vrot.lane.b32.xlu0 %v4990, 32
    %v5011 = vpop.permute.xlu0 %5010
    %5012 = vrot.lane.b32.xlu0 %v4994, 32
    %v5013 = vpop.permute.xlu0 %5012
    %v5014 = vsel %vm4996, %v4999, %v5007
    %v5015 = vsel %vm4996, %v5001, %v5009
    %v5016 = vsel %vm4996, %v5003, %v5011
    %v5017 = vsel %vm4996, %v5005, %v5013
    %v5018 = vsel %vm4996, %v5007, %v4999
    %v5019 = vsel %vm4996, %v5009, %v5001
    %v5020 = vsel %vm4996, %v5011, %v5003
    %v5021 = vsel %vm4996, %v5013, %v5005
    %v5022 = vsel %vm4996, -inf, %v5018
    %v5023 = vsel %vm4997, -inf, %v5014
    %v5024 = vsel %vm4996, -inf, %v5019
    %v5025 = vsel %vm4997, -inf, %v5015
    %v5026 = vsel %vm4996, -inf, %v5020
    %v5027 = vsel %vm4997, -inf, %v5016
    %v5028 = vsel %vm4996, -inf, %v5021
    %v5029 = vsel %vm4997, -inf, %v5017
    %5030 = vrot.lane.b32.xlu0 %v4978, 96
    %v5031 = vpop.permute.xlu0 %5030
    %5032 = vrot.lane.b32.xlu0 %v4982, 96
    %v5033 = vpop.permute.xlu0 %5032
    %5034 = vrot.lane.b32.xlu0 %v4988, 96
    %v5035 = vpop.permute.xlu0 %5034
    %5036 = vrot.lane.b32.xlu0 %v4992, 96
    %v5037 = vpop.permute.xlu0 %5036
    %5038 = vrot.lane.b32.xlu0 %v4980, 96
    %v5039 = vpop.permute.xlu0 %5038
    %5040 = vrot.lane.b32.xlu0 %v4984, 96
    %v5041 = vpop.permute.xlu0 %5040
    %5042 = vrot.lane.b32.xlu0 %v4990, 96
    %v5043 = vpop.permute.xlu0 %5042
    %5044 = vrot.lane.b32.xlu0 %v4994, 96
    %v5045 = vpop.permute.xlu0 %5044
    %vm5046 = vcmp.lt.s32.totalorder %v1776, 96
    %v5047 = vsel %vm5046, %v5031, %v5039
    %v5048 = vsel %vm5046, %v5033, %v5041
    %v5049 = vsel %vm5046, %v5035, %v5043
    %v5050 = vsel %vm5046, %v5037, %v5045
    %v5051 = vsel %vm5046, %v5039, %v5031
    %v5052 = vsel %vm5046, %v5041, %v5033
    %v5053 = vsel %vm5046, %v5043, %v5035
    %v5054 = vsel %vm5046, %v5045, %v5037
    %v5055 = vmax.f32 %v5022, %v4978
    %v5056 = vmax.f32 %v5023, %v4980
    %v5057 = vmax.f32 %v5024, %v4982
    %v5058 = vmax.f32 %v5025, %v4984
    %v5059 = vmax.f32 %v5026, %v4988
    %v5060 = vmax.f32 %v5027, %v4990
    %v5061 = vmax.f32 %v5028, %v4992
    %v5062 = vmax.f32 %v5029, %v4994
    %v5063 = vmax.f32 %v5055, %v5047
    %v5064 = vmax.f32 %v5056, %v5051
    %v5065 = vmax.f32 %v5057, %v5048
    %v5066 = vmax.f32 %v5058, %v5052
    %v5067 = vmax.f32 %v5059, %v5049
    %v5068 = vmax.f32 %v5060, %v5053
    %v5069 = vmax.f32 %v5061, %v5050
    %v5070 = vmax.f32 %v5062, %v5054
    %v5071 = vpack.c.bf16 %v5065, %v5063
    %v5072 = vpack.c.bf16 %v5066, %v5064
    %v5073 = vpack.c.bf16 %v5069, %v5067
    %v5074 = vpack.c.bf16 %v5070, %v5068
    %v5075 = vld [vmem:[%s49] sm:$0xf]
    %v5076 = vld [vmem:[%s49 + $0x4] sm:$0xf]
    %v5077 = vld [vmem:[%s49 + $0x8] sm:$0xf]
    %v5078 = vld [vmem:[%s49 + $0xc] sm:$0xf]
    %v5079 = vld [vmem:[%s49 + $0x10] sm:$0xf]
    %v5080 = vld [vmem:[%s49 + $0x14] sm:$0xf]
    %v5081 = vld [vmem:[%s49 + $0x18] sm:$0xf]
    %v5082 = vld [vmem:[%s49 + $0x1c] sm:$0xf]
    %v5083 = vld [vmem:[%s49 + $0x20] sm:$0xf]
    %v5084 = vld [vmem:[%s49 + $0x24] sm:$0xf]
    %v5085 = vld [vmem:[%s49 + $0x28] sm:$0xf]
    %v5086 = vld [vmem:[%s49 + $0x2c] sm:$0xf]
    %v5087 = vld [vmem:[%s49 + $0x30] sm:$0xf]
    %v5088 = vld [vmem:[%s49 + $0x34] sm:$0xf]
    %v5089 = vld [vmem:[%s49 + $0x38] sm:$0xf]
    %v5090 = vld [vmem:[%s49 + $0x3c] sm:$0xf]
    %v5091 = vld [vmem:[%s49 + $0x40] sm:$0xf]
    %v5092 = vld [vmem:[%s49 + $0x44] sm:$0xf]
    %v5093 = vld [vmem:[%s49 + $0x48] sm:$0xf]
    %v5094 = vld [vmem:[%s49 + $0x4c] sm:$0xf]
    %v5095 = vld [vmem:[%s49 + $0x50] sm:$0xf]
    %v5096 = vld [vmem:[%s49 + $0x54] sm:$0xf]
    %v5097 = vld [vmem:[%s49 + $0x58] sm:$0xf]
    %v5098 = vld [vmem:[%s49 + $0x5c] sm:$0xf]
    %v5099 = vld [vmem:[%s49 + $0x60] sm:$0xf]
    %v5100 = vld [vmem:[%s49 + $0x64] sm:$0xf]
    %v5101 = vld [vmem:[%s49 + $0x68] sm:$0xf]
    %v5102 = vld [vmem:[%s49 + $0x6c] sm:$0xf]
    %v5103 = vld [vmem:[%s49 + $0x70] sm:$0xf]
    %v5104 = vld [vmem:[%s49 + $0x74] sm:$0xf]
    %v5105 = vld [vmem:[%s49 + $0x78] sm:$0xf]
    %v5106 = vld [vmem:[%s49 + $0x7c] sm:$0xf]
    %v5139 = vunpack.c.l.b16 %v5075
    %v5140 = vunpack.c.l.b16 %v5076
    %v5141 = vunpack.c.l.b16 %v5077
    %v5142 = vunpack.c.l.b16 %v5078
    %v5143 = vunpack.c.l.b16 %v5079
    %v5144 = vunpack.c.l.b16 %v5080
    %v5145 = vunpack.c.l.b16 %v5081
    %v5146 = vunpack.c.l.b16 %v5082
    %v5147 = vunpack.c.l.b16 %v5083
    %v5148 = vunpack.c.l.b16 %v5084
    %v5149 = vunpack.c.l.b16 %v5085
    %v5150 = vunpack.c.l.b16 %v5086
    %v5151 = vunpack.c.l.b16 %v5087
    %v5152 = vunpack.c.l.b16 %v5088
    %v5153 = vunpack.c.l.b16 %v5089
    %v5154 = vunpack.c.l.b16 %v5090
    %v5155 = vunpack.c.l.b16 %v5091
    %v5156 = vunpack.c.l.b16 %v5092
    %v5157 = vunpack.c.l.b16 %v5093
    %v5158 = vunpack.c.l.b16 %v5094
    %v5159 = vunpack.c.l.b16 %v5095
    %v5160 = vunpack.c.l.b16 %v5096
    %v5161 = vunpack.c.l.b16 %v5097
    %v5162 = vunpack.c.l.b16 %v5098
    %v5163 = vunpack.c.l.b16 %v5099
    %v5164 = vunpack.c.l.b16 %v5100
    %v5165 = vunpack.c.l.b16 %v5101
    %v5166 = vunpack.c.l.b16 %v5102
    %v5167 = vunpack.c.l.b16 %v5103
    %v5168 = vunpack.c.l.b16 %v5104
    %v5169 = vunpack.c.l.b16 %v5105
    %v5170 = vunpack.c.l.b16 %v5106
    %v5171 = vpack.c.b16 %v5140, %v5139
    %v5172 = vpack.c.b16 %v5142, %v5141
    %v5173 = vpack.c.b16 %v5144, %v5143
    %v5174 = vpack.c.b16 %v5146, %v5145
    %v5175 = vpack.c.b16 %v5148, %v5147
    %v5176 = vpack.c.b16 %v5150, %v5149
    %v5177 = vpack.c.b16 %v5152, %v5151
    %v5178 = vpack.c.b16 %v5154, %v5153
    %v5179 = vpack.c.b16 %v5156, %v5155
    %v5180 = vpack.c.b16 %v5158, %v5157
    %v5181 = vpack.c.b16 %v5160, %v5159
    %v5182 = vpack.c.b16 %v5162, %v5161
    %v5183 = vpack.c.b16 %v5164, %v5163
    %v5184 = vpack.c.b16 %v5166, %v5165
    %v5185 = vpack.c.b16 %v5168, %v5167
    %v5186 = vpack.c.b16 %v5170, %v5169
    %5203 = vmatprep.subr.bf16.mxu0 0
    %5204 = vmatpush1.bf16.msra.mxu0 %v5178
    %5205 = vmatprep.subr.bf16.mxu0 0
    %5206 = vmatpush1.bf16.msra.mxu0 %v5177
    %5207 = vmatprep.subr.bf16.mxu0 0
    %5208 = vmatpush1.bf16.msra.mxu0 %v5176
    %5209 = vmatprep.subr.bf16.mxu0 0
    %5210 = vmatpush1.bf16.msra.mxu0 %v5175
    %5211 = vmatprep.subr.bf16.mxu0 0
    %5212 = vmatpush1.bf16.msra.mxu0 %v5174
    %5213 = vmatprep.subr.bf16.mxu0 0
    %5214 = vmatpush1.bf16.msra.mxu0 %v5173
    %5215 = vmatprep.subr.bf16.mxu0 0
    %5216 = vmatpush1.bf16.msra.mxu0 %v5172
    %5217 = vmatprep.subr.bf16.mxu0 0
    %5218 = vmatpush1.bf16.msra.mxu0 %v5171
    %5219 = vmatprep.subr.bf16.mxu0 0
    %5220 = vmatpush2.bf16.msra.mxu0 %v5186
    %5221 = vmatprep.subr.bf16.mxu0 0
    %5222 = vmatpush2.bf16.msra.mxu0 %v5185
    %5223 = vmatprep.subr.bf16.mxu0 0
    %5224 = vmatpush2.bf16.msra.mxu0 %v5184
    %5225 = vmatprep.subr.bf16.mxu0 0
    %5226 = vmatpush2.bf16.msra.mxu0 %v5183
    %5227 = vmatprep.subr.bf16.mxu0 0
    %5228 = vmatpush2.bf16.msra.mxu0 %v5182
    %5229 = vmatprep.subr.bf16.mxu0 0
    %5230 = vmatpush2.bf16.msra.mxu0 %v5181
    %5231 = vmatprep.subr.bf16.mxu0 0
    %5232 = vmatpush2.bf16.msra.mxu0 %v5180
    %5233 = vmatprep.subr.bf16.mxu0 0
    %5234 = vmatpush2.bf16.msra.mxu0 %v5179
    %5235 = vmatprep.mubr.bf16.mxu0 %v5072
    %5236 = vmatmul.mubr.bf16.gmra.mxu0 %v5071
    %v5237 = vpop.f32.mrf.mxu0
    %v5238 = vadd.f32 0.0, %v5237
    %v5239 = vpop.f32.mrf.mxu0
    %v5240 = vpop.f32.mrf.mxu0
    %v5241 = vadd.f32 0.0, %v5240
    %v5242 = vpop.f32.mrf.mxu0
    %5243 = vmatprep.mubr.bf16.mxu0 %v5074
    %5244 = vmatmul.mubr.bf16.gmra.mxu0 %v5073
    %v5245 = vpop.f32.mrf.mxu0
    %v5246 = vadd.f32 0.0, %v5245
    %v5247 = vpop.f32.mrf.mxu0
    %v5248 = vpop.f32.mrf.mxu0
    %v5249 = vadd.f32 0.0, %v5248
    %v5250 = vpop.f32.mrf.mxu0
    %5251 = vdwg.mxu0
    %v5252 = vmax.f32 %v5238, 0.0
    %v5253 = vmax.f32 %v5241, 0.0
    %v5254 = vmax.f32 %v5246, 0.0
    %v5255 = vmax.f32 %v5249, 0.0
    %vm5256 = vcmp.lt.s32.totalorder %v402, 0
    %v5257 = vsub.s32 0, %v402
    %v5258 = vsel %vm5256, %v5257, %v402
    %v5259 = vshrl.u32 %v5258, 2
    %v5260 = vand.u32 %v5258, 3
    %v5261 = vsub.s32 0, %v5260
    %v5262 = vsel %vm5256, %v5261, %v5260
    %vm5263 = vcmp.lt.s32.totalorder %v403, 0
    %v5264 = vsub.s32 0, %v403
    %v5265 = vsel %vm5263, %v5264, %v403
    %v5266 = vshrl.u32 %v5265, 2
    %v5267 = vand.u32 %v5265, 3
    %v5268 = vsub.s32 0, %v5267
    %v5269 = vsel %vm5263, %v5268, %v5267
    %vm5270 = vcmp.lt.s32.totalorder %v404, 0
    %v5271 = vsub.s32 0, %v404
    %v5272 = vsel %vm5270, %v5271, %v404
    %v5273 = vshrl.u32 %v5272, 2
    %v5274 = vand.u32 %v5272, 3
    %v5275 = vsub.s32 0, %v5274
    %v5276 = vsel %vm5270, %v5275, %v5274
    %vm5277 = vcmp.lt.s32.totalorder %v405, 0
    %v5278 = vsub.s32 0, %v405
    %v5279 = vsel %vm5277, %v5278, %v405
    %v5280 = vshrl.u32 %v5279, 2
    %v5281 = vand.u32 %v5279, 3
    %v5282 = vsub.s32 0, %v5281
    %v5283 = vsel %vm5277, %v5282, %v5281
    %vm5284 = vcmp.ne.s32.totalorder %v5262, 0
    %vm5285 = vcmp.ne.s32.totalorder %v5269, 0
    %vm5286 = vcmp.ne.s32.totalorder %v5276, 0
    %vm5287 = vcmp.ne.s32.totalorder %v5283, 0
    %vm5288 = vcmp.lt.s32.totalorder %v5262, 0
    %vm5289 = vcmp.lt.s32.totalorder %v5269, 0
    %vm5290 = vcmp.lt.s32.totalorder %v5276, 0
    %vm5291 = vcmp.lt.s32.totalorder %v5283, 0
    %vm5292 = vmand %vm5288, %vm5284
    %vm5293 = vmand %vm5289, %vm5285
    %vm5294 = vmand %vm5290, %vm5286
    %vm5295 = vmand %vm5291, %vm5287
    %v5296 = vadd.s32 %v5262, 4
    %v5297 = vadd.s32 %v5269, 4
    %v5298 = vadd.s32 %v5276, 4
    %v5299 = vadd.s32 %v5283, 4
    %v5300 = vsel %vm5292, %v5296, %v5262
    %v5301 = vsel %vm5293, %v5297, %v5269
    %v5302 = vsel %vm5294, %v5298, %v5276
    %v5303 = vsel %vm5295, %v5299, %v5283
    %vm5304 = vcmp.eq.s32.totalorder %v5300, 0
    %vm5305 = vcmp.eq.s32.totalorder %v5301, 0
    %vm5306 = vcmp.eq.s32.totalorder %v5302, 0
    %vm5307 = vcmp.eq.s32.totalorder %v5303, 0
    %v5308 = vrot.slane %v5252, 7
    %v5309 = vrot.slane %v5253, 7
    %v5310 = vrot.slane %v5254, 7
    %v5311 = vrot.slane %v5255, 7
    %v5312 = vsel %vm642, %v5310, %v5311
    %v5313 = vsel %vm642, %v5309, %v5310
    %v5314 = vsel %vm642, %v5308, %v5309
    %v5315 = vsel %vm642, %v5311, %v5308
    %v5316 = vsel %vm5304, 0.0, %v5315
    %v5317 = vsel %vm5305, 0.0, %v5314
    %v5318 = vsel %vm5306, 0.0, %v5313
    %v5319 = vsel %vm5307, 0.0, %v5312
    %vm5320 = vcmp.eq.s32.totalorder %v5300, 3
    %vm5321 = vcmp.eq.s32.totalorder %v5301, 3
    %vm5322 = vcmp.eq.s32.totalorder %v5302, 3
    %vm5323 = vcmp.eq.s32.totalorder %v5303, 3
    %v5324 = vrot.slane %v5252, 1
    %v5325 = vrot.slane %v5253, 1
    %v5326 = vrot.slane %v5254, 1
    %v5327 = vrot.slane %v5255, 1
    %v5328 = vsel %vm707, %v5326, %v5327
    %v5329 = vsel %vm707, %v5325, %v5326
    %v5330 = vsel %vm707, %v5324, %v5325
    %v5331 = vsel %vm707, %v5327, %v5324
    %v5332 = vsel %vm5320, 0.0, %v5330
    %v5333 = vsel %vm5321, 0.0, %v5329
    %v5334 = vsel %vm5322, 0.0, %v5328
    %v5335 = vsel %vm5323, 0.0, %v5331
    %v5336 = vpack.c.bf16 %v5317, %v5316
    %v5337 = vpack.c.bf16 %v5319, %v5318
    %v5338 = vld [vmem:[%s31] sm:$0xf]
    %v5339 = vld [vmem:[%s31 + $0x4] sm:$0xf]
    %v5340 = vld [vmem:[%s31 + $0x8] sm:$0xf]
    %v5341 = vld [vmem:[%s31 + $0xc] sm:$0xf]
    %v5342 = vld [vmem:[%s31 + $0x10] sm:$0xf]
    %v5343 = vld [vmem:[%s31 + $0x14] sm:$0xf]
    %v5344 = vld [vmem:[%s31 + $0x18] sm:$0xf]
    %v5345 = vld [vmem:[%s31 + $0x1c] sm:$0xf]
    %v5346 = vld [vmem:[%s31 + $0x20] sm:$0xf]
    %v5347 = vld [vmem:[%s31 + $0x24] sm:$0xf]
    %v5348 = vld [vmem:[%s31 + $0x28] sm:$0xf]
    %v5349 = vld [vmem:[%s31 + $0x2c] sm:$0xf]
    %v5350 = vld [vmem:[%s31 + $0x30] sm:$0xf]
    %v5351 = vld [vmem:[%s31 + $0x34] sm:$0xf]
    %v5352 = vld [vmem:[%s31 + $0x38] sm:$0xf]
    %v5353 = vld [vmem:[%s31 + $0x3c] sm:$0xf]
    %v5354 = vpack.c.bf16 %v5253, %v5252
    %v5355 = vpack.c.bf16 %v5255, %v5254
    %s5356 = scalar_lea.vmem %s31, 64
    %v5357 = vld [vmem:[%s5356] sm:$0xf]
    %v5358 = vld [vmem:[%s5356 + $0x4] sm:$0xf]
    %v5359 = vld [vmem:[%s5356 + $0x8] sm:$0xf]
    %v5360 = vld [vmem:[%s5356 + $0xc] sm:$0xf]
    %v5361 = vld [vmem:[%s5356 + $0x10] sm:$0xf]
    %v5362 = vld [vmem:[%s5356 + $0x14] sm:$0xf]
    %v5363 = vld [vmem:[%s5356 + $0x18] sm:$0xf]
    %v5364 = vld [vmem:[%s5356 + $0x1c] sm:$0xf]
    %v5365 = vld [vmem:[%s5356 + $0x20] sm:$0xf]
    %v5366 = vld [vmem:[%s5356 + $0x24] sm:$0xf]
    %v5367 = vld [vmem:[%s5356 + $0x28] sm:$0xf]
    %v5368 = vld [vmem:[%s5356 + $0x2c] sm:$0xf]
    %v5369 = vld [vmem:[%s5356 + $0x30] sm:$0xf]
    %v5370 = vld [vmem:[%s5356 + $0x34] sm:$0xf]
    %v5371 = vld [vmem:[%s5356 + $0x38] sm:$0xf]
    %v5372 = vld [vmem:[%s5356 + $0x3c] sm:$0xf]
    %v5389 = vunpack.c.l.b16 %v5357
    %v5390 = vunpack.c.l.b16 %v5358
    %v5391 = vunpack.c.l.b16 %v5359
    %v5392 = vunpack.c.l.b16 %v5360
    %v5393 = vunpack.c.l.b16 %v5361
    %v5394 = vunpack.c.l.b16 %v5362
    %v5395 = vunpack.c.l.b16 %v5363
    %v5396 = vunpack.c.l.b16 %v5364
    %v5397 = vunpack.c.l.b16 %v5365
    %v5398 = vunpack.c.l.b16 %v5366
    %v5399 = vunpack.c.l.b16 %v5367
    %v5400 = vunpack.c.l.b16 %v5368
    %v5401 = vunpack.c.l.b16 %v5369
    %v5402 = vunpack.c.l.b16 %v5370
    %v5403 = vunpack.c.l.b16 %v5371
    %v5404 = vunpack.c.l.b16 %v5372
    %v5405 = vpack.c.b16 %v5390, %v5389
    %v5406 = vpack.c.b16 %v5392, %v5391
    %v5407 = vpack.c.b16 %v5394, %v5393
    %v5408 = vpack.c.b16 %v5396, %v5395
    %v5409 = vpack.c.b16 %v5398, %v5397
    %v5410 = vpack.c.b16 %v5400, %v5399
    %v5411 = vpack.c.b16 %v5402, %v5401
    %v5412 = vpack.c.b16 %v5404, %v5403
    %5421 = vmatprep.subr.bf16.mxu0 0
    %5422 = vmatpush1.bf16.msra.mxu0 %v5412
    %5423 = vmatprep.subr.bf16.mxu0 0
    %5424 = vmatpush1.bf16.msra.mxu0 %v5411
    %5425 = vmatprep.subr.bf16.mxu0 0
    %5426 = vmatpush1.bf16.msra.mxu0 %v5410
    %5427 = vmatprep.subr.bf16.mxu0 0
    %5428 = vmatpush1.bf16.msra.mxu0 %v5409
    %5429 = vmatprep.subr.bf16.mxu0 0
    %5430 = vmatpush1.bf16.msra.mxu0 %v5408
    %5431 = vmatprep.subr.bf16.mxu0 0
    %5432 = vmatpush1.bf16.msra.mxu0 %v5407
    %5433 = vmatprep.subr.bf16.mxu0 0
    %5434 = vmatpush1.bf16.msra.mxu0 %v5406
    %5435 = vmatprep.subr.bf16.mxu0 0
    %5436 = vmatpush1.bf16.msra.mxu0 %v5405
    %5437 = vmatprep.subr.bf16.mxu0 0
    %5438 = vmatpush2.bf16.msra.mxu0 0
    %5439 = vmatprep.subr.bf16.mxu0 0
    %5440 = vmatpush2.bf16.msra.mxu0 0
    %5441 = vmatprep.subr.bf16.mxu0 0
    %5442 = vmatpush2.bf16.msra.mxu0 0
    %5443 = vmatprep.subr.bf16.mxu0 0
    %5444 = vmatpush2.bf16.msra.mxu0 0
    %5445 = vmatprep.subr.bf16.mxu0 0
    %5446 = vmatpush2.bf16.msra.mxu0 0
    %5447 = vmatprep.subr.bf16.mxu0 0
    %5448 = vmatpush2.bf16.msra.mxu0 0
    %5449 = vmatprep.subr.bf16.mxu0 0
    %5450 = vmatpush2.bf16.msra.mxu0 0
    %5451 = vmatprep.subr.bf16.mxu0 0
    %5452 = vmatpush2.bf16.msra.mxu0 0
    %5453 = vmatprep.mubr.bf16.mxu0 0
    %5454 = vmatmul.mubr.bf16.gmra.mxu0 %v5354
    %v5455 = vpop.f32.mrf.mxu0
    %v5456 = vadd.f32 0.0, %v5455
    %v5457 = vpop.f32.mrf.mxu0
    %v5458 = vpop.f32.mrf.mxu0
    %v5459 = vadd.f32 0.0, %v5458
    %v5460 = vpop.f32.mrf.mxu0
    %5461 = vmatprep.mubr.bf16.mxu0 0
    %5462 = vmatmul.mubr.bf16.gmra.mxu0 %v5355
    %v5463 = vpop.f32.mrf.mxu0
    %v5464 = vadd.f32 0.0, %v5463
    %v5465 = vpop.f32.mrf.mxu0
    %v5466 = vpop.f32.mrf.mxu0
    %v5467 = vadd.f32 0.0, %v5466
    %v5468 = vpop.f32.mrf.mxu0
    %5469 = vdwg.mxu0
    %v5486 = vunpack.c.l.b16 %v5338
    %v5487 = vunpack.c.l.b16 %v5339
    %v5488 = vunpack.c.l.b16 %v5340
    %v5489 = vunpack.c.l.b16 %v5341
    %v5490 = vunpack.c.l.b16 %v5342
    %v5491 = vunpack.c.l.b16 %v5343
    %v5492 = vunpack.c.l.b16 %v5344
    %v5493 = vunpack.c.l.b16 %v5345
    %v5494 = vunpack.c.l.b16 %v5346
    %v5495 = vunpack.c.l.b16 %v5347
    %v5496 = vunpack.c.l.b16 %v5348
    %v5497 = vunpack.c.l.b16 %v5349
    %v5498 = vunpack.c.l.b16 %v5350
    %v5499 = vunpack.c.l.b16 %v5351
    %v5500 = vunpack.c.l.b16 %v5352
    %v5501 = vunpack.c.l.b16 %v5353
    %v5502 = vpack.c.b16 %v5487, %v5486
    %v5503 = vpack.c.b16 %v5489, %v5488
    %v5504 = vpack.c.b16 %v5491, %v5490
    %v5505 = vpack.c.b16 %v5493, %v5492
    %v5506 = vpack.c.b16 %v5495, %v5494
    %v5507 = vpack.c.b16 %v5497, %v5496
    %v5508 = vpack.c.b16 %v5499, %v5498
    %v5509 = vpack.c.b16 %v5501, %v5500
    %5518 = vmatprep.subr.bf16.mxu0 0
    %5519 = vmatpush1.bf16.msra.mxu0 %v5509
    %5520 = vmatprep.subr.bf16.mxu0 0
    %5521 = vmatpush1.bf16.msra.mxu0 %v5508
    %5522 = vmatprep.subr.bf16.mxu0 0
    %5523 = vmatpush1.bf16.msra.mxu0 %v5507
    %5524 = vmatprep.subr.bf16.mxu0 0
    %5525 = vmatpush1.bf16.msra.mxu0 %v5506
    %5526 = vmatprep.subr.bf16.mxu0 0
    %5527 = vmatpush1.bf16.msra.mxu0 %v5505
    %5528 = vmatprep.subr.bf16.mxu0 0
    %5529 = vmatpush1.bf16.msra.mxu0 %v5504
    %5530 = vmatprep.subr.bf16.mxu0 0
    %5531 = vmatpush1.bf16.msra.mxu0 %v5503
    %5532 = vmatprep.subr.bf16.mxu0 0
    %5533 = vmatpush1.bf16.msra.mxu0 %v5502
    %5534 = vmatprep.subr.bf16.mxu0 0
    %5535 = vmatpush2.bf16.msra.mxu0 0
    %5536 = vmatprep.subr.bf16.mxu0 0
    %5537 = vmatpush2.bf16.msra.mxu0 0
    %5538 = vmatprep.subr.bf16.mxu0 0
    %5539 = vmatpush2.bf16.msra.mxu0 0
    %5540 = vmatprep.subr.bf16.mxu0 0
    %5541 = vmatpush2.bf16.msra.mxu0 0
    %5542 = vmatprep.subr.bf16.mxu0 0
    %5543 = vmatpush2.bf16.msra.mxu0 0
    %5544 = vmatprep.subr.bf16.mxu0 0
    %5545 = vmatpush2.bf16.msra.mxu0 0
    %5546 = vmatprep.subr.bf16.mxu0 0
    %5547 = vmatpush2.bf16.msra.mxu0 0
    %5548 = vmatprep.subr.bf16.mxu0 0
    %5549 = vmatpush2.bf16.msra.mxu0 0
    %5550 = vmatprep.mubr.bf16.mxu0 0
    %5551 = vmatmul.mubr.bf16.gmra.mxu0 %v5336
    %v5552 = vpop.f32.mrf.mxu0
    %v5553 = vadd.f32 %v5456, %v5552
    %v5554 = vpop.f32.mrf.mxu0
    %v5555 = vpop.f32.mrf.mxu0
    %v5556 = vadd.f32 %v5459, %v5555
    %v5557 = vpop.f32.mrf.mxu0
    %5558 = vmatprep.mubr.bf16.mxu0 0
    %5559 = vmatmul.mubr.bf16.gmra.mxu0 %v5337
    %v5560 = vpop.f32.mrf.mxu0
    %v5561 = vadd.f32 %v5464, %v5560
    %v5562 = vpop.f32.mrf.mxu0
    %v5563 = vpop.f32.mrf.mxu0
    %v5564 = vadd.f32 %v5467, %v5563
    %v5565 = vpop.f32.mrf.mxu0
    %5566 = vdwg.mxu0
    %v5567 = vpack.c.bf16 %v5333, %v5332
    %v5568 = vpack.c.bf16 %v5335, %v5334
    %s5569 = scalar_lea.vmem %s31, 128
    %v5570 = vld [vmem:[%s5569] sm:$0xf]
    %v5571 = vld [vmem:[%s5569 + $0x4] sm:$0xf]
    %v5572 = vld [vmem:[%s5569 + $0x8] sm:$0xf]
    %v5573 = vld [vmem:[%s5569 + $0xc] sm:$0xf]
    %v5574 = vld [vmem:[%s5569 + $0x10] sm:$0xf]
    %v5575 = vld [vmem:[%s5569 + $0x14] sm:$0xf]
    %v5576 = vld [vmem:[%s5569 + $0x18] sm:$0xf]
    %v5577 = vld [vmem:[%s5569 + $0x1c] sm:$0xf]
    %v5578 = vld [vmem:[%s5569 + $0x20] sm:$0xf]
    %v5579 = vld [vmem:[%s5569 + $0x24] sm:$0xf]
    %v5580 = vld [vmem:[%s5569 + $0x28] sm:$0xf]
    %v5581 = vld [vmem:[%s5569 + $0x2c] sm:$0xf]
    %v5582 = vld [vmem:[%s5569 + $0x30] sm:$0xf]
    %v5583 = vld [vmem:[%s5569 + $0x34] sm:$0xf]
    %v5584 = vld [vmem:[%s5569 + $0x38] sm:$0xf]
    %v5585 = vld [vmem:[%s5569 + $0x3c] sm:$0xf]
    %v5602 = vunpack.c.l.b16 %v5570
    %v5603 = vunpack.c.l.b16 %v5571
    %v5604 = vunpack.c.l.b16 %v5572
    %v5605 = vunpack.c.l.b16 %v5573
    %v5606 = vunpack.c.l.b16 %v5574
    %v5607 = vunpack.c.l.b16 %v5575
    %v5608 = vunpack.c.l.b16 %v5576
    %v5609 = vunpack.c.l.b16 %v5577
    %v5610 = vunpack.c.l.b16 %v5578
    %v5611 = vunpack.c.l.b16 %v5579
    %v5612 = vunpack.c.l.b16 %v5580
    %v5613 = vunpack.c.l.b16 %v5581
    %v5614 = vunpack.c.l.b16 %v5582
    %v5615 = vunpack.c.l.b16 %v5583
    %v5616 = vunpack.c.l.b16 %v5584
    %v5617 = vunpack.c.l.b16 %v5585
    %v5618 = vpack.c.b16 %v5603, %v5602
    %v5619 = vpack.c.b16 %v5605, %v5604
    %v5620 = vpack.c.b16 %v5607, %v5606
    %v5621 = vpack.c.b16 %v5609, %v5608
    %v5622 = vpack.c.b16 %v5611, %v5610
    %v5623 = vpack.c.b16 %v5613, %v5612
    %v5624 = vpack.c.b16 %v5615, %v5614
    %v5625 = vpack.c.b16 %v5617, %v5616
    %5634 = vmatprep.subr.bf16.mxu0 0
    %5635 = vmatpush1.bf16.msra.mxu0 %v5625
    %5636 = vmatprep.subr.bf16.mxu0 0
    %5637 = vmatpush1.bf16.msra.mxu0 %v5624
    %5638 = vmatprep.subr.bf16.mxu0 0
    %5639 = vmatpush1.bf16.msra.mxu0 %v5623
    %5640 = vmatprep.subr.bf16.mxu0 0
    %5641 = vmatpush1.bf16.msra.mxu0 %v5622
    %5642 = vmatprep.subr.bf16.mxu0 0
    %5643 = vmatpush1.bf16.msra.mxu0 %v5621
    %5644 = vmatprep.subr.bf16.mxu0 0
    %5645 = vmatpush1.bf16.msra.mxu0 %v5620
    %5646 = vmatprep.subr.bf16.mxu0 0
    %5647 = vmatpush1.bf16.msra.mxu0 %v5619
    %5648 = vmatprep.subr.bf16.mxu0 0
    %5649 = vmatpush1.bf16.msra.mxu0 %v5618
    %5650 = vmatprep.subr.bf16.mxu0 0
    %5651 = vmatpush2.bf16.msra.mxu0 0
    %5652 = vmatprep.subr.bf16.mxu0 0
    %5653 = vmatpush2.bf16.msra.mxu0 0
    %5654 = vmatprep.subr.bf16.mxu0 0
    %5655 = vmatpush2.bf16.msra.mxu0 0
    %5656 = vmatprep.subr.bf16.mxu0 0
    %5657 = vmatpush2.bf16.msra.mxu0 0
    %5658 = vmatprep.subr.bf16.mxu0 0
    %5659 = vmatpush2.bf16.msra.mxu0 0
    %5660 = vmatprep.subr.bf16.mxu0 0
    %5661 = vmatpush2.bf16.msra.mxu0 0
    %5662 = vmatprep.subr.bf16.mxu0 0
    %5663 = vmatpush2.bf16.msra.mxu0 0
    %5664 = vmatprep.subr.bf16.mxu0 0
    %5665 = vmatpush2.bf16.msra.mxu0 0
    %5666 = vmatprep.mubr.bf16.mxu0 0
    %5667 = vmatmul.mubr.bf16.gmra.mxu0 %v5567
    %v5668 = vpop.f32.mrf.mxu0
    %v5669 = vadd.f32 0.0, %v5668
    %v5670 = vpop.f32.mrf.mxu0
    %v5671 = vpop.f32.mrf.mxu0
    %v5672 = vadd.f32 0.0, %v5671
    %v5673 = vpop.f32.mrf.mxu0
    %5674 = vmatprep.mubr.bf16.mxu0 0
    %5675 = vmatmul.mubr.bf16.gmra.mxu0 %v5568
    %v5676 = vpop.f32.mrf.mxu0
    %v5677 = vadd.f32 0.0, %v5676
    %v5678 = vpop.f32.mrf.mxu0
    %v5679 = vpop.f32.mrf.mxu0
    %v5680 = vadd.f32 0.0, %v5679
    %v5681 = vpop.f32.mrf.mxu0
    %5682 = vdwg.mxu0
    %v5683 = vadd.f32 %v5553, %v5669
    %v5684 = vadd.f32 %v5556, %v5672
    %v5685 = vadd.f32 %v5561, %v5677
    %v5686 = vadd.f32 %v5564, %v5680
    %v5687 = vld [vmem:[#allocation19] sm:$0x1]
    %v5689 = vlaneseq
    %v5690 = vshrl.u32 %v5689, 7
    %v5691 = vsub.s32 0, %v5690
    %v5692 = vrot.slane %v5687, %v5691
    %v5694 = vadd.f32 %v5683, %v5692
    %v5695 = vadd.f32 %v5684, %v5692
    %v5696 = vadd.f32 %v5685, %v5692
    %v5697 = vadd.f32 %v5686, %v5692
    %v5698 = vmax.f32 %v5694, 0.0
    %v5699 = vmax.f32 %v5695, 0.0
    %v5700 = vmax.f32 %v5696, 0.0
    %v5701 = vmax.f32 %v5697, 0.0
    %v5702 = vrot.slane %v5698, 7
    %v5703 = vrot.slane %v5699, 7
    %v5704 = vrot.slane %v5700, 7
    %v5705 = vrot.slane %v5701, 7
    %v5706 = vsel %vm642, %v5704, %v5705
    %v5707 = vsel %vm642, %v5703, %v5704
    %v5708 = vsel %vm642, %v5702, %v5703
    %v5709 = vsel %vm642, %v5705, %v5702
    %v5710 = vsel %vm5304, 0.0, %v5709
    %v5711 = vsel %vm5305, 0.0, %v5708
    %v5712 = vsel %vm5306, 0.0, %v5707
    %v5713 = vsel %vm5307, 0.0, %v5706
    %v5714 = vrot.slane %v5698, 1
    %v5715 = vrot.slane %v5699, 1
    %v5716 = vrot.slane %v5700, 1
    %v5717 = vrot.slane %v5701, 1
    %v5718 = vsel %vm707, %v5716, %v5717
    %v5719 = vsel %vm707, %v5715, %v5716
    %v5720 = vsel %vm707, %v5714, %v5715
    %v5721 = vsel %vm707, %v5717, %v5714
    %v5722 = vsel %vm5320, 0.0, %v5720
    %v5723 = vsel %vm5321, 0.0, %v5719
    %v5724 = vsel %vm5322, 0.0, %v5718
    %v5725 = vsel %vm5323, 0.0, %v5721
    %v5726 = vpack.c.bf16 %v5711, %v5710
    %v5727 = vpack.c.bf16 %v5713, %v5712
    %v5728 = vld [vmem:[%s35] sm:$0xf]
    %v5729 = vld [vmem:[%s35 + $0x4] sm:$0xf]
    %v5730 = vld [vmem:[%s35 + $0x8] sm:$0xf]
    %v5731 = vld [vmem:[%s35 + $0xc] sm:$0xf]
    %v5732 = vld [vmem:[%s35 + $0x10] sm:$0xf]
    %v5733 = vld [vmem:[%s35 + $0x14] sm:$0xf]
    %v5734 = vld [vmem:[%s35 + $0x18] sm:$0xf]
    %v5735 = vld [vmem:[%s35 + $0x1c] sm:$0xf]
    %v5736 = vld [vmem:[%s35 + $0x20] sm:$0xf]
    %v5737 = vld [vmem:[%s35 + $0x24] sm:$0xf]
    %v5738 = vld [vmem:[%s35 + $0x28] sm:$0xf]
    %v5739 = vld [vmem:[%s35 + $0x2c] sm:$0xf]
    %v5740 = vld [vmem:[%s35 + $0x30] sm:$0xf]
    %v5741 = vld [vmem:[%s35 + $0x34] sm:$0xf]
    %v5742 = vld [vmem:[%s35 + $0x38] sm:$0xf]
    %v5743 = vld [vmem:[%s35 + $0x3c] sm:$0xf]
    %v5744 = vpack.c.bf16 %v5699, %v5698
    %v5745 = vpack.c.bf16 %v5701, %v5700
    %s5746 = scalar_lea.vmem %s35, 64
    %v5747 = vld [vmem:[%s5746] sm:$0xf]
    %v5748 = vld [vmem:[%s5746 + $0x4] sm:$0xf]
    %v5749 = vld [vmem:[%s5746 + $0x8] sm:$0xf]
    %v5750 = vld [vmem:[%s5746 + $0xc] sm:$0xf]
    %v5751 = vld [vmem:[%s5746 + $0x10] sm:$0xf]
    %v5752 = vld [vmem:[%s5746 + $0x14] sm:$0xf]
    %v5753 = vld [vmem:[%s5746 + $0x18] sm:$0xf]
    %v5754 = vld [vmem:[%s5746 + $0x1c] sm:$0xf]
    %v5755 = vld [vmem:[%s5746 + $0x20] sm:$0xf]
    %v5756 = vld [vmem:[%s5746 + $0x24] sm:$0xf]
    %v5757 = vld [vmem:[%s5746 + $0x28] sm:$0xf]
    %v5758 = vld [vmem:[%s5746 + $0x2c] sm:$0xf]
    %v5759 = vld [vmem:[%s5746 + $0x30] sm:$0xf]
    %v5760 = vld [vmem:[%s5746 + $0x34] sm:$0xf]
    %v5761 = vld [vmem:[%s5746 + $0x38] sm:$0xf]
    %v5762 = vld [vmem:[%s5746 + $0x3c] sm:$0xf]
    %v5779 = vunpack.c.l.b16 %v5747
    %v5780 = vunpack.c.l.b16 %v5748
    %v5781 = vunpack.c.l.b16 %v5749
    %v5782 = vunpack.c.l.b16 %v5750
    %v5783 = vunpack.c.l.b16 %v5751
    %v5784 = vunpack.c.l.b16 %v5752
    %v5785 = vunpack.c.l.b16 %v5753
    %v5786 = vunpack.c.l.b16 %v5754
    %v5787 = vunpack.c.l.b16 %v5755
    %v5788 = vunpack.c.l.b16 %v5756
    %v5789 = vunpack.c.l.b16 %v5757
    %v5790 = vunpack.c.l.b16 %v5758
    %v5791 = vunpack.c.l.b16 %v5759
    %v5792 = vunpack.c.l.b16 %v5760
    %v5793 = vunpack.c.l.b16 %v5761
    %v5794 = vunpack.c.l.b16 %v5762
    %v5795 = vpack.c.b16 %v5780, %v5779
    %v5796 = vpack.c.b16 %v5782, %v5781
    %v5797 = vpack.c.b16 %v5784, %v5783
    %v5798 = vpack.c.b16 %v5786, %v5785
    %v5799 = vpack.c.b16 %v5788, %v5787
    %v5800 = vpack.c.b16 %v5790, %v5789
    %v5801 = vpack.c.b16 %v5792, %v5791
    %v5802 = vpack.c.b16 %v5794, %v5793
    %5811 = vmatprep.subr.bf16.mxu0 0
    %5812 = vmatpush1.bf16.msra.mxu0 %v5802
    %5813 = vmatprep.subr.bf16.mxu0 0
    %5814 = vmatpush1.bf16.msra.mxu0 %v5801
    %5815 = vmatprep.subr.bf16.mxu0 0
    %5816 = vmatpush1.bf16.msra.mxu0 %v5800
    %5817 = vmatprep.subr.bf16.mxu0 0
    %5818 = vmatpush1.bf16.msra.mxu0 %v5799
    %5819 = vmatprep.subr.bf16.mxu0 0
    %5820 = vmatpush1.bf16.msra.mxu0 %v5798
    %5821 = vmatprep.subr.bf16.mxu0 0
    %5822 = vmatpush1.bf16.msra.mxu0 %v5797
    %5823 = vmatprep.subr.bf16.mxu0 0
    %5824 = vmatpush1.bf16.msra.mxu0 %v5796
    %5825 = vmatprep.subr.bf16.mxu0 0
    %5826 = vmatpush1.bf16.msra.mxu0 %v5795
    %5827 = vmatprep.subr.bf16.mxu0 0
    %5828 = vmatpush2.bf16.msra.mxu0 0
    %5829 = vmatprep.subr.bf16.mxu0 0
    %5830 = vmatpush2.bf16.msra.mxu0 0
    %5831 = vmatprep.subr.bf16.mxu0 0
    %5832 = vmatpush2.bf16.msra.mxu0 0
    %5833 = vmatprep.subr.bf16.mxu0 0
    %5834 = vmatpush2.bf16.msra.mxu0 0
    %5835 = vmatprep.subr.bf16.mxu0 0
    %5836 = vmatpush2.bf16.msra.mxu0 0
    %5837 = vmatprep.subr.bf16.mxu0 0
    %5838 = vmatpush2.bf16.msra.mxu0 0
    %5839 = vmatprep.subr.bf16.mxu0 0
    %5840 = vmatpush2.bf16.msra.mxu0 0
    %5841 = vmatprep.subr.bf16.mxu0 0
    %5842 = vmatpush2.bf16.msra.mxu0 0
    %5843 = vmatprep.mubr.bf16.mxu0 0
    %5844 = vmatmul.mubr.bf16.gmra.mxu0 %v5744
    %v5845 = vpop.f32.mrf.mxu0
    %v5846 = vadd.f32 0.0, %v5845
    %v5847 = vpop.f32.mrf.mxu0
    %v5848 = vpop.f32.mrf.mxu0
    %v5849 = vadd.f32 0.0, %v5848
    %v5850 = vpop.f32.mrf.mxu0
    %5851 = vmatprep.mubr.bf16.mxu0 0
    %5852 = vmatmul.mubr.bf16.gmra.mxu0 %v5745
    %v5853 = vpop.f32.mrf.mxu0
    %v5854 = vadd.f32 0.0, %v5853
    %v5855 = vpop.f32.mrf.mxu0
    %v5856 = vpop.f32.mrf.mxu0
    %v5857 = vadd.f32 0.0, %v5856
    %v5858 = vpop.f32.mrf.mxu0
    %5859 = vdwg.mxu0
    %v5876 = vunpack.c.l.b16 %v5728
    %v5877 = vunpack.c.l.b16 %v5729
    %v5878 = vunpack.c.l.b16 %v5730
    %v5879 = vunpack.c.l.b16 %v5731
    %v5880 = vunpack.c.l.b16 %v5732
    %v5881 = vunpack.c.l.b16 %v5733
    %v5882 = vunpack.c.l.b16 %v5734
    %v5883 = vunpack.c.l.b16 %v5735
    %v5884 = vunpack.c.l.b16 %v5736
    %v5885 = vunpack.c.l.b16 %v5737
    %v5886 = vunpack.c.l.b16 %v5738
    %v5887 = vunpack.c.l.b16 %v5739
    %v5888 = vunpack.c.l.b16 %v5740
    %v5889 = vunpack.c.l.b16 %v5741
    %v5890 = vunpack.c.l.b16 %v5742
    %v5891 = vunpack.c.l.b16 %v5743
    %v5892 = vpack.c.b16 %v5877, %v5876
    %v5893 = vpack.c.b16 %v5879, %v5878
    %v5894 = vpack.c.b16 %v5881, %v5880
    %v5895 = vpack.c.b16 %v5883, %v5882
    %v5896 = vpack.c.b16 %v5885, %v5884
    %v5897 = vpack.c.b16 %v5887, %v5886
    %v5898 = vpack.c.b16 %v5889, %v5888
    %v5899 = vpack.c.b16 %v5891, %v5890
    %5908 = vmatprep.subr.bf16.mxu0 0
    %5909 = vmatpush1.bf16.msra.mxu0 %v5899
    %5910 = vmatprep.subr.bf16.mxu0 0
    %5911 = vmatpush1.bf16.msra.mxu0 %v5898
    %5912 = vmatprep.subr.bf16.mxu0 0
    %5913 = vmatpush1.bf16.msra.mxu0 %v5897
    %5914 = vmatprep.subr.bf16.mxu0 0
    %5915 = vmatpush1.bf16.msra.mxu0 %v5896
    %5916 = vmatprep.subr.bf16.mxu0 0
    %5917 = vmatpush1.bf16.msra.mxu0 %v5895
    %5918 = vmatprep.subr.bf16.mxu0 0
    %5919 = vmatpush1.bf16.msra.mxu0 %v5894
    %5920 = vmatprep.subr.bf16.mxu0 0
    %5921 = vmatpush1.bf16.msra.mxu0 %v5893
    %5922 = vmatprep.subr.bf16.mxu0 0
    %5923 = vmatpush1.bf16.msra.mxu0 %v5892
    %5924 = vmatprep.subr.bf16.mxu0 0
    %5925 = vmatpush2.bf16.msra.mxu0 0
    %5926 = vmatprep.subr.bf16.mxu0 0
    %5927 = vmatpush2.bf16.msra.mxu0 0
    %5928 = vmatprep.subr.bf16.mxu0 0
    %5929 = vmatpush2.bf16.msra.mxu0 0
    %5930 = vmatprep.subr.bf16.mxu0 0
    %5931 = vmatpush2.bf16.msra.mxu0 0
    %5932 = vmatprep.subr.bf16.mxu0 0
    %5933 = vmatpush2.bf16.msra.mxu0 0
    %5934 = vmatprep.subr.bf16.mxu0 0
    %5935 = vmatpush2.bf16.msra.mxu0 0
    %5936 = vmatprep.subr.bf16.mxu0 0
    %5937 = vmatpush2.bf16.msra.mxu0 0
    %5938 = vmatprep.subr.bf16.mxu0 0
    %5939 = vmatpush2.bf16.msra.mxu0 0
    %5940 = vmatprep.mubr.bf16.mxu0 0
    %5941 = vmatmul.mubr.bf16.gmra.mxu0 %v5726
    %v5942 = vpop.f32.mrf.mxu0
    %v5943 = vadd.f32 %v5846, %v5942
    %v5944 = vpop.f32.mrf.mxu0
    %v5945 = vpop.f32.mrf.mxu0
    %v5946 = vadd.f32 %v5849, %v5945
    %v5947 = vpop.f32.mrf.mxu0
    %5948 = vmatprep.mubr.bf16.mxu0 0
    %5949 = vmatmul.mubr.bf16.gmra.mxu0 %v5727
    %v5950 = vpop.f32.mrf.mxu0
    %v5951 = vadd.f32 %v5854, %v5950
    %v5952 = vpop.f32.mrf.mxu0
    %v5953 = vpop.f32.mrf.mxu0
    %v5954 = vadd.f32 %v5857, %v5953
    %v5955 = vpop.f32.mrf.mxu0
    %5956 = vdwg.mxu0
    %v5957 = vpack.c.bf16 %v5723, %v5722
    %v5958 = vpack.c.bf16 %v5725, %v5724
    %s5959 = scalar_lea.vmem %s35, 128
    %v5960 = vld [vmem:[%s5959] sm:$0xf]
    %v5961 = vld [vmem:[%s5959 + $0x4] sm:$0xf]
    %v5962 = vld [vmem:[%s5959 + $0x8] sm:$0xf]
    %v5963 = vld [vmem:[%s5959 + $0xc] sm:$0xf]
    %v5964 = vld [vmem:[%s5959 + $0x10] sm:$0xf]
    %v5965 = vld [vmem:[%s5959 + $0x14] sm:$0xf]
    %v5966 = vld [vmem:[%s5959 + $0x18] sm:$0xf]
    %v5967 = vld [vmem:[%s5959 + $0x1c] sm:$0xf]
    %v5968 = vld [vmem:[%s5959 + $0x20] sm:$0xf]
    %v5969 = vld [vmem:[%s5959 + $0x24] sm:$0xf]
    %v5970 = vld [vmem:[%s5959 + $0x28] sm:$0xf]
    %v5971 = vld [vmem:[%s5959 + $0x2c] sm:$0xf]
    %v5972 = vld [vmem:[%s5959 + $0x30] sm:$0xf]
    %v5973 = vld [vmem:[%s5959 + $0x34] sm:$0xf]
    %v5974 = vld [vmem:[%s5959 + $0x38] sm:$0xf]
    %v5975 = vld [vmem:[%s5959 + $0x3c] sm:$0xf]
    %v5992 = vunpack.c.l.b16 %v5960
    %v5993 = vunpack.c.l.b16 %v5961
    %v5994 = vunpack.c.l.b16 %v5962
    %v5995 = vunpack.c.l.b16 %v5963
    %v5996 = vunpack.c.l.b16 %v5964
    %v5997 = vunpack.c.l.b16 %v5965
    %v5998 = vunpack.c.l.b16 %v5966
    %v5999 = vunpack.c.l.b16 %v5967
    %v6000 = vunpack.c.l.b16 %v5968
    %v6001 = vunpack.c.l.b16 %v5969
    %v6002 = vunpack.c.l.b16 %v5970
    %v6003 = vunpack.c.l.b16 %v5971
    %v6004 = vunpack.c.l.b16 %v5972
    %v6005 = vunpack.c.l.b16 %v5973
    %v6006 = vunpack.c.l.b16 %v5974
    %v6007 = vunpack.c.l.b16 %v5975
    %v6008 = vpack.c.b16 %v5993, %v5992
    %v6009 = vpack.c.b16 %v5995, %v5994
    %v6010 = vpack.c.b16 %v5997, %v5996
    %v6011 = vpack.c.b16 %v5999, %v5998
    %v6012 = vpack.c.b16 %v6001, %v6000
    %v6013 = vpack.c.b16 %v6003, %v6002
    %v6014 = vpack.c.b16 %v6005, %v6004
    %v6015 = vpack.c.b16 %v6007, %v6006
    %6024 = vmatprep.subr.bf16.mxu0 0
    %6025 = vmatpush1.bf16.msra.mxu0 %v6015
    %6026 = vmatprep.subr.bf16.mxu0 0
    %6027 = vmatpush1.bf16.msra.mxu0 %v6014
    %6028 = vmatprep.subr.bf16.mxu0 0
    %6029 = vmatpush1.bf16.msra.mxu0 %v6013
    %6030 = vmatprep.subr.bf16.mxu0 0
    %6031 = vmatpush1.bf16.msra.mxu0 %v6012
    %6032 = vmatprep.subr.bf16.mxu0 0
    %6033 = vmatpush1.bf16.msra.mxu0 %v6011
    %6034 = vmatprep.subr.bf16.mxu0 0
    %6035 = vmatpush1.bf16.msra.mxu0 %v6010
    %6036 = vmatprep.subr.bf16.mxu0 0
    %6037 = vmatpush1.bf16.msra.mxu0 %v6009
    %6038 = vmatprep.subr.bf16.mxu0 0
    %6039 = vmatpush1.bf16.msra.mxu0 %v6008
    %6040 = vmatprep.subr.bf16.mxu0 0
    %6041 = vmatpush2.bf16.msra.mxu0 0
    %6042 = vmatprep.subr.bf16.mxu0 0
    %6043 = vmatpush2.bf16.msra.mxu0 0
    %6044 = vmatprep.subr.bf16.mxu0 0
    %6045 = vmatpush2.bf16.msra.mxu0 0
    %6046 = vmatprep.subr.bf16.mxu0 0
    %6047 = vmatpush2.bf16.msra.mxu0 0
    %6048 = vmatprep.subr.bf16.mxu0 0
    %6049 = vmatpush2.bf16.msra.mxu0 0
    %6050 = vmatprep.subr.bf16.mxu0 0
    %6051 = vmatpush2.bf16.msra.mxu0 0
    %6052 = vmatprep.subr.bf16.mxu0 0
    %6053 = vmatpush2.bf16.msra.mxu0 0
    %6054 = vmatprep.subr.bf16.mxu0 0
    %6055 = vmatpush2.bf16.msra.mxu0 0
    %6056 = vmatprep.mubr.bf16.mxu0 0
    %6057 = vmatmul.mubr.bf16.gmra.mxu0 %v5957
    %v6058 = vpop.f32.mrf.mxu0
    %v6059 = vadd.f32 0.0, %v6058
    %v6060 = vpop.f32.mrf.mxu0
    %v6061 = vpop.f32.mrf.mxu0
    %v6062 = vadd.f32 0.0, %v6061
    %v6063 = vpop.f32.mrf.mxu0
    %6064 = vmatprep.mubr.bf16.mxu0 0
    %6065 = vmatmul.mubr.bf16.gmra.mxu0 %v5958
    %v6066 = vpop.f32.mrf.mxu0
    %v6067 = vadd.f32 0.0, %v6066
    %v6068 = vpop.f32.mrf.mxu0
    %v6069 = vpop.f32.mrf.mxu0
    %v6070 = vadd.f32 0.0, %v6069
    %v6071 = vpop.f32.mrf.mxu0
    %6072 = vdwg.mxu0
    %v6073 = vadd.f32 %v5943, %v6059
    %v6074 = vadd.f32 %v5946, %v6062
    %v6075 = vadd.f32 %v5951, %v6067
    %v6076 = vadd.f32 %v5954, %v6070
    %v6077 = vld [vmem:[#allocation21] sm:$0x1]
    %v6079 = vlaneseq
    %v6080 = vshrl.u32 %v6079, 7
    %v6081 = vsub.s32 0, %v6080
    %v6082 = vrot.slane %v6077, %v6081
    %v6084 = vadd.f32 %v6073, %v6082
    %v6085 = vadd.f32 %v6074, %v6082
    %v6086 = vadd.f32 %v6075, %v6082
    %v6087 = vadd.f32 %v6076, %v6082
    %v6088 = vadd.f32 %v5238, %v6084
    %v6089 = vadd.f32 %v5241, %v6085
    %v6090 = vadd.f32 %v5246, %v6086
    %v6091 = vadd.f32 %v5249, %v6087
    %v6092 = vmax.f32 %v6088, 0.0
    %v6093 = vmax.f32 %v6089, 0.0
    %v6094 = vmax.f32 %v6090, 0.0
    %v6095 = vmax.f32 %v6091, 0.0
    %v6096 = vrot.slane %v6092, 7
    %v6097 = vrot.slane %v6093, 7
    %v6098 = vrot.slane %v6094, 7
    %v6099 = vrot.slane %v6095, 7
    %v6100 = vsel %vm642, %v6098, %v6099
    %v6101 = vsel %vm642, %v6097, %v6098
    %v6102 = vsel %vm642, %v6096, %v6097
    %v6103 = vsel %vm642, %v6099, %v6096
    %v6104 = vsel %vm5304, 0.0, %v6103
    %v6105 = vsel %vm5305, 0.0, %v6102
    %v6106 = vsel %vm5306, 0.0, %v6101
    %v6107 = vsel %vm5307, 0.0, %v6100
    %v6108 = vrot.slane %v6092, 1
    %v6109 = vrot.slane %v6093, 1
    %v6110 = vrot.slane %v6094, 1
    %v6111 = vrot.slane %v6095, 1
    %v6112 = vsel %vm707, %v6110, %v6111
    %v6113 = vsel %vm707, %v6109, %v6110
    %v6114 = vsel %vm707, %v6108, %v6109
    %v6115 = vsel %vm707, %v6111, %v6108
    %v6116 = vsel %vm5320, 0.0, %v6114
    %v6117 = vsel %vm5321, 0.0, %v6113
    %v6118 = vsel %vm5322, 0.0, %v6112
    %v6119 = vsel %vm5323, 0.0, %v6115
    %v6120 = vpack.c.bf16 %v6105, %v6104
    %v6121 = vpack.c.bf16 %v6107, %v6106
    %v6122 = vld [vmem:[%s39] sm:$0xf]
    %v6123 = vld [vmem:[%s39 + $0x4] sm:$0xf]
    %v6124 = vld [vmem:[%s39 + $0x8] sm:$0xf]
    %v6125 = vld [vmem:[%s39 + $0xc] sm:$0xf]
    %v6126 = vld [vmem:[%s39 + $0x10] sm:$0xf]
    %v6127 = vld [vmem:[%s39 + $0x14] sm:$0xf]
    %v6128 = vld [vmem:[%s39 + $0x18] sm:$0xf]
    %v6129 = vld [vmem:[%s39 + $0x1c] sm:$0xf]
    %v6130 = vld [vmem:[%s39 + $0x20] sm:$0xf]
    %v6131 = vld [vmem:[%s39 + $0x24] sm:$0xf]
    %v6132 = vld [vmem:[%s39 + $0x28] sm:$0xf]
    %v6133 = vld [vmem:[%s39 + $0x2c] sm:$0xf]
    %v6134 = vld [vmem:[%s39 + $0x30] sm:$0xf]
    %v6135 = vld [vmem:[%s39 + $0x34] sm:$0xf]
    %v6136 = vld [vmem:[%s39 + $0x38] sm:$0xf]
    %v6137 = vld [vmem:[%s39 + $0x3c] sm:$0xf]
    %v6138 = vpack.c.bf16 %v6093, %v6092
    %v6139 = vpack.c.bf16 %v6095, %v6094
    %s6140 = scalar_lea.vmem %s39, 64
    %v6141 = vld [vmem:[%s6140] sm:$0xf]
    %v6142 = vld [vmem:[%s6140 + $0x4] sm:$0xf]
    %v6143 = vld [vmem:[%s6140 + $0x8] sm:$0xf]
    %v6144 = vld [vmem:[%s6140 + $0xc] sm:$0xf]
    %v6145 = vld [vmem:[%s6140 + $0x10] sm:$0xf]
    %v6146 = vld [vmem:[%s6140 + $0x14] sm:$0xf]
    %v6147 = vld [vmem:[%s6140 + $0x18] sm:$0xf]
    %v6148 = vld [vmem:[%s6140 + $0x1c] sm:$0xf]
    %v6149 = vld [vmem:[%s6140 + $0x20] sm:$0xf]
    %v6150 = vld [vmem:[%s6140 + $0x24] sm:$0xf]
    %v6151 = vld [vmem:[%s6140 + $0x28] sm:$0xf]
    %v6152 = vld [vmem:[%s6140 + $0x2c] sm:$0xf]
    %v6153 = vld [vmem:[%s6140 + $0x30] sm:$0xf]
    %v6154 = vld [vmem:[%s6140 + $0x34] sm:$0xf]
    %v6155 = vld [vmem:[%s6140 + $0x38] sm:$0xf]
    %v6156 = vld [vmem:[%s6140 + $0x3c] sm:$0xf]
    %v6173 = vunpack.c.l.b16 %v6141
    %v6174 = vunpack.c.l.b16 %v6142
    %v6175 = vunpack.c.l.b16 %v6143
    %v6176 = vunpack.c.l.b16 %v6144
    %v6177 = vunpack.c.l.b16 %v6145
    %v6178 = vunpack.c.l.b16 %v6146
    %v6179 = vunpack.c.l.b16 %v6147
    %v6180 = vunpack.c.l.b16 %v6148
    %v6181 = vunpack.c.l.b16 %v6149
    %v6182 = vunpack.c.l.b16 %v6150
    %v6183 = vunpack.c.l.b16 %v6151
    %v6184 = vunpack.c.l.b16 %v6152
    %v6185 = vunpack.c.l.b16 %v6153
    %v6186 = vunpack.c.l.b16 %v6154
    %v6187 = vunpack.c.l.b16 %v6155
    %v6188 = vunpack.c.l.b16 %v6156
    %v6189 = vpack.c.b16 %v6174, %v6173
    %v6190 = vpack.c.b16 %v6176, %v6175
    %v6191 = vpack.c.b16 %v6178, %v6177
    %v6192 = vpack.c.b16 %v6180, %v6179
    %v6193 = vpack.c.b16 %v6182, %v6181
    %v6194 = vpack.c.b16 %v6184, %v6183
    %v6195 = vpack.c.b16 %v6186, %v6185
    %v6196 = vpack.c.b16 %v6188, %v6187
    %6205 = vmatprep.subr.bf16.mxu0 0
    %6206 = vmatpush1.bf16.msra.mxu0 %v6196
    %6207 = vmatprep.subr.bf16.mxu0 0
    %6208 = vmatpush1.bf16.msra.mxu0 %v6195
    %6209 = vmatprep.subr.bf16.mxu0 0
    %6210 = vmatpush1.bf16.msra.mxu0 %v6194
    %6211 = vmatprep.subr.bf16.mxu0 0
    %6212 = vmatpush1.bf16.msra.mxu0 %v6193
    %6213 = vmatprep.subr.bf16.mxu0 0
    %6214 = vmatpush1.bf16.msra.mxu0 %v6192
    %6215 = vmatprep.subr.bf16.mxu0 0
    %6216 = vmatpush1.bf16.msra.mxu0 %v6191
    %6217 = vmatprep.subr.bf16.mxu0 0
    %6218 = vmatpush1.bf16.msra.mxu0 %v6190
    %6219 = vmatprep.subr.bf16.mxu0 0
    %6220 = vmatpush1.bf16.msra.mxu0 %v6189
    %6221 = vmatprep.subr.bf16.mxu0 0
    %6222 = vmatpush2.bf16.msra.mxu0 0
    %6223 = vmatprep.subr.bf16.mxu0 0
    %6224 = vmatpush2.bf16.msra.mxu0 0
    %6225 = vmatprep.subr.bf16.mxu0 0
    %6226 = vmatpush2.bf16.msra.mxu0 0
    %6227 = vmatprep.subr.bf16.mxu0 0
    %6228 = vmatpush2.bf16.msra.mxu0 0
    %6229 = vmatprep.subr.bf16.mxu0 0
    %6230 = vmatpush2.bf16.msra.mxu0 0
    %6231 = vmatprep.subr.bf16.mxu0 0
    %6232 = vmatpush2.bf16.msra.mxu0 0
    %6233 = vmatprep.subr.bf16.mxu0 0
    %6234 = vmatpush2.bf16.msra.mxu0 0
    %6235 = vmatprep.subr.bf16.mxu0 0
    %6236 = vmatpush2.bf16.msra.mxu0 0
    %6237 = vmatprep.mubr.bf16.mxu0 0
    %6238 = vmatmul.mubr.bf16.gmra.mxu0 %v6138
    %v6239 = vpop.f32.mrf.mxu0
    %v6240 = vadd.f32 0.0, %v6239
    %v6241 = vpop.f32.mrf.mxu0
    %v6242 = vpop.f32.mrf.mxu0
    %v6243 = vadd.f32 0.0, %v6242
    %v6244 = vpop.f32.mrf.mxu0
    %6245 = vmatprep.mubr.bf16.mxu0 0
    %6246 = vmatmul.mubr.bf16.gmra.mxu0 %v6139
    %v6247 = vpop.f32.mrf.mxu0
    %v6248 = vadd.f32 0.0, %v6247
    %v6249 = vpop.f32.mrf.mxu0
    %v6250 = vpop.f32.mrf.mxu0
    %v6251 = vadd.f32 0.0, %v6250
    %v6252 = vpop.f32.mrf.mxu0
    %6253 = vdwg.mxu0
    %v6270 = vunpack.c.l.b16 %v6122
    %v6271 = vunpack.c.l.b16 %v6123
    %v6272 = vunpack.c.l.b16 %v6124
    %v6273 = vunpack.c.l.b16 %v6125
    %v6274 = vunpack.c.l.b16 %v6126
    %v6275 = vunpack.c.l.b16 %v6127
    %v6276 = vunpack.c.l.b16 %v6128
    %v6277 = vunpack.c.l.b16 %v6129
    %v6278 = vunpack.c.l.b16 %v6130
    %v6279 = vunpack.c.l.b16 %v6131
    %v6280 = vunpack.c.l.b16 %v6132
    %v6281 = vunpack.c.l.b16 %v6133
    %v6282 = vunpack.c.l.b16 %v6134
    %v6283 = vunpack.c.l.b16 %v6135
    %v6284 = vunpack.c.l.b16 %v6136
    %v6285 = vunpack.c.l.b16 %v6137
    %v6286 = vpack.c.b16 %v6271, %v6270
    %v6287 = vpack.c.b16 %v6273, %v6272
    %v6288 = vpack.c.b16 %v6275, %v6274
    %v6289 = vpack.c.b16 %v6277, %v6276
    %v6290 = vpack.c.b16 %v6279, %v6278
    %v6291 = vpack.c.b16 %v6281, %v6280
    %v6292 = vpack.c.b16 %v6283, %v6282
    %v6293 = vpack.c.b16 %v6285, %v6284
    %6302 = vmatprep.subr.bf16.mxu0 0
    %6303 = vmatpush1.bf16.msra.mxu0 %v6293
    %6304 = vmatprep.subr.bf16.mxu0 0
    %6305 = vmatpush1.bf16.msra.mxu0 %v6292
    %6306 = vmatprep.subr.bf16.mxu0 0
    %6307 = vmatpush1.bf16.msra.mxu0 %v6291
    %6308 = vmatprep.subr.bf16.mxu0 0
    %6309 = vmatpush1.bf16.msra.mxu0 %v6290
    %6310 = vmatprep.subr.bf16.mxu0 0
    %6311 = vmatpush1.bf16.msra.mxu0 %v6289
    %6312 = vmatprep.subr.bf16.mxu0 0
    %6313 = vmatpush1.bf16.msra.mxu0 %v6288
    %6314 = vmatprep.subr.bf16.mxu0 0
    %6315 = vmatpush1.bf16.msra.mxu0 %v6287
    %6316 = vmatprep.subr.bf16.mxu0 0
    %6317 = vmatpush1.bf16.msra.mxu0 %v6286
    %6318 = vmatprep.subr.bf16.mxu0 0
    %6319 = vmatpush2.bf16.msra.mxu0 0
    %6320 = vmatprep.subr.bf16.mxu0 0
    %6321 = vmatpush2.bf16.msra.mxu0 0
    %6322 = vmatprep.subr.bf16.mxu0 0
    %6323 = vmatpush2.bf16.msra.mxu0 0
    %6324 = vmatprep.subr.bf16.mxu0 0
    %6325 = vmatpush2.bf16.msra.mxu0 0
    %6326 = vmatprep.subr.bf16.mxu0 0
    %6327 = vmatpush2.bf16.msra.mxu0 0
    %6328 = vmatprep.subr.bf16.mxu0 0
    %6329 = vmatpush2.bf16.msra.mxu0 0
    %6330 = vmatprep.subr.bf16.mxu0 0
    %6331 = vmatpush2.bf16.msra.mxu0 0
    %6332 = vmatprep.subr.bf16.mxu0 0
    %6333 = vmatpush2.bf16.msra.mxu0 0
    %6334 = vmatprep.mubr.bf16.mxu0 0
    %6335 = vmatmul.mubr.bf16.gmra.mxu0 %v6120
    %v6336 = vpop.f32.mrf.mxu0
    %v6337 = vadd.f32 %v6240, %v6336
    %v6338 = vpop.f32.mrf.mxu0
    %v6339 = vpop.f32.mrf.mxu0
    %v6340 = vadd.f32 %v6243, %v6339
    %v6341 = vpop.f32.mrf.mxu0
    %6342 = vmatprep.mubr.bf16.mxu0 0
    %6343 = vmatmul.mubr.bf16.gmra.mxu0 %v6121
    %v6344 = vpop.f32.mrf.mxu0
    %v6345 = vadd.f32 %v6248, %v6344
    %v6346 = vpop.f32.mrf.mxu0
    %v6347 = vpop.f32.mrf.mxu0
    %v6348 = vadd.f32 %v6251, %v6347
    %v6349 = vpop.f32.mrf.mxu0
    %6350 = vdwg.mxu0
    %v6351 = vpack.c.bf16 %v6117, %v6116
    %v6352 = vpack.c.bf16 %v6119, %v6118
    %s6353 = scalar_lea.vmem %s39, 128
    %v6354 = vld [vmem:[%s6353] sm:$0xf]
    %v6355 = vld [vmem:[%s6353 + $0x4] sm:$0xf]
    %v6356 = vld [vmem:[%s6353 + $0x8] sm:$0xf]
    %v6357 = vld [vmem:[%s6353 + $0xc] sm:$0xf]
    %v6358 = vld [vmem:[%s6353 + $0x10] sm:$0xf]
    %v6359 = vld [vmem:[%s6353 + $0x14] sm:$0xf]
    %v6360 = vld [vmem:[%s6353 + $0x18] sm:$0xf]
    %v6361 = vld [vmem:[%s6353 + $0x1c] sm:$0xf]
    %v6362 = vld [vmem:[%s6353 + $0x20] sm:$0xf]
    %v6363 = vld [vmem:[%s6353 + $0x24] sm:$0xf]
    %v6364 = vld [vmem:[%s6353 + $0x28] sm:$0xf]
    %v6365 = vld [vmem:[%s6353 + $0x2c] sm:$0xf]
    %v6366 = vld [vmem:[%s6353 + $0x30] sm:$0xf]
    %v6367 = vld [vmem:[%s6353 + $0x34] sm:$0xf]
    %v6368 = vld [vmem:[%s6353 + $0x38] sm:$0xf]
    %v6369 = vld [vmem:[%s6353 + $0x3c] sm:$0xf]
    %v6386 = vunpack.c.l.b16 %v6354
    %v6387 = vunpack.c.l.b16 %v6355
    %v6388 = vunpack.c.l.b16 %v6356
    %v6389 = vunpack.c.l.b16 %v6357
    %v6390 = vunpack.c.l.b16 %v6358
    %v6391 = vunpack.c.l.b16 %v6359
    %v6392 = vunpack.c.l.b16 %v6360
    %v6393 = vunpack.c.l.b16 %v6361
    %v6394 = vunpack.c.l.b16 %v6362
    %v6395 = vunpack.c.l.b16 %v6363
    %v6396 = vunpack.c.l.b16 %v6364
    %v6397 = vunpack.c.l.b16 %v6365
    %v6398 = vunpack.c.l.b16 %v6366
    %v6399 = vunpack.c.l.b16 %v6367
    %v6400 = vunpack.c.l.b16 %v6368
    %v6401 = vunpack.c.l.b16 %v6369
    %v6402 = vpack.c.b16 %v6387, %v6386
    %v6403 = vpack.c.b16 %v6389, %v6388
    %v6404 = vpack.c.b16 %v6391, %v6390
    %v6405 = vpack.c.b16 %v6393, %v6392
    %v6406 = vpack.c.b16 %v6395, %v6394
    %v6407 = vpack.c.b16 %v6397, %v6396
    %v6408 = vpack.c.b16 %v6399, %v6398
    %v6409 = vpack.c.b16 %v6401, %v6400
    %6418 = vmatprep.subr.bf16.mxu0 0
    %6419 = vmatpush1.bf16.msra.mxu0 %v6409
    %6420 = vmatprep.subr.bf16.mxu0 0
    %6421 = vmatpush1.bf16.msra.mxu0 %v6408
    %6422 = vmatprep.subr.bf16.mxu0 0
    %6423 = vmatpush1.bf16.msra.mxu0 %v6407
    %6424 = vmatprep.subr.bf16.mxu0 0
    %6425 = vmatpush1.bf16.msra.mxu0 %v6406
    %6426 = vmatprep.subr.bf16.mxu0 0
    %6427 = vmatpush1.bf16.msra.mxu0 %v6405
    %6428 = vmatprep.subr.bf16.mxu0 0
    %6429 = vmatpush1.bf16.msra.mxu0 %v6404
    %6430 = vmatprep.subr.bf16.mxu0 0
    %6431 = vmatpush1.bf16.msra.mxu0 %v6403
    %6432 = vmatprep.subr.bf16.mxu0 0
    %6433 = vmatpush1.bf16.msra.mxu0 %v6402
    %6434 = vmatprep.subr.bf16.mxu0 0
    %6435 = vmatpush2.bf16.msra.mxu0 0
    %6436 = vmatprep.subr.bf16.mxu0 0
    %6437 = vmatpush2.bf16.msra.mxu0 0
    %6438 = vmatprep.subr.bf16.mxu0 0
    %6439 = vmatpush2.bf16.msra.mxu0 0
    %6440 = vmatprep.subr.bf16.mxu0 0
    %6441 = vmatpush2.bf16.msra.mxu0 0
    %6442 = vmatprep.subr.bf16.mxu0 0
    %6443 = vmatpush2.bf16.msra.mxu0 0
    %6444 = vmatprep.subr.bf16.mxu0 0
    %6445 = vmatpush2.bf16.msra.mxu0 0
    %6446 = vmatprep.subr.bf16.mxu0 0
    %6447 = vmatpush2.bf16.msra.mxu0 0
    %6448 = vmatprep.subr.bf16.mxu0 0
    %6449 = vmatpush2.bf16.msra.mxu0 0
    %6450 = vmatprep.mubr.bf16.mxu0 0
    %6451 = vmatmul.mubr.bf16.gmra.mxu0 %v6351
    %v6452 = vpop.f32.mrf.mxu0
    %v6453 = vadd.f32 0.0, %v6452
    %v6454 = vpop.f32.mrf.mxu0
    %v6455 = vpop.f32.mrf.mxu0
    %v6456 = vadd.f32 0.0, %v6455
    %v6457 = vpop.f32.mrf.mxu0
    %6458 = vmatprep.mubr.bf16.mxu0 0
    %6459 = vmatmul.mubr.bf16.gmra.mxu0 %v6352
    %v6460 = vpop.f32.mrf.mxu0
    %v6461 = vadd.f32 0.0, %v6460
    %v6462 = vpop.f32.mrf.mxu0
    %v6463 = vpop.f32.mrf.mxu0
    %v6464 = vadd.f32 0.0, %v6463
    %v6465 = vpop.f32.mrf.mxu0
    %6466 = vdwg.mxu0
    %v6467 = vadd.f32 %v6337, %v6453
    %v6468 = vadd.f32 %v6340, %v6456
    %v6469 = vadd.f32 %v6345, %v6461
    %v6470 = vadd.f32 %v6348, %v6464
    %v6471 = vld [vmem:[%s41] sm:$0x1]
    %v6473 = vlaneseq
    %v6474 = vshrl.u32 %v6473, 7
    %v6475 = vsub.s32 0, %v6474
    %v6476 = vrot.slane %v6471, %v6475
    %v6478 = vadd.f32 %v6467, %v6476
    %v6479 = vadd.f32 %v6468, %v6476
    %v6480 = vadd.f32 %v6469, %v6476
    %v6481 = vadd.f32 %v6470, %v6476
    %v6482 = vmax.f32 %v6478, 0.0
    %v6483 = vmax.f32 %v6479, 0.0
    %v6484 = vmax.f32 %v6480, 0.0
    %v6485 = vmax.f32 %v6481, 0.0
    %v6486 = vrot.slane %v6482, 7
    %v6487 = vrot.slane %v6483, 7
    %v6488 = vrot.slane %v6484, 7
    %v6489 = vrot.slane %v6485, 7
    %v6490 = vsel %vm642, %v6488, %v6489
    %v6491 = vsel %vm642, %v6487, %v6488
    %v6492 = vsel %vm642, %v6486, %v6487
    %v6493 = vsel %vm642, %v6489, %v6486
    %v6494 = vsel %vm5304, 0.0, %v6493
    %v6495 = vsel %vm5305, 0.0, %v6492
    %v6496 = vsel %vm5306, 0.0, %v6491
    %v6497 = vsel %vm5307, 0.0, %v6490
    %v6498 = vrot.slane %v6482, 1
    %v6499 = vrot.slane %v6483, 1
    %v6500 = vrot.slane %v6484, 1
    %v6501 = vrot.slane %v6485, 1
    %v6502 = vsel %vm707, %v6500, %v6501
    %v6503 = vsel %vm707, %v6499, %v6500
    %v6504 = vsel %vm707, %v6498, %v6499
    %v6505 = vsel %vm707, %v6501, %v6498
    %v6506 = vsel %vm5320, 0.0, %v6504
    %v6507 = vsel %vm5321, 0.0, %v6503
    %v6508 = vsel %vm5322, 0.0, %v6502
    %v6509 = vsel %vm5323, 0.0, %v6505
    %v6510 = vpack.c.bf16 %v6495, %v6494
    %v6511 = vpack.c.bf16 %v6497, %v6496
    %v6512 = vld [vmem:[%s43] sm:$0xf]
    %v6513 = vld [vmem:[%s43 + $0x4] sm:$0xf]
    %v6514 = vld [vmem:[%s43 + $0x8] sm:$0xf]
    %v6515 = vld [vmem:[%s43 + $0xc] sm:$0xf]
    %v6516 = vld [vmem:[%s43 + $0x10] sm:$0xf]
    %v6517 = vld [vmem:[%s43 + $0x14] sm:$0xf]
    %v6518 = vld [vmem:[%s43 + $0x18] sm:$0xf]
    %v6519 = vld [vmem:[%s43 + $0x1c] sm:$0xf]
    %v6520 = vld [vmem:[%s43 + $0x20] sm:$0xf]
    %v6521 = vld [vmem:[%s43 + $0x24] sm:$0xf]
    %v6522 = vld [vmem:[%s43 + $0x28] sm:$0xf]
    %v6523 = vld [vmem:[%s43 + $0x2c] sm:$0xf]
    %v6524 = vld [vmem:[%s43 + $0x30] sm:$0xf]
    %v6525 = vld [vmem:[%s43 + $0x34] sm:$0xf]
    %v6526 = vld [vmem:[%s43 + $0x38] sm:$0xf]
    %v6527 = vld [vmem:[%s43 + $0x3c] sm:$0xf]
    %v6528 = vpack.c.bf16 %v6483, %v6482
    %v6529 = vpack.c.bf16 %v6485, %v6484
    %s6530 = scalar_lea.vmem %s43, 64
    %v6531 = vld [vmem:[%s6530] sm:$0xf]
    %v6532 = vld [vmem:[%s6530 + $0x4] sm:$0xf]
    %v6533 = vld [vmem:[%s6530 + $0x8] sm:$0xf]
    %v6534 = vld [vmem:[%s6530 + $0xc] sm:$0xf]
    %v6535 = vld [vmem:[%s6530 + $0x10] sm:$0xf]
    %v6536 = vld [vmem:[%s6530 + $0x14] sm:$0xf]
    %v6537 = vld [vmem:[%s6530 + $0x18] sm:$0xf]
    %v6538 = vld [vmem:[%s6530 + $0x1c] sm:$0xf]
    %v6539 = vld [vmem:[%s6530 + $0x20] sm:$0xf]
    %v6540 = vld [vmem:[%s6530 + $0x24] sm:$0xf]
    %v6541 = vld [vmem:[%s6530 + $0x28] sm:$0xf]
    %v6542 = vld [vmem:[%s6530 + $0x2c] sm:$0xf]
    %v6543 = vld [vmem:[%s6530 + $0x30] sm:$0xf]
    %v6544 = vld [vmem:[%s6530 + $0x34] sm:$0xf]
    %v6545 = vld [vmem:[%s6530 + $0x38] sm:$0xf]
    %v6546 = vld [vmem:[%s6530 + $0x3c] sm:$0xf]
    %v6563 = vunpack.c.l.b16 %v6531
    %v6564 = vunpack.c.l.b16 %v6532
    %v6565 = vunpack.c.l.b16 %v6533
    %v6566 = vunpack.c.l.b16 %v6534
    %v6567 = vunpack.c.l.b16 %v6535
    %v6568 = vunpack.c.l.b16 %v6536
    %v6569 = vunpack.c.l.b16 %v6537
    %v6570 = vunpack.c.l.b16 %v6538
    %v6571 = vunpack.c.l.b16 %v6539
    %v6572 = vunpack.c.l.b16 %v6540
    %v6573 = vunpack.c.l.b16 %v6541
    %v6574 = vunpack.c.l.b16 %v6542
    %v6575 = vunpack.c.l.b16 %v6543
    %v6576 = vunpack.c.l.b16 %v6544
    %v6577 = vunpack.c.l.b16 %v6545
    %v6578 = vunpack.c.l.b16 %v6546
    %v6579 = vpack.c.b16 %v6564, %v6563
    %v6580 = vpack.c.b16 %v6566, %v6565
    %v6581 = vpack.c.b16 %v6568, %v6567
    %v6582 = vpack.c.b16 %v6570, %v6569
    %v6583 = vpack.c.b16 %v6572, %v6571
    %v6584 = vpack.c.b16 %v6574, %v6573
    %v6585 = vpack.c.b16 %v6576, %v6575
    %v6586 = vpack.c.b16 %v6578, %v6577
    %6595 = vmatprep.subr.bf16.mxu0 0
    %6596 = vmatpush1.bf16.msra.mxu0 %v6586
    %6597 = vmatprep.subr.bf16.mxu0 0
    %6598 = vmatpush1.bf16.msra.mxu0 %v6585
    %6599 = vmatprep.subr.bf16.mxu0 0
    %6600 = vmatpush1.bf16.msra.mxu0 %v6584
    %6601 = vmatprep.subr.bf16.mxu0 0
    %6602 = vmatpush1.bf16.msra.mxu0 %v6583
    %6603 = vmatprep.subr.bf16.mxu0 0
    %6604 = vmatpush1.bf16.msra.mxu0 %v6582
    %6605 = vmatprep.subr.bf16.mxu0 0
    %6606 = vmatpush1.bf16.msra.mxu0 %v6581
    %6607 = vmatprep.subr.bf16.mxu0 0
    %6608 = vmatpush1.bf16.msra.mxu0 %v6580
    %6609 = vmatprep.subr.bf16.mxu0 0
    %6610 = vmatpush1.bf16.msra.mxu0 %v6579
    %6611 = vmatprep.subr.bf16.mxu0 0
    %6612 = vmatpush2.bf16.msra.mxu0 0
    %6613 = vmatprep.subr.bf16.mxu0 0
    %6614 = vmatpush2.bf16.msra.mxu0 0
    %6615 = vmatprep.subr.bf16.mxu0 0
    %6616 = vmatpush2.bf16.msra.mxu0 0
    %6617 = vmatprep.subr.bf16.mxu0 0
    %6618 = vmatpush2.bf16.msra.mxu0 0
    %6619 = vmatprep.subr.bf16.mxu0 0
    %6620 = vmatpush2.bf16.msra.mxu0 0
    %6621 = vmatprep.subr.bf16.mxu0 0
    %6622 = vmatpush2.bf16.msra.mxu0 0
    %6623 = vmatprep.subr.bf16.mxu0 0
    %6624 = vmatpush2.bf16.msra.mxu0 0
    %6625 = vmatprep.subr.bf16.mxu0 0
    %6626 = vmatpush2.bf16.msra.mxu0 0
    %6627 = vmatprep.mubr.bf16.mxu0 0
    %6628 = vmatmul.mubr.bf16.gmra.mxu0 %v6528
    %v6629 = vpop.f32.mrf.mxu0
    %v6630 = vadd.f32 0.0, %v6629
    %v6631 = vpop.f32.mrf.mxu0
    %v6632 = vpop.f32.mrf.mxu0
    %v6633 = vadd.f32 0.0, %v6632
    %v6634 = vpop.f32.mrf.mxu0
    %6635 = vmatprep.mubr.bf16.mxu0 0
    %6636 = vmatmul.mubr.bf16.gmra.mxu0 %v6529
    %v6637 = vpop.f32.mrf.mxu0
    %v6638 = vadd.f32 0.0, %v6637
    %v6639 = vpop.f32.mrf.mxu0
    %v6640 = vpop.f32.mrf.mxu0
    %v6641 = vadd.f32 0.0, %v6640
    %v6642 = vpop.f32.mrf.mxu0
    %6643 = vdwg.mxu0
    %v6660 = vunpack.c.l.b16 %v6512
    %v6661 = vunpack.c.l.b16 %v6513
    %v6662 = vunpack.c.l.b16 %v6514
    %v6663 = vunpack.c.l.b16 %v6515
    %v6664 = vunpack.c.l.b16 %v6516
    %v6665 = vunpack.c.l.b16 %v6517
    %v6666 = vunpack.c.l.b16 %v6518
    %v6667 = vunpack.c.l.b16 %v6519
    %v6668 = vunpack.c.l.b16 %v6520
    %v6669 = vunpack.c.l.b16 %v6521
    %v6670 = vunpack.c.l.b16 %v6522
    %v6671 = vunpack.c.l.b16 %v6523
    %v6672 = vunpack.c.l.b16 %v6524
    %v6673 = vunpack.c.l.b16 %v6525
    %v6674 = vunpack.c.l.b16 %v6526
    %v6675 = vunpack.c.l.b16 %v6527
    %v6676 = vpack.c.b16 %v6661, %v6660
    %v6677 = vpack.c.b16 %v6663, %v6662
    %v6678 = vpack.c.b16 %v6665, %v6664
    %v6679 = vpack.c.b16 %v6667, %v6666
    %v6680 = vpack.c.b16 %v6669, %v6668
    %v6681 = vpack.c.b16 %v6671, %v6670
    %v6682 = vpack.c.b16 %v6673, %v6672
    %v6683 = vpack.c.b16 %v6675, %v6674
    %6692 = vmatprep.subr.bf16.mxu0 0
    %6693 = vmatpush1.bf16.msra.mxu0 %v6683
    %6694 = vmatprep.subr.bf16.mxu0 0
    %6695 = vmatpush1.bf16.msra.mxu0 %v6682
    %6696 = vmatprep.subr.bf16.mxu0 0
    %6697 = vmatpush1.bf16.msra.mxu0 %v6681
    %6698 = vmatprep.subr.bf16.mxu0 0
    %6699 = vmatpush1.bf16.msra.mxu0 %v6680
    %6700 = vmatprep.subr.bf16.mxu0 0
    %6701 = vmatpush1.bf16.msra.mxu0 %v6679
    %6702 = vmatprep.subr.bf16.mxu0 0
    %6703 = vmatpush1.bf16.msra.mxu0 %v6678
    %6704 = vmatprep.subr.bf16.mxu0 0
    %6705 = vmatpush1.bf16.msra.mxu0 %v6677
    %6706 = vmatprep.subr.bf16.mxu0 0
    %6707 = vmatpush1.bf16.msra.mxu0 %v6676
    %6708 = vmatprep.subr.bf16.mxu0 0
    %6709 = vmatpush2.bf16.msra.mxu0 0
    %6710 = vmatprep.subr.bf16.mxu0 0
    %6711 = vmatpush2.bf16.msra.mxu0 0
    %6712 = vmatprep.subr.bf16.mxu0 0
    %6713 = vmatpush2.bf16.msra.mxu0 0
    %6714 = vmatprep.subr.bf16.mxu0 0
    %6715 = vmatpush2.bf16.msra.mxu0 0
    %6716 = vmatprep.subr.bf16.mxu0 0
    %6717 = vmatpush2.bf16.msra.mxu0 0
    %6718 = vmatprep.subr.bf16.mxu0 0
    %6719 = vmatpush2.bf16.msra.mxu0 0
    %6720 = vmatprep.subr.bf16.mxu0 0
    %6721 = vmatpush2.bf16.msra.mxu0 0
    %6722 = vmatprep.subr.bf16.mxu0 0
    %6723 = vmatpush2.bf16.msra.mxu0 0
    %6724 = vmatprep.mubr.bf16.mxu0 0
    %6725 = vmatmul.mubr.bf16.gmra.mxu0 %v6510
    %v6726 = vpop.f32.mrf.mxu0
    %v6727 = vadd.f32 %v6630, %v6726
    %v6728 = vpop.f32.mrf.mxu0
    %v6729 = vpop.f32.mrf.mxu0
    %v6730 = vadd.f32 %v6633, %v6729
    %v6731 = vpop.f32.mrf.mxu0
    %6732 = vmatprep.mubr.bf16.mxu0 0
    %6733 = vmatmul.mubr.bf16.gmra.mxu0 %v6511
    %v6734 = vpop.f32.mrf.mxu0
    %v6735 = vadd.f32 %v6638, %v6734
    %v6736 = vpop.f32.mrf.mxu0
    %v6737 = vpop.f32.mrf.mxu0
    %v6738 = vadd.f32 %v6641, %v6737
    %v6739 = vpop.f32.mrf.mxu0
    %6740 = vdwg.mxu0
    %v6741 = vpack.c.bf16 %v6507, %v6506
    %v6742 = vpack.c.bf16 %v6509, %v6508
    %s6743 = scalar_lea.vmem %s43, 128
    %v6744 = vld [vmem:[%s6743] sm:$0xf]
    %v6745 = vld [vmem:[%s6743 + $0x4] sm:$0xf]
    %v6746 = vld [vmem:[%s6743 + $0x8] sm:$0xf]
    %v6747 = vld [vmem:[%s6743 + $0xc] sm:$0xf]
    %v6748 = vld [vmem:[%s6743 + $0x10] sm:$0xf]
    %v6749 = vld [vmem:[%s6743 + $0x14] sm:$0xf]
    %v6750 = vld [vmem:[%s6743 + $0x18] sm:$0xf]
    %v6751 = vld [vmem:[%s6743 + $0x1c] sm:$0xf]
    %v6752 = vld [vmem:[%s6743 + $0x20] sm:$0xf]
    %v6753 = vld [vmem:[%s6743 + $0x24] sm:$0xf]
    %v6754 = vld [vmem:[%s6743 + $0x28] sm:$0xf]
    %v6755 = vld [vmem:[%s6743 + $0x2c] sm:$0xf]
    %v6756 = vld [vmem:[%s6743 + $0x30] sm:$0xf]
    %v6757 = vld [vmem:[%s6743 + $0x34] sm:$0xf]
    %v6758 = vld [vmem:[%s6743 + $0x38] sm:$0xf]
    %v6759 = vld [vmem:[%s6743 + $0x3c] sm:$0xf]
    %v6776 = vunpack.c.l.b16 %v6744
    %v6777 = vunpack.c.l.b16 %v6745
    %v6778 = vunpack.c.l.b16 %v6746
    %v6779 = vunpack.c.l.b16 %v6747
    %v6780 = vunpack.c.l.b16 %v6748
    %v6781 = vunpack.c.l.b16 %v6749
    %v6782 = vunpack.c.l.b16 %v6750
    %v6783 = vunpack.c.l.b16 %v6751
    %v6784 = vunpack.c.l.b16 %v6752
    %v6785 = vunpack.c.l.b16 %v6753
    %v6786 = vunpack.c.l.b16 %v6754
    %v6787 = vunpack.c.l.b16 %v6755
    %v6788 = vunpack.c.l.b16 %v6756
    %v6789 = vunpack.c.l.b16 %v6757
    %v6790 = vunpack.c.l.b16 %v6758
    %v6791 = vunpack.c.l.b16 %v6759
    %v6792 = vpack.c.b16 %v6777, %v6776
    %v6793 = vpack.c.b16 %v6779, %v6778
    %v6794 = vpack.c.b16 %v6781, %v6780
    %v6795 = vpack.c.b16 %v6783, %v6782
    %v6796 = vpack.c.b16 %v6785, %v6784
    %v6797 = vpack.c.b16 %v6787, %v6786
    %v6798 = vpack.c.b16 %v6789, %v6788
    %v6799 = vpack.c.b16 %v6791, %v6790
    %6808 = vmatprep.subr.bf16.mxu0 0
    %6809 = vmatpush1.bf16.msra.mxu0 %v6799
    %6810 = vmatprep.subr.bf16.mxu0 0
    %6811 = vmatpush1.bf16.msra.mxu0 %v6798
    %6812 = vmatprep.subr.bf16.mxu0 0
    %6813 = vmatpush1.bf16.msra.mxu0 %v6797
    %6814 = vmatprep.subr.bf16.mxu0 0
    %6815 = vmatpush1.bf16.msra.mxu0 %v6796
    %6816 = vmatprep.subr.bf16.mxu0 0
    %6817 = vmatpush1.bf16.msra.mxu0 %v6795
    %6818 = vmatprep.subr.bf16.mxu0 0
    %6819 = vmatpush1.bf16.msra.mxu0 %v6794
    %6820 = vmatprep.subr.bf16.mxu0 0
    %6821 = vmatpush1.bf16.msra.mxu0 %v6793
    %6822 = vmatprep.subr.bf16.mxu0 0
    %6823 = vmatpush1.bf16.msra.mxu0 %v6792
    %6824 = vmatprep.subr.bf16.mxu0 0
    %6825 = vmatpush2.bf16.msra.mxu0 0
    %6826 = vmatprep.subr.bf16.mxu0 0
    %6827 = vmatpush2.bf16.msra.mxu0 0
    %6828 = vmatprep.subr.bf16.mxu0 0
    %6829 = vmatpush2.bf16.msra.mxu0 0
    %6830 = vmatprep.subr.bf16.mxu0 0
    %6831 = vmatpush2.bf16.msra.mxu0 0
    %6832 = vmatprep.subr.bf16.mxu0 0
    %6833 = vmatpush2.bf16.msra.mxu0 0
    %6834 = vmatprep.subr.bf16.mxu0 0
    %6835 = vmatpush2.bf16.msra.mxu0 0
    %6836 = vmatprep.subr.bf16.mxu0 0
    %6837 = vmatpush2.bf16.msra.mxu0 0
    %6838 = vmatprep.subr.bf16.mxu0 0
    %6839 = vmatpush2.bf16.msra.mxu0 0
    %6840 = vmatprep.mubr.bf16.mxu0 0
    %6841 = vmatmul.mubr.bf16.gmra.mxu0 %v6741
    %v6842 = vpop.f32.mrf.mxu0
    %v6843 = vadd.f32 0.0, %v6842
    %v6844 = vpop.f32.mrf.mxu0
    %v6845 = vpop.f32.mrf.mxu0
    %v6846 = vadd.f32 0.0, %v6845
    %v6847 = vpop.f32.mrf.mxu0
    %6848 = vmatprep.mubr.bf16.mxu0 0
    %6849 = vmatmul.mubr.bf16.gmra.mxu0 %v6742
    %v6850 = vpop.f32.mrf.mxu0
    %v6851 = vadd.f32 0.0, %v6850
    %v6852 = vpop.f32.mrf.mxu0
    %v6853 = vpop.f32.mrf.mxu0
    %v6854 = vadd.f32 0.0, %v6853
    %v6855 = vpop.f32.mrf.mxu0
    %6856 = vdwg.mxu0
    %v6857 = vadd.f32 %v6727, %v6843
    %v6858 = vadd.f32 %v6730, %v6846
    %v6859 = vadd.f32 %v6735, %v6851
    %v6860 = vadd.f32 %v6738, %v6854
    %v6861 = vld [vmem:[%s45] sm:$0x1]
    %v6863 = vlaneseq
    %v6864 = vshrl.u32 %v6863, 7
    %v6865 = vsub.s32 0, %v6864
    %v6866 = vrot.slane %v6861, %v6865
    %v6868 = vadd.f32 %v6857, %v6866
    %v6869 = vadd.f32 %v6858, %v6866
    %v6870 = vadd.f32 %v6859, %v6866
    %v6871 = vadd.f32 %v6860, %v6866
    %v6872 = vadd.f32 %v6088, %v6868
    %v6873 = vadd.f32 %v6089, %v6869
    %v6874 = vadd.f32 %v6090, %v6870
    %v6875 = vadd.f32 %v6091, %v6871
    %v6876 = vrot.slane %v6872, 7
    %v6877 = vrot.slane %v6873, 7
    %v6878 = vrot.slane %v6874, 7
    %v6879 = vrot.slane %v6875, 7
    %v6880 = vsel %vm642, %v6878, %v6879
    %v6881 = vsel %vm642, %v6877, %v6878
    %v6882 = vsel %vm642, %v6876, %v6877
    %v6883 = vsel %vm642, %v6879, %v6876
    %v6884 = vsel %vm5304, 0.0, %v6883
    %v6885 = vsel %vm5305, 0.0, %v6882
    %v6886 = vsel %vm5306, 0.0, %v6881
    %v6887 = vsel %vm5307, 0.0, %v6880
    %v6888 = vrot.slane %v6872, 1
    %v6889 = vrot.slane %v6873, 1
    %v6890 = vrot.slane %v6874, 1
    %v6891 = vrot.slane %v6875, 1
    %v6892 = vsel %vm707, %v6890, %v6891
    %v6893 = vsel %vm707, %v6889, %v6890
    %v6894 = vsel %vm707, %v6888, %v6889
    %v6895 = vsel %vm707, %v6891, %v6888
    %v6896 = vsel %vm5320, 0.0, %v6894
    %v6897 = vsel %vm5321, 0.0, %v6893
    %v6898 = vsel %vm5322, 0.0, %v6892
    %v6899 = vsel %vm5323, 0.0, %v6895
    %v6900 = vpack.c.bf16 %v6885, %v6884
    %v6901 = vpack.c.bf16 %v6887, %v6886
    %v6902 = vld [vmem:[%s51] sm:$0xf]
    %v6903 = vld [vmem:[%s51 + $0x4] sm:$0xf]
    %v6904 = vld [vmem:[%s51 + $0x8] sm:$0xf]
    %v6905 = vld [vmem:[%s51 + $0xc] sm:$0xf]
    %v6906 = vld [vmem:[%s51 + $0x10] sm:$0xf]
    %v6907 = vld [vmem:[%s51 + $0x14] sm:$0xf]
    %v6908 = vld [vmem:[%s51 + $0x18] sm:$0xf]
    %v6909 = vld [vmem:[%s51 + $0x1c] sm:$0xf]
    %v6910 = vld [vmem:[%s51 + $0x20] sm:$0xf]
    %v6911 = vld [vmem:[%s51 + $0x24] sm:$0xf]
    %v6912 = vld [vmem:[%s51 + $0x28] sm:$0xf]
    %v6913 = vld [vmem:[%s51 + $0x2c] sm:$0xf]
    %v6914 = vld [vmem:[%s51 + $0x30] sm:$0xf]
    %v6915 = vld [vmem:[%s51 + $0x34] sm:$0xf]
    %v6916 = vld [vmem:[%s51 + $0x38] sm:$0xf]
    %v6917 = vld [vmem:[%s51 + $0x3c] sm:$0xf]
    %v6918 = vpack.c.bf16 %v6873, %v6872
    %v6919 = vpack.c.bf16 %v6875, %v6874
    %s6920 = scalar_lea.vmem %s51, 64
    %v6921 = vld [vmem:[%s6920] sm:$0xf]
    %v6922 = vld [vmem:[%s6920 + $0x4] sm:$0xf]
    %v6923 = vld [vmem:[%s6920 + $0x8] sm:$0xf]
    %v6924 = vld [vmem:[%s6920 + $0xc] sm:$0xf]
    %v6925 = vld [vmem:[%s6920 + $0x10] sm:$0xf]
    %v6926 = vld [vmem:[%s6920 + $0x14] sm:$0xf]
    %v6927 = vld [vmem:[%s6920 + $0x18] sm:$0xf]
    %v6928 = vld [vmem:[%s6920 + $0x1c] sm:$0xf]
    %v6929 = vld [vmem:[%s6920 + $0x20] sm:$0xf]
    %v6930 = vld [vmem:[%s6920 + $0x24] sm:$0xf]
    %v6931 = vld [vmem:[%s6920 + $0x28] sm:$0xf]
    %v6932 = vld [vmem:[%s6920 + $0x2c] sm:$0xf]
    %v6933 = vld [vmem:[%s6920 + $0x30] sm:$0xf]
    %v6934 = vld [vmem:[%s6920 + $0x34] sm:$0xf]
    %v6935 = vld [vmem:[%s6920 + $0x38] sm:$0xf]
    %v6936 = vld [vmem:[%s6920 + $0x3c] sm:$0xf]
    %v6953 = vunpack.c.l.b16 %v6921
    %v6954 = vunpack.c.l.b16 %v6922
    %v6955 = vunpack.c.l.b16 %v6923
    %v6956 = vunpack.c.l.b16 %v6924
    %v6957 = vunpack.c.l.b16 %v6925
    %v6958 = vunpack.c.l.b16 %v6926
    %v6959 = vunpack.c.l.b16 %v6927
    %v6960 = vunpack.c.l.b16 %v6928
    %v6961 = vunpack.c.l.b16 %v6929
    %v6962 = vunpack.c.l.b16 %v6930
    %v6963 = vunpack.c.l.b16 %v6931
    %v6964 = vunpack.c.l.b16 %v6932
    %v6965 = vunpack.c.l.b16 %v6933
    %v6966 = vunpack.c.l.b16 %v6934
    %v6967 = vunpack.c.l.b16 %v6935
    %v6968 = vunpack.c.l.b16 %v6936
    %v6969 = vpack.c.b16 %v6954, %v6953
    %v6970 = vpack.c.b16 %v6956, %v6955
    %v6971 = vpack.c.b16 %v6958, %v6957
    %v6972 = vpack.c.b16 %v6960, %v6959
    %v6973 = vpack.c.b16 %v6962, %v6961
    %v6974 = vpack.c.b16 %v6964, %v6963
    %v6975 = vpack.c.b16 %v6966, %v6965
    %v6976 = vpack.c.b16 %v6968, %v6967
    %6985 = vmatprep.subr.bf16.mxu0 0
    %6986 = vmatpush1.bf16.msra.mxu0 %v6976
    %6987 = vmatprep.subr.bf16.mxu0 0
    %6988 = vmatpush1.bf16.msra.mxu0 %v6975
    %6989 = vmatprep.subr.bf16.mxu0 0
    %6990 = vmatpush1.bf16.msra.mxu0 %v6974
    %6991 = vmatprep.subr.bf16.mxu0 0
    %6992 = vmatpush1.bf16.msra.mxu0 %v6973
    %6993 = vmatprep.subr.bf16.mxu0 0
    %6994 = vmatpush1.bf16.msra.mxu0 %v6972
    %6995 = vmatprep.subr.bf16.mxu0 0
    %6996 = vmatpush1.bf16.msra.mxu0 %v6971
    %6997 = vmatprep.subr.bf16.mxu0 0
    %6998 = vmatpush1.bf16.msra.mxu0 %v6970
    %6999 = vmatprep.subr.bf16.mxu0 0
    %7000 = vmatpush1.bf16.msra.mxu0 %v6969
    %7001 = vmatprep.subr.bf16.mxu0 0
    %7002 = vmatpush2.bf16.msra.mxu0 0
    %7003 = vmatprep.subr.bf16.mxu0 0
    %7004 = vmatpush2.bf16.msra.mxu0 0
    %7005 = vmatprep.subr.bf16.mxu0 0
    %7006 = vmatpush2.bf16.msra.mxu0 0
    %7007 = vmatprep.subr.bf16.mxu0 0
    %7008 = vmatpush2.bf16.msra.mxu0 0
    %7009 = vmatprep.subr.bf16.mxu0 0
    %7010 = vmatpush2.bf16.msra.mxu0 0
    %7011 = vmatprep.subr.bf16.mxu0 0
    %7012 = vmatpush2.bf16.msra.mxu0 0
    %7013 = vmatprep.subr.bf16.mxu0 0
    %7014 = vmatpush2.bf16.msra.mxu0 0
    %7015 = vmatprep.subr.bf16.mxu0 0
    %7016 = vmatpush2.bf16.msra.mxu0 0
    %7017 = vmatprep.mubr.bf16.mxu0 0
    %7018 = vmatmul.mubr.bf16.gmra.mxu0 %v6918
    %v7019 = vpop.f32.mrf.mxu0
    %v7020 = vadd.f32 0.0, %v7019
    %v7021 = vpop.f32.mrf.mxu0
    %v7022 = vpop.f32.mrf.mxu0
    %v7023 = vadd.f32 0.0, %v7022
    %v7024 = vpop.f32.mrf.mxu0
    %7025 = vmatprep.mubr.bf16.mxu0 0
    %7026 = vmatmul.mubr.bf16.gmra.mxu0 %v6919
    %v7027 = vpop.f32.mrf.mxu0
    %v7028 = vadd.f32 0.0, %v7027
    %v7029 = vpop.f32.mrf.mxu0
    %v7030 = vpop.f32.mrf.mxu0
    %v7031 = vadd.f32 0.0, %v7030
    %v7032 = vpop.f32.mrf.mxu0
    %7033 = vdwg.mxu0
    %v7050 = vunpack.c.l.b16 %v6902
    %v7051 = vunpack.c.l.b16 %v6903
    %v7052 = vunpack.c.l.b16 %v6904
    %v7053 = vunpack.c.l.b16 %v6905
    %v7054 = vunpack.c.l.b16 %v6906
    %v7055 = vunpack.c.l.b16 %v6907
    %v7056 = vunpack.c.l.b16 %v6908
    %v7057 = vunpack.c.l.b16 %v6909
    %v7058 = vunpack.c.l.b16 %v6910
    %v7059 = vunpack.c.l.b16 %v6911
    %v7060 = vunpack.c.l.b16 %v6912
    %v7061 = vunpack.c.l.b16 %v6913
    %v7062 = vunpack.c.l.b16 %v6914
    %v7063 = vunpack.c.l.b16 %v6915
    %v7064 = vunpack.c.l.b16 %v6916
    %v7065 = vunpack.c.l.b16 %v6917
    %v7066 = vpack.c.b16 %v7051, %v7050
    %v7067 = vpack.c.b16 %v7053, %v7052
    %v7068 = vpack.c.b16 %v7055, %v7054
    %v7069 = vpack.c.b16 %v7057, %v7056
    %v7070 = vpack.c.b16 %v7059, %v7058
    %v7071 = vpack.c.b16 %v7061, %v7060
    %v7072 = vpack.c.b16 %v7063, %v7062
    %v7073 = vpack.c.b16 %v7065, %v7064
    %7082 = vmatprep.subr.bf16.mxu0 0
    %7083 = vmatpush1.bf16.msra.mxu0 %v7073
    %7084 = vmatprep.subr.bf16.mxu0 0
    %7085 = vmatpush1.bf16.msra.mxu0 %v7072
    %7086 = vmatprep.subr.bf16.mxu0 0
    %7087 = vmatpush1.bf16.msra.mxu0 %v7071
    %7088 = vmatprep.subr.bf16.mxu0 0
    %7089 = vmatpush1.bf16.msra.mxu0 %v7070
    %7090 = vmatprep.subr.bf16.mxu0 0
    %7091 = vmatpush1.bf16.msra.mxu0 %v7069
    %7092 = vmatprep.subr.bf16.mxu0 0
    %7093 = vmatpush1.bf16.msra.mxu0 %v7068
    %7094 = vmatprep.subr.bf16.mxu0 0
    %7095 = vmatpush1.bf16.msra.mxu0 %v7067
    %7096 = vmatprep.subr.bf16.mxu0 0
    %7097 = vmatpush1.bf16.msra.mxu0 %v7066
    %7098 = vmatprep.subr.bf16.mxu0 0
    %7099 = vmatpush2.bf16.msra.mxu0 0
    %7100 = vmatprep.subr.bf16.mxu0 0
    %7101 = vmatpush2.bf16.msra.mxu0 0
    %7102 = vmatprep.subr.bf16.mxu0 0
    %7103 = vmatpush2.bf16.msra.mxu0 0
    %7104 = vmatprep.subr.bf16.mxu0 0
    %7105 = vmatpush2.bf16.msra.mxu0 0
    %7106 = vmatprep.subr.bf16.mxu0 0
    %7107 = vmatpush2.bf16.msra.mxu0 0
    %7108 = vmatprep.subr.bf16.mxu0 0
    %7109 = vmatpush2.bf16.msra.mxu0 0
    %7110 = vmatprep.subr.bf16.mxu0 0
    %7111 = vmatpush2.bf16.msra.mxu0 0
    %7112 = vmatprep.subr.bf16.mxu0 0
    %7113 = vmatpush2.bf16.msra.mxu0 0
    %7114 = vmatprep.mubr.bf16.mxu0 0
    %7115 = vmatmul.mubr.bf16.gmra.mxu0 %v6900
    %v7116 = vpop.f32.mrf.mxu0
    %v7117 = vadd.f32 %v7020, %v7116
    %v7118 = vpop.f32.mrf.mxu0
    %v7119 = vpop.f32.mrf.mxu0
    %v7120 = vadd.f32 %v7023, %v7119
    %v7121 = vpop.f32.mrf.mxu0
    %7122 = vmatprep.mubr.bf16.mxu0 0
    %7123 = vmatmul.mubr.bf16.gmra.mxu0 %v6901
    %v7124 = vpop.f32.mrf.mxu0
    %v7125 = vadd.f32 %v7028, %v7124
    %v7126 = vpop.f32.mrf.mxu0
    %v7127 = vpop.f32.mrf.mxu0
    %v7128 = vadd.f32 %v7031, %v7127
    %v7129 = vpop.f32.mrf.mxu0
    %7130 = vdwg.mxu0
    %v7131 = vpack.c.bf16 %v6897, %v6896
    %v7132 = vpack.c.bf16 %v6899, %v6898
    %s7133 = scalar_lea.vmem %s51, 128
    %v7134 = vld [vmem:[%s7133] sm:$0xf]
    %v7135 = vld [vmem:[%s7133 + $0x4] sm:$0xf]
    %v7136 = vld [vmem:[%s7133 + $0x8] sm:$0xf]
    %v7137 = vld [vmem:[%s7133 + $0xc] sm:$0xf]
    %v7138 = vld [vmem:[%s7133 + $0x10] sm:$0xf]
    %v7139 = vld [vmem:[%s7133 + $0x14] sm:$0xf]
    %v7140 = vld [vmem:[%s7133 + $0x18] sm:$0xf]
    %v7141 = vld [vmem:[%s7133 + $0x1c] sm:$0xf]
    %v7142 = vld [vmem:[%s7133 + $0x20] sm:$0xf]
    %v7143 = vld [vmem:[%s7133 + $0x24] sm:$0xf]
    %v7144 = vld [vmem:[%s7133 + $0x28] sm:$0xf]
    %v7145 = vld [vmem:[%s7133 + $0x2c] sm:$0xf]
    %v7146 = vld [vmem:[%s7133 + $0x30] sm:$0xf]
    %v7147 = vld [vmem:[%s7133 + $0x34] sm:$0xf]
    %v7148 = vld [vmem:[%s7133 + $0x38] sm:$0xf]
    %v7149 = vld [vmem:[%s7133 + $0x3c] sm:$0xf]
    %v7166 = vunpack.c.l.b16 %v7134
    %v7167 = vunpack.c.l.b16 %v7135
    %v7168 = vunpack.c.l.b16 %v7136
    %v7169 = vunpack.c.l.b16 %v7137
    %v7170 = vunpack.c.l.b16 %v7138
    %v7171 = vunpack.c.l.b16 %v7139
    %v7172 = vunpack.c.l.b16 %v7140
    %v7173 = vunpack.c.l.b16 %v7141
    %v7174 = vunpack.c.l.b16 %v7142
    %v7175 = vunpack.c.l.b16 %v7143
    %v7176 = vunpack.c.l.b16 %v7144
    %v7177 = vunpack.c.l.b16 %v7145
    %v7178 = vunpack.c.l.b16 %v7146
    %v7179 = vunpack.c.l.b16 %v7147
    %v7180 = vunpack.c.l.b16 %v7148
    %v7181 = vunpack.c.l.b16 %v7149
    %v7182 = vpack.c.b16 %v7167, %v7166
    %v7183 = vpack.c.b16 %v7169, %v7168
    %v7184 = vpack.c.b16 %v7171, %v7170
    %v7185 = vpack.c.b16 %v7173, %v7172
    %v7186 = vpack.c.b16 %v7175, %v7174
    %v7187 = vpack.c.b16 %v7177, %v7176
    %v7188 = vpack.c.b16 %v7179, %v7178
    %v7189 = vpack.c.b16 %v7181, %v7180
    %7198 = vmatprep.subr.bf16.mxu0 0
    %7199 = vmatpush1.bf16.msra.mxu0 %v7189
    %7200 = vmatprep.subr.bf16.mxu0 0
    %7201 = vmatpush1.bf16.msra.mxu0 %v7188
    %7202 = vmatprep.subr.bf16.mxu0 0
    %7203 = vmatpush1.bf16.msra.mxu0 %v7187
    %7204 = vmatprep.subr.bf16.mxu0 0
    %7205 = vmatpush1.bf16.msra.mxu0 %v7186
    %7206 = vmatprep.subr.bf16.mxu0 0
    %7207 = vmatpush1.bf16.msra.mxu0 %v7185
    %7208 = vmatprep.subr.bf16.mxu0 0
    %7209 = vmatpush1.bf16.msra.mxu0 %v7184
    %7210 = vmatprep.subr.bf16.mxu0 0
    %7211 = vmatpush1.bf16.msra.mxu0 %v7183
    %7212 = vmatprep.subr.bf16.mxu0 0
    %7213 = vmatpush1.bf16.msra.mxu0 %v7182
    %7214 = vmatprep.subr.bf16.mxu0 0
    %7215 = vmatpush2.bf16.msra.mxu0 0
    %7216 = vmatprep.subr.bf16.mxu0 0
    %7217 = vmatpush2.bf16.msra.mxu0 0
    %7218 = vmatprep.subr.bf16.mxu0 0
    %7219 = vmatpush2.bf16.msra.mxu0 0
    %7220 = vmatprep.subr.bf16.mxu0 0
    %7221 = vmatpush2.bf16.msra.mxu0 0
    %7222 = vmatprep.subr.bf16.mxu0 0
    %7223 = vmatpush2.bf16.msra.mxu0 0
    %7224 = vmatprep.subr.bf16.mxu0 0
    %7225 = vmatpush2.bf16.msra.mxu0 0
    %7226 = vmatprep.subr.bf16.mxu0 0
    %7227 = vmatpush2.bf16.msra.mxu0 0
    %7228 = vmatprep.subr.bf16.mxu0 0
    %7229 = vmatpush2.bf16.msra.mxu0 0
    %7230 = vmatprep.mubr.bf16.mxu0 0
    %7231 = vmatmul.mubr.bf16.gmra.mxu0 %v7131
    %v7232 = vpop.f32.mrf.mxu0
    %v7233 = vadd.f32 0.0, %v7232
    %v7234 = vpop.f32.mrf.mxu0
    %v7235 = vpop.f32.mrf.mxu0
    %v7236 = vadd.f32 0.0, %v7235
    %v7237 = vpop.f32.mrf.mxu0
    %7238 = vmatprep.mubr.bf16.mxu0 0
    %7239 = vmatmul.mubr.bf16.gmra.mxu0 %v7132
    %v7240 = vpop.f32.mrf.mxu0
    %v7241 = vadd.f32 0.0, %v7240
    %v7242 = vpop.f32.mrf.mxu0
    %v7243 = vpop.f32.mrf.mxu0
    %v7244 = vadd.f32 0.0, %v7243
    %v7245 = vpop.f32.mrf.mxu0
    %7246 = vdwg.mxu0
    %v7247 = vadd.f32 %v7117, %v7233
    %v7248 = vadd.f32 %v7120, %v7236
    %v7249 = vadd.f32 %v7125, %v7241
    %v7250 = vadd.f32 %v7128, %v7244
    %v7251 = vld [vmem:[%s53] sm:$0x1]
    %v7253 = vlaneseq
    %v7254 = vshrl.u32 %v7253, 7
    %v7255 = vsub.s32 0, %v7254
    %v7256 = vrot.slane %v7251, %v7255
    %v7258 = vadd.f32 %v7247, %v7256
    %v7259 = vadd.f32 %v7248, %v7256
    %v7260 = vadd.f32 %v7249, %v7256
    %v7261 = vadd.f32 %v7250, %v7256
    %v7262 = vrot.slane %v7258, 7
    %v7263 = vrot.slane %v7259, 7
    %v7264 = vrot.slane %v7260, 7
    %v7265 = vrot.slane %v7261, 7
    %v7266 = vsel %vm642, %v7264, %v7265
    %v7267 = vsel %vm642, %v7263, %v7264
    %v7268 = vsel %vm642, %v7262, %v7263
    %v7269 = vsel %vm642, %v7265, %v7262
    %v7270 = vsel %vm5304, -inf, %v7269
    %v7271 = vsel %vm5305, -inf, %v7268
    %v7272 = vsel %vm5306, -inf, %v7267
    %v7273 = vsel %vm5307, -inf, %v7266
    %v7274 = vrot.slane %v7258, 1
    %v7275 = vrot.slane %v7259, 1
    %v7276 = vrot.slane %v7260, 1
    %v7277 = vrot.slane %v7261, 1
    %v7278 = vsel %vm707, %v7276, %v7277
    %v7279 = vsel %vm707, %v7275, %v7276
    %v7280 = vsel %vm707, %v7274, %v7275
    %v7281 = vsel %vm707, %v7277, %v7274
    %v7282 = vsel %vm5320, -inf, %v7280
    %v7283 = vsel %vm5321, -inf, %v7279
    %v7284 = vsel %vm5322, -inf, %v7278
    %v7285 = vsel %vm5323, -inf, %v7281
    %v7286 = vmax.f32 %v7270, %v7258
    %v7287 = vmax.f32 %v7271, %v7259
    %v7288 = vmax.f32 %v7272, %v7260
    %v7289 = vmax.f32 %v7273, %v7261
    %v7290 = vmax.f32 %v7286, %v7282
    %v7291 = vmax.f32 %v7287, %v7283
    %v7292 = vmax.f32 %v7288, %v7284
    %v7293 = vmax.f32 %v7289, %v7285
    %v7294 = vld [vmem:[%s71] sm:$0xf]
    %v7295 = vld [vmem:[%s71 + $0x4] sm:$0xf]
    %v7296 = vpack.c.bf16 %v7291, %v7290
    %v7297 = vpack.c.bf16 %v7293, %v7292
    %v7300 = vunpack.c.l.b16 %v7294
    %v7301 = vunpack.c.l.b16 %v7295
    %v7302 = vpack.c.b16 %v7301, %v7300
    %vm7303 = vcmask 261120
    %v7305 = vsel %vm7303, %v7302, 0
    %7307 = vmatprep.subr.bf16.mxu0 0
    %7308 = vmatpush1.bf16.msra.mxu0 0
    %7309 = vmatprep.subr.bf16.mxu0 0
    %7310 = vmatpush1.bf16.msra.mxu0 0
    %7311 = vmatprep.subr.bf16.mxu0 0
    %7312 = vmatpush1.bf16.msra.mxu0 0
    %7313 = vmatprep.subr.bf16.mxu0 0
    %7314 = vmatpush1.bf16.msra.mxu0 0
    %7315 = vmatprep.subr.bf16.mxu0 0
    %7316 = vmatpush1.bf16.msra.mxu0 0
    %7317 = vmatprep.subr.bf16.mxu0 0
    %7318 = vmatpush1.bf16.msra.mxu0 0
    %7319 = vmatprep.subr.bf16.mxu0 0
    %7320 = vmatpush1.bf16.msra.mxu0 %v7297
    %7321 = vmatprep.subr.bf16.mxu0 0
    %7322 = vmatpush1.bf16.msra.mxu0 %v7296
    %7323 = vmatprep.subr.bf16.mxu0 0
    %7324 = vmatpush2.bf16.msra.mxu0 0
    %7325 = vmatprep.subr.bf16.mxu0 0
    %7326 = vmatpush2.bf16.msra.mxu0 0
    %7327 = vmatprep.subr.bf16.mxu0 0
    %7328 = vmatpush2.bf16.msra.mxu0 0
    %7329 = vmatprep.subr.bf16.mxu0 0
    %7330 = vmatpush2.bf16.msra.mxu0 0
    %7331 = vmatprep.subr.bf16.mxu0 0
    %7332 = vmatpush2.bf16.msra.mxu0 0
    %7333 = vmatprep.subr.bf16.mxu0 0
    %7334 = vmatpush2.bf16.msra.mxu0 0
    %7335 = vmatprep.subr.bf16.mxu0 0
    %7336 = vmatpush2.bf16.msra.mxu0 0
    %7337 = vmatprep.subr.bf16.mxu0 0
    %7338 = vmatpush2.bf16.msra.mxu0 0
    %7339 = vmatprep.mubr.bf16.mxu0 0
    %7340 = vmatmul.mubr.bf16.gmra.mxu0 %v7305
    %v7341 = vpop.f32.mrf.mxu0
    %v7342 = vadd.f32 0.0, %v7341
    %v7343 = vpop.f32.mrf.mxu0
    %v7344 = vpop.f32.mrf.mxu0
    %v7345 = vadd.f32 0.0, %v7344
    %v7346 = vpop.f32.mrf.mxu0
    %7347 = vdwg.mxu0
    %7348 = vrot.lane.b32.xlu0 %v7342, 32
    %v7349 = vpop.permute.xlu0 %7348
    %7350 = vrot.lane.b32.xlu0 %v7345, 32
    %v7351 = vpop.permute.xlu0 %7350
    %v7352 = vsel %vm4996, -inf, %v7349
    %v7353 = vsel %vm4996, -inf, %v7351
    %7354 = vrot.lane.b32.xlu0 %v7342, 96
    %v7355 = vpop.permute.xlu0 %7354
    %7356 = vrot.lane.b32.xlu0 %v7345, 96
    %v7357 = vpop.permute.xlu0 %7356
    %v7358 = vmax.f32 %v7352, %v7342
    %v7359 = vmax.f32 %v7353, %v7345
    %v7360 = vmax.f32 %v7358, %v7355
    %v7361 = vmax.f32 %v7359, %v7357
    %v7362 = vpack.c.bf16 %v7361, %v7360
    %v7363 = vld [vmem:[#allocation28] sm:$0xf]
    %v7364 = vld [vmem:[#allocation28 + $0x4] sm:$0xf]
    %v7365 = vld [vmem:[#allocation28 + $0x8] sm:$0xf]
    %v7366 = vld [vmem:[#allocation28 + $0xc] sm:$0xf]
    %v7367 = vld [vmem:[#allocation28 + $0x10] sm:$0xf]
    %v7368 = vld [vmem:[#allocation28 + $0x14] sm:$0xf]
    %v7369 = vld [vmem:[#allocation28 + $0x18] sm:$0xf]
    %v7370 = vld [vmem:[#allocation28 + $0x1c] sm:$0xf]
    %v7371 = vld [vmem:[#allocation28 + $0x20] sm:$0xf]
    %v7372 = vld [vmem:[#allocation28 + $0x24] sm:$0xf]
    %v7373 = vld [vmem:[#allocation28 + $0x28] sm:$0xf]
    %v7374 = vld [vmem:[#allocation28 + $0x2c] sm:$0xf]
    %v7375 = vld [vmem:[#allocation28 + $0x30] sm:$0xf]
    %v7376 = vld [vmem:[#allocation28 + $0x34] sm:$0xf]
    %v7377 = vld [vmem:[#allocation28 + $0x38] sm:$0xf]
    %v7378 = vld [vmem:[#allocation28 + $0x3c] sm:$0xf]
    %v7395 = vunpack.c.l.b16 %v7363
    %v7396 = vunpack.c.l.b16 %v7364
    %v7397 = vunpack.c.l.b16 %v7365
    %v7398 = vunpack.c.l.b16 %v7366
    %v7399 = vunpack.c.l.b16 %v7367
    %v7400 = vunpack.c.l.b16 %v7368
    %v7401 = vunpack.c.l.b16 %v7369
    %v7402 = vunpack.c.l.b16 %v7370
    %v7403 = vunpack.c.l.b16 %v7371
    %v7404 = vunpack.c.l.b16 %v7372
    %v7405 = vunpack.c.l.b16 %v7373
    %v7406 = vunpack.c.l.b16 %v7374
    %v7407 = vunpack.c.l.b16 %v7375
    %v7408 = vunpack.c.l.b16 %v7376
    %v7409 = vunpack.c.l.b16 %v7377
    %v7410 = vunpack.c.l.b16 %v7378
    %v7411 = vpack.c.b16 %v7396, %v7395
    %v7412 = vpack.c.b16 %v7398, %v7397
    %v7413 = vpack.c.b16 %v7400, %v7399
    %v7414 = vpack.c.b16 %v7402, %v7401
    %v7415 = vpack.c.b16 %v7404, %v7403
    %v7416 = vpack.c.b16 %v7406, %v7405
    %v7417 = vpack.c.b16 %v7408, %v7407
    %v7418 = vpack.c.b16 %v7410, %v7409
    %7427 = vmatprep.subr.bf16.mxu0 0
    %7428 = vmatpush1.bf16.msra.mxu0 %v7418
    %7429 = vmatprep.subr.bf16.mxu0 0
    %7430 = vmatpush1.bf16.msra.mxu0 %v7417
    %7431 = vmatprep.subr.bf16.mxu0 0
    %7432 = vmatpush1.bf16.msra.mxu0 %v7416
    %7433 = vmatprep.subr.bf16.mxu0 0
    %7434 = vmatpush1.bf16.msra.mxu0 %v7415
    %7435 = vmatprep.subr.bf16.mxu0 0
    %7436 = vmatpush1.bf16.msra.mxu0 %v7414
    %7437 = vmatprep.subr.bf16.mxu0 0
    %7438 = vmatpush1.bf16.msra.mxu0 %v7413
    %7439 = vmatprep.subr.bf16.mxu0 0
    %7440 = vmatpush1.bf16.msra.mxu0 %v7412
    %7441 = vmatprep.subr.bf16.mxu0 0
    %7442 = vmatpush1.bf16.msra.mxu0 %v7411
    %7443 = vmatprep.subr.bf16.mxu0 0
    %7444 = vmatpush2.bf16.msra.mxu0 0
    %7445 = vmatprep.subr.bf16.mxu0 0
    %7446 = vmatpush2.bf16.msra.mxu0 0
    %7447 = vmatprep.subr.bf16.mxu0 0
    %7448 = vmatpush2.bf16.msra.mxu0 0
    %7449 = vmatprep.subr.bf16.mxu0 0
    %7450 = vmatpush2.bf16.msra.mxu0 0
    %7451 = vmatprep.subr.bf16.mxu0 0
    %7452 = vmatpush2.bf16.msra.mxu0 0
    %7453 = vmatprep.subr.bf16.mxu0 0
    %7454 = vmatpush2.bf16.msra.mxu0 0
    %7455 = vmatprep.subr.bf16.mxu0 0
    %7456 = vmatpush2.bf16.msra.mxu0 0
    %7457 = vmatprep.subr.bf16.mxu0 0
    %7458 = vmatpush2.bf16.msra.mxu0 0
    %7459 = vmatprep.mubr.bf16.mxu0 0
    %7460 = vmatmul.mubr.bf16.gmra.mxu0 %v7362
    %v7461 = vpop.f32.mrf.mxu0
    %v7462 = vadd.f32 0.0, %v7461
    %v7463 = vpop.f32.mrf.mxu0
    %v7464 = vpop.f32.mrf.mxu0
    %v7465 = vadd.f32 0.0, %v7464
    %v7466 = vpop.f32.mrf.mxu0
    %7467 = vdwg.mxu0
    %v7468 = vmax.f32 %v7462, 0.0
    %v7469 = vmax.f32 %v7465, 0.0
    %vm7470 = vcmp.lt.s32.totalorder %v402, 0
    %v7471 = vsub.s32 0, %v402
    %v7472 = vsel %vm7470, %v7471, %v402
    %v7473 = vshrl.u32 %v7472, 1
    %v7474 = vand.u32 %v7472, 1
    %v7475 = vsub.s32 0, %v7474
    %v7476 = vsel %vm7470, %v7475, %v7474
    %vm7477 = vcmp.lt.s32.totalorder %v403, 0
    %v7478 = vsub.s32 0, %v403
    %v7479 = vsel %vm7477, %v7478, %v403
    %v7480 = vshrl.u32 %v7479, 1
    %v7481 = vand.u32 %v7479, 1
    %v7482 = vsub.s32 0, %v7481
    %v7483 = vsel %vm7477, %v7482, %v7481
    %vm7484 = vcmp.ne.s32.totalorder %v7476, 0
    %vm7485 = vcmp.ne.s32.totalorder %v7483, 0
    %vm7486 = vcmp.lt.s32.totalorder %v7476, 0
    %vm7487 = vcmp.lt.s32.totalorder %v7483, 0
    %vm7488 = vmand %vm7486, %vm7484
    %vm7489 = vmand %vm7487, %vm7485
    %v7490 = vadd.s32 %v7476, 2
    %v7491 = vadd.s32 %v7483, 2
    %v7492 = vsel %vm7488, %v7490, %v7476
    %v7493 = vsel %vm7489, %v7491, %v7483
    %vm7494 = vcmp.eq.s32.totalorder %v7492, 0
    %vm7495 = vcmp.eq.s32.totalorder %v7493, 0
    %v7496 = vrot.slane %v7468, 7
    %v7497 = vrot.slane %v7469, 7
    %v7498 = vsel %vm642, %v7496, %v7497
    %v7499 = vsel %vm642, %v7497, %v7496
    %v7500 = vsel %vm7494, 0.0, %v7499
    %v7501 = vsel %vm7495, 0.0, %v7498
    %vm7502 = vcmp.eq.s32.totalorder %v7492, 1
    %vm7503 = vcmp.eq.s32.totalorder %v7493, 1
    %v7504 = vrot.slane %v7468, 1
    %v7505 = vrot.slane %v7469, 1
    %v7506 = vsel %vm707, %v7504, %v7505
    %v7507 = vsel %vm707, %v7505, %v7504
    %v7508 = vsel %vm7502, 0.0, %v7506
    %v7509 = vsel %vm7503, 0.0, %v7507
    %v7510 = vpack.c.bf16 %v7501, %v7500
    %v7511 = vld [vmem:[#allocation22] sm:$0xf]
    %v7512 = vld [vmem:[#allocation22 + $0x4] sm:$0xf]
    %v7513 = vld [vmem:[#allocation22 + $0x8] sm:$0xf]
    %v7514 = vld [vmem:[#allocation22 + $0xc] sm:$0xf]
    %v7515 = vld [vmem:[#allocation22 + $0x10] sm:$0xf]
    %v7516 = vld [vmem:[#allocation22 + $0x14] sm:$0xf]
    %v7517 = vld [vmem:[#allocation22 + $0x18] sm:$0xf]
    %v7518 = vld [vmem:[#allocation22 + $0x1c] sm:$0xf]
    %v7519 = vpack.c.bf16 %v7469, %v7468
    %s7520 = scalar_lea.vmem [#allocation22], 32
    %v7521 = vld [vmem:[%s7520] sm:$0xf]
    %v7522 = vld [vmem:[%s7520 + $0x4] sm:$0xf]
    %v7523 = vld [vmem:[%s7520 + $0x8] sm:$0xf]
    %v7524 = vld [vmem:[%s7520 + $0xc] sm:$0xf]
    %v7525 = vld [vmem:[%s7520 + $0x10] sm:$0xf]
    %v7526 = vld [vmem:[%s7520 + $0x14] sm:$0xf]
    %v7527 = vld [vmem:[%s7520 + $0x18] sm:$0xf]
    %v7528 = vld [vmem:[%s7520 + $0x1c] sm:$0xf]
    %v7537 = vunpack.c.l.b16 %v7521
    %v7538 = vunpack.c.l.b16 %v7522
    %v7539 = vunpack.c.l.b16 %v7523
    %v7540 = vunpack.c.l.b16 %v7524
    %v7541 = vunpack.c.l.b16 %v7525
    %v7542 = vunpack.c.l.b16 %v7526
    %v7543 = vunpack.c.l.b16 %v7527
    %v7544 = vunpack.c.l.b16 %v7528
    %v7545 = vpack.c.b16 %v7538, %v7537
    %v7546 = vpack.c.b16 %v7540, %v7539
    %v7547 = vpack.c.b16 %v7542, %v7541
    %v7548 = vpack.c.b16 %v7544, %v7543
    %v7554 = vsel %vm813, %v7519, 0
    %7556 = vmatprep.subr.bf16.mxu0 0
    %7557 = vmatpush1.bf16.msra.mxu0 0
    %7558 = vmatprep.subr.bf16.mxu0 0
    %7559 = vmatpush1.bf16.msra.mxu0 0
    %7560 = vmatprep.subr.bf16.mxu0 0
    %7561 = vmatpush1.bf16.msra.mxu0 0
    %7562 = vmatprep.subr.bf16.mxu0 0
    %7563 = vmatpush1.bf16.msra.mxu0 0
    %7564 = vmatprep.subr.bf16.mxu0 0
    %7565 = vmatpush1.bf16.msra.mxu0 %v7548
    %7566 = vmatprep.subr.bf16.mxu0 0
    %7567 = vmatpush1.bf16.msra.mxu0 %v7547
    %7568 = vmatprep.subr.bf16.mxu0 0
    %7569 = vmatpush1.bf16.msra.mxu0 %v7546
    %7570 = vmatprep.subr.bf16.mxu0 0
    %7571 = vmatpush1.bf16.msra.mxu0 %v7545
    %7572 = vmatprep.subr.bf16.mxu0 0
    %7573 = vmatpush2.bf16.msra.mxu0 0
    %7574 = vmatprep.subr.bf16.mxu0 0
    %7575 = vmatpush2.bf16.msra.mxu0 0
    %7576 = vmatprep.subr.bf16.mxu0 0
    %7577 = vmatpush2.bf16.msra.mxu0 0
    %7578 = vmatprep.subr.bf16.mxu0 0
    %7579 = vmatpush2.bf16.msra.mxu0 0
    %7580 = vmatprep.subr.bf16.mxu0 0
    %7581 = vmatpush2.bf16.msra.mxu0 0
    %7582 = vmatprep.subr.bf16.mxu0 0
    %7583 = vmatpush2.bf16.msra.mxu0 0
    %7584 = vmatprep.subr.bf16.mxu0 0
    %7585 = vmatpush2.bf16.msra.mxu0 0
    %7586 = vmatprep.subr.bf16.mxu0 0
    %7587 = vmatpush2.bf16.msra.mxu0 0
    %7588 = vmatprep.mubr.bf16.mxu0 0
    %7589 = vmatmul.mubr.bf16.gmra.mxu0 %v7554
    %v7590 = vpop.f32.mrf.mxu0
    %v7591 = vadd.f32 0.0, %v7590
    %v7592 = vpop.f32.mrf.mxu0
    %v7593 = vpop.f32.mrf.mxu0
    %v7594 = vadd.f32 0.0, %v7593
    %v7595 = vpop.f32.mrf.mxu0
    %7596 = vdwg.mxu0
    %v7605 = vunpack.c.l.b16 %v7511
    %v7606 = vunpack.c.l.b16 %v7512
    %v7607 = vunpack.c.l.b16 %v7513
    %v7608 = vunpack.c.l.b16 %v7514
    %v7609 = vunpack.c.l.b16 %v7515
    %v7610 = vunpack.c.l.b16 %v7516
    %v7611 = vunpack.c.l.b16 %v7517
    %v7612 = vunpack.c.l.b16 %v7518
    %v7613 = vpack.c.b16 %v7606, %v7605
    %v7614 = vpack.c.b16 %v7608, %v7607
    %v7615 = vpack.c.b16 %v7610, %v7609
    %v7616 = vpack.c.b16 %v7612, %v7611
    %v7622 = vsel %vm813, %v7510, 0
    %7624 = vmatprep.subr.bf16.mxu0 0
    %7625 = vmatpush1.bf16.msra.mxu0 0
    %7626 = vmatprep.subr.bf16.mxu0 0
    %7627 = vmatpush1.bf16.msra.mxu0 0
    %7628 = vmatprep.subr.bf16.mxu0 0
    %7629 = vmatpush1.bf16.msra.mxu0 0
    %7630 = vmatprep.subr.bf16.mxu0 0
    %7631 = vmatpush1.bf16.msra.mxu0 0
    %7632 = vmatprep.subr.bf16.mxu0 0
    %7633 = vmatpush1.bf16.msra.mxu0 %v7616
    %7634 = vmatprep.subr.bf16.mxu0 0
    %7635 = vmatpush1.bf16.msra.mxu0 %v7615
    %7636 = vmatprep.subr.bf16.mxu0 0
    %7637 = vmatpush1.bf16.msra.mxu0 %v7614
    %7638 = vmatprep.subr.bf16.mxu0 0
    %7639 = vmatpush1.bf16.msra.mxu0 %v7613
    %7640 = vmatprep.subr.bf16.mxu0 0
    %7641 = vmatpush2.bf16.msra.mxu0 0
    %7642 = vmatprep.subr.bf16.mxu0 0
    %7643 = vmatpush2.bf16.msra.mxu0 0
    %7644 = vmatprep.subr.bf16.mxu0 0
    %7645 = vmatpush2.bf16.msra.mxu0 0
    %7646 = vmatprep.subr.bf16.mxu0 0
    %7647 = vmatpush2.bf16.msra.mxu0 0
    %7648 = vmatprep.subr.bf16.mxu0 0
    %7649 = vmatpush2.bf16.msra.mxu0 0
    %7650 = vmatprep.subr.bf16.mxu0 0
    %7651 = vmatpush2.bf16.msra.mxu0 0
    %7652 = vmatprep.subr.bf16.mxu0 0
    %7653 = vmatpush2.bf16.msra.mxu0 0
    %7654 = vmatprep.subr.bf16.mxu0 0
    %7655 = vmatpush2.bf16.msra.mxu0 0
    %7656 = vmatprep.mubr.bf16.mxu0 0
    %7657 = vmatmul.mubr.bf16.gmra.mxu0 %v7622
    %v7658 = vpop.f32.mrf.mxu0
    %v7659 = vadd.f32 %v7591, %v7658
    %v7660 = vpop.f32.mrf.mxu0
    %v7661 = vpop.f32.mrf.mxu0
    %v7662 = vadd.f32 %v7594, %v7661
    %v7663 = vpop.f32.mrf.mxu0
    %7664 = vdwg.mxu0
    %v7665 = vpack.c.bf16 %v7509, %v7508
    %s7666 = scalar_lea.vmem [#allocation22], 64
    %v7667 = vld [vmem:[%s7666] sm:$0xf]
    %v7668 = vld [vmem:[%s7666 + $0x4] sm:$0xf]
    %v7669 = vld [vmem:[%s7666 + $0x8] sm:$0xf]
    %v7670 = vld [vmem:[%s7666 + $0xc] sm:$0xf]
    %v7671 = vld [vmem:[%s7666 + $0x10] sm:$0xf]
    %v7672 = vld [vmem:[%s7666 + $0x14] sm:$0xf]
    %v7673 = vld [vmem:[%s7666 + $0x18] sm:$0xf]
    %v7674 = vld [vmem:[%s7666 + $0x1c] sm:$0xf]
    %v7683 = vunpack.c.l.b16 %v7667
    %v7684 = vunpack.c.l.b16 %v7668
    %v7685 = vunpack.c.l.b16 %v7669
    %v7686 = vunpack.c.l.b16 %v7670
    %v7687 = vunpack.c.l.b16 %v7671
    %v7688 = vunpack.c.l.b16 %v7672
    %v7689 = vunpack.c.l.b16 %v7673
    %v7690 = vunpack.c.l.b16 %v7674
    %v7691 = vpack.c.b16 %v7684, %v7683
    %v7692 = vpack.c.b16 %v7686, %v7685
    %v7693 = vpack.c.b16 %v7688, %v7687
    %v7694 = vpack.c.b16 %v7690, %v7689
    %v7700 = vsel %vm813, %v7665, 0
    %7702 = vmatprep.subr.bf16.mxu0 0
    %7703 = vmatpush1.bf16.msra.mxu0 0
    %7704 = vmatprep.subr.bf16.mxu0 0
    %7705 = vmatpush1.bf16.msra.mxu0 0
    %7706 = vmatprep.subr.bf16.mxu0 0
    %7707 = vmatpush1.bf16.msra.mxu0 0
    %7708 = vmatprep.subr.bf16.mxu0 0
    %7709 = vmatpush1.bf16.msra.mxu0 0
    %7710 = vmatprep.subr.bf16.mxu0 0
    %7711 = vmatpush1.bf16.msra.mxu0 %v7694
    %7712 = vmatprep.subr.bf16.mxu0 0
    %7713 = vmatpush1.bf16.msra.mxu0 %v7693
    %7714 = vmatprep.subr.bf16.mxu0 0
    %7715 = vmatpush1.bf16.msra.mxu0 %v7692
    %7716 = vmatprep.subr.bf16.mxu0 0
    %7717 = vmatpush1.bf16.msra.mxu0 %v7691
    %7718 = vmatprep.subr.bf16.mxu0 0
    %7719 = vmatpush2.bf16.msra.mxu0 0
    %7720 = vmatprep.subr.bf16.mxu0 0
    %7721 = vmatpush2.bf16.msra.mxu0 0
    %7722 = vmatprep.subr.bf16.mxu0 0
    %7723 = vmatpush2.bf16.msra.mxu0 0
    %7724 = vmatprep.subr.bf16.mxu0 0
    %7725 = vmatpush2.bf16.msra.mxu0 0
    %7726 = vmatprep.subr.bf16.mxu0 0
    %7727 = vmatpush2.bf16.msra.mxu0 0
    %7728 = vmatprep.subr.bf16.mxu0 0
    %7729 = vmatpush2.bf16.msra.mxu0 0
    %7730 = vmatprep.subr.bf16.mxu0 0
    %7731 = vmatpush2.bf16.msra.mxu0 0
    %7732 = vmatprep.subr.bf16.mxu0 0
    %7733 = vmatpush2.bf16.msra.mxu0 0
    %7734 = vmatprep.mubr.bf16.mxu0 0
    %7735 = vmatmul.mubr.bf16.gmra.mxu0 %v7700
    %v7736 = vpop.f32.mrf.mxu0
    %v7737 = vadd.f32 0.0, %v7736
    %v7738 = vpop.f32.mrf.mxu0
    %v7739 = vpop.f32.mrf.mxu0
    %v7740 = vadd.f32 0.0, %v7739
    %v7741 = vpop.f32.mrf.mxu0
    %7742 = vdwg.mxu0
    %v7743 = vadd.f32 %v7659, %v7737
    %v7744 = vadd.f32 %v7662, %v7740
    %v7745 = vld [vmem:[%s57] sm:$0x1]
    %v7747 = vlaneseq
    %v7748 = vshrl.u32 %v7747, 7
    %v7749 = vsub.s32 0, %v7748
    %v7750 = vrot.slane %v7745, %v7749
    %v7752 = vadd.f32 %v7743, %v7750
    %v7753 = vadd.f32 %v7744, %v7750
    %v7754 = vmax.f32 %v7752, 0.0
    %v7755 = vmax.f32 %v7753, 0.0
    %v7756 = vrot.slane %v7754, 7
    %v7757 = vrot.slane %v7755, 7
    %v7758 = vsel %vm642, %v7756, %v7757
    %v7759 = vsel %vm642, %v7757, %v7756
    %v7760 = vsel %vm7494, 0.0, %v7759
    %v7761 = vsel %vm7495, 0.0, %v7758
    %v7762 = vrot.slane %v7754, 1
    %v7763 = vrot.slane %v7755, 1
    %v7764 = vsel %vm707, %v7762, %v7763
    %v7765 = vsel %vm707, %v7763, %v7762
    %v7766 = vsel %vm7502, 0.0, %v7764
    %v7767 = vsel %vm7503, 0.0, %v7765
    %v7768 = vpack.c.bf16 %v7761, %v7760
    %v7769 = vld [vmem:[#allocation24] sm:$0xf]
    %v7770 = vld [vmem:[#allocation24 + $0x4] sm:$0xf]
    %v7771 = vld [vmem:[#allocation24 + $0x8] sm:$0xf]
    %v7772 = vld [vmem:[#allocation24 + $0xc] sm:$0xf]
    %v7773 = vld [vmem:[#allocation24 + $0x10] sm:$0xf]
    %v7774 = vld [vmem:[#allocation24 + $0x14] sm:$0xf]
    %v7775 = vld [vmem:[#allocation24 + $0x18] sm:$0xf]
    %v7776 = vld [vmem:[#allocation24 + $0x1c] sm:$0xf]
    %v7777 = vpack.c.bf16 %v7755, %v7754
    %s7778 = scalar_lea.vmem [#allocation24], 32
    %v7779 = vld [vmem:[%s7778] sm:$0xf]
    %v7780 = vld [vmem:[%s7778 + $0x4] sm:$0xf]
    %v7781 = vld [vmem:[%s7778 + $0x8] sm:$0xf]
    %v7782 = vld [vmem:[%s7778 + $0xc] sm:$0xf]
    %v7783 = vld [vmem:[%s7778 + $0x10] sm:$0xf]
    %v7784 = vld [vmem:[%s7778 + $0x14] sm:$0xf]
    %v7785 = vld [vmem:[%s7778 + $0x18] sm:$0xf]
    %v7786 = vld [vmem:[%s7778 + $0x1c] sm:$0xf]
    %v7795 = vunpack.c.l.b16 %v7779
    %v7796 = vunpack.c.l.b16 %v7780
    %v7797 = vunpack.c.l.b16 %v7781
    %v7798 = vunpack.c.l.b16 %v7782
    %v7799 = vunpack.c.l.b16 %v7783
    %v7800 = vunpack.c.l.b16 %v7784
    %v7801 = vunpack.c.l.b16 %v7785
    %v7802 = vunpack.c.l.b16 %v7786
    %v7803 = vpack.c.b16 %v7796, %v7795
    %v7804 = vpack.c.b16 %v7798, %v7797
    %v7805 = vpack.c.b16 %v7800, %v7799
    %v7806 = vpack.c.b16 %v7802, %v7801
    %v7812 = vsel %vm813, %v7777, 0
    %7814 = vmatprep.subr.bf16.mxu0 0
    %7815 = vmatpush1.bf16.msra.mxu0 0
    %7816 = vmatprep.subr.bf16.mxu0 0
    %7817 = vmatpush1.bf16.msra.mxu0 0
    %7818 = vmatprep.subr.bf16.mxu0 0
    %7819 = vmatpush1.bf16.msra.mxu0 0
    %7820 = vmatprep.subr.bf16.mxu0 0
    %7821 = vmatpush1.bf16.msra.mxu0 0
    %7822 = vmatprep.subr.bf16.mxu0 0
    %7823 = vmatpush1.bf16.msra.mxu0 %v7806
    %7824 = vmatprep.subr.bf16.mxu0 0
    %7825 = vmatpush1.bf16.msra.mxu0 %v7805
    %7826 = vmatprep.subr.bf16.mxu0 0
    %7827 = vmatpush1.bf16.msra.mxu0 %v7804
    %7828 = vmatprep.subr.bf16.mxu0 0
    %7829 = vmatpush1.bf16.msra.mxu0 %v7803
    %7830 = vmatprep.subr.bf16.mxu0 0
    %7831 = vmatpush2.bf16.msra.mxu0 0
    %7832 = vmatprep.subr.bf16.mxu0 0
    %7833 = vmatpush2.bf16.msra.mxu0 0
    %7834 = vmatprep.subr.bf16.mxu0 0
    %7835 = vmatpush2.bf16.msra.mxu0 0
    %7836 = vmatprep.subr.bf16.mxu0 0
    %7837 = vmatpush2.bf16.msra.mxu0 0
    %7838 = vmatprep.subr.bf16.mxu0 0
    %7839 = vmatpush2.bf16.msra.mxu0 0
    %7840 = vmatprep.subr.bf16.mxu0 0
    %7841 = vmatpush2.bf16.msra.mxu0 0
    %7842 = vmatprep.subr.bf16.mxu0 0
    %7843 = vmatpush2.bf16.msra.mxu0 0
    %7844 = vmatprep.subr.bf16.mxu0 0
    %7845 = vmatpush2.bf16.msra.mxu0 0
    %7846 = vmatprep.mubr.bf16.mxu0 0
    %7847 = vmatmul.mubr.bf16.gmra.mxu0 %v7812
    %v7848 = vpop.f32.mrf.mxu0
    %v7849 = vadd.f32 0.0, %v7848
    %v7850 = vpop.f32.mrf.mxu0
    %v7851 = vpop.f32.mrf.mxu0
    %v7852 = vadd.f32 0.0, %v7851
    %v7853 = vpop.f32.mrf.mxu0
    %7854 = vdwg.mxu0
    %v7863 = vunpack.c.l.b16 %v7769
    %v7864 = vunpack.c.l.b16 %v7770
    %v7865 = vunpack.c.l.b16 %v7771
    %v7866 = vunpack.c.l.b16 %v7772
    %v7867 = vunpack.c.l.b16 %v7773
    %v7868 = vunpack.c.l.b16 %v7774
    %v7869 = vunpack.c.l.b16 %v7775
    %v7870 = vunpack.c.l.b16 %v7776
    %v7871 = vpack.c.b16 %v7864, %v7863
    %v7872 = vpack.c.b16 %v7866, %v7865
    %v7873 = vpack.c.b16 %v7868, %v7867
    %v7874 = vpack.c.b16 %v7870, %v7869
    %v7880 = vsel %vm813, %v7768, 0
    %7882 = vmatprep.subr.bf16.mxu0 0
    %7883 = vmatpush1.bf16.msra.mxu0 0
    %7884 = vmatprep.subr.bf16.mxu0 0
    %7885 = vmatpush1.bf16.msra.mxu0 0
    %7886 = vmatprep.subr.bf16.mxu0 0
    %7887 = vmatpush1.bf16.msra.mxu0 0
    %7888 = vmatprep.subr.bf16.mxu0 0
    %7889 = vmatpush1.bf16.msra.mxu0 0
    %7890 = vmatprep.subr.bf16.mxu0 0
    %7891 = vmatpush1.bf16.msra.mxu0 %v7874
    %7892 = vmatprep.subr.bf16.mxu0 0
    %7893 = vmatpush1.bf16.msra.mxu0 %v7873
    %7894 = vmatprep.subr.bf16.mxu0 0
    %7895 = vmatpush1.bf16.msra.mxu0 %v7872
    %7896 = vmatprep.subr.bf16.mxu0 0
    %7897 = vmatpush1.bf16.msra.mxu0 %v7871
    %7898 = vmatprep.subr.bf16.mxu0 0
    %7899 = vmatpush2.bf16.msra.mxu0 0
    %7900 = vmatprep.subr.bf16.mxu0 0
    %7901 = vmatpush2.bf16.msra.mxu0 0
    %7902 = vmatprep.subr.bf16.mxu0 0
    %7903 = vmatpush2.bf16.msra.mxu0 0
    %7904 = vmatprep.subr.bf16.mxu0 0
    %7905 = vmatpush2.bf16.msra.mxu0 0
    %7906 = vmatprep.subr.bf16.mxu0 0
    %7907 = vmatpush2.bf16.msra.mxu0 0
    %7908 = vmatprep.subr.bf16.mxu0 0
    %7909 = vmatpush2.bf16.msra.mxu0 0
    %7910 = vmatprep.subr.bf16.mxu0 0
    %7911 = vmatpush2.bf16.msra.mxu0 0
    %7912 = vmatprep.subr.bf16.mxu0 0
    %7913 = vmatpush2.bf16.msra.mxu0 0
    %7914 = vmatprep.mubr.bf16.mxu0 0
    %7915 = vmatmul.mubr.bf16.gmra.mxu0 %v7880
    %v7916 = vpop.f32.mrf.mxu0
    %v7917 = vadd.f32 %v7849, %v7916
    %v7918 = vpop.f32.mrf.mxu0
    %v7919 = vpop.f32.mrf.mxu0
    %v7920 = vadd.f32 %v7852, %v7919
    %v7921 = vpop.f32.mrf.mxu0
    %7922 = vdwg.mxu0
    %v7923 = vpack.c.bf16 %v7767, %v7766
    %s7924 = scalar_lea.vmem [#allocation24], 64
    %v7925 = vld [vmem:[%s7924] sm:$0xf]
    %v7926 = vld [vmem:[%s7924 + $0x4] sm:$0xf]
    %v7927 = vld [vmem:[%s7924 + $0x8] sm:$0xf]
    %v7928 = vld [vmem:[%s7924 + $0xc] sm:$0xf]
    %v7929 = vld [vmem:[%s7924 + $0x10] sm:$0xf]
    %v7930 = vld [vmem:[%s7924 + $0x14] sm:$0xf]
    %v7931 = vld [vmem:[%s7924 + $0x18] sm:$0xf]
    %v7932 = vld [vmem:[%s7924 + $0x1c] sm:$0xf]
    %v7941 = vunpack.c.l.b16 %v7925
    %v7942 = vunpack.c.l.b16 %v7926
    %v7943 = vunpack.c.l.b16 %v7927
    %v7944 = vunpack.c.l.b16 %v7928
    %v7945 = vunpack.c.l.b16 %v7929
    %v7946 = vunpack.c.l.b16 %v7930
    %v7947 = vunpack.c.l.b16 %v7931
    %v7948 = vunpack.c.l.b16 %v7932
    %v7949 = vpack.c.b16 %v7942, %v7941
    %v7950 = vpack.c.b16 %v7944, %v7943
    %v7951 = vpack.c.b16 %v7946, %v7945
    %v7952 = vpack.c.b16 %v7948, %v7947
    %v7958 = vsel %vm813, %v7923, 0
    %7960 = vmatprep.subr.bf16.mxu0 0
    %7961 = vmatpush1.bf16.msra.mxu0 0
    %7962 = vmatprep.subr.bf16.mxu0 0
    %7963 = vmatpush1.bf16.msra.mxu0 0
    %7964 = vmatprep.subr.bf16.mxu0 0
    %7965 = vmatpush1.bf16.msra.mxu0 0
    %7966 = vmatprep.subr.bf16.mxu0 0
    %7967 = vmatpush1.bf16.msra.mxu0 0
    %7968 = vmatprep.subr.bf16.mxu0 0
    %7969 = vmatpush1.bf16.msra.mxu0 %v7952
    %7970 = vmatprep.subr.bf16.mxu0 0
    %7971 = vmatpush1.bf16.msra.mxu0 %v7951
    %7972 = vmatprep.subr.bf16.mxu0 0
    %7973 = vmatpush1.bf16.msra.mxu0 %v7950
    %7974 = vmatprep.subr.bf16.mxu0 0
    %7975 = vmatpush1.bf16.msra.mxu0 %v7949
    %7976 = vmatprep.subr.bf16.mxu0 0
    %7977 = vmatpush2.bf16.msra.mxu0 0
    %7978 = vmatprep.subr.bf16.mxu0 0
    %7979 = vmatpush2.bf16.msra.mxu0 0
    %7980 = vmatprep.subr.bf16.mxu0 0
    %7981 = vmatpush2.bf16.msra.mxu0 0
    %7982 = vmatprep.subr.bf16.mxu0 0
    %7983 = vmatpush2.bf16.msra.mxu0 0
    %7984 = vmatprep.subr.bf16.mxu0 0
    %7985 = vmatpush2.bf16.msra.mxu0 0
    %7986 = vmatprep.subr.bf16.mxu0 0
    %7987 = vmatpush2.bf16.msra.mxu0 0
    %7988 = vmatprep.subr.bf16.mxu0 0
    %7989 = vmatpush2.bf16.msra.mxu0 0
    %7990 = vmatprep.subr.bf16.mxu0 0
    %7991 = vmatpush2.bf16.msra.mxu0 0
    %7992 = vmatprep.mubr.bf16.mxu0 0
    %7993 = vmatmul.mubr.bf16.gmra.mxu0 %v7958
    %v7994 = vpop.f32.mrf.mxu0
    %v7995 = vadd.f32 0.0, %v7994
    %v7996 = vpop.f32.mrf.mxu0
    %v7997 = vpop.f32.mrf.mxu0
    %v7998 = vadd.f32 0.0, %v7997
    %v7999 = vpop.f32.mrf.mxu0
    %8000 = vdwg.mxu0
    %v8001 = vadd.f32 %v7917, %v7995
    %v8002 = vadd.f32 %v7920, %v7998
    %v8003 = vld [vmem:[%s61] sm:$0x1]
    %v8005 = vlaneseq
    %v8006 = vshrl.u32 %v8005, 7
    %v8007 = vsub.s32 0, %v8006
    %v8008 = vrot.slane %v8003, %v8007
    %v8010 = vadd.f32 %v8001, %v8008
    %v8011 = vadd.f32 %v8002, %v8008
    %v8012 = vadd.f32 %v7462, %v8010
    %v8013 = vadd.f32 %v7465, %v8011
    %v8014 = vmax.f32 %v8012, 0.0
    %v8015 = vmax.f32 %v8013, 0.0
    %v8016 = vrot.slane %v8014, 7
    %v8017 = vrot.slane %v8015, 7
    %v8018 = vsel %vm642, %v8016, %v8017
    %v8019 = vsel %vm642, %v8017, %v8016
    %v8020 = vsel %vm7494, 0.0, %v8019
    %v8021 = vsel %vm7495, 0.0, %v8018
    %v8022 = vrot.slane %v8014, 1
    %v8023 = vrot.slane %v8015, 1
    %v8024 = vsel %vm707, %v8022, %v8023
    %v8025 = vsel %vm707, %v8023, %v8022
    %v8026 = vsel %vm7502, 0.0, %v8024
    %v8027 = vsel %vm7503, 0.0, %v8025
    %v8028 = vpack.c.bf16 %v8021, %v8020
    %v8029 = vld [vmem:[#allocation25] sm:$0xf]
    %v8030 = vld [vmem:[#allocation25 + $0x4] sm:$0xf]
    %v8031 = vld [vmem:[#allocation25 + $0x8] sm:$0xf]
    %v8032 = vld [vmem:[#allocation25 + $0xc] sm:$0xf]
    %v8033 = vld [vmem:[#allocation25 + $0x10] sm:$0xf]
    %v8034 = vld [vmem:[#allocation25 + $0x14] sm:$0xf]
    %v8035 = vld [vmem:[#allocation25 + $0x18] sm:$0xf]
    %v8036 = vld [vmem:[#allocation25 + $0x1c] sm:$0xf]
    %v8037 = vpack.c.bf16 %v8015, %v8014
    %s8038 = scalar_lea.vmem [#allocation25], 32
    %v8039 = vld [vmem:[%s8038] sm:$0xf]
    %v8040 = vld [vmem:[%s8038 + $0x4] sm:$0xf]
    %v8041 = vld [vmem:[%s8038 + $0x8] sm:$0xf]
    %v8042 = vld [vmem:[%s8038 + $0xc] sm:$0xf]
    %v8043 = vld [vmem:[%s8038 + $0x10] sm:$0xf]
    %v8044 = vld [vmem:[%s8038 + $0x14] sm:$0xf]
    %v8045 = vld [vmem:[%s8038 + $0x18] sm:$0xf]
    %v8046 = vld [vmem:[%s8038 + $0x1c] sm:$0xf]
    %v8055 = vunpack.c.l.b16 %v8039
    %v8056 = vunpack.c.l.b16 %v8040
    %v8057 = vunpack.c.l.b16 %v8041
    %v8058 = vunpack.c.l.b16 %v8042
    %v8059 = vunpack.c.l.b16 %v8043
    %v8060 = vunpack.c.l.b16 %v8044
    %v8061 = vunpack.c.l.b16 %v8045
    %v8062 = vunpack.c.l.b16 %v8046
    %v8063 = vpack.c.b16 %v8056, %v8055
    %v8064 = vpack.c.b16 %v8058, %v8057
    %v8065 = vpack.c.b16 %v8060, %v8059
    %v8066 = vpack.c.b16 %v8062, %v8061
    %v8072 = vsel %vm813, %v8037, 0
    %8074 = vmatprep.subr.bf16.mxu0 0
    %8075 = vmatpush1.bf16.msra.mxu0 0
    %8076 = vmatprep.subr.bf16.mxu0 0
    %8077 = vmatpush1.bf16.msra.mxu0 0
    %8078 = vmatprep.subr.bf16.mxu0 0
    %8079 = vmatpush1.bf16.msra.mxu0 0
    %8080 = vmatprep.subr.bf16.mxu0 0
    %8081 = vmatpush1.bf16.msra.mxu0 0
    %8082 = vmatprep.subr.bf16.mxu0 0
    %8083 = vmatpush1.bf16.msra.mxu0 %v8066
    %8084 = vmatprep.subr.bf16.mxu0 0
    %8085 = vmatpush1.bf16.msra.mxu0 %v8065
    %8086 = vmatprep.subr.bf16.mxu0 0
    %8087 = vmatpush1.bf16.msra.mxu0 %v8064
    %8088 = vmatprep.subr.bf16.mxu0 0
    %8089 = vmatpush1.bf16.msra.mxu0 %v8063
    %8090 = vmatprep.subr.bf16.mxu0 0
    %8091 = vmatpush2.bf16.msra.mxu0 0
    %8092 = vmatprep.subr.bf16.mxu0 0
    %8093 = vmatpush2.bf16.msra.mxu0 0
    %8094 = vmatprep.subr.bf16.mxu0 0
    %8095 = vmatpush2.bf16.msra.mxu0 0
    %8096 = vmatprep.subr.bf16.mxu0 0
    %8097 = vmatpush2.bf16.msra.mxu0 0
    %8098 = vmatprep.subr.bf16.mxu0 0
    %8099 = vmatpush2.bf16.msra.mxu0 0
    %8100 = vmatprep.subr.bf16.mxu0 0
    %8101 = vmatpush2.bf16.msra.mxu0 0
    %8102 = vmatprep.subr.bf16.mxu0 0
    %8103 = vmatpush2.bf16.msra.mxu0 0
    %8104 = vmatprep.subr.bf16.mxu0 0
    %8105 = vmatpush2.bf16.msra.mxu0 0
    %8106 = vmatprep.mubr.bf16.mxu0 0
    %8107 = vmatmul.mubr.bf16.gmra.mxu0 %v8072
    %v8108 = vpop.f32.mrf.mxu0
    %v8109 = vadd.f32 0.0, %v8108
    %v8110 = vpop.f32.mrf.mxu0
    %v8111 = vpop.f32.mrf.mxu0
    %v8112 = vadd.f32 0.0, %v8111
    %v8113 = vpop.f32.mrf.mxu0
    %8114 = vdwg.mxu0
    %v8123 = vunpack.c.l.b16 %v8029
    %v8124 = vunpack.c.l.b16 %v8030
    %v8125 = vunpack.c.l.b16 %v8031
    %v8126 = vunpack.c.l.b16 %v8032
    %v8127 = vunpack.c.l.b16 %v8033
    %v8128 = vunpack.c.l.b16 %v8034
    %v8129 = vunpack.c.l.b16 %v8035
    %v8130 = vunpack.c.l.b16 %v8036
    %v8131 = vpack.c.b16 %v8124, %v8123
    %v8132 = vpack.c.b16 %v8126, %v8125
    %v8133 = vpack.c.b16 %v8128, %v8127
    %v8134 = vpack.c.b16 %v8130, %v8129
    %v8140 = vsel %vm813, %v8028, 0
    %8142 = vmatprep.subr.bf16.mxu0 0
    %8143 = vmatpush1.bf16.msra.mxu0 0
    %8144 = vmatprep.subr.bf16.mxu0 0
    %8145 = vmatpush1.bf16.msra.mxu0 0
    %8146 = vmatprep.subr.bf16.mxu0 0
    %8147 = vmatpush1.bf16.msra.mxu0 0
    %8148 = vmatprep.subr.bf16.mxu0 0
    %8149 = vmatpush1.bf16.msra.mxu0 0
    %8150 = vmatprep.subr.bf16.mxu0 0
    %8151 = vmatpush1.bf16.msra.mxu0 %v8134
    %8152 = vmatprep.subr.bf16.mxu0 0
    %8153 = vmatpush1.bf16.msra.mxu0 %v8133
    %8154 = vmatprep.subr.bf16.mxu0 0
    %8155 = vmatpush1.bf16.msra.mxu0 %v8132
    %8156 = vmatprep.subr.bf16.mxu0 0
    %8157 = vmatpush1.bf16.msra.mxu0 %v8131
    %8158 = vmatprep.subr.bf16.mxu0 0
    %8159 = vmatpush2.bf16.msra.mxu0 0
    %8160 = vmatprep.subr.bf16.mxu0 0
    %8161 = vmatpush2.bf16.msra.mxu0 0
    %8162 = vmatprep.subr.bf16.mxu0 0
    %8163 = vmatpush2.bf16.msra.mxu0 0
    %8164 = vmatprep.subr.bf16.mxu0 0
    %8165 = vmatpush2.bf16.msra.mxu0 0
    %8166 = vmatprep.subr.bf16.mxu0 0
    %8167 = vmatpush2.bf16.msra.mxu0 0
    %8168 = vmatprep.subr.bf16.mxu0 0
    %8169 = vmatpush2.bf16.msra.mxu0 0
    %8170 = vmatprep.subr.bf16.mxu0 0
    %8171 = vmatpush2.bf16.msra.mxu0 0
    %8172 = vmatprep.subr.bf16.mxu0 0
    %8173 = vmatpush2.bf16.msra.mxu0 0
    %8174 = vmatprep.mubr.bf16.mxu0 0
    %8175 = vmatmul.mubr.bf16.gmra.mxu0 %v8140
    %v8176 = vpop.f32.mrf.mxu0
    %v8177 = vadd.f32 %v8109, %v8176
    %v8178 = vpop.f32.mrf.mxu0
    %v8179 = vpop.f32.mrf.mxu0
    %v8180 = vadd.f32 %v8112, %v8179
    %v8181 = vpop.f32.mrf.mxu0
    %8182 = vdwg.mxu0
    %v8183 = vpack.c.bf16 %v8027, %v8026
    %s8184 = scalar_lea.vmem [#allocation25], 64
    %v8185 = vld [vmem:[%s8184] sm:$0xf]
    %v8186 = vld [vmem:[%s8184 + $0x4] sm:$0xf]
    %v8187 = vld [vmem:[%s8184 + $0x8] sm:$0xf]
    %v8188 = vld [vmem:[%s8184 + $0xc] sm:$0xf]
    %v8189 = vld [vmem:[%s8184 + $0x10] sm:$0xf]
    %v8190 = vld [vmem:[%s8184 + $0x14] sm:$0xf]
    %v8191 = vld [vmem:[%s8184 + $0x18] sm:$0xf]
    %v8192 = vld [vmem:[%s8184 + $0x1c] sm:$0xf]
    %v8201 = vunpack.c.l.b16 %v8185
    %v8202 = vunpack.c.l.b16 %v8186
    %v8203 = vunpack.c.l.b16 %v8187
    %v8204 = vunpack.c.l.b16 %v8188
    %v8205 = vunpack.c.l.b16 %v8189
    %v8206 = vunpack.c.l.b16 %v8190
    %v8207 = vunpack.c.l.b16 %v8191
    %v8208 = vunpack.c.l.b16 %v8192
    %v8209 = vpack.c.b16 %v8202, %v8201
    %v8210 = vpack.c.b16 %v8204, %v8203
    %v8211 = vpack.c.b16 %v8206, %v8205
    %v8212 = vpack.c.b16 %v8208, %v8207
    %v8218 = vsel %vm813, %v8183, 0
    %8220 = vmatprep.subr.bf16.mxu0 0
    %8221 = vmatpush1.bf16.msra.mxu0 0
    %8222 = vmatprep.subr.bf16.mxu0 0
    %8223 = vmatpush1.bf16.msra.mxu0 0
    %8224 = vmatprep.subr.bf16.mxu0 0
    %8225 = vmatpush1.bf16.msra.mxu0 0
    %8226 = vmatprep.subr.bf16.mxu0 0
    %8227 = vmatpush1.bf16.msra.mxu0 0
    %8228 = vmatprep.subr.bf16.mxu0 0
    %8229 = vmatpush1.bf16.msra.mxu0 %v8212
    %8230 = vmatprep.subr.bf16.mxu0 0
    %8231 = vmatpush1.bf16.msra.mxu0 %v8211
    %8232 = vmatprep.subr.bf16.mxu0 0
    %8233 = vmatpush1.bf16.msra.mxu0 %v8210
    %8234 = vmatprep.subr.bf16.mxu0 0
    %8235 = vmatpush1.bf16.msra.mxu0 %v8209
    %8236 = vmatprep.subr.bf16.mxu0 0
    %8237 = vmatpush2.bf16.msra.mxu0 0
    %8238 = vmatprep.subr.bf16.mxu0 0
    %8239 = vmatpush2.bf16.msra.mxu0 0
    %8240 = vmatprep.subr.bf16.mxu0 0
    %8241 = vmatpush2.bf16.msra.mxu0 0
    %8242 = vmatprep.subr.bf16.mxu0 0
    %8243 = vmatpush2.bf16.msra.mxu0 0
    %8244 = vmatprep.subr.bf16.mxu0 0
    %8245 = vmatpush2.bf16.msra.mxu0 0
    %8246 = vmatprep.subr.bf16.mxu0 0
    %8247 = vmatpush2.bf16.msra.mxu0 0
    %8248 = vmatprep.subr.bf16.mxu0 0
    %8249 = vmatpush2.bf16.msra.mxu0 0
    %8250 = vmatprep.subr.bf16.mxu0 0
    %8251 = vmatpush2.bf16.msra.mxu0 0
    %8252 = vmatprep.mubr.bf16.mxu0 0
    %8253 = vmatmul.mubr.bf16.gmra.mxu0 %v8218
    %v8254 = vpop.f32.mrf.mxu0
    %v8255 = vadd.f32 0.0, %v8254
    %v8256 = vpop.f32.mrf.mxu0
    %v8257 = vpop.f32.mrf.mxu0
    %v8258 = vadd.f32 0.0, %v8257
    %v8259 = vpop.f32.mrf.mxu0
    %8260 = vdwg.mxu0
    %v8261 = vadd.f32 %v8177, %v8255
    %v8262 = vadd.f32 %v8180, %v8258
    %v8263 = vld [vmem:[%s65] sm:$0x1]
    %v8265 = vlaneseq
    %v8266 = vshrl.u32 %v8265, 7
    %v8267 = vsub.s32 0, %v8266
    %v8268 = vrot.slane %v8263, %v8267
    %v8270 = vadd.f32 %v8261, %v8268
    %v8271 = vadd.f32 %v8262, %v8268
    %v8272 = vmax.f32 %v8270, 0.0
    %v8273 = vmax.f32 %v8271, 0.0
    %v8274 = vrot.slane %v8272, 7
    %v8275 = vrot.slane %v8273, 7
    %v8276 = vsel %vm642, %v8274, %v8275
    %v8277 = vsel %vm642, %v8275, %v8274
    %v8278 = vsel %vm7494, 0.0, %v8277
    %v8279 = vsel %vm7495, 0.0, %v8276
    %v8280 = vrot.slane %v8272, 1
    %v8281 = vrot.slane %v8273, 1
    %v8282 = vsel %vm707, %v8280, %v8281
    %v8283 = vsel %vm707, %v8281, %v8280
    %v8284 = vsel %vm7502, 0.0, %v8282
    %v8285 = vsel %vm7503, 0.0, %v8283
    %v8286 = vpack.c.bf16 %v8279, %v8278
    %v8287 = vld [vmem:[#allocation27] sm:$0xf]
    %v8288 = vld [vmem:[#allocation27 + $0x4] sm:$0xf]
    %v8289 = vld [vmem:[#allocation27 + $0x8] sm:$0xf]
    %v8290 = vld [vmem:[#allocation27 + $0xc] sm:$0xf]
    %v8291 = vld [vmem:[#allocation27 + $0x10] sm:$0xf]
    %v8292 = vld [vmem:[#allocation27 + $0x14] sm:$0xf]
    %v8293 = vld [vmem:[#allocation27 + $0x18] sm:$0xf]
    %v8294 = vld [vmem:[#allocation27 + $0x1c] sm:$0xf]
    %v8295 = vpack.c.bf16 %v8273, %v8272
    %s8296 = scalar_lea.vmem [#allocation27], 32
    %v8297 = vld [vmem:[%s8296] sm:$0xf]
    %v8298 = vld [vmem:[%s8296 + $0x4] sm:$0xf]
    %v8299 = vld [vmem:[%s8296 + $0x8] sm:$0xf]
    %v8300 = vld [vmem:[%s8296 + $0xc] sm:$0xf]
    %v8301 = vld [vmem:[%s8296 + $0x10] sm:$0xf]
    %v8302 = vld [vmem:[%s8296 + $0x14] sm:$0xf]
    %v8303 = vld [vmem:[%s8296 + $0x18] sm:$0xf]
    %v8304 = vld [vmem:[%s8296 + $0x1c] sm:$0xf]
    %v8313 = vunpack.c.l.b16 %v8297
    %v8314 = vunpack.c.l.b16 %v8298
    %v8315 = vunpack.c.l.b16 %v8299
    %v8316 = vunpack.c.l.b16 %v8300
    %v8317 = vunpack.c.l.b16 %v8301
    %v8318 = vunpack.c.l.b16 %v8302
    %v8319 = vunpack.c.l.b16 %v8303
    %v8320 = vunpack.c.l.b16 %v8304
    %v8321 = vpack.c.b16 %v8314, %v8313
    %v8322 = vpack.c.b16 %v8316, %v8315
    %v8323 = vpack.c.b16 %v8318, %v8317
    %v8324 = vpack.c.b16 %v8320, %v8319
    %v8330 = vsel %vm813, %v8295, 0
    %8332 = vmatprep.subr.bf16.mxu0 0
    %8333 = vmatpush1.bf16.msra.mxu0 0
    %8334 = vmatprep.subr.bf16.mxu0 0
    %8335 = vmatpush1.bf16.msra.mxu0 0
    %8336 = vmatprep.subr.bf16.mxu0 0
    %8337 = vmatpush1.bf16.msra.mxu0 0
    %8338 = vmatprep.subr.bf16.mxu0 0
    %8339 = vmatpush1.bf16.msra.mxu0 0
    %8340 = vmatprep.subr.bf16.mxu0 0
    %8341 = vmatpush1.bf16.msra.mxu0 %v8324
    %8342 = vmatprep.subr.bf16.mxu0 0
    %8343 = vmatpush1.bf16.msra.mxu0 %v8323
    %8344 = vmatprep.subr.bf16.mxu0 0
    %8345 = vmatpush1.bf16.msra.mxu0 %v8322
    %8346 = vmatprep.subr.bf16.mxu0 0
    %8347 = vmatpush1.bf16.msra.mxu0 %v8321
    %8348 = vmatprep.subr.bf16.mxu0 0
    %8349 = vmatpush2.bf16.msra.mxu0 0
    %8350 = vmatprep.subr.bf16.mxu0 0
    %8351 = vmatpush2.bf16.msra.mxu0 0
    %8352 = vmatprep.subr.bf16.mxu0 0
    %8353 = vmatpush2.bf16.msra.mxu0 0
    %8354 = vmatprep.subr.bf16.mxu0 0
    %8355 = vmatpush2.bf16.msra.mxu0 0
    %8356 = vmatprep.subr.bf16.mxu0 0
    %8357 = vmatpush2.bf16.msra.mxu0 0
    %8358 = vmatprep.subr.bf16.mxu0 0
    %8359 = vmatpush2.bf16.msra.mxu0 0
    %8360 = vmatprep.subr.bf16.mxu0 0
    %8361 = vmatpush2.bf16.msra.mxu0 0
    %8362 = vmatprep.subr.bf16.mxu0 0
    %8363 = vmatpush2.bf16.msra.mxu0 0
    %8364 = vmatprep.mubr.bf16.mxu0 0
    %8365 = vmatmul.mubr.bf16.gmra.mxu0 %v8330
    %v8366 = vpop.f32.mrf.mxu0
    %v8367 = vadd.f32 0.0, %v8366
    %v8368 = vpop.f32.mrf.mxu0
    %v8369 = vpop.f32.mrf.mxu0
    %v8370 = vadd.f32 0.0, %v8369
    %v8371 = vpop.f32.mrf.mxu0
    %8372 = vdwg.mxu0
    %v8381 = vunpack.c.l.b16 %v8287
    %v8382 = vunpack.c.l.b16 %v8288
    %v8383 = vunpack.c.l.b16 %v8289
    %v8384 = vunpack.c.l.b16 %v8290
    %v8385 = vunpack.c.l.b16 %v8291
    %v8386 = vunpack.c.l.b16 %v8292
    %v8387 = vunpack.c.l.b16 %v8293
    %v8388 = vunpack.c.l.b16 %v8294
    %v8389 = vpack.c.b16 %v8382, %v8381
    %v8390 = vpack.c.b16 %v8384, %v8383
    %v8391 = vpack.c.b16 %v8386, %v8385
    %v8392 = vpack.c.b16 %v8388, %v8387
    %v8398 = vsel %vm813, %v8286, 0
    %8400 = vmatprep.subr.bf16.mxu0 0
    %8401 = vmatpush1.bf16.msra.mxu0 0
    %8402 = vmatprep.subr.bf16.mxu0 0
    %8403 = vmatpush1.bf16.msra.mxu0 0
    %8404 = vmatprep.subr.bf16.mxu0 0
    %8405 = vmatpush1.bf16.msra.mxu0 0
    %8406 = vmatprep.subr.bf16.mxu0 0
    %8407 = vmatpush1.bf16.msra.mxu0 0
    %8408 = vmatprep.subr.bf16.mxu0 0
    %8409 = vmatpush1.bf16.msra.mxu0 %v8392
    %8410 = vmatprep.subr.bf16.mxu0 0
    %8411 = vmatpush1.bf16.msra.mxu0 %v8391
    %8412 = vmatprep.subr.bf16.mxu0 0
    %8413 = vmatpush1.bf16.msra.mxu0 %v8390
    %8414 = vmatprep.subr.bf16.mxu0 0
    %8415 = vmatpush1.bf16.msra.mxu0 %v8389
    %8416 = vmatprep.subr.bf16.mxu0 0
    %8417 = vmatpush2.bf16.msra.mxu0 0
    %8418 = vmatprep.subr.bf16.mxu0 0
    %8419 = vmatpush2.bf16.msra.mxu0 0
    %8420 = vmatprep.subr.bf16.mxu0 0
    %8421 = vmatpush2.bf16.msra.mxu0 0
    %8422 = vmatprep.subr.bf16.mxu0 0
    %8423 = vmatpush2.bf16.msra.mxu0 0
    %8424 = vmatprep.subr.bf16.mxu0 0
    %8425 = vmatpush2.bf16.msra.mxu0 0
    %8426 = vmatprep.subr.bf16.mxu0 0
    %8427 = vmatpush2.bf16.msra.mxu0 0
    %8428 = vmatprep.subr.bf16.mxu0 0
    %8429 = vmatpush2.bf16.msra.mxu0 0
    %8430 = vmatprep.subr.bf16.mxu0 0
    %8431 = vmatpush2.bf16.msra.mxu0 0
    %8432 = vmatprep.mubr.bf16.mxu0 0
    %8433 = vmatmul.mubr.bf16.gmra.mxu0 %v8398
    %v8434 = vpop.f32.mrf.mxu0
    %v8435 = vadd.f32 %v8367, %v8434
    %v8436 = vpop.f32.mrf.mxu0
    %v8437 = vpop.f32.mrf.mxu0
    %v8438 = vadd.f32 %v8370, %v8437
    %v8439 = vpop.f32.mrf.mxu0
    %8440 = vdwg.mxu0
    %v8441 = vpack.c.bf16 %v8285, %v8284
    %s8442 = scalar_lea.vmem [#allocation27], 64
    %v8443 = vld [vmem:[%s8442] sm:$0xf]
    %v8444 = vld [vmem:[%s8442 + $0x4] sm:$0xf]
    %v8445 = vld [vmem:[%s8442 + $0x8] sm:$0xf]
    %v8446 = vld [vmem:[%s8442 + $0xc] sm:$0xf]
    %v8447 = vld [vmem:[%s8442 + $0x10] sm:$0xf]
    %v8448 = vld [vmem:[%s8442 + $0x14] sm:$0xf]
    %v8449 = vld [vmem:[%s8442 + $0x18] sm:$0xf]
    %v8450 = vld [vmem:[%s8442 + $0x1c] sm:$0xf]
    %v8459 = vunpack.c.l.b16 %v8443
    %v8460 = vunpack.c.l.b16 %v8444
    %v8461 = vunpack.c.l.b16 %v8445
    %v8462 = vunpack.c.l.b16 %v8446
    %v8463 = vunpack.c.l.b16 %v8447
    %v8464 = vunpack.c.l.b16 %v8448
    %v8465 = vunpack.c.l.b16 %v8449
    %v8466 = vunpack.c.l.b16 %v8450
    %v8467 = vpack.c.b16 %v8460, %v8459
    %v8468 = vpack.c.b16 %v8462, %v8461
    %v8469 = vpack.c.b16 %v8464, %v8463
    %v8470 = vpack.c.b16 %v8466, %v8465
    %v8476 = vsel %vm813, %v8441, 0
    %8478 = vmatprep.subr.bf16.mxu0 0
    %8479 = vmatpush1.bf16.msra.mxu0 0
    %8480 = vmatprep.subr.bf16.mxu0 0
    %8481 = vmatpush1.bf16.msra.mxu0 0
    %8482 = vmatprep.subr.bf16.mxu0 0
    %8483 = vmatpush1.bf16.msra.mxu0 0
    %8484 = vmatprep.subr.bf16.mxu0 0
    %8485 = vmatpush1.bf16.msra.mxu0 0
    %8486 = vmatprep.subr.bf16.mxu0 0
    %8487 = vmatpush1.bf16.msra.mxu0 %v8470
    %8488 = vmatprep.subr.bf16.mxu0 0
    %8489 = vmatpush1.bf16.msra.mxu0 %v8469
    %8490 = vmatprep.subr.bf16.mxu0 0
    %8491 = vmatpush1.bf16.msra.mxu0 %v8468
    %8492 = vmatprep.subr.bf16.mxu0 0
    %8493 = vmatpush1.bf16.msra.mxu0 %v8467
    %8494 = vmatprep.subr.bf16.mxu0 0
    %8495 = vmatpush2.bf16.msra.mxu0 0
    %8496 = vmatprep.subr.bf16.mxu0 0
    %8497 = vmatpush2.bf16.msra.mxu0 0
    %8498 = vmatprep.subr.bf16.mxu0 0
    %8499 = vmatpush2.bf16.msra.mxu0 0
    %8500 = vmatprep.subr.bf16.mxu0 0
    %8501 = vmatpush2.bf16.msra.mxu0 0
    %8502 = vmatprep.subr.bf16.mxu0 0
    %8503 = vmatpush2.bf16.msra.mxu0 0
    %8504 = vmatprep.subr.bf16.mxu0 0
    %8505 = vmatpush2.bf16.msra.mxu0 0
    %8506 = vmatprep.subr.bf16.mxu0 0
    %8507 = vmatpush2.bf16.msra.mxu0 0
    %8508 = vmatprep.subr.bf16.mxu0 0
    %8509 = vmatpush2.bf16.msra.mxu0 0
    %8510 = vmatprep.mubr.bf16.mxu0 0
    %8511 = vmatmul.mubr.bf16.gmra.mxu0 %v8476
    %v8512 = vpop.f32.mrf.mxu0
    %v8513 = vadd.f32 0.0, %v8512
    %v8514 = vpop.f32.mrf.mxu0
    %v8515 = vpop.f32.mrf.mxu0
    %v8516 = vadd.f32 0.0, %v8515
    %v8517 = vpop.f32.mrf.mxu0
    %8518 = vdwg.mxu0
    %v8519 = vadd.f32 %v8435, %v8513
    %v8520 = vadd.f32 %v8438, %v8516
    %v8521 = vld [vmem:[%s69] sm:$0x1]
    %v8523 = vlaneseq
    %v8524 = vshrl.u32 %v8523, 7
    %v8525 = vsub.s32 0, %v8524
    %v8526 = vrot.slane %v8521, %v8525
    %v8528 = vadd.f32 %v8519, %v8526
    %v8529 = vadd.f32 %v8520, %v8526
    %v8530 = vadd.f32 %v8012, %v8528
    %v8531 = vadd.f32 %v8013, %v8529
    %v8532 = vmax.f32 %v8530, 0.0
    %v8533 = vmax.f32 %v8531, 0.0
    %8534 = vst.msk [vmem:[%s75] sm:$0xff] %vm813, %v8532
    %8535 = vst.msk [vmem:[%s75 + $0x8] sm:$0xff] %vm813, %v8533
    // Predicated region
    $region222: #{_lambda_.1} parent=1 // pred_check
      _
    $region223: #{_lambda_.1} parent=1 // pred_check_branch
      %8537 = sbr.rel (0) target = $region225
    $region224: #{_lambda_.1} parent=1 // pred_region
      _
    $region225: #{_lambda_.1} parent=1 // pred_fallthru
      _
    // Predicated region
    $region226: #{_lambda_.1} parent=1 // pred_check
      _
    $region227: #{_lambda_.1} parent=1 // pred_check_branch
      %8539 = sbr.rel (0) target = $region229
    $region228: #{_lambda_.1} parent=1 // pred_region
      _
    $region229: #{_lambda_.1} parent=1 // pred_fallthru
      _
    %8540 = vsyncpa [#allocation3], 1
    %8541 = vsyncpa [#allocation5], 1
    %8542 = vsyncpa [#allocation8], 1
    %8543 = vsyncpa [#allocation11], 1
    %8544 = vsyncpa [#allocation14], 1
    %8545 = vsyncpa [#allocation17], 1
    %8546 = vsyncpa [#allocation20], 1
    %8547 = vsyncpa [#allocation23], 1
    %8548 = vsyncpa [#allocation26], 1
    %8549 = vsyncpa [#allocation29], 1

</llo_original>
